<compile_context>
chip_gen: v7x
topology: tpu7x:2x2x1
jax: 0.10.0
libtpu: 0.0.40
codegen_flags: <defaults>
</compile_context>

<pallas_src>
import math
import functools

import jax
import jax.numpy as jnp
from jax.experimental import pallas as pl
from jax.experimental.pallas import tpu as pltpu

# ---------------------------------------------------------------------------
# Module-consistent hyper-parameters
# ---------------------------------------------------------------------------
B = 2             # batch
DIM = 8           # `dim` (input channels)
H = W = 8         # spatial size; reduce_size == H -> "no_reduce" path (no pooling)
HEADS = 2
DIM_HEAD = 16
INNER = HEADS * DIM_HEAD            # inner_dim = dim_head * heads
SCALE = DIM_HEAD ** (-0.5)
REL_POS_LEN = 2 * 32 - 1            # module hard-codes input_size = [32, 32]

HI = jax.lax.Precision.HIGHEST


# ---------------------------------------------------------------------------
# Fused Pallas kernel: qkv conv -> attention (+rel-pos) -> out conv
# ---------------------------------------------------------------------------
def _fused_forward_kernel(x_ref, wqkv_ref, wout_ref, bfull_ref, onehot_ref,
                          out_ref, attn_ref, xpad_ref, opad_ref, *, scale):
    """Per-batch-element fused forward.

    x_ref     : (1, H, W, Cin)          input tile (channels-last)
    wqkv_ref  : (9*Cin, 3*inner)        fused dw+pw qkv conv weight (head-major cols)
    wout_ref  : (9*inner, Cout)         fused dw+pw out conv weight (head-major rows)
    bfull_ref : ((H+W)*dim_head, N)     decomposed rel-pos basis
    onehot_ref: (N, H+W)                one-hot of (row, col) for every token
    out_ref   : (1, N, Cout)            conv output (pixel-major)
    attn_ref  : (1, N, heads*N)         lane-dense softmax attention slab
    xpad/opad : VMEM scratch for the 3x3 conv zero-pad halos
    """
    _, Hh, Ww, Cin = x_ref.shape
    N = Hh * Ww

    # ---------- to_qkv: depthwise-separable 3x3 conv as one im2col GEMM ----------
    xpad_ref[...] = jnp.zeros(xpad_ref.shape, xpad_ref.dtype)
    xpad_ref[1:Hh + 1, 1:Ww + 1, :] = x_ref[0]
    xpad = xpad_ref[...]
    patches = jnp.concatenate(
        [xpad[di:di + Hh, dj:dj + Ww, :] for di in range(3) for dj in range(3)],
        axis=-1,
    ).reshape(N, 9 * Cin)
    qkv = jnp.dot(patches, wqkv_ref[...], preferred_element_type=jnp.float32)  # (N, 3*inner)

    onehot = onehot_ref[...]            # (N, H+W)
    bfull = bfull_ref[...]              # ((H+W)*D, N)

    attn_heads = []
    o_heads = []
    for e in range(HEADS):
        q = qkv[:, e * DIM_HEAD:(e + 1) * DIM_HEAD]                           # (N, D)
        k = qkv[:, INNER + e * DIM_HEAD:INNER + (e + 1) * DIM_HEAD]           # (N, D)
        v = qkv[:, 2 * INNER + e * DIM_HEAD:2 * INNER + (e + 1) * DIM_HEAD]   # (N, D)

        # content logits: q @ k^T (contract head_dim, no explicit transpose)
        s = jax.lax.dot_general(q, k, (((1,), (1,)), ((), ())),
                                preferred_element_type=jnp.float32)           # (N, N)

        # decomposed rel-pos bias as a single MXU GEMM:
        #   bias[n, m] = sum_c q[n,c]*(Rh[h(n),kh(m),c] + Rw[w(n),kw(m),c])
        q_exp = (onehot[:, :, None] * q[:, None, :]).reshape(N, (Hh + Ww) * DIM_HEAD)
        bias = jnp.dot(q_exp, bfull, preferred_element_type=jnp.float32)      # (N, N)

        logits = (s + bias) * scale
        m = jnp.max(logits, axis=-1, keepdims=True)
        p = jnp.exp(logits - m)
        p = p * pl.reciprocal(jnp.sum(p, axis=-1, keepdims=True), approx=True)
        attn_heads.append(p)
        o_heads.append(jnp.dot(p, v, preferred_element_type=jnp.float32))     # (N, D)

    # lane-dense (N, heads*N) attention slab
    attn_ref[0] = jnp.concatenate(attn_heads, axis=-1).astype(attn_ref.dtype)
    o_cat = jnp.concatenate(o_heads, axis=-1)            # (N, inner), channel = e*D + d

    # ---------- to_out: depthwise-separable 3x3 conv as one im2col GEMM ----------
    opad_ref[...] = jnp.zeros(opad_ref.shape, opad_ref.dtype)
    opad_ref[1:Hh + 1, 1:Ww + 1, :] = o_cat.reshape(Hh, Ww, INNER)
    opad = opad_ref[...]
    opatches = jnp.concatenate(
        [opad[di:di + Hh, dj:dj + Ww, :] for di in range(3) for dj in range(3)],
        axis=-1,
    ).reshape(N, 9 * INNER)
    out_ref[0] = jnp.dot(opatches, wout_ref[...],
                         preferred_element_type=jnp.float32).astype(out_ref.dtype)


# ---------------------------------------------------------------------------
# Glue: get_rel_pos / constant prep (plain JAX, tiny)
# ---------------------------------------------------------------------------
def get_rel_pos_jax(q_size, k_size, rel_pos):
    """JAX port of get_rel_pos (F.interpolate mode='linear', align_corners=False)."""
    max_rel_dist = int(2 * max(q_size, k_size) - 1)
    L, _ = rel_pos.shape
    if L != max_rel_dist:
        scale = L / max_rel_dist
        dst = jnp.arange(max_rel_dist, dtype=jnp.float32)
        src = jnp.clip((dst + 0.5) * scale - 0.5, 0.0, L - 1)
        lo = jnp.floor(src).astype(jnp.int32)
        hi = jnp.minimum(lo + 1, L - 1)
        wgt = (src - lo.astype(jnp.float32))[:, None]
        rel_pos_resized = rel_pos[lo] * (1.0 - wgt) + rel_pos[hi] * wgt
    else:
        rel_pos_resized = rel_pos
    q_coords = jnp.arange(q_size)[:, None] * max(k_size / q_size, 1.0)
    k_coords = jnp.arange(k_size)[None, :] * max(q_size / k_size, 1.0)
    rel_coords = (q_coords - k_coords + (k_size - 1) * max(q_size / k_size, 1.0)).astype(jnp.int32)
    return rel_pos_resized[rel_coords]                      # (q_size, k_size, C)


def _prepare_constants(params, Hh, Ww):
    """Fold depthwise into pointwise weights (im2col GEMM weights, head-major
    channel order) and build the rel-pos GEMM basis + spatial one-hot."""
    # new channel e*dim_head + d  <-  original channel d*heads + e  (einops '(dim_head heads)')
    head_perm = jnp.array([d * HEADS + e for e in range(HEADS) for d in range(DIM_HEAD)],
                          dtype=jnp.int32)
    qkv_col_perm = jnp.concatenate([part * INNER + head_perm for part in range(3)])

    cin = params["w_dw_qkv"].shape[-1]
    w_pw_qkv = params["w_pw_qkv"][:, qkv_col_perm]                          # (cin, 3*inner)
    w_qkv_fused = (params["w_dw_qkv"][:, :, :, None] *
                   w_pw_qkv[None, None, :, :]).reshape(9 * cin, 3 * INNER)

    cout = params["w_pw_out"].shape[-1]
    w_dw_out = params["w_dw_out"][:, :, head_perm]                          # (3,3,inner)
    w_pw_out = params["w_pw_out"][head_perm, :]                             # (inner, cout)
    w_out_fused = (w_dw_out[:, :, :, None] *
                   w_pw_out[None, None, :, :]).reshape(9 * INNER, cout)

    Rh = get_rel_pos_jax(Hh, Hh, params["rel_pos_h"])                       # (H, KH, D)
    Rw = get_rel_pos_jax(Ww, Ww, params["rel_pos_w"])                       # (W, KW, D)
    KH, KW = Hh, Ww
    N = Hh * Ww
    # Bh[h*D + c, kh*KW + kw] = Rh[h, kh, c];  Bw[w*D + c, kh*KW + kw] = Rw[w, kw, c]
    Bh = jnp.broadcast_to(jnp.transpose(Rh, (0, 2, 1))[:, :, :, None],
                          (Hh, DIM_HEAD, KH, KW)).reshape(Hh * DIM_HEAD, N)
    Bw = jnp.broadcast_to(jnp.transpose(Rw, (0, 2, 1))[:, :, None, :],
                          (Ww, DIM_HEAD, KH, KW)).reshape(Ww * DIM_HEAD, N)
    b_full = jnp.concatenate([Bh, Bw], axis=0)                              # ((H+W)*D, N)

    n_ids = jnp.arange(N)
    oh_h = (n_ids[:, None] // Ww == jnp.arange(Hh)[None, :]).astype(jnp.float32)
    oh_w = (n_ids[:, None] % Ww == jnp.arange(Ww)[None, :]).astype(jnp.float32)
    onehot = jnp.concatenate([oh_h, oh_w], axis=1)                          # (N, H+W)
    return w_qkv_fused, w_out_fused, b_full, onehot


def linear_attention_forward(x_nchw, params):
    """Forward pass of LinearAttention_expand_rel_SAM_no_reduce.

    Returns (out NCHW, softmax attention (B, heads, N, N)).
    reduce_size == H, so the maxpool/interp reduction branch is not taken.
    Dropout probabilities are 0.0 -> identity.
    """
    Bn, C, Hh, Ww = x_nchw.shape
    N = Hh * Ww
    w_qkv_fused, w_out_fused, b_full, onehot = _prepare_constants(params, Hh, Ww)
    x_nhwc = jnp.transpose(x_nchw, (0, 2, 3, 1))                            # NHWC (tiny)

    kern = functools.partial(_fused_forward_kernel, scale=SCALE)
    out_slab, attn_slab = pl.pallas_call(
        kern,
        out_shape=(jax.ShapeDtypeStruct((Bn, N, C), jnp.float32),
                   jax.ShapeDtypeStruct((Bn, N, HEADS * N), jnp.float32)),
        grid=(Bn,),
        in_specs=[
            pl.BlockSpec((1, Hh, Ww, C), lambda b: (b, 0, 0, 0)),
            pl.BlockSpec((9 * C, 3 * INNER), lambda b: (0, 0)),
            pl.BlockSpec((9 * INNER, C), lambda b: (0, 0)),
            pl.BlockSpec(((Hh + Ww) * DIM_HEAD, N), lambda b: (0, 0)),
            pl.BlockSpec((N, Hh + Ww), lambda b: (0, 0)),
        ],
        out_specs=(
            pl.BlockSpec((1, N, C), lambda b: (b, 0, 0)),
            pl.BlockSpec((1, N, HEADS * N), lambda b: (b, 0, 0)),
        ),
        scratch_shapes=[
            pltpu.VMEM((Hh + 2, Ww + 2, C), jnp.float32),       # qkv-conv pad halo
            pltpu.VMEM((Hh + 2, Ww + 2, INNER), jnp.float32),   # out-conv pad halo
        ],
        compiler_params=pltpu.CompilerParams(dimension_semantics=("parallel",)),
    )(x_nhwc, w_qkv_fused, w_out_fused, b_full, onehot)

    out_nchw = jnp.transpose(out_slab, (0, 2, 1)).reshape(Bn, C, Hh, Ww)
    attn = jnp.transpose(attn_slab.reshape(Bn, N, HEADS, N), (0, 2, 1, 3))
    return out_nchw, attn
    # TODO(synk): adaptive_max_pool2d / interp branch (reduce_size != H) not exercised ("no_reduce").


# ---------------------------------------------------------------------------
# Pure-JAX reference (independent path, for numerical check)
# ---------------------------------------------------------------------------
def _dwsep_conv_ref(x_nhwc, w_dw, w_pw):
    Cin = x_nhwc.shape[-1]
    dw = jax.lax.conv_general_dilated(
        x_nhwc, w_dw[:, :, None, :], (1, 1), "SAME",
        dimension_numbers=("NHWC", "HWIO", "NHWC"),
        feature_group_count=Cin, precision=HI)
    return jnp.einsum("bhwi,io->bhwo", dw, w_pw, precision=HI)


def _to_heads(t, Bn, Hh, Ww):
    # einops 'b (dim_head heads) h w -> b heads (h w) dim_head' (channel = d*heads + head)
    t = t.reshape(Bn, Hh, Ww, DIM_HEAD, HEADS)
    t = jnp.transpose(t, (0, 4, 1, 2, 3))
    return t.reshape(Bn * HEADS, Hh * Ww, DIM_HEAD)


def reference_forward(x_nchw, params):
    Bn, C, Hh, Ww = x_nchw.shape
    x = jnp.transpose(x_nchw, (0, 2, 3, 1))
    qkv = _dwsep_conv_ref(x, params["w_dw_qkv"], params["w_pw_qkv"])
    q_c, k_c, v_c = jnp.split(qkv, 3, axis=-1)
    q = _to_heads(q_c, Bn, Hh, Ww)
    k = _to_heads(k_c, Bn, Hh, Ww)
    v = _to_heads(v_c, Bn, Hh, Ww)
    s = jnp.einsum("bid,bjd->bij", q, k, precision=HI)
    Rh = get_rel_pos_jax(Hh, Hh, params["rel_pos_h"])
    Rw = get_rel_pos_jax(Ww, Ww, params["rel_pos_w"])
    r_q = q.reshape(Bn * HEADS, Hh, Ww, DIM_HEAD)
    rel_h = jnp.einsum("bhwc,hkc->bhwk", r_q, Rh, precision=HI)
    rel_w = jnp.einsum("bhwc,wkc->bhwk", r_q, Rw, precision=HI)
    attn = (s.reshape(Bn * HEADS, Hh, Ww, Hh, Ww)
            + rel_h[:, :, :, :, None] + rel_w[:, :, :, None, :])
    attn = attn.reshape(Bn * HEADS, Hh * Ww, Hh * Ww) * SCALE
    attn = jax.nn.softmax(attn, axis=-1)
    o = jnp.einsum("bij,bjd->bid", attn, v, precision=HI)
    o = o.reshape(Bn, HEADS, Hh, Ww, DIM_HEAD)
    o = jnp.transpose(o, (0, 2, 3, 4, 1)).reshape(Bn, Hh, Ww, INNER)
    out = _dwsep_conv_ref(o, params["w_dw_out"], params["w_pw_out"])
    return jnp.transpose(out, (0, 3, 1, 2)), attn.reshape(Bn, HEADS, Hh * Ww, Hh * Ww)


# ---------------------------------------------------------------------------
if __name__ == "__main__":
    key = jax.random.PRNGKey(0)
    ks = jax.random.split(key, 7)
    params = {
        # depthwise weights stored as (3, 3, C); pointwise as (Cin, Cout); bias=False.
        "w_dw_qkv": jax.random.normal(ks[0], (3, 3, DIM), jnp.float32) / 3.0,
        "w_pw_qkv": jax.random.normal(ks[1], (DIM, 3 * INNER), jnp.float32) / math.sqrt(DIM),
        "w_dw_out": jax.random.normal(ks[2], (3, 3, INNER), jnp.float32) / 3.0,
        "w_pw_out": jax.random.normal(ks[3], (INNER, DIM), jnp.float32) / math.sqrt(INNER),
        "rel_pos_h": jax.random.normal(ks[4], (REL_POS_LEN, DIM_HEAD), jnp.float32) * 0.02,
        "rel_pos_w": jax.random.normal(ks[5], (REL_POS_LEN, DIM_HEAD), jnp.float32) * 0.02,
    }
    x = jax.random.normal(ks[6], (B, DIM, H, W), jnp.float32)

    out, attn = jax.jit(linear_attention_forward)(x, params)
    out = jax.block_until_ready(out)
    attn = jax.block_until_ready(attn)

    out_ref, attn_ref = reference_forward(x, params)
    assert out.shape == (B, DIM, H, W)
    assert attn.shape == (B, HEADS, H * W, H * W)
    assert float(jnp.max(jnp.abs(out - out_ref))) < 5e-2, "output mismatch"
    assert float(jnp.max(jnp.abs(attn - attn_ref))) < 5e-2, "attention mismatch"
    print("KERNEL_OK")
</pallas_src>

<mosaic_0001>
module attributes {stable_mosaic.version = 11 : i64} {
  func.func @_fused_forward_kernel(%arg0: i32, %arg1: memref<1x8x8x8xf32, #tpu.memory_space<vmem>>, %arg2: memref<72x96xf32, #tpu.memory_space<vmem>>, %arg3: memref<288x8xf32, #tpu.memory_space<vmem>>, %arg4: memref<256x64xf32, #tpu.memory_space<vmem>>, %arg5: memref<64x16xf32, #tpu.memory_space<vmem>>, %arg6: memref<1x64x8xf32, #tpu.memory_space<vmem>>, %arg7: memref<1x64x128xf32, #tpu.memory_space<vmem>>, %arg8: memref<10x10x8xf32, #tpu.memory_space<vmem>>, %arg9: memref<10x10x32xf32, #tpu.memory_space<vmem>>) attributes {dimension_semantics = [#tpu.dimension_semantics<parallel>], iteration_bounds = array<i64: 2>, scalar_prefetch = 0 : i64, scratch_operands = 2 : i64, tpu.core_type = #tpu.core_type<tc>, window_params = [{transform_indices = @transform_0, window_bounds = array<i64: 1, 8, 8, 8>}, {pipeline_mode = #tpu.pipeline_mode<synchronous>, transform_indices = @transform_1, window_bounds = array<i64: 72, 96>}, {pipeline_mode = #tpu.pipeline_mode<synchronous>, transform_indices = @transform_2, window_bounds = array<i64: 288, 8>}, {pipeline_mode = #tpu.pipeline_mode<synchronous>, transform_indices = @transform_3, window_bounds = array<i64: 256, 64>}, {pipeline_mode = #tpu.pipeline_mode<synchronous>, transform_indices = @transform_4, window_bounds = array<i64: 64, 16>}, {transform_indices = @transform_5, window_bounds = array<i64: 1, 64, 8>}, {transform_indices = @transform_6, window_bounds = array<i64: 1, 64, 128>}]} {
    %cst = arith.constant 0.000000e+00 : f32
    %0 = vector.broadcast %cst : f32 to vector<10x10x8xf32>
    %c0 = arith.constant 0 : index
    %c0_0 = arith.constant 0 : index
    %c0_1 = arith.constant 0 : index
    %1 = vector.load %arg8[%c0, %c0_0, %c0_1] : memref<10x10x8xf32, #tpu.memory_space<vmem>>, vector<10x10x8xf32>
    tpu.vector_store %arg8[%c0, %c0_0, %c0_1], %0 {strides = array<i32>} : memref<10x10x8xf32, #tpu.memory_space<vmem>>, vector<10x10x8xf32>,
    %c0_2 = arith.constant 0 : index
    %c0_3 = arith.constant 0 : index
    %c0_4 = arith.constant 0 : index
    %c0_5 = arith.constant 0 : index
    %2 = vector.load %arg1[%c0_2, %c0_3, %c0_4, %c0_5] : memref<1x8x8x8xf32, #tpu.memory_space<vmem>>, vector<1x8x8x8xf32>
    %3 = vector.shape_cast %2 : vector<1x8x8x8xf32> to vector<8x8x8xf32>
    %c1 = arith.constant 1 : index
    %c1_6 = arith.constant 1 : index
    %c0_7 = arith.constant 0 : index
    %4 = vector.load %arg8[%c1, %c1_6, %c0_7] : memref<10x10x8xf32, #tpu.memory_space<vmem>>, vector<8x8x8xf32>
    tpu.vector_store %arg8[%c1, %c1_6, %c0_7], %3 {strides = array<i32>} : memref<10x10x8xf32, #tpu.memory_space<vmem>>, vector<8x8x8xf32>,
    %c0_8 = arith.constant 0 : index
    %c0_9 = arith.constant 0 : index
    %c0_10 = arith.constant 0 : index
    %5 = vector.load %arg8[%c0_8, %c0_9, %c0_10] : memref<10x10x8xf32, #tpu.memory_space<vmem>>, vector<10x10x8xf32>
    %6 = vector.extract_strided_slice %5 {offsets = [0, 0, 0], sizes = [8, 8, 8], strides = [1, 1, 1]} : vector<10x10x8xf32> to vector<8x8x8xf32>
    %7 = vector.extract_strided_slice %5 {offsets = [0, 1, 0], sizes = [8, 8, 8], strides = [1, 1, 1]} : vector<10x10x8xf32> to vector<8x8x8xf32>
    %8 = vector.extract_strided_slice %5 {offsets = [0, 2, 0], sizes = [8, 8, 8], strides = [1, 1, 1]} : vector<10x10x8xf32> to vector<8x8x8xf32>
    %9 = vector.extract_strided_slice %5 {offsets = [1, 0, 0], sizes = [8, 8, 8], strides = [1, 1, 1]} : vector<10x10x8xf32> to vector<8x8x8xf32>
    %10 = vector.extract_strided_slice %5 {offsets = [1, 1, 0], sizes = [8, 8, 8], strides = [1, 1, 1]} : vector<10x10x8xf32> to vector<8x8x8xf32>
    %11 = vector.extract_strided_slice %5 {offsets = [1, 2, 0], sizes = [8, 8, 8], strides = [1, 1, 1]} : vector<10x10x8xf32> to vector<8x8x8xf32>
    %12 = vector.extract_strided_slice %5 {offsets = [2, 0, 0], sizes = [8, 8, 8], strides = [1, 1, 1]} : vector<10x10x8xf32> to vector<8x8x8xf32>
    %13 = vector.extract_strided_slice %5 {offsets = [2, 1, 0], sizes = [8, 8, 8], strides = [1, 1, 1]} : vector<10x10x8xf32> to vector<8x8x8xf32>
    %14 = vector.extract_strided_slice %5 {offsets = [2, 2, 0], sizes = [8, 8, 8], strides = [1, 1, 1]} : vector<10x10x8xf32> to vector<8x8x8xf32>
    %15 = tpu.concatenate %6, %7, %8, %9, %10, %11, %12, %13, %14 in 2 : vector<8x8x8xf32>, vector<8x8x8xf32>, vector<8x8x8xf32>, vector<8x8x8xf32>, vector<8x8x8xf32>, vector<8x8x8xf32>, vector<8x8x8xf32>, vector<8x8x8xf32>, vector<8x8x8xf32> -> vector<8x8x72xf32>
    %16 = vector.shape_cast %15 : vector<8x8x72xf32> to vector<64x72xf32>
    %c0_11 = arith.constant 0 : index
    %c0_12 = arith.constant 0 : index
    %17 = vector.load %arg2[%c0_11, %c0_12] : memref<72x96xf32, #tpu.memory_space<vmem>>, vector<72x96xf32>
    %cst_13 = arith.constant dense<0.000000e+00> : vector<64x96xf32>
    %18 = tpu.matmul %16, %17, %cst_13 {dimension_numbers = #tpu.dot_dimension_numbers<[1], [0], [0], [1], [0, 0, 1, 1], [], []>} : vector<64x72xf32>, vector<72x96xf32>, vector<64x96xf32> -> vector<64x96xf32>
    %c0_14 = arith.constant 0 : index
    %c0_15 = arith.constant 0 : index
    %19 = vector.load %arg5[%c0_14, %c0_15] : memref<64x16xf32, #tpu.memory_space<vmem>>, vector<64x16xf32>
    %c0_16 = arith.constant 0 : index
    %c0_17 = arith.constant 0 : index
    %20 = vector.load %arg4[%c0_16, %c0_17] : memref<256x64xf32, #tpu.memory_space<vmem>>, vector<256x64xf32>
    %21 = vector.extract_strided_slice %18 {offsets = [0, 0], sizes = [64, 16], strides = [1, 1]} : vector<64x96xf32> to vector<64x16xf32>
    %22 = vector.extract_strided_slice %18 {offsets = [0, 32], sizes = [64, 16], strides = [1, 1]} : vector<64x96xf32> to vector<64x16xf32>
    %23 = vector.extract_strided_slice %18 {offsets = [0, 64], sizes = [64, 16], strides = [1, 1]} : vector<64x96xf32> to vector<64x16xf32>
    %cst_18 = arith.constant dense<0.000000e+00> : vector<64x64xf32>
    %24 = tpu.matmul %21, %22, %cst_18 {dimension_numbers = #tpu.dot_dimension_numbers<[1], [1], [0], [0], [0, 0, 1, 0], [], []>} : vector<64x16xf32>, vector<64x16xf32>, vector<64x64xf32> -> vector<64x64xf32>
    %25 = vector.shape_cast %19 : vector<64x16xf32> to vector<64x16x1xf32>
    %26 = vector.shape_cast %21 : vector<64x16xf32> to vector<64x1x16xf32>
    %27 = vector.broadcast %25 : vector<64x16x1xf32> to vector<64x16x16xf32>
    %28 = vector.broadcast %26 : vector<64x1x16xf32> to vector<64x16x16xf32>
    %29 = arith.mulf %27, %28 : vector<64x16x16xf32>
    %30 = vector.shape_cast %29 : vector<64x16x16xf32> to vector<64x256xf32>
    %cst_19 = arith.constant dense<0.000000e+00> : vector<64x64xf32>
    %31 = tpu.matmul %30, %20, %cst_19 {dimension_numbers = #tpu.dot_dimension_numbers<[1], [0], [0], [1], [0, 0, 1, 1], [], []>} : vector<64x256xf32>, vector<256x64xf32>, vector<64x64xf32> -> vector<64x64xf32>
    %32 = arith.addf %24, %31 : vector<64x64xf32>
    %cst_20 = arith.constant 2.500000e-01 : f32
    %33 = vector.broadcast %cst_20 : f32 to vector<64x64xf32>
    %34 = arith.mulf %32, %33 : vector<64x64xf32>
    %cst_21 = arith.constant dense<0xFF800000> : vector<64xf32>
    %35 = vector.multi_reduction <maximumf>, %34, %cst_21 [1] : vector<64x64xf32> to vector<64xf32>
    %36 = vector.shape_cast %35 : vector<64xf32> to vector<64x1xf32>
    %37 = vector.broadcast %36 : vector<64x1xf32> to vector<64x64xf32>
    %38 = arith.subf %34, %37 : vector<64x64xf32>
    %39 = math.exp %38 : vector<64x64xf32>
    %cst_22 = arith.constant dense<0.000000e+00> : vector<64xf32>
    %40 = vector.multi_reduction <add>, %39, %cst_22 [1] : vector<64x64xf32> to vector<64xf32>
    %41 = vector.shape_cast %40 : vector<64xf32> to vector<64x1xf32>
    %42 = tpu.reciprocal %41 {approx = true} : vector<64x1xf32> -> vector<64x1xf32>
    %43 = vector.broadcast %42 : vector<64x1xf32> to vector<64x64xf32>
    %44 = arith.mulf %39, %43 : vector<64x64xf32>
    %cst_23 = arith.constant dense<0.000000e+00> : vector<64x16xf32>
    %45 = tpu.matmul %44, %23, %cst_23 {dimension_numbers = #tpu.dot_dimension_numbers<[1], [0], [0], [1], [0, 0, 1, 1], [], []>} : vector<64x64xf32>, vector<64x16xf32>, vector<64x16xf32> -> vector<64x16xf32>
    %46 = vector.extract_strided_slice %18 {offsets = [0, 16], sizes = [64, 16], strides = [1, 1]} : vector<64x96xf32> to vector<64x16xf32>
    %47 = vector.extract_strided_slice %18 {offsets = [0, 48], sizes = [64, 16], strides = [1, 1]} : vector<64x96xf32> to vector<64x16xf32>
    %48 = vector.extract_strided_slice %18 {offsets = [0, 80], sizes = [64, 16], strides = [1, 1]} : vector<64x96xf32> to vector<64x16xf32>
    %cst_24 = arith.constant dense<0.000000e+00> : vector<64x64xf32>
    %49 = tpu.matmul %46, %47, %cst_24 {dimension_numbers = #tpu.dot_dimension_numbers<[1], [1], [0], [0], [0, 0, 1, 0], [], []>} : vector<64x16xf32>, vector<64x16xf32>, vector<64x64xf32> -> vector<64x64xf32>
    %50 = vector.shape_cast %19 : vector<64x16xf32> to vector<64x16x1xf32>
    %51 = vector.shape_cast %46 : vector<64x16xf32> to vector<64x1x16xf32>
    %52 = vector.broadcast %50 : vector<64x16x1xf32> to vector<64x16x16xf32>
    %53 = vector.broadcast %51 : vector<64x1x16xf32> to vector<64x16x16xf32>
    %54 = arith.mulf %52, %53 : vector<64x16x16xf32>
    %55 = vector.shape_cast %54 : vector<64x16x16xf32> to vector<64x256xf32>
    %cst_25 = arith.constant dense<0.000000e+00> : vector<64x64xf32>
    %56 = tpu.matmul %55, %20, %cst_25 {dimension_numbers = #tpu.dot_dimension_numbers<[1], [0], [0], [1], [0, 0, 1, 1], [], []>} : vector<64x256xf32>, vector<256x64xf32>, vector<64x64xf32> -> vector<64x64xf32>
    %57 = arith.addf %49, %56 : vector<64x64xf32>
    %cst_26 = arith.constant 2.500000e-01 : f32
    %58 = vector.broadcast %cst_26 : f32 to vector<64x64xf32>
    %59 = arith.mulf %57, %58 : vector<64x64xf32>
    %cst_27 = arith.constant dense<0xFF800000> : vector<64xf32>
    %60 = vector.multi_reduction <maximumf>, %59, %cst_27 [1] : vector<64x64xf32> to vector<64xf32>
    %61 = vector.shape_cast %60 : vector<64xf32> to vector<64x1xf32>
    %62 = vector.broadcast %61 : vector<64x1xf32> to vector<64x64xf32>
    %63 = arith.subf %59, %62 : vector<64x64xf32>
    %64 = math.exp %63 : vector<64x64xf32>
    %cst_28 = arith.constant dense<0.000000e+00> : vector<64xf32>
    %65 = vector.multi_reduction <add>, %64, %cst_28 [1] : vector<64x64xf32> to vector<64xf32>
    %66 = vector.shape_cast %65 : vector<64xf32> to vector<64x1xf32>
    %67 = tpu.reciprocal %66 {approx = true} : vector<64x1xf32> -> vector<64x1xf32>
    %68 = vector.broadcast %67 : vector<64x1xf32> to vector<64x64xf32>
    %69 = arith.mulf %64, %68 : vector<64x64xf32>
    %cst_29 = arith.constant dense<0.000000e+00> : vector<64x16xf32>
    %70 = tpu.matmul %69, %48, %cst_29 {dimension_numbers = #tpu.dot_dimension_numbers<[1], [0], [0], [1], [0, 0, 1, 1], [], []>} : vector<64x64xf32>, vector<64x16xf32>, vector<64x16xf32> -> vector<64x16xf32>
    %71 = tpu.concatenate %44, %69 in 1 : vector<64x64xf32>, vector<64x64xf32> -> vector<64x128xf32>
    %c0_30 = arith.constant 0 : index
    %c0_31 = arith.constant 0 : index
    %c0_32 = arith.constant 0 : index
    %72 = vector.load %arg7[%c0_30, %c0_31, %c0_32] : memref<1x64x128xf32, #tpu.memory_space<vmem>>, vector<1x64x128xf32>
    %73 = vector.shape_cast %72 : vector<1x64x128xf32> to vector<64x128xf32>
    %74 = vector.shape_cast %71 : vector<64x128xf32> to vector<1x64x128xf32>
    tpu.vector_store %arg7[%c0_30, %c0_31, %c0_32], %74 {strides = array<i32>} : memref<1x64x128xf32, #tpu.memory_space<vmem>>, vector<1x64x128xf32>,
    %75 = tpu.concatenate %45, %70 in 1 : vector<64x16xf32>, vector<64x16xf32> -> vector<64x32xf32>
    %cst_33 = arith.constant 0.000000e+00 : f32
    %76 = vector.broadcast %cst_33 : f32 to vector<10x10x32xf32>
    %c0_34 = arith.constant 0 : index
    %c0_35 = arith.constant 0 : index
    %c0_36 = arith.constant 0 : index
    %77 = vector.load %arg9[%c0_34, %c0_35, %c0_36] : memref<10x10x32xf32, #tpu.memory_space<vmem>>, vector<10x10x32xf32>
    tpu.vector_store %arg9[%c0_34, %c0_35, %c0_36], %76 {strides = array<i32>} : memref<10x10x32xf32, #tpu.memory_space<vmem>>, vector<10x10x32xf32>,
    %78 = vector.shape_cast %75 : vector<64x32xf32> to vector<8x8x32xf32>
    %c1_37 = arith.constant 1 : index
    %c1_38 = arith.constant 1 : index
    %c0_39 = arith.constant 0 : index
    %79 = vector.load %arg9[%c1_37, %c1_38, %c0_39] : memref<10x10x32xf32, #tpu.memory_space<vmem>>, vector<8x8x32xf32>
    tpu.vector_store %arg9[%c1_37, %c1_38, %c0_39], %78 {strides = array<i32>} : memref<10x10x32xf32, #tpu.memory_space<vmem>>, vector<8x8x32xf32>,
    %c0_40 = arith.constant 0 : index
    %c0_41 = arith.constant 0 : index
    %c0_42 = arith.constant 0 : index
    %80 = vector.load %arg9[%c0_40, %c0_41, %c0_42] : memref<10x10x32xf32, #tpu.memory_space<vmem>>, vector<10x10x32xf32>
    %81 = vector.extract_strided_slice %80 {offsets = [0, 0, 0], sizes = [8, 8, 32], strides = [1, 1, 1]} : vector<10x10x32xf32> to vector<8x8x32xf32>
    %82 = vector.extract_strided_slice %80 {offsets = [0, 1, 0], sizes = [8, 8, 32], strides = [1, 1, 1]} : vector<10x10x32xf32> to vector<8x8x32xf32>
    %83 = vector.extract_strided_slice %80 {offsets = [0, 2, 0], sizes = [8, 8, 32], strides = [1, 1, 1]} : vector<10x10x32xf32> to vector<8x8x32xf32>
    %84 = vector.extract_strided_slice %80 {offsets = [1, 0, 0], sizes = [8, 8, 32], strides = [1, 1, 1]} : vector<10x10x32xf32> to vector<8x8x32xf32>
    %85 = vector.extract_strided_slice %80 {offsets = [1, 1, 0], sizes = [8, 8, 32], strides = [1, 1, 1]} : vector<10x10x32xf32> to vector<8x8x32xf32>
    %86 = vector.extract_strided_slice %80 {offsets = [1, 2, 0], sizes = [8, 8, 32], strides = [1, 1, 1]} : vector<10x10x32xf32> to vector<8x8x32xf32>
    %87 = vector.extract_strided_slice %80 {offsets = [2, 0, 0], sizes = [8, 8, 32], strides = [1, 1, 1]} : vector<10x10x32xf32> to vector<8x8x32xf32>
    %88 = vector.extract_strided_slice %80 {offsets = [2, 1, 0], sizes = [8, 8, 32], strides = [1, 1, 1]} : vector<10x10x32xf32> to vector<8x8x32xf32>
    %89 = vector.extract_strided_slice %80 {offsets = [2, 2, 0], sizes = [8, 8, 32], strides = [1, 1, 1]} : vector<10x10x32xf32> to vector<8x8x32xf32>
    %90 = tpu.concatenate %81, %82, %83, %84, %85, %86, %87, %88, %89 in 2 : vector<8x8x32xf32>, vector<8x8x32xf32>, vector<8x8x32xf32>, vector<8x8x32xf32>, vector<8x8x32xf32>, vector<8x8x32xf32>, vector<8x8x32xf32>, vector<8x8x32xf32>, vector<8x8x32xf32> -> vector<8x8x288xf32>
    %91 = vector.shape_cast %90 : vector<8x8x288xf32> to vector<64x288xf32>
    %c0_43 = arith.constant 0 : index
    %c0_44 = arith.constant 0 : index
    %92 = vector.load %arg3[%c0_43, %c0_44] : memref<288x8xf32, #tpu.memory_space<vmem>>, vector<288x8xf32>
    %cst_45 = arith.constant dense<0.000000e+00> : vector<64x8xf32>
    %93 = tpu.matmul %91, %92, %cst_45 {dimension_numbers = #tpu.dot_dimension_numbers<[1], [0], [0], [1], [0, 0, 1, 1], [], []>} : vector<64x288xf32>, vector<288x8xf32>, vector<64x8xf32> -> vector<64x8xf32>
    %c0_46 = arith.constant 0 : index
    %c0_47 = arith.constant 0 : index
    %c0_48 = arith.constant 0 : index
    %94 = vector.load %arg6[%c0_46, %c0_47, %c0_48] : memref<1x64x8xf32, #tpu.memory_space<vmem>>, vector<1x64x8xf32>
    %95 = vector.shape_cast %94 : vector<1x64x8xf32> to vector<64x8xf32>
    %96 = vector.shape_cast %93 : vector<64x8xf32> to vector<1x64x8xf32>
    tpu.vector_store %arg6[%c0_46, %c0_47, %c0_48], %96 {strides = array<i32>} : memref<1x64x8xf32, #tpu.memory_space<vmem>>, vector<1x64x8xf32>,
    return
  }
  func.func @transform_0(%arg0: i32) -> (i32, i32, i32, i32) {
    %c0_i32 = arith.constant 0 : i32
    %c0_i32_0 = arith.constant 0 : i32
    %c0_i32_1 = arith.constant 0 : i32
    %c0_i32_2 = arith.constant 0 : i32
    return %arg0, %c0_i32, %c0_i32_0, %c0_i32_1 : i32, i32, i32, i32
  }
  func.func @transform_1(%arg0: i32) -> (i32, i32) {
    %c0_i32 = arith.constant 0 : i32
    %c0_i32_0 = arith.constant 0 : i32
    %c0_i32_1 = arith.constant 0 : i32
    return %c0_i32, %c0_i32_0 : i32, i32
  }
  func.func @transform_2(%arg0: i32) -> (i32, i32) {
    %c0_i32 = arith.constant 0 : i32
    %c0_i32_0 = arith.constant 0 : i32
    %c0_i32_1 = arith.constant 0 : i32
    return %c0_i32, %c0_i32_0 : i32, i32
  }
  func.func @transform_3(%arg0: i32) -> (i32, i32) {
    %c0_i32 = arith.constant 0 : i32
    %c0_i32_0 = arith.constant 0 : i32
    %c0_i32_1 = arith.constant 0 : i32
    return %c0_i32, %c0_i32_0 : i32, i32
  }
  func.func @transform_4(%arg0: i32) -> (i32, i32) {
    %c0_i32 = arith.constant 0 : i32
    %c0_i32_0 = arith.constant 0 : i32
    %c0_i32_1 = arith.constant 0 : i32
    return %c0_i32, %c0_i32_0 : i32, i32
  }
  func.func @transform_5(%arg0: i32) -> (i32, i32, i32) {
    %c0_i32 = arith.constant 0 : i32
    %c0_i32_0 = arith.constant 0 : i32
    %c0_i32_1 = arith.constant 0 : i32
    return %arg0, %c0_i32, %c0_i32_0 : i32, i32, i32
  }
  func.func @transform_6(%arg0: i32) -> (i32, i32, i32) {
    %c0_i32 = arith.constant 0 : i32
    %c0_i32_0 = arith.constant 0 : i32
    %c0_i32_1 = arith.constant 0 : i32
    return %arg0, %c0_i32, %c0_i32_0 : i32, i32, i32
  }
}

</mosaic_0001>

<llo_original>
// kernel: linear_attention_forward.1
$region0: #{linear_attention_forward.1}
  #allocation0 [shape = 'u32[]', space=smem, size = 0x4, offset = 0x4, fixed_abs, tag = 'smem constant byte address 0x4 - core index']
  #allocation1 [shape = 'u32[144,128]{1,0:T(1,128)}', space=vmem, size = 0x12000, scoped, tag = 'internal scratch']
  #allocation2 [shape = 'f32[10,10,8]{2,1,0:T(8,128)}', space=vmem, size = 0x14000, scoped, tag = 'scratch operand']
  #allocation3 [shape = 'f32[10,10,32]{2,1,0:T(8,128)}', space=vmem, size = 0x14000, scoped, tag = 'scratch operand']
  %s0 = inlined_call_operand.vmem [shape: f32[2,8,8,8], index: 0, kind: input, shape index: {}]
  %s1 = inlined_call_operand.vmem [shape: f32[72,96], index: 1, kind: input, shape index: {}]
  %s2 = inlined_call_operand.vmem [shape: f32[288,8], index: 2, kind: input, shape index: {}]
  %s3 = inlined_call_operand.vmem [shape: f32[256,64], index: 3, kind: input, shape index: {}]
  %s4 = inlined_call_operand.vmem [shape: f32[64,16], index: 4, kind: input, shape index: {}]
  %s5 = inlined_call_operand.vmem [shape: f32[2,64,8], index: 5, kind: output, shape index: {0}]
  %s6 = inlined_call_operand.vmem [shape: f32[2,64,128], index: 6, kind: output, shape index: {1}]
  %7 = xla_tuple %s5, %s6
  %s8 = sld [smem:[#allocation0]]
  $region61: #{linear_attention_forward.1} parent=0
    _
  %s10 = ssub.s32 1, %s8
  %s11 = scalar_select 0, %s10, %s8
  loop: start=0, step=1, limit=4
  $region2: #{linear_attention_forward.1} parent=0 // loop_pre_header
    _
  $region3: #{linear_attention_forward.1} parent=0 // loop_header
    %s13 = sphi 0, %s17
    %p14 = scmp.ge.s32.totalorder %s13, 4
    %s23 = sphi 0, %s25
    %s26 = sphi 0, %s23
    %s27 = sphi 0, %s26
    %s43 = sphi 0, %s27
    %s47 = sphi 0, %s47
    %s49 = sphi 0, %s47
    %s50 = sphi 0, %s49
    %s64 = sphi 0, %s50
    %s68 = sphi 0, %s68
    %s70 = sphi 0, %s68
    %s71 = sphi 0, %s70
    %s85 = sphi 0, %s71
    %s89 = sphi 0, %s89
    %s91 = sphi 0, %s89
    %s92 = sphi 0, %s91
    %s106 = sphi 0, %s92
    %s110 = sphi 0, %s110
    %s112 = sphi 0, %s110
    %s113 = sphi 0, %s112
    %s127 = sphi 0, %s113
    %s133 = sphi 0, %s135
    %s136 = sphi 0, %s133
    %s137 = sphi 0, %s136
    %s153 = sphi 0, %s137
    %s159 = sphi 0, %s161
    %s162 = sphi 0, %s159
    %s163 = sphi 0, %s162
    %s179 = sphi 0, %s163
  $region4: #{linear_attention_forward.1} parent=0 // loop_header_branch
    %16 = sbr.rel (%p14) target = $region8
  $region5: #{linear_attention_forward.1} parent=0 // loop_body
    %s18 = ssub.s32 %s13, 1
    %s19 = ssub.s32 %s13, 2
    %s20 = sadd.s32 %s13, 1
    %s21 = ssub.s32 %s13, %s20
    %p22 = scmp.eq.s32.totalorder %s21, 0
    %s24 = sadd.s32 %s23, 1
    %s25 = scalar_select %p22, %s23, %s24
    %p28 = pneg %p22
    %p29 = scmp.eq.s32.totalorder %s13, 1
    %p30 = por %p28, %p29
    %p31 = scmp.ne.s32.totalorder %s23, %s26
    %p32 = scmp.eq.s32.totalorder %s13, 0
    %p33 = por %p31, %p32
    %p34 = scmp.ne.s32.totalorder %s23, %s26
    %p35 = scmp.eq.s32.totalorder %s18, 1
    %p36 = por %p34, %p35
    %p37 = scmp.ne.s32.totalorder %s26, %s27
    %p38 = scmp.eq.s32.totalorder %s18, 0
    %p39 = por %p37, %p38
    %p40 = scmp.ne.s32.totalorder %s26, %s27
    %p41 = scmp.eq.s32.totalorder %s19, 1
    %p42 = por %p40, %p41
    %p44 = scmp.ne.s32.totalorder %s27, %s43
    %p45 = scmp.eq.s32.totalorder %s19, 0
    %p46 = por %p44, %p45
    %s48 = sadd.s32 %s47, 1
    %p51 = scmp.eq.s32.totalorder %s13, 1
    %p52 = scmp.ne.s32.totalorder %s47, %s49
    %p53 = scmp.eq.s32.totalorder %s13, 0
    %p54 = por %p52, %p53
    %p55 = scmp.ne.s32.totalorder %s47, %s49
    %p56 = scmp.eq.s32.totalorder %s18, 1
    %p57 = por %p55, %p56
    %p58 = scmp.ne.s32.totalorder %s49, %s50
    %p59 = scmp.eq.s32.totalorder %s18, 0
    %p60 = por %p58, %p59
    %p61 = scmp.ne.s32.totalorder %s49, %s50
    %p62 = scmp.eq.s32.totalorder %s19, 1
    %p63 = por %p61, %p62
    %p65 = scmp.ne.s32.totalorder %s50, %s64
    %p66 = scmp.eq.s32.totalorder %s19, 0
    %p67 = por %p65, %p66
    %s69 = sadd.s32 %s68, 1
    %p72 = scmp.eq.s32.totalorder %s13, 1
    %p73 = scmp.ne.s32.totalorder %s68, %s70
    %p74 = scmp.eq.s32.totalorder %s13, 0
    %p75 = por %p73, %p74
    %p76 = scmp.ne.s32.totalorder %s68, %s70
    %p77 = scmp.eq.s32.totalorder %s18, 1
    %p78 = por %p76, %p77
    %p79 = scmp.ne.s32.totalorder %s70, %s71
    %p80 = scmp.eq.s32.totalorder %s18, 0
    %p81 = por %p79, %p80
    %p82 = scmp.ne.s32.totalorder %s70, %s71
    %p83 = scmp.eq.s32.totalorder %s19, 1
    %p84 = por %p82, %p83
    %p86 = scmp.ne.s32.totalorder %s71, %s85
    %p87 = scmp.eq.s32.totalorder %s19, 0
    %p88 = por %p86, %p87
    %s90 = sadd.s32 %s89, 1
    %p93 = scmp.eq.s32.totalorder %s13, 1
    %p94 = scmp.ne.s32.totalorder %s89, %s91
    %p95 = scmp.eq.s32.totalorder %s13, 0
    %p96 = por %p94, %p95
    %p97 = scmp.ne.s32.totalorder %s89, %s91
    %p98 = scmp.eq.s32.totalorder %s18, 1
    %p99 = por %p97, %p98
    %p100 = scmp.ne.s32.totalorder %s91, %s92
    %p101 = scmp.eq.s32.totalorder %s18, 0
    %p102 = por %p100, %p101
    %p103 = scmp.ne.s32.totalorder %s91, %s92
    %p104 = scmp.eq.s32.totalorder %s19, 1
    %p105 = por %p103, %p104
    %p107 = scmp.ne.s32.totalorder %s92, %s106
    %p108 = scmp.eq.s32.totalorder %s19, 0
    %p109 = por %p107, %p108
    %s111 = sadd.s32 %s110, 1
    %p114 = scmp.eq.s32.totalorder %s13, 1
    %p115 = scmp.ne.s32.totalorder %s110, %s112
    %p116 = scmp.eq.s32.totalorder %s13, 0
    %p117 = por %p115, %p116
    %p118 = scmp.ne.s32.totalorder %s110, %s112
    %p119 = scmp.eq.s32.totalorder %s18, 1
    %p120 = por %p118, %p119
    %p121 = scmp.ne.s32.totalorder %s112, %s113
    %p122 = scmp.eq.s32.totalorder %s18, 0
    %p123 = por %p121, %p122
    %p124 = scmp.ne.s32.totalorder %s112, %s113
    %p125 = scmp.eq.s32.totalorder %s19, 1
    %p126 = por %p124, %p125
    %p128 = scmp.ne.s32.totalorder %s113, %s127
    %p129 = scmp.eq.s32.totalorder %s19, 0
    %p130 = por %p128, %p129
    %s131 = ssub.s32 %s13, %s20
    %p132 = scmp.eq.s32.totalorder %s131, 0
    %s134 = sadd.s32 %s133, 1
    %s135 = scalar_select %p132, %s133, %s134
    %p138 = pneg %p132
    %p139 = scmp.eq.s32.totalorder %s13, 1
    %p140 = por %p138, %p139
    %p141 = scmp.ne.s32.totalorder %s133, %s136
    %p142 = scmp.eq.s32.totalorder %s13, 0
    %p143 = por %p141, %p142
    %p144 = scmp.ne.s32.totalorder %s133, %s136
    %p145 = scmp.eq.s32.totalorder %s18, 1
    %p146 = por %p144, %p145
    %p147 = scmp.ne.s32.totalorder %s136, %s137
    %p148 = scmp.eq.s32.totalorder %s18, 0
    %p149 = por %p147, %p148
    %p150 = scmp.ne.s32.totalorder %s136, %s137
    %p151 = scmp.eq.s32.totalorder %s19, 1
    %p152 = por %p150, %p151
    %p154 = scmp.ne.s32.totalorder %s137, %s153
    %p155 = scmp.eq.s32.totalorder %s19, 0
    %p156 = por %p154, %p155
    %s157 = ssub.s32 %s13, %s20
    %p158 = scmp.eq.s32.totalorder %s157, 0
    %s160 = sadd.s32 %s159, 1
    %s161 = scalar_select %p158, %s159, %s160
    %p164 = pneg %p158
    %p165 = scmp.eq.s32.totalorder %s13, 1
    %p166 = por %p164, %p165
    %p167 = scmp.ne.s32.totalorder %s159, %s162
    %p168 = scmp.eq.s32.totalorder %s13, 0
    %p169 = por %p167, %p168
    %p170 = scmp.ne.s32.totalorder %s159, %s162
    %p171 = scmp.eq.s32.totalorder %s18, 1
    %p172 = por %p170, %p171
    %p173 = scmp.ne.s32.totalorder %s162, %s163
    %p174 = scmp.eq.s32.totalorder %s18, 0
    %p175 = por %p173, %p174
    %p176 = scmp.ne.s32.totalorder %s162, %s163
    %p177 = scmp.eq.s32.totalorder %s19, 1
    %p178 = por %p176, %p177
    %p180 = scmp.ne.s32.totalorder %s163, %s179
    %p181 = scmp.eq.s32.totalorder %s19, 0
    %p182 = por %p180, %p181
    %p183 = scmp.le.s32.totalorder 1, %s13
    %p184 = scmp.lt.s32.totalorder %s13, 3
    %p185 = pnand %p183, %p184
    %p186 = pneg %p185
    // Predicated region
    $region9: #{linear_attention_forward.1} parent=5 // pred_check
      _
    $region10: #{linear_attention_forward.1} parent=5 // pred_check_branch
      %188 = sbr.rel (%p185) target = $region12
    $region11: #{linear_attention_forward.1} parent=5 // pred_region
      %s189 = ssub.s32 %s13, 1
      // Predicated region
      $region13: #{linear_attention_forward.1} parent=11 // pred_check
        %p190 = pneg %p60
      $region14: #{linear_attention_forward.1} parent=11 // pred_check_branch
        %192 = sbr.rel (%p190) target = $region16
      $region15: #{linear_attention_forward.1} parent=11 // pred_region
        _
      $region16: #{linear_attention_forward.1} parent=11 // pred_fallthru
        _
      // Predicated region
      $region17: #{linear_attention_forward.1} parent=11 // pred_check
        %p193 = pneg %p81
      $region18: #{linear_attention_forward.1} parent=11 // pred_check_branch
        %195 = sbr.rel (%p193) target = $region20
      $region19: #{linear_attention_forward.1} parent=11 // pred_region
        _
      $region20: #{linear_attention_forward.1} parent=11 // pred_fallthru
        _
      // Predicated region
      $region21: #{linear_attention_forward.1} parent=11 // pred_check
        %p196 = pneg %p102
      $region22: #{linear_attention_forward.1} parent=11 // pred_check_branch
        %198 = sbr.rel (%p196) target = $region24
      $region23: #{linear_attention_forward.1} parent=11 // pred_region
        _
      $region24: #{linear_attention_forward.1} parent=11 // pred_fallthru
        _
      // Predicated region
      $region25: #{linear_attention_forward.1} parent=11 // pred_check
        %p199 = pneg %p123
      $region26: #{linear_attention_forward.1} parent=11 // pred_check_branch
        %201 = sbr.rel (%p199) target = $region28
      $region27: #{linear_attention_forward.1} parent=11 // pred_region
        _
      $region28: #{linear_attention_forward.1} parent=11 // pred_fallthru
        _
    $region12: #{linear_attention_forward.1} parent=5 // pred_fallthru
      _
    %p202 = scmp.lt.s32.totalorder %s13, 2
    // Predicated region
    $region29: #{linear_attention_forward.1} parent=5 // pred_check
      %p203 = pneg %p202
    $region30: #{linear_attention_forward.1} parent=5 // pred_check_branch
      %205 = sbr.rel (%p203) target = $region32
    $region31: #{linear_attention_forward.1} parent=5 // pred_region
      // Predicated region
      $region33: #{linear_attention_forward.1} parent=31 // pred_check
        %p206 = pneg %p33
      $region34: #{linear_attention_forward.1} parent=31 // pred_check_branch
        %208 = sbr.rel (%p206) target = $region36
      $region35: #{linear_attention_forward.1} parent=31 // pred_region
        %p209 = scmp.lt.s32.totalorder %s13, 1
        %s210 = scalar_select %p209, %s13, 1
        %s211 = smul.addr %s210, 8
        %s212 = smul.addr %s211, 8
        %s213 = scalar_lea.vmem %s0, %s212
      $region36: #{linear_attention_forward.1} parent=31 // pred_fallthru
        _
    $region32: #{linear_attention_forward.1} parent=5 // pred_fallthru
      _
    %p214 = scmp.le.s32.totalorder 1, %s13
    %p215 = scmp.lt.s32.totalorder %s13, 3
    %p216 = pnand %p214, %p215
    %p217 = pneg %p216
    // Predicated region
    $region37: #{linear_attention_forward.1} parent=5 // pred_check
      _
    $region38: #{linear_attention_forward.1} parent=5 // pred_check_branch
      %219 = sbr.rel (%p216) target = $region40
    $region39: #{linear_attention_forward.1} parent=5 // pred_region
      %s220 = ssub.s32 %s13, 1
      %p221 = scmp.lt.s32.totalorder %s18, 1
      %s222 = scalar_select %p221, %s18, 1
      %s223 = smul.addr %s222, 8
      %s224 = smul.addr %s223, 8
      %s225 = scalar_lea.vmem %s0, %s224
      %p226 = pneg %p39
      %p227 = pneg %p36
      %p228 = pneg %p60
      %p229 = pneg %p57
      %p230 = pneg %p81
      %p231 = pneg %p78
      %p232 = pneg %p102
      %p233 = pneg %p99
      %p234 = pneg %p123
      %p235 = pneg %p120
      %p236 = pneg %p149
      %p237 = pneg %p146
      %p238 = scmp.lt.s32.totalorder %s18, 1
      %s239 = scalar_select %p238, %s18, 1
      %s240 = smul.addr %s239, 8
      %s241 = smul.addr %s240, 8
      %s242 = scalar_lea.vmem %s5, %s241
      %p243 = pneg %p175
      %p244 = pneg %p172
      %p245 = scmp.lt.s32.totalorder %s18, 1
      %s246 = scalar_select %p245, %s18, 1
      %s247 = smul.addr %s246, 8
      %s248 = smul.addr %s247, 8
      %s249 = scalar_lea.vmem %s6, %s248
      %p250 = scmp.lt.s32.totalorder %s18, 1
      %s251 = scalar_select %p250, %s18, 1
      %s252 = smul.addr %s251, 8
      %s253 = smul.addr %s252, 8
      %s254 = scalar_lea.vmem %s0, %s253
      %p255 = scmp.lt.s32.totalorder %s18, 1
      %s256 = scalar_select %p255, %s18, 1
      %s257 = smul.addr %s256, 8
      %s258 = smul.addr %s257, 8
      %s259 = scalar_lea.vmem %s5, %s258
      %p260 = scmp.lt.s32.totalorder %s18, 1
      %s261 = scalar_select %p260, %s18, 1
      %s262 = smul.addr %s261, 8
      %s263 = smul.addr %s262, 8
      %s264 = scalar_lea.vmem %s6, %s263
      %vm265 = vcmask 64512
      %266 = vst.msk [vmem:[#allocation2] sm:$0xff] %vm265, 0.0
      %vm267 = vcmask 58368
      %268 = vst.msk [vmem:[#allocation2 + $0x8] sm:$0x3] %vm267, 0.0
      %269 = vst.msk [vmem:[#allocation2 + $0x10] sm:$0xff] %vm265, 0.0
      %270 = vst.msk [vmem:[#allocation2 + $0x18] sm:$0x3] %vm267, 0.0
      %271 = vst.msk [vmem:[#allocation2 + $0x20] sm:$0xff] %vm265, 0.0
      %272 = vst.msk [vmem:[#allocation2 + $0x28] sm:$0x3] %vm267, 0.0
      %273 = vst.msk [vmem:[#allocation2 + $0x30] sm:$0xff] %vm265, 0.0
      %274 = vst.msk [vmem:[#allocation2 + $0x38] sm:$0x3] %vm267, 0.0
      %275 = vst.msk [vmem:[#allocation2 + $0x40] sm:$0xff] %vm265, 0.0
      %276 = vst.msk [vmem:[#allocation2 + $0x48] sm:$0x3] %vm267, 0.0
      %277 = vst.msk [vmem:[#allocation2 + $0x50] sm:$0xff] %vm265, 0.0
      %278 = vst.msk [vmem:[#allocation2 + $0x58] sm:$0x3] %vm267, 0.0
      %279 = vst.msk [vmem:[#allocation2 + $0x60] sm:$0xff] %vm265, 0.0
      %280 = vst.msk [vmem:[#allocation2 + $0x68] sm:$0x3] %vm267, 0.0
      %281 = vst.msk [vmem:[#allocation2 + $0x70] sm:$0xff] %vm265, 0.0
      %282 = vst.msk [vmem:[#allocation2 + $0x78] sm:$0x3] %vm267, 0.0
      %283 = vst.msk [vmem:[#allocation2 + $0x80] sm:$0xff] %vm265, 0.0
      %284 = vst.msk [vmem:[#allocation2 + $0x88] sm:$0x3] %vm267, 0.0
      %285 = vst.msk [vmem:[#allocation2 + $0x90] sm:$0xff] %vm265, 0.0
      %286 = vst.msk [vmem:[#allocation2 + $0x98] sm:$0x3] %vm267, 0.0
      %v287 = vld [vmem:[%s254] sm:$0xff]
      %v288 = vld [vmem:[%s254 + $0x8] sm:$0xff]
      %v289 = vld [vmem:[%s254 + $0x10] sm:$0xff]
      %v290 = vld [vmem:[%s254 + $0x18] sm:$0xff]
      %v291 = vld [vmem:[%s254 + $0x20] sm:$0xff]
      %v292 = vld [vmem:[%s254 + $0x28] sm:$0xff]
      %v293 = vld [vmem:[%s254 + $0x30] sm:$0xff]
      %v294 = vld [vmem:[%s254 + $0x38] sm:$0xff]
      %s295 = scalar_lea.vmem [#allocation2], 16
      %296 = vst.msk [vmem:[%s295 + $0x1] sm:$0xff] %vm265, %v287
      %297 = vst.msk [vmem:[%s295 + $0x11] sm:$0xff] %vm265, %v288
      %298 = vst.msk [vmem:[%s295 + $0x21] sm:$0xff] %vm265, %v289
      %299 = vst.msk [vmem:[%s295 + $0x31] sm:$0xff] %vm265, %v290
      %300 = vst.msk [vmem:[%s295 + $0x41] sm:$0xff] %vm265, %v291
      %301 = vst.msk [vmem:[%s295 + $0x51] sm:$0xff] %vm265, %v292
      %302 = vst.msk [vmem:[%s295 + $0x61] sm:$0xff] %vm265, %v293
      %303 = vst.msk [vmem:[%s295 + $0x71] sm:$0xff] %vm265, %v294
      %v304 = vld [vmem:[#allocation2] sm:$0xff]
      %v305 = vld [vmem:[#allocation2 + $0x8] sm:$0x3]
      %v306 = vld [vmem:[#allocation2 + $0x10] sm:$0xff]
      %v307 = vld [vmem:[#allocation2 + $0x18] sm:$0x3]
      %v308 = vld [vmem:[#allocation2 + $0x20] sm:$0xff]
      %v309 = vld [vmem:[#allocation2 + $0x28] sm:$0x3]
      %v310 = vld [vmem:[#allocation2 + $0x30] sm:$0xff]
      %v311 = vld [vmem:[#allocation2 + $0x38] sm:$0x3]
      %v312 = vld [vmem:[#allocation2 + $0x40] sm:$0xff]
      %v313 = vld [vmem:[#allocation2 + $0x48] sm:$0x3]
      %v314 = vld [vmem:[#allocation2 + $0x50] sm:$0xff]
      %v315 = vld [vmem:[#allocation2 + $0x58] sm:$0x3]
      %v316 = vld [vmem:[#allocation2 + $0x60] sm:$0xff]
      %v317 = vld [vmem:[#allocation2 + $0x68] sm:$0x3]
      %v318 = vld [vmem:[#allocation2 + $0x70] sm:$0xff]
      %v319 = vld [vmem:[#allocation2 + $0x78] sm:$0x3]
      %v320 = vld [vmem:[#allocation2 + $0x80] sm:$0xff]
      %v321 = vld [vmem:[#allocation2 + $0x88] sm:$0x3]
      %v322 = vld [vmem:[#allocation2 + $0x90] sm:$0xff]
      %v323 = vld [vmem:[#allocation2 + $0x98] sm:$0x3]
      %vm340 = vcmask 1046528
      %v341 = vrot.slane %v304, 1
      %v342 = vrot.slane %v305, 1
      %v343 = vsel %vm340, %v341, %v342
      %v344 = vrot.slane %v306, 1
      %v345 = vrot.slane %v307, 1
      %v346 = vsel %vm340, %v344, %v345
      %v347 = vrot.slane %v308, 1
      %v348 = vrot.slane %v309, 1
      %v349 = vsel %vm340, %v347, %v348
      %v350 = vrot.slane %v310, 1
      %v351 = vrot.slane %v311, 1
      %v352 = vsel %vm340, %v350, %v351
      %v353 = vrot.slane %v312, 1
      %v354 = vrot.slane %v313, 1
      %v355 = vsel %vm340, %v353, %v354
      %v356 = vrot.slane %v314, 1
      %v357 = vrot.slane %v315, 1
      %v358 = vsel %vm340, %v356, %v357
      %v359 = vrot.slane %v316, 1
      %v360 = vrot.slane %v317, 1
      %v361 = vsel %vm340, %v359, %v360
      %v362 = vrot.slane %v318, 1
      %v363 = vrot.slane %v319, 1
      %v364 = vsel %vm340, %v362, %v363
      %365 = vrot.lane.b32.xlu0 %v343, 8
      %v366 = vpop.permute.xlu0 %365
      %367 = vrot.lane.b32.xlu0 %v346, 8
      %v368 = vpop.permute.xlu0 %367
      %369 = vrot.lane.b32.xlu0 %v349, 8
      %v370 = vpop.permute.xlu0 %369
      %371 = vrot.lane.b32.xlu0 %v352, 8
      %v372 = vpop.permute.xlu0 %371
      %373 = vrot.lane.b32.xlu0 %v355, 8
      %v374 = vpop.permute.xlu0 %373
      %375 = vrot.lane.b32.xlu0 %v358, 8
      %v376 = vpop.permute.xlu0 %375
      %377 = vrot.lane.b32.xlu0 %v361, 8
      %v378 = vpop.permute.xlu0 %377
      %379 = vrot.lane.b32.xlu0 %v364, 8
      %v380 = vpop.permute.xlu0 %379
      %vm389 = vcmask 1045504
      %v390 = vrot.slane %v304, 2
      %v391 = vrot.slane %v305, 2
      %v392 = vsel %vm389, %v390, %v391
      %v393 = vrot.slane %v306, 2
      %v394 = vrot.slane %v307, 2
      %v395 = vsel %vm389, %v393, %v394
      %v396 = vrot.slane %v308, 2
      %v397 = vrot.slane %v309, 2
      %v398 = vsel %vm389, %v396, %v397
      %v399 = vrot.slane %v310, 2
      %v400 = vrot.slane %v311, 2
      %v401 = vsel %vm389, %v399, %v400
      %v402 = vrot.slane %v312, 2
      %v403 = vrot.slane %v313, 2
      %v404 = vsel %vm389, %v402, %v403
      %v405 = vrot.slane %v314, 2
      %v406 = vrot.slane %v315, 2
      %v407 = vsel %vm389, %v405, %v406
      %v408 = vrot.slane %v316, 2
      %v409 = vrot.slane %v317, 2
      %v410 = vsel %vm389, %v408, %v409
      %v411 = vrot.slane %v318, 2
      %v412 = vrot.slane %v319, 2
      %v413 = vsel %vm389, %v411, %v412
      %414 = vrot.lane.b32.xlu0 %v392, 16
      %v415 = vpop.permute.xlu0 %414
      %416 = vrot.lane.b32.xlu0 %v395, 16
      %v417 = vpop.permute.xlu0 %416
      %418 = vrot.lane.b32.xlu0 %v398, 16
      %v419 = vpop.permute.xlu0 %418
      %420 = vrot.lane.b32.xlu0 %v401, 16
      %v421 = vpop.permute.xlu0 %420
      %422 = vrot.lane.b32.xlu0 %v404, 16
      %v423 = vpop.permute.xlu0 %422
      %424 = vrot.lane.b32.xlu0 %v407, 16
      %v425 = vpop.permute.xlu0 %424
      %426 = vrot.lane.b32.xlu0 %v410, 16
      %v427 = vpop.permute.xlu0 %426
      %428 = vrot.lane.b32.xlu0 %v413, 16
      %v429 = vpop.permute.xlu0 %428
      %439 = vrot.lane.b32.xlu0 %v306, 24
      %v440 = vpop.permute.xlu0 %439
      %441 = vrot.lane.b32.xlu0 %v308, 24
      %v442 = vpop.permute.xlu0 %441
      %443 = vrot.lane.b32.xlu0 %v310, 24
      %v444 = vpop.permute.xlu0 %443
      %445 = vrot.lane.b32.xlu0 %v312, 24
      %v446 = vpop.permute.xlu0 %445
      %447 = vrot.lane.b32.xlu0 %v314, 24
      %v448 = vpop.permute.xlu0 %447
      %449 = vrot.lane.b32.xlu0 %v316, 24
      %v450 = vpop.permute.xlu0 %449
      %451 = vrot.lane.b32.xlu0 %v318, 24
      %v452 = vpop.permute.xlu0 %451
      %453 = vrot.lane.b32.xlu0 %v320, 24
      %v454 = vpop.permute.xlu0 %453
      %v464 = vrot.slane %v320, 1
      %v465 = vrot.slane %v321, 1
      %v466 = vsel %vm340, %v464, %v465
      %467 = vrot.lane.b32.xlu0 %v346, 32
      %v468 = vpop.permute.xlu0 %467
      %469 = vrot.lane.b32.xlu0 %v349, 32
      %v470 = vpop.permute.xlu0 %469
      %471 = vrot.lane.b32.xlu0 %v352, 32
      %v472 = vpop.permute.xlu0 %471
      %473 = vrot.lane.b32.xlu0 %v355, 32
      %v474 = vpop.permute.xlu0 %473
      %475 = vrot.lane.b32.xlu0 %v358, 32
      %v476 = vpop.permute.xlu0 %475
      %477 = vrot.lane.b32.xlu0 %v361, 32
      %v478 = vpop.permute.xlu0 %477
      %479 = vrot.lane.b32.xlu0 %v364, 32
      %v480 = vpop.permute.xlu0 %479
      %481 = vrot.lane.b32.xlu0 %v466, 32
      %v482 = vpop.permute.xlu0 %481
      %v491 = vrot.slane %v320, 2
      %v492 = vrot.slane %v321, 2
      %v493 = vsel %vm389, %v491, %v492
      %494 = vrot.lane.b32.xlu0 %v395, 40
      %v495 = vpop.permute.xlu0 %494
      %496 = vrot.lane.b32.xlu0 %v398, 40
      %v497 = vpop.permute.xlu0 %496
      %498 = vrot.lane.b32.xlu0 %v401, 40
      %v499 = vpop.permute.xlu0 %498
      %500 = vrot.lane.b32.xlu0 %v404, 40
      %v501 = vpop.permute.xlu0 %500
      %502 = vrot.lane.b32.xlu0 %v407, 40
      %v503 = vpop.permute.xlu0 %502
      %504 = vrot.lane.b32.xlu0 %v410, 40
      %v505 = vpop.permute.xlu0 %504
      %506 = vrot.lane.b32.xlu0 %v413, 40
      %v507 = vpop.permute.xlu0 %506
      %508 = vrot.lane.b32.xlu0 %v493, 40
      %v509 = vpop.permute.xlu0 %508
      %519 = vrot.lane.b32.xlu0 %v308, 48
      %v520 = vpop.permute.xlu0 %519
      %521 = vrot.lane.b32.xlu0 %v310, 48
      %v522 = vpop.permute.xlu0 %521
      %523 = vrot.lane.b32.xlu0 %v312, 48
      %v524 = vpop.permute.xlu0 %523
      %525 = vrot.lane.b32.xlu0 %v314, 48
      %v526 = vpop.permute.xlu0 %525
      %527 = vrot.lane.b32.xlu0 %v316, 48
      %v528 = vpop.permute.xlu0 %527
      %529 = vrot.lane.b32.xlu0 %v318, 48
      %v530 = vpop.permute.xlu0 %529
      %531 = vrot.lane.b32.xlu0 %v320, 48
      %v532 = vpop.permute.xlu0 %531
      %533 = vrot.lane.b32.xlu0 %v322, 48
      %v534 = vpop.permute.xlu0 %533
      %v544 = vrot.slane %v322, 1
      %v545 = vrot.slane %v323, 1
      %v546 = vsel %vm340, %v544, %v545
      %547 = vrot.lane.b32.xlu0 %v349, 56
      %v548 = vpop.permute.xlu0 %547
      %549 = vrot.lane.b32.xlu0 %v352, 56
      %v550 = vpop.permute.xlu0 %549
      %551 = vrot.lane.b32.xlu0 %v355, 56
      %v552 = vpop.permute.xlu0 %551
      %553 = vrot.lane.b32.xlu0 %v358, 56
      %v554 = vpop.permute.xlu0 %553
      %555 = vrot.lane.b32.xlu0 %v361, 56
      %v556 = vpop.permute.xlu0 %555
      %557 = vrot.lane.b32.xlu0 %v364, 56
      %v558 = vpop.permute.xlu0 %557
      %559 = vrot.lane.b32.xlu0 %v466, 56
      %v560 = vpop.permute.xlu0 %559
      %561 = vrot.lane.b32.xlu0 %v546, 56
      %v562 = vpop.permute.xlu0 %561
      %v571 = vrot.slane %v322, 2
      %v572 = vrot.slane %v323, 2
      %v573 = vsel %vm389, %v571, %v572
      %574 = vrot.lane.b32.xlu0 %v398, 64
      %v575 = vpop.permute.xlu0 %574
      %576 = vrot.lane.b32.xlu0 %v401, 64
      %v577 = vpop.permute.xlu0 %576
      %578 = vrot.lane.b32.xlu0 %v404, 64
      %v579 = vpop.permute.xlu0 %578
      %580 = vrot.lane.b32.xlu0 %v407, 64
      %v581 = vpop.permute.xlu0 %580
      %582 = vrot.lane.b32.xlu0 %v410, 64
      %v583 = vpop.permute.xlu0 %582
      %584 = vrot.lane.b32.xlu0 %v413, 64
      %v585 = vpop.permute.xlu0 %584
      %586 = vrot.lane.b32.xlu0 %v493, 64
      %v587 = vpop.permute.xlu0 %586
      %588 = vrot.lane.b32.xlu0 %v573, 64
      %v589 = vpop.permute.xlu0 %588
      %v598 = vsel %vm265, %v304, %v366
      %v599 = vsel %vm265, %v306, %v368
      %v600 = vsel %vm265, %v308, %v370
      %v601 = vsel %vm265, %v310, %v372
      %v602 = vsel %vm265, %v312, %v374
      %v603 = vsel %vm265, %v314, %v376
      %v604 = vsel %vm265, %v316, %v378
      %v605 = vsel %vm265, %v318, %v380
      %vm606 = vcmask 130048
      %v607 = vsel %vm606, %v598, %v415
      %v608 = vsel %vm606, %v599, %v417
      %v609 = vsel %vm606, %v600, %v419
      %v610 = vsel %vm606, %v601, %v421
      %v611 = vsel %vm606, %v602, %v423
      %v612 = vsel %vm606, %v603, %v425
      %v613 = vsel %vm606, %v604, %v427
      %v614 = vsel %vm606, %v605, %v429
      %vm615 = vcmask 195584
      %v616 = vsel %vm615, %v607, %v440
      %v617 = vsel %vm615, %v608, %v442
      %v618 = vsel %vm615, %v609, %v444
      %v619 = vsel %vm615, %v610, %v446
      %v620 = vsel %vm615, %v611, %v448
      %v621 = vsel %vm615, %v612, %v450
      %v622 = vsel %vm615, %v613, %v452
      %v623 = vsel %vm615, %v614, %v454
      %vm624 = vcmask 261120
      %v625 = vsel %vm624, %v616, %v468
      %v626 = vsel %vm624, %v617, %v470
      %v627 = vsel %vm624, %v618, %v472
      %v628 = vsel %vm624, %v619, %v474
      %v629 = vsel %vm624, %v620, %v476
      %v630 = vsel %vm624, %v621, %v478
      %v631 = vsel %vm624, %v622, %v480
      %v632 = vsel %vm624, %v623, %v482
      %vm633 = vcmask 326656
      %v634 = vsel %vm633, %v625, %v495
      %v635 = vsel %vm633, %v626, %v497
      %v636 = vsel %vm633, %v627, %v499
      %v637 = vsel %vm633, %v628, %v501
      %v638 = vsel %vm633, %v629, %v503
      %v639 = vsel %vm633, %v630, %v505
      %v640 = vsel %vm633, %v631, %v507
      %v641 = vsel %vm633, %v632, %v509
      %vm642 = vcmask 392192
      %v643 = vsel %vm642, %v634, %v520
      %v644 = vsel %vm642, %v635, %v522
      %v645 = vsel %vm642, %v636, %v524
      %v646 = vsel %vm642, %v637, %v526
      %v647 = vsel %vm642, %v638, %v528
      %v648 = vsel %vm642, %v639, %v530
      %v649 = vsel %vm642, %v640, %v532
      %v650 = vsel %vm642, %v641, %v534
      %vm651 = vcmask 457728
      %v652 = vsel %vm651, %v643, %v548
      %v653 = vsel %vm651, %v644, %v550
      %v654 = vsel %vm651, %v645, %v552
      %v655 = vsel %vm651, %v646, %v554
      %v656 = vsel %vm651, %v647, %v556
      %v657 = vsel %vm651, %v648, %v558
      %v658 = vsel %vm651, %v649, %v560
      %v659 = vsel %vm651, %v650, %v562
      %vm660 = vcmask 523264
      %v661 = vsel %vm660, %v652, %v575
      %v662 = vsel %vm660, %v653, %v577
      %v663 = vsel %vm660, %v654, %v579
      %v664 = vsel %vm660, %v655, %v581
      %v665 = vsel %vm660, %v656, %v583
      %v666 = vsel %vm660, %v657, %v585
      %v667 = vsel %vm660, %v658, %v587
      %v668 = vsel %vm660, %v659, %v589
      %v669 = vld [vmem:[%s1] sm:$0xff]
      %v670 = vld [vmem:[%s1 + $0x8] sm:$0xff]
      %v671 = vld [vmem:[%s1 + $0x10] sm:$0xff]
      %v672 = vld [vmem:[%s1 + $0x18] sm:$0xff]
      %v673 = vld [vmem:[%s1 + $0x20] sm:$0xff]
      %v674 = vld [vmem:[%s1 + $0x28] sm:$0xff]
      %v675 = vld [vmem:[%s1 + $0x30] sm:$0xff]
      %v676 = vld [vmem:[%s1 + $0x38] sm:$0xff]
      %v677 = vld [vmem:[%s1 + $0x40] sm:$0xff]
      %vm678 = vcmask 588800
      %v680 = vsel %vm678, %v661, 0
      %v683 = vsel %vm678, %v662, 0
      %v686 = vsel %vm678, %v663, 0
      %v689 = vsel %vm678, %v664, 0
      %v692 = vsel %vm678, %v665, 0
      %v695 = vsel %vm678, %v666, 0
      %v698 = vsel %vm678, %v667, 0
      %v701 = vsel %vm678, %v668, 0
      %703 = vmatprep.subr.mxu0 0.0
      %704 = vmatpush1.msra.mxu0 %v669
      %705 = vmatprep.subr.mxu0 0.0
      %706 = vmatpush1.msra.mxu0 %v670
      %707 = vmatprep.subr.mxu0 0.0
      %708 = vmatpush1.msra.mxu0 %v671
      %709 = vmatprep.subr.mxu0 0.0
      %710 = vmatpush1.msra.mxu0 %v672
      %711 = vmatprep.subr.mxu0 0.0
      %712 = vmatpush1.msra.mxu0 %v673
      %713 = vmatprep.subr.mxu0 0.0
      %714 = vmatpush1.msra.mxu0 %v674
      %715 = vmatprep.subr.mxu0 0.0
      %716 = vmatpush1.msra.mxu0 %v675
      %717 = vmatprep.subr.mxu0 0.0
      %718 = vmatpush1.msra.mxu0 %v676
      %719 = vmatprep.subr.mxu0 0.0
      %720 = vmatpush1.msra.mxu0 %v677
      %721 = vmatprep.subr.mxu0 0.0
      %722 = vmatpush1.msra.mxu0 0.0
      %723 = vmatprep.subr.mxu0 0.0
      %724 = vmatpush1.msra.mxu0 0.0
      %725 = vmatprep.subr.mxu0 0.0
      %726 = vmatpush1.msra.mxu0 0.0
      %727 = vmatprep.subr.mxu0 0.0
      %728 = vmatpush1.msra.mxu0 0.0
      %729 = vmatprep.subr.mxu0 0.0
      %730 = vmatpush1.msra.mxu0 0.0
      %731 = vmatprep.subr.mxu0 0.0
      %732 = vmatpush1.msra.mxu0 0.0
      %733 = vmatprep.subr.mxu0 0.0
      %734 = vmatpush1.msra.mxu0 0.0
      %735 = vmatprep.subr.mxu0 0.0
      %736 = vmatpush1.msra.mxu0 0.0
      %737 = vmatprep.subr.mxu0 0.0
      %738 = vmatpush1.msra.mxu0 0.0
      %739 = vmatprep.subr.mxu0 0.0
      %740 = vmatpush1.msra.mxu0 0.0
      %741 = vmatprep.subr.mxu0 0.0
      %742 = vmatpush1.msra.mxu0 0.0
      %743 = vmatprep.subr.mxu0 0.0
      %744 = vmatpush1.msra.mxu0 0.0
      %745 = vmatprep.subr.mxu0 0.0
      %746 = vmatpush1.msra.mxu0 0.0
      %747 = vmatprep.subr.mxu0 0.0
      %748 = vmatpush1.msra.mxu0 0.0
      %749 = vmatprep.subr.mxu0 0.0
      %750 = vmatpush1.msra.mxu0 0.0
      %751 = vmatprep.subr.mxu0 0.0
      %752 = vmatpush1.msra.mxu0 0.0
      %753 = vmatprep.subr.mxu0 0.0
      %754 = vmatpush1.msra.mxu0 0.0
      %755 = vmatprep.subr.mxu0 0.0
      %756 = vmatpush1.msra.mxu0 0.0
      %757 = vmatprep.subr.mxu0 0.0
      %758 = vmatpush1.msra.mxu0 0.0
      %759 = vmatprep.subr.mxu0 0.0
      %760 = vmatpush1.msra.mxu0 0.0
      %761 = vmatprep.subr.mxu0 0.0
      %762 = vmatpush1.msra.mxu0 0.0
      %763 = vmatprep.subr.mxu0 0.0
      %764 = vmatpush1.msra.mxu0 0.0
      %765 = vmatprep.subr.mxu0 0.0
      %766 = vmatpush1.msra.mxu0 0.0
      %767 = vmatprep.mubr.f32.mxu0 0.0
      %768 = vmatmul.mubr.f32.gmra.mrb[0].mxu0 %v680
      %v769 = vpop.f32.mrb[0].mxu0
      %v770 = vadd.f32 0.0, %v769
      %v771 = vpop.f32.mrb[0].mxu0
      %772 = vmatprep.mubr.f32.mxu0 0.0
      %773 = vmatmul.mubr.f32.gmra.mrb[0].mxu0 %v683
      %v774 = vpop.f32.mrb[0].mxu0
      %v775 = vadd.f32 0.0, %v774
      %v776 = vpop.f32.mrb[0].mxu0
      %777 = vmatprep.mubr.f32.mxu0 0.0
      %778 = vmatmul.mubr.f32.gmra.mrb[0].mxu0 %v686
      %v779 = vpop.f32.mrb[0].mxu0
      %v780 = vadd.f32 0.0, %v779
      %v781 = vpop.f32.mrb[0].mxu0
      %782 = vmatprep.mubr.f32.mxu0 0.0
      %783 = vmatmul.mubr.f32.gmra.mrb[0].mxu0 %v689
      %v784 = vpop.f32.mrb[0].mxu0
      %v785 = vadd.f32 0.0, %v784
      %v786 = vpop.f32.mrb[0].mxu0
      %787 = vmatprep.mubr.f32.mxu0 0.0
      %788 = vmatmul.mubr.f32.gmra.mrb[0].mxu0 %v692
      %v789 = vpop.f32.mrb[0].mxu0
      %v790 = vadd.f32 0.0, %v789
      %v791 = vpop.f32.mrb[0].mxu0
      %792 = vmatprep.mubr.f32.mxu0 0.0
      %793 = vmatmul.mubr.f32.gmra.mrb[0].mxu0 %v695
      %v794 = vpop.f32.mrb[0].mxu0
      %v795 = vadd.f32 0.0, %v794
      %v796 = vpop.f32.mrb[0].mxu0
      %797 = vmatprep.mubr.f32.mxu0 0.0
      %798 = vmatmul.mubr.f32.gmra.mrb[0].mxu0 %v698
      %v799 = vpop.f32.mrb[0].mxu0
      %v800 = vadd.f32 0.0, %v799
      %v801 = vpop.f32.mrb[0].mxu0
      %802 = vmatprep.mubr.f32.mxu0 0.0
      %803 = vmatmul.mubr.f32.gmra.mrb[0].mxu0 %v701
      %v804 = vpop.f32.mrb[0].mxu0
      %v805 = vadd.f32 0.0, %v804
      %v806 = vpop.f32.mrb[0].mxu0
      %807 = vdwg.mxu0
      %v808 = vld [vmem:[%s4] sm:$0xff]
      %v809 = vld [vmem:[%s4 + $0x8] sm:$0xff]
      %v810 = vld [vmem:[%s4 + $0x10] sm:$0xff]
      %v811 = vld [vmem:[%s4 + $0x18] sm:$0xff]
      %v812 = vld [vmem:[%s4 + $0x20] sm:$0xff]
      %v813 = vld [vmem:[%s4 + $0x28] sm:$0xff]
      %v814 = vld [vmem:[%s4 + $0x30] sm:$0xff]
      %v815 = vld [vmem:[%s4 + $0x38] sm:$0xff]
      %v816 = vld [vmem:[%s3] sm:$0xff]
      %v817 = vld [vmem:[%s3 + $0x8] sm:$0xff]
      %v818 = vld [vmem:[%s3 + $0x10] sm:$0xff]
      %v819 = vld [vmem:[%s3 + $0x18] sm:$0xff]
      %v820 = vld [vmem:[%s3 + $0x20] sm:$0xff]
      %v821 = vld [vmem:[%s3 + $0x28] sm:$0xff]
      %v822 = vld [vmem:[%s3 + $0x30] sm:$0xff]
      %v823 = vld [vmem:[%s3 + $0x38] sm:$0xff]
      %v824 = vld [vmem:[%s3 + $0x40] sm:$0xff]
      %v825 = vld [vmem:[%s3 + $0x48] sm:$0xff]
      %v826 = vld [vmem:[%s3 + $0x50] sm:$0xff]
      %v827 = vld [vmem:[%s3 + $0x58] sm:$0xff]
      %v828 = vld [vmem:[%s3 + $0x60] sm:$0xff]
      %v829 = vld [vmem:[%s3 + $0x68] sm:$0xff]
      %v830 = vld [vmem:[%s3 + $0x70] sm:$0xff]
      %v831 = vld [vmem:[%s3 + $0x78] sm:$0xff]
      %v832 = vld [vmem:[%s3 + $0x80] sm:$0xff]
      %v833 = vld [vmem:[%s3 + $0x88] sm:$0xff]
      %v834 = vld [vmem:[%s3 + $0x90] sm:$0xff]
      %v835 = vld [vmem:[%s3 + $0x98] sm:$0xff]
      %v836 = vld [vmem:[%s3 + $0xa0] sm:$0xff]
      %v837 = vld [vmem:[%s3 + $0xa8] sm:$0xff]
      %v838 = vld [vmem:[%s3 + $0xb0] sm:$0xff]
      %v839 = vld [vmem:[%s3 + $0xb8] sm:$0xff]
      %v840 = vld [vmem:[%s3 + $0xc0] sm:$0xff]
      %v841 = vld [vmem:[%s3 + $0xc8] sm:$0xff]
      %v842 = vld [vmem:[%s3 + $0xd0] sm:$0xff]
      %v843 = vld [vmem:[%s3 + $0xd8] sm:$0xff]
      %v844 = vld [vmem:[%s3 + $0xe0] sm:$0xff]
      %v845 = vld [vmem:[%s3 + $0xe8] sm:$0xff]
      %v846 = vld [vmem:[%s3 + $0xf0] sm:$0xff]
      %v847 = vld [vmem:[%s3 + $0xf8] sm:$0xff]
      %v848 = vlaneseq
      %v849 = vshrl.u32 %v848, 7
      %v850 = vsub.s32 0, %v849
      %v851 = vrot.slane %v808, %v850
      %853 = vbcast.lane.b32.xlu0 %v851, 256
      %v854 = vpop.permute.xlu0 %853
      %s856 = sor.u32 256, 8
      %857 = vbcast.lane.b32.xlu0 %v851, %s856
      %v858 = vpop.permute.xlu0 %857
      %v859 = vlaneseq
      %v860 = vshrl.u32 %v859, 7
      %v861 = vsub.s32 1, %v860
      %v862 = vrot.slane %v808, %v861
      %864 = vbcast.lane.b32.xlu0 %v862, 256
      %v865 = vpop.permute.xlu0 %864
      %s867 = sor.u32 256, 8
      %868 = vbcast.lane.b32.xlu0 %v862, %s867
      %v869 = vpop.permute.xlu0 %868
      %v870 = vlaneseq
      %v871 = vshrl.u32 %v870, 7
      %v872 = vsub.s32 2, %v871
      %v873 = vrot.slane %v808, %v872
      %875 = vbcast.lane.b32.xlu0 %v873, 256
      %v876 = vpop.permute.xlu0 %875
      %s878 = sor.u32 256, 8
      %879 = vbcast.lane.b32.xlu0 %v873, %s878
      %v880 = vpop.permute.xlu0 %879
      %v881 = vlaneseq
      %v882 = vshrl.u32 %v881, 7
      %v883 = vsub.s32 3, %v882
      %v884 = vrot.slane %v808, %v883
      %886 = vbcast.lane.b32.xlu0 %v884, 256
      %v887 = vpop.permute.xlu0 %886
      %s889 = sor.u32 256, 8
      %890 = vbcast.lane.b32.xlu0 %v884, %s889
      %v891 = vpop.permute.xlu0 %890
      %v892 = vlaneseq
      %v893 = vshrl.u32 %v892, 7
      %v894 = vsub.s32 4, %v893
      %v895 = vrot.slane %v808, %v894
      %897 = vbcast.lane.b32.xlu0 %v895, 256
      %v898 = vpop.permute.xlu0 %897
      %s900 = sor.u32 256, 8
      %901 = vbcast.lane.b32.xlu0 %v895, %s900
      %v902 = vpop.permute.xlu0 %901
      %v903 = vlaneseq
      %v904 = vshrl.u32 %v903, 7
      %v905 = vsub.s32 5, %v904
      %v906 = vrot.slane %v808, %v905
      %908 = vbcast.lane.b32.xlu0 %v906, 256
      %v909 = vpop.permute.xlu0 %908
      %s911 = sor.u32 256, 8
      %912 = vbcast.lane.b32.xlu0 %v906, %s911
      %v913 = vpop.permute.xlu0 %912
      %v914 = vlaneseq
      %v915 = vshrl.u32 %v914, 7
      %v916 = vsub.s32 6, %v915
      %v917 = vrot.slane %v808, %v916
      %919 = vbcast.lane.b32.xlu0 %v917, 256
      %v920 = vpop.permute.xlu0 %919
      %s922 = sor.u32 256, 8
      %923 = vbcast.lane.b32.xlu0 %v917, %s922
      %v924 = vpop.permute.xlu0 %923
      %v925 = vlaneseq
      %v926 = vshrl.u32 %v925, 7
      %v927 = vsub.s32 7, %v926
      %v928 = vrot.slane %v808, %v927
      %930 = vbcast.lane.b32.xlu0 %v928, 256
      %v931 = vpop.permute.xlu0 %930
      %s933 = sor.u32 256, 8
      %934 = vbcast.lane.b32.xlu0 %v928, %s933
      %v935 = vpop.permute.xlu0 %934
      %v936 = vlaneseq
      %v937 = vshrl.u32 %v936, 7
      %v938 = vsub.s32 0, %v937
      %v939 = vrot.slane %v809, %v938
      %941 = vbcast.lane.b32.xlu0 %v939, 256
      %v942 = vpop.permute.xlu0 %941
      %s944 = sor.u32 256, 8
      %945 = vbcast.lane.b32.xlu0 %v939, %s944
      %v946 = vpop.permute.xlu0 %945
      %v947 = vlaneseq
      %v948 = vshrl.u32 %v947, 7
      %v949 = vsub.s32 1, %v948
      %v950 = vrot.slane %v809, %v949
      %952 = vbcast.lane.b32.xlu0 %v950, 256
      %v953 = vpop.permute.xlu0 %952
      %s955 = sor.u32 256, 8
      %956 = vbcast.lane.b32.xlu0 %v950, %s955
      %v957 = vpop.permute.xlu0 %956
      %v958 = vlaneseq
      %v959 = vshrl.u32 %v958, 7
      %v960 = vsub.s32 2, %v959
      %v961 = vrot.slane %v809, %v960
      %963 = vbcast.lane.b32.xlu0 %v961, 256
      %v964 = vpop.permute.xlu0 %963
      %s966 = sor.u32 256, 8
      %967 = vbcast.lane.b32.xlu0 %v961, %s966
      %v968 = vpop.permute.xlu0 %967
      %v969 = vlaneseq
      %v970 = vshrl.u32 %v969, 7
      %v971 = vsub.s32 3, %v970
      %v972 = vrot.slane %v809, %v971
      %974 = vbcast.lane.b32.xlu0 %v972, 256
      %v975 = vpop.permute.xlu0 %974
      %s977 = sor.u32 256, 8
      %978 = vbcast.lane.b32.xlu0 %v972, %s977
      %v979 = vpop.permute.xlu0 %978
      %v980 = vlaneseq
      %v981 = vshrl.u32 %v980, 7
      %v982 = vsub.s32 4, %v981
      %v983 = vrot.slane %v809, %v982
      %985 = vbcast.lane.b32.xlu0 %v983, 256
      %v986 = vpop.permute.xlu0 %985
      %s988 = sor.u32 256, 8
      %989 = vbcast.lane.b32.xlu0 %v983, %s988
      %v990 = vpop.permute.xlu0 %989
      %v991 = vlaneseq
      %v992 = vshrl.u32 %v991, 7
      %v993 = vsub.s32 5, %v992
      %v994 = vrot.slane %v809, %v993
      %996 = vbcast.lane.b32.xlu0 %v994, 256
      %v997 = vpop.permute.xlu0 %996
      %s999 = sor.u32 256, 8
      %1000 = vbcast.lane.b32.xlu0 %v994, %s999
      %v1001 = vpop.permute.xlu0 %1000
      %v1002 = vlaneseq
      %v1003 = vshrl.u32 %v1002, 7
      %v1004 = vsub.s32 6, %v1003
      %v1005 = vrot.slane %v809, %v1004
      %1007 = vbcast.lane.b32.xlu0 %v1005, 256
      %v1008 = vpop.permute.xlu0 %1007
      %s1010 = sor.u32 256, 8
      %1011 = vbcast.lane.b32.xlu0 %v1005, %s1010
      %v1012 = vpop.permute.xlu0 %1011
      %v1013 = vlaneseq
      %v1014 = vshrl.u32 %v1013, 7
      %v1015 = vsub.s32 7, %v1014
      %v1016 = vrot.slane %v809, %v1015
      %1018 = vbcast.lane.b32.xlu0 %v1016, 256
      %v1019 = vpop.permute.xlu0 %1018
      %s1021 = sor.u32 256, 8
      %1022 = vbcast.lane.b32.xlu0 %v1016, %s1021
      %v1023 = vpop.permute.xlu0 %1022
      %v1024 = vlaneseq
      %v1025 = vshrl.u32 %v1024, 7
      %v1026 = vsub.s32 0, %v1025
      %v1027 = vrot.slane %v810, %v1026
      %1029 = vbcast.lane.b32.xlu0 %v1027, 256
      %v1030 = vpop.permute.xlu0 %1029
      %s1032 = sor.u32 256, 8
      %1033 = vbcast.lane.b32.xlu0 %v1027, %s1032
      %v1034 = vpop.permute.xlu0 %1033
      %v1035 = vlaneseq
      %v1036 = vshrl.u32 %v1035, 7
      %v1037 = vsub.s32 1, %v1036
      %v1038 = vrot.slane %v810, %v1037
      %1040 = vbcast.lane.b32.xlu0 %v1038, 256
      %v1041 = vpop.permute.xlu0 %1040
      %s1043 = sor.u32 256, 8
      %1044 = vbcast.lane.b32.xlu0 %v1038, %s1043
      %v1045 = vpop.permute.xlu0 %1044
      %v1046 = vlaneseq
      %v1047 = vshrl.u32 %v1046, 7
      %v1048 = vsub.s32 2, %v1047
      %v1049 = vrot.slane %v810, %v1048
      %1051 = vbcast.lane.b32.xlu0 %v1049, 256
      %v1052 = vpop.permute.xlu0 %1051
      %s1054 = sor.u32 256, 8
      %1055 = vbcast.lane.b32.xlu0 %v1049, %s1054
      %v1056 = vpop.permute.xlu0 %1055
      %v1057 = vlaneseq
      %v1058 = vshrl.u32 %v1057, 7
      %v1059 = vsub.s32 3, %v1058
      %v1060 = vrot.slane %v810, %v1059
      %1062 = vbcast.lane.b32.xlu0 %v1060, 256
      %v1063 = vpop.permute.xlu0 %1062
      %s1065 = sor.u32 256, 8
      %1066 = vbcast.lane.b32.xlu0 %v1060, %s1065
      %v1067 = vpop.permute.xlu0 %1066
      %v1068 = vlaneseq
      %v1069 = vshrl.u32 %v1068, 7
      %v1070 = vsub.s32 4, %v1069
      %v1071 = vrot.slane %v810, %v1070
      %1073 = vbcast.lane.b32.xlu0 %v1071, 256
      %v1074 = vpop.permute.xlu0 %1073
      %s1076 = sor.u32 256, 8
      %1077 = vbcast.lane.b32.xlu0 %v1071, %s1076
      %v1078 = vpop.permute.xlu0 %1077
      %v1079 = vlaneseq
      %v1080 = vshrl.u32 %v1079, 7
      %v1081 = vsub.s32 5, %v1080
      %v1082 = vrot.slane %v810, %v1081
      %1084 = vbcast.lane.b32.xlu0 %v1082, 256
      %v1085 = vpop.permute.xlu0 %1084
      %s1087 = sor.u32 256, 8
      %1088 = vbcast.lane.b32.xlu0 %v1082, %s1087
      %v1089 = vpop.permute.xlu0 %1088
      %v1090 = vlaneseq
      %v1091 = vshrl.u32 %v1090, 7
      %v1092 = vsub.s32 6, %v1091
      %v1093 = vrot.slane %v810, %v1092
      %1095 = vbcast.lane.b32.xlu0 %v1093, 256
      %v1096 = vpop.permute.xlu0 %1095
      %s1098 = sor.u32 256, 8
      %1099 = vbcast.lane.b32.xlu0 %v1093, %s1098
      %v1100 = vpop.permute.xlu0 %1099
      %v1101 = vlaneseq
      %v1102 = vshrl.u32 %v1101, 7
      %v1103 = vsub.s32 7, %v1102
      %v1104 = vrot.slane %v810, %v1103
      %1106 = vbcast.lane.b32.xlu0 %v1104, 256
      %v1107 = vpop.permute.xlu0 %1106
      %s1109 = sor.u32 256, 8
      %1110 = vbcast.lane.b32.xlu0 %v1104, %s1109
      %v1111 = vpop.permute.xlu0 %1110
      %v1112 = vlaneseq
      %v1113 = vshrl.u32 %v1112, 7
      %v1114 = vsub.s32 0, %v1113
      %v1115 = vrot.slane %v811, %v1114
      %1117 = vbcast.lane.b32.xlu0 %v1115, 256
      %v1118 = vpop.permute.xlu0 %1117
      %s1120 = sor.u32 256, 8
      %1121 = vbcast.lane.b32.xlu0 %v1115, %s1120
      %v1122 = vpop.permute.xlu0 %1121
      %v1123 = vlaneseq
      %v1124 = vshrl.u32 %v1123, 7
      %v1125 = vsub.s32 1, %v1124
      %v1126 = vrot.slane %v811, %v1125
      %1128 = vbcast.lane.b32.xlu0 %v1126, 256
      %v1129 = vpop.permute.xlu0 %1128
      %s1131 = sor.u32 256, 8
      %1132 = vbcast.lane.b32.xlu0 %v1126, %s1131
      %v1133 = vpop.permute.xlu0 %1132
      %v1134 = vlaneseq
      %v1135 = vshrl.u32 %v1134, 7
      %v1136 = vsub.s32 2, %v1135
      %v1137 = vrot.slane %v811, %v1136
      %1139 = vbcast.lane.b32.xlu0 %v1137, 256
      %v1140 = vpop.permute.xlu0 %1139
      %s1142 = sor.u32 256, 8
      %1143 = vbcast.lane.b32.xlu0 %v1137, %s1142
      %v1144 = vpop.permute.xlu0 %1143
      %v1145 = vlaneseq
      %v1146 = vshrl.u32 %v1145, 7
      %v1147 = vsub.s32 3, %v1146
      %v1148 = vrot.slane %v811, %v1147
      %1150 = vbcast.lane.b32.xlu0 %v1148, 256
      %v1151 = vpop.permute.xlu0 %1150
      %s1153 = sor.u32 256, 8
      %1154 = vbcast.lane.b32.xlu0 %v1148, %s1153
      %v1155 = vpop.permute.xlu0 %1154
      %v1156 = vlaneseq
      %v1157 = vshrl.u32 %v1156, 7
      %v1158 = vsub.s32 4, %v1157
      %v1159 = vrot.slane %v811, %v1158
      %1161 = vbcast.lane.b32.xlu0 %v1159, 256
      %v1162 = vpop.permute.xlu0 %1161
      %s1164 = sor.u32 256, 8
      %1165 = vbcast.lane.b32.xlu0 %v1159, %s1164
      %v1166 = vpop.permute.xlu0 %1165
      %v1167 = vlaneseq
      %v1168 = vshrl.u32 %v1167, 7
      %v1169 = vsub.s32 5, %v1168
      %v1170 = vrot.slane %v811, %v1169
      %1172 = vbcast.lane.b32.xlu0 %v1170, 256
      %v1173 = vpop.permute.xlu0 %1172
      %s1175 = sor.u32 256, 8
      %1176 = vbcast.lane.b32.xlu0 %v1170, %s1175
      %v1177 = vpop.permute.xlu0 %1176
      %v1178 = vlaneseq
      %v1179 = vshrl.u32 %v1178, 7
      %v1180 = vsub.s32 6, %v1179
      %v1181 = vrot.slane %v811, %v1180
      %1183 = vbcast.lane.b32.xlu0 %v1181, 256
      %v1184 = vpop.permute.xlu0 %1183
      %s1186 = sor.u32 256, 8
      %1187 = vbcast.lane.b32.xlu0 %v1181, %s1186
      %v1188 = vpop.permute.xlu0 %1187
      %v1189 = vlaneseq
      %v1190 = vshrl.u32 %v1189, 7
      %v1191 = vsub.s32 7, %v1190
      %v1192 = vrot.slane %v811, %v1191
      %1194 = vbcast.lane.b32.xlu0 %v1192, 256
      %v1195 = vpop.permute.xlu0 %1194
      %s1197 = sor.u32 256, 8
      %1198 = vbcast.lane.b32.xlu0 %v1192, %s1197
      %v1199 = vpop.permute.xlu0 %1198
      %v1200 = vlaneseq
      %v1201 = vshrl.u32 %v1200, 7
      %v1202 = vsub.s32 0, %v1201
      %v1203 = vrot.slane %v812, %v1202
      %1205 = vbcast.lane.b32.xlu0 %v1203, 256
      %v1206 = vpop.permute.xlu0 %1205
      %s1208 = sor.u32 256, 8
      %1209 = vbcast.lane.b32.xlu0 %v1203, %s1208
      %v1210 = vpop.permute.xlu0 %1209
      %v1211 = vlaneseq
      %v1212 = vshrl.u32 %v1211, 7
      %v1213 = vsub.s32 1, %v1212
      %v1214 = vrot.slane %v812, %v1213
      %1216 = vbcast.lane.b32.xlu0 %v1214, 256
      %v1217 = vpop.permute.xlu0 %1216
      %s1219 = sor.u32 256, 8
      %1220 = vbcast.lane.b32.xlu0 %v1214, %s1219
      %v1221 = vpop.permute.xlu0 %1220
      %v1222 = vlaneseq
      %v1223 = vshrl.u32 %v1222, 7
      %v1224 = vsub.s32 2, %v1223
      %v1225 = vrot.slane %v812, %v1224
      %1227 = vbcast.lane.b32.xlu0 %v1225, 256
      %v1228 = vpop.permute.xlu0 %1227
      %s1230 = sor.u32 256, 8
      %1231 = vbcast.lane.b32.xlu0 %v1225, %s1230
      %v1232 = vpop.permute.xlu0 %1231
      %v1233 = vlaneseq
      %v1234 = vshrl.u32 %v1233, 7
      %v1235 = vsub.s32 3, %v1234
      %v1236 = vrot.slane %v812, %v1235
      %1238 = vbcast.lane.b32.xlu0 %v1236, 256
      %v1239 = vpop.permute.xlu0 %1238
      %s1241 = sor.u32 256, 8
      %1242 = vbcast.lane.b32.xlu0 %v1236, %s1241
      %v1243 = vpop.permute.xlu0 %1242
      %v1244 = vlaneseq
      %v1245 = vshrl.u32 %v1244, 7
      %v1246 = vsub.s32 4, %v1245
      %v1247 = vrot.slane %v812, %v1246
      %1249 = vbcast.lane.b32.xlu0 %v1247, 256
      %v1250 = vpop.permute.xlu0 %1249
      %s1252 = sor.u32 256, 8
      %1253 = vbcast.lane.b32.xlu0 %v1247, %s1252
      %v1254 = vpop.permute.xlu0 %1253
      %v1255 = vlaneseq
      %v1256 = vshrl.u32 %v1255, 7
      %v1257 = vsub.s32 5, %v1256
      %v1258 = vrot.slane %v812, %v1257
      %1260 = vbcast.lane.b32.xlu0 %v1258, 256
      %v1261 = vpop.permute.xlu0 %1260
      %s1263 = sor.u32 256, 8
      %1264 = vbcast.lane.b32.xlu0 %v1258, %s1263
      %v1265 = vpop.permute.xlu0 %1264
      %v1266 = vlaneseq
      %v1267 = vshrl.u32 %v1266, 7
      %v1268 = vsub.s32 6, %v1267
      %v1269 = vrot.slane %v812, %v1268
      %1271 = vbcast.lane.b32.xlu0 %v1269, 256
      %v1272 = vpop.permute.xlu0 %1271
      %s1274 = sor.u32 256, 8
      %1275 = vbcast.lane.b32.xlu0 %v1269, %s1274
      %v1276 = vpop.permute.xlu0 %1275
      %v1277 = vlaneseq
      %v1278 = vshrl.u32 %v1277, 7
      %v1279 = vsub.s32 7, %v1278
      %v1280 = vrot.slane %v812, %v1279
      %1282 = vbcast.lane.b32.xlu0 %v1280, 256
      %v1283 = vpop.permute.xlu0 %1282
      %s1285 = sor.u32 256, 8
      %1286 = vbcast.lane.b32.xlu0 %v1280, %s1285
      %v1287 = vpop.permute.xlu0 %1286
      %v1288 = vlaneseq
      %v1289 = vshrl.u32 %v1288, 7
      %v1290 = vsub.s32 0, %v1289
      %v1291 = vrot.slane %v813, %v1290
      %1293 = vbcast.lane.b32.xlu0 %v1291, 256
      %v1294 = vpop.permute.xlu0 %1293
      %s1296 = sor.u32 256, 8
      %1297 = vbcast.lane.b32.xlu0 %v1291, %s1296
      %v1298 = vpop.permute.xlu0 %1297
      %v1299 = vlaneseq
      %v1300 = vshrl.u32 %v1299, 7
      %v1301 = vsub.s32 1, %v1300
      %v1302 = vrot.slane %v813, %v1301
      %1304 = vbcast.lane.b32.xlu0 %v1302, 256
      %v1305 = vpop.permute.xlu0 %1304
      %s1307 = sor.u32 256, 8
      %1308 = vbcast.lane.b32.xlu0 %v1302, %s1307
      %v1309 = vpop.permute.xlu0 %1308
      %v1310 = vlaneseq
      %v1311 = vshrl.u32 %v1310, 7
      %v1312 = vsub.s32 2, %v1311
      %v1313 = vrot.slane %v813, %v1312
      %1315 = vbcast.lane.b32.xlu0 %v1313, 256
      %v1316 = vpop.permute.xlu0 %1315
      %s1318 = sor.u32 256, 8
      %1319 = vbcast.lane.b32.xlu0 %v1313, %s1318
      %v1320 = vpop.permute.xlu0 %1319
      %v1321 = vlaneseq
      %v1322 = vshrl.u32 %v1321, 7
      %v1323 = vsub.s32 3, %v1322
      %v1324 = vrot.slane %v813, %v1323
      %1326 = vbcast.lane.b32.xlu0 %v1324, 256
      %v1327 = vpop.permute.xlu0 %1326
      %s1329 = sor.u32 256, 8
      %1330 = vbcast.lane.b32.xlu0 %v1324, %s1329
      %v1331 = vpop.permute.xlu0 %1330
      %v1332 = vlaneseq
      %v1333 = vshrl.u32 %v1332, 7
      %v1334 = vsub.s32 4, %v1333
      %v1335 = vrot.slane %v813, %v1334
      %1337 = vbcast.lane.b32.xlu0 %v1335, 256
      %v1338 = vpop.permute.xlu0 %1337
      %s1340 = sor.u32 256, 8
      %1341 = vbcast.lane.b32.xlu0 %v1335, %s1340
      %v1342 = vpop.permute.xlu0 %1341
      %v1343 = vlaneseq
      %v1344 = vshrl.u32 %v1343, 7
      %v1345 = vsub.s32 5, %v1344
      %v1346 = vrot.slane %v813, %v1345
      %1348 = vbcast.lane.b32.xlu0 %v1346, 256
      %v1349 = vpop.permute.xlu0 %1348
      %s1351 = sor.u32 256, 8
      %1352 = vbcast.lane.b32.xlu0 %v1346, %s1351
      %v1353 = vpop.permute.xlu0 %1352
      %v1354 = vlaneseq
      %v1355 = vshrl.u32 %v1354, 7
      %v1356 = vsub.s32 6, %v1355
      %v1357 = vrot.slane %v813, %v1356
      %1359 = vbcast.lane.b32.xlu0 %v1357, 256
      %v1360 = vpop.permute.xlu0 %1359
      %s1362 = sor.u32 256, 8
      %1363 = vbcast.lane.b32.xlu0 %v1357, %s1362
      %v1364 = vpop.permute.xlu0 %1363
      %v1365 = vlaneseq
      %v1366 = vshrl.u32 %v1365, 7
      %v1367 = vsub.s32 7, %v1366
      %v1368 = vrot.slane %v813, %v1367
      %1370 = vbcast.lane.b32.xlu0 %v1368, 256
      %v1371 = vpop.permute.xlu0 %1370
      %s1373 = sor.u32 256, 8
      %1374 = vbcast.lane.b32.xlu0 %v1368, %s1373
      %v1375 = vpop.permute.xlu0 %1374
      %v1376 = vlaneseq
      %v1377 = vshrl.u32 %v1376, 7
      %v1378 = vsub.s32 0, %v1377
      %v1379 = vrot.slane %v814, %v1378
      %1381 = vbcast.lane.b32.xlu0 %v1379, 256
      %v1382 = vpop.permute.xlu0 %1381
      %s1384 = sor.u32 256, 8
      %1385 = vbcast.lane.b32.xlu0 %v1379, %s1384
      %v1386 = vpop.permute.xlu0 %1385
      %v1387 = vlaneseq
      %v1388 = vshrl.u32 %v1387, 7
      %v1389 = vsub.s32 1, %v1388
      %v1390 = vrot.slane %v814, %v1389
      %1392 = vbcast.lane.b32.xlu0 %v1390, 256
      %v1393 = vpop.permute.xlu0 %1392
      %s1395 = sor.u32 256, 8
      %1396 = vbcast.lane.b32.xlu0 %v1390, %s1395
      %v1397 = vpop.permute.xlu0 %1396
      %v1398 = vlaneseq
      %v1399 = vshrl.u32 %v1398, 7
      %v1400 = vsub.s32 2, %v1399
      %v1401 = vrot.slane %v814, %v1400
      %1403 = vbcast.lane.b32.xlu0 %v1401, 256
      %v1404 = vpop.permute.xlu0 %1403
      %s1406 = sor.u32 256, 8
      %1407 = vbcast.lane.b32.xlu0 %v1401, %s1406
      %v1408 = vpop.permute.xlu0 %1407
      %v1409 = vlaneseq
      %v1410 = vshrl.u32 %v1409, 7
      %v1411 = vsub.s32 3, %v1410
      %v1412 = vrot.slane %v814, %v1411
      %1414 = vbcast.lane.b32.xlu0 %v1412, 256
      %v1415 = vpop.permute.xlu0 %1414
      %s1417 = sor.u32 256, 8
      %1418 = vbcast.lane.b32.xlu0 %v1412, %s1417
      %v1419 = vpop.permute.xlu0 %1418
      %v1420 = vlaneseq
      %v1421 = vshrl.u32 %v1420, 7
      %v1422 = vsub.s32 4, %v1421
      %v1423 = vrot.slane %v814, %v1422
      %1425 = vbcast.lane.b32.xlu0 %v1423, 256
      %v1426 = vpop.permute.xlu0 %1425
      %s1428 = sor.u32 256, 8
      %1429 = vbcast.lane.b32.xlu0 %v1423, %s1428
      %v1430 = vpop.permute.xlu0 %1429
      %v1431 = vlaneseq
      %v1432 = vshrl.u32 %v1431, 7
      %v1433 = vsub.s32 5, %v1432
      %v1434 = vrot.slane %v814, %v1433
      %1436 = vbcast.lane.b32.xlu0 %v1434, 256
      %v1437 = vpop.permute.xlu0 %1436
      %s1439 = sor.u32 256, 8
      %1440 = vbcast.lane.b32.xlu0 %v1434, %s1439
      %v1441 = vpop.permute.xlu0 %1440
      %v1442 = vlaneseq
      %v1443 = vshrl.u32 %v1442, 7
      %v1444 = vsub.s32 6, %v1443
      %v1445 = vrot.slane %v814, %v1444
      %1447 = vbcast.lane.b32.xlu0 %v1445, 256
      %v1448 = vpop.permute.xlu0 %1447
      %s1450 = sor.u32 256, 8
      %1451 = vbcast.lane.b32.xlu0 %v1445, %s1450
      %v1452 = vpop.permute.xlu0 %1451
      %v1453 = vlaneseq
      %v1454 = vshrl.u32 %v1453, 7
      %v1455 = vsub.s32 7, %v1454
      %v1456 = vrot.slane %v814, %v1455
      %1458 = vbcast.lane.b32.xlu0 %v1456, 256
      %v1459 = vpop.permute.xlu0 %1458
      %s1461 = sor.u32 256, 8
      %1462 = vbcast.lane.b32.xlu0 %v1456, %s1461
      %v1463 = vpop.permute.xlu0 %1462
      %v1464 = vlaneseq
      %v1465 = vshrl.u32 %v1464, 7
      %v1466 = vsub.s32 0, %v1465
      %v1467 = vrot.slane %v815, %v1466
      %1469 = vbcast.lane.b32.xlu0 %v1467, 256
      %v1470 = vpop.permute.xlu0 %1469
      %s1472 = sor.u32 256, 8
      %1473 = vbcast.lane.b32.xlu0 %v1467, %s1472
      %v1474 = vpop.permute.xlu0 %1473
      %v1475 = vlaneseq
      %v1476 = vshrl.u32 %v1475, 7
      %v1477 = vsub.s32 1, %v1476
      %v1478 = vrot.slane %v815, %v1477
      %1480 = vbcast.lane.b32.xlu0 %v1478, 256
      %v1481 = vpop.permute.xlu0 %1480
      %s1483 = sor.u32 256, 8
      %1484 = vbcast.lane.b32.xlu0 %v1478, %s1483
      %v1485 = vpop.permute.xlu0 %1484
      %v1486 = vlaneseq
      %v1487 = vshrl.u32 %v1486, 7
      %v1488 = vsub.s32 2, %v1487
      %v1489 = vrot.slane %v815, %v1488
      %1491 = vbcast.lane.b32.xlu0 %v1489, 256
      %v1492 = vpop.permute.xlu0 %1491
      %s1494 = sor.u32 256, 8
      %1495 = vbcast.lane.b32.xlu0 %v1489, %s1494
      %v1496 = vpop.permute.xlu0 %1495
      %v1497 = vlaneseq
      %v1498 = vshrl.u32 %v1497, 7
      %v1499 = vsub.s32 3, %v1498
      %v1500 = vrot.slane %v815, %v1499
      %1502 = vbcast.lane.b32.xlu0 %v1500, 256
      %v1503 = vpop.permute.xlu0 %1502
      %s1505 = sor.u32 256, 8
      %1506 = vbcast.lane.b32.xlu0 %v1500, %s1505
      %v1507 = vpop.permute.xlu0 %1506
      %v1508 = vlaneseq
      %v1509 = vshrl.u32 %v1508, 7
      %v1510 = vsub.s32 4, %v1509
      %v1511 = vrot.slane %v815, %v1510
      %1513 = vbcast.lane.b32.xlu0 %v1511, 256
      %v1514 = vpop.permute.xlu0 %1513
      %s1516 = sor.u32 256, 8
      %1517 = vbcast.lane.b32.xlu0 %v1511, %s1516
      %v1518 = vpop.permute.xlu0 %1517
      %v1519 = vlaneseq
      %v1520 = vshrl.u32 %v1519, 7
      %v1521 = vsub.s32 5, %v1520
      %v1522 = vrot.slane %v815, %v1521
      %1524 = vbcast.lane.b32.xlu0 %v1522, 256
      %v1525 = vpop.permute.xlu0 %1524
      %s1527 = sor.u32 256, 8
      %1528 = vbcast.lane.b32.xlu0 %v1522, %s1527
      %v1529 = vpop.permute.xlu0 %1528
      %v1530 = vlaneseq
      %v1531 = vshrl.u32 %v1530, 7
      %v1532 = vsub.s32 6, %v1531
      %v1533 = vrot.slane %v815, %v1532
      %1535 = vbcast.lane.b32.xlu0 %v1533, 256
      %v1536 = vpop.permute.xlu0 %1535
      %s1538 = sor.u32 256, 8
      %1539 = vbcast.lane.b32.xlu0 %v1533, %s1538
      %v1540 = vpop.permute.xlu0 %1539
      %v1541 = vlaneseq
      %v1542 = vshrl.u32 %v1541, 7
      %v1543 = vsub.s32 7, %v1542
      %v1544 = vrot.slane %v815, %v1543
      %1546 = vbcast.lane.b32.xlu0 %v1544, 256
      %v1547 = vpop.permute.xlu0 %1546
      %s1549 = sor.u32 256, 8
      %1550 = vbcast.lane.b32.xlu0 %v1544, %s1549
      %v1551 = vpop.permute.xlu0 %1550
      %v1560 = vcombine.high %v770, %v770
      %v1562 = vunpack.c.l.s4 1966171168
      %v1563 = vunpack.c.0.s8 %v1562
      %v1564 = vlaneseq
      %v1565 = vshrl.u32 %v1564, 7
      %v1566 = vsub.s32 %v1563, %v1565
      %v1567 = vrot.slane %v770, %v1566
      %v1569 = vunpack.c.l.s4 1966171168
      %v1570 = vunpack.c.0.s8 %v1569
      %v1571 = vlaneseq
      %v1572 = vshrl.u32 %v1571, 7
      %v1573 = vsub.s32 %v1570, %v1572
      %v1574 = vrot.slane %v1560, %v1573
      %v1575 = vcombine.high %v1567, %v1567
      %v1576 = vcombine.high %v1574, %v1574
      %v1578 = vunpack.c.l.s4 1966171168
      %v1579 = vunpack.c.0.s8 %v1578
      %v1580 = vlaneseq
      %v1581 = vshrl.u32 %v1580, 7
      %v1582 = vsub.s32 %v1579, %v1581
      %v1583 = vrot.slane %v1567, %v1582
      %v1585 = vunpack.c.l.s4 1966171168
      %v1586 = vunpack.c.0.s8 %v1585
      %v1587 = vlaneseq
      %v1588 = vshrl.u32 %v1587, 7
      %v1589 = vsub.s32 %v1586, %v1588
      %v1590 = vrot.slane %v1574, %v1589
      %v1592 = vunpack.c.l.s4 1966171168
      %v1593 = vunpack.c.0.s8 %v1592
      %v1594 = vlaneseq
      %v1595 = vshrl.u32 %v1594, 7
      %v1596 = vsub.s32 %v1593, %v1595
      %v1597 = vrot.slane %v1575, %v1596
      %v1599 = vunpack.c.l.s4 1966171168
      %v1600 = vunpack.c.0.s8 %v1599
      %v1601 = vlaneseq
      %v1602 = vshrl.u32 %v1601, 7
      %v1603 = vsub.s32 %v1600, %v1602
      %v1604 = vrot.slane %v1576, %v1603
      %v1605 = vcombine.high %v1583, %v1583
      %v1606 = vcombine.high %v1590, %v1590
      %v1607 = vcombine.high %v1597, %v1597
      %v1608 = vcombine.high %v1604, %v1604
      %v1609 = vcombine.high %v775, %v775
      %v1611 = vunpack.c.l.s4 1966171168
      %v1612 = vunpack.c.0.s8 %v1611
      %v1613 = vlaneseq
      %v1614 = vshrl.u32 %v1613, 7
      %v1615 = vsub.s32 %v1612, %v1614
      %v1616 = vrot.slane %v775, %v1615
      %v1618 = vunpack.c.l.s4 1966171168
      %v1619 = vunpack.c.0.s8 %v1618
      %v1620 = vlaneseq
      %v1621 = vshrl.u32 %v1620, 7
      %v1622 = vsub.s32 %v1619, %v1621
      %v1623 = vrot.slane %v1609, %v1622
      %v1624 = vcombine.high %v1616, %v1616
      %v1625 = vcombine.high %v1623, %v1623
      %v1627 = vunpack.c.l.s4 1966171168
      %v1628 = vunpack.c.0.s8 %v1627
      %v1629 = vlaneseq
      %v1630 = vshrl.u32 %v1629, 7
      %v1631 = vsub.s32 %v1628, %v1630
      %v1632 = vrot.slane %v1616, %v1631
      %v1634 = vunpack.c.l.s4 1966171168
      %v1635 = vunpack.c.0.s8 %v1634
      %v1636 = vlaneseq
      %v1637 = vshrl.u32 %v1636, 7
      %v1638 = vsub.s32 %v1635, %v1637
      %v1639 = vrot.slane %v1623, %v1638
      %v1641 = vunpack.c.l.s4 1966171168
      %v1642 = vunpack.c.0.s8 %v1641
      %v1643 = vlaneseq
      %v1644 = vshrl.u32 %v1643, 7
      %v1645 = vsub.s32 %v1642, %v1644
      %v1646 = vrot.slane %v1624, %v1645
      %v1648 = vunpack.c.l.s4 1966171168
      %v1649 = vunpack.c.0.s8 %v1648
      %v1650 = vlaneseq
      %v1651 = vshrl.u32 %v1650, 7
      %v1652 = vsub.s32 %v1649, %v1651
      %v1653 = vrot.slane %v1625, %v1652
      %v1654 = vcombine.high %v1632, %v1632
      %v1655 = vcombine.high %v1639, %v1639
      %v1656 = vcombine.high %v1646, %v1646
      %v1657 = vcombine.high %v1653, %v1653
      %v1658 = vcombine.high %v780, %v780
      %v1660 = vunpack.c.l.s4 1966171168
      %v1661 = vunpack.c.0.s8 %v1660
      %v1662 = vlaneseq
      %v1663 = vshrl.u32 %v1662, 7
      %v1664 = vsub.s32 %v1661, %v1663
      %v1665 = vrot.slane %v780, %v1664
      %v1667 = vunpack.c.l.s4 1966171168
      %v1668 = vunpack.c.0.s8 %v1667
      %v1669 = vlaneseq
      %v1670 = vshrl.u32 %v1669, 7
      %v1671 = vsub.s32 %v1668, %v1670
      %v1672 = vrot.slane %v1658, %v1671
      %v1673 = vcombine.high %v1665, %v1665
      %v1674 = vcombine.high %v1672, %v1672
      %v1676 = vunpack.c.l.s4 1966171168
      %v1677 = vunpack.c.0.s8 %v1676
      %v1678 = vlaneseq
      %v1679 = vshrl.u32 %v1678, 7
      %v1680 = vsub.s32 %v1677, %v1679
      %v1681 = vrot.slane %v1665, %v1680
      %v1683 = vunpack.c.l.s4 1966171168
      %v1684 = vunpack.c.0.s8 %v1683
      %v1685 = vlaneseq
      %v1686 = vshrl.u32 %v1685, 7
      %v1687 = vsub.s32 %v1684, %v1686
      %v1688 = vrot.slane %v1672, %v1687
      %v1690 = vunpack.c.l.s4 1966171168
      %v1691 = vunpack.c.0.s8 %v1690
      %v1692 = vlaneseq
      %v1693 = vshrl.u32 %v1692, 7
      %v1694 = vsub.s32 %v1691, %v1693
      %v1695 = vrot.slane %v1673, %v1694
      %v1697 = vunpack.c.l.s4 1966171168
      %v1698 = vunpack.c.0.s8 %v1697
      %v1699 = vlaneseq
      %v1700 = vshrl.u32 %v1699, 7
      %v1701 = vsub.s32 %v1698, %v1700
      %v1702 = vrot.slane %v1674, %v1701
      %v1703 = vcombine.high %v1681, %v1681
      %v1704 = vcombine.high %v1688, %v1688
      %v1705 = vcombine.high %v1695, %v1695
      %v1706 = vcombine.high %v1702, %v1702
      %v1707 = vcombine.high %v785, %v785
      %v1709 = vunpack.c.l.s4 1966171168
      %v1710 = vunpack.c.0.s8 %v1709
      %v1711 = vlaneseq
      %v1712 = vshrl.u32 %v1711, 7
      %v1713 = vsub.s32 %v1710, %v1712
      %v1714 = vrot.slane %v785, %v1713
      %v1716 = vunpack.c.l.s4 1966171168
      %v1717 = vunpack.c.0.s8 %v1716
      %v1718 = vlaneseq
      %v1719 = vshrl.u32 %v1718, 7
      %v1720 = vsub.s32 %v1717, %v1719
      %v1721 = vrot.slane %v1707, %v1720
      %v1722 = vcombine.high %v1714, %v1714
      %v1723 = vcombine.high %v1721, %v1721
      %v1725 = vunpack.c.l.s4 1966171168
      %v1726 = vunpack.c.0.s8 %v1725
      %v1727 = vlaneseq
      %v1728 = vshrl.u32 %v1727, 7
      %v1729 = vsub.s32 %v1726, %v1728
      %v1730 = vrot.slane %v1714, %v1729
      %v1732 = vunpack.c.l.s4 1966171168
      %v1733 = vunpack.c.0.s8 %v1732
      %v1734 = vlaneseq
      %v1735 = vshrl.u32 %v1734, 7
      %v1736 = vsub.s32 %v1733, %v1735
      %v1737 = vrot.slane %v1721, %v1736
      %v1739 = vunpack.c.l.s4 1966171168
      %v1740 = vunpack.c.0.s8 %v1739
      %v1741 = vlaneseq
      %v1742 = vshrl.u32 %v1741, 7
      %v1743 = vsub.s32 %v1740, %v1742
      %v1744 = vrot.slane %v1722, %v1743
      %v1746 = vunpack.c.l.s4 1966171168
      %v1747 = vunpack.c.0.s8 %v1746
      %v1748 = vlaneseq
      %v1749 = vshrl.u32 %v1748, 7
      %v1750 = vsub.s32 %v1747, %v1749
      %v1751 = vrot.slane %v1723, %v1750
      %v1752 = vcombine.high %v1730, %v1730
      %v1753 = vcombine.high %v1737, %v1737
      %v1754 = vcombine.high %v1744, %v1744
      %v1755 = vcombine.high %v1751, %v1751
      %v1756 = vcombine.high %v790, %v790
      %v1758 = vunpack.c.l.s4 1966171168
      %v1759 = vunpack.c.0.s8 %v1758
      %v1760 = vlaneseq
      %v1761 = vshrl.u32 %v1760, 7
      %v1762 = vsub.s32 %v1759, %v1761
      %v1763 = vrot.slane %v790, %v1762
      %v1765 = vunpack.c.l.s4 1966171168
      %v1766 = vunpack.c.0.s8 %v1765
      %v1767 = vlaneseq
      %v1768 = vshrl.u32 %v1767, 7
      %v1769 = vsub.s32 %v1766, %v1768
      %v1770 = vrot.slane %v1756, %v1769
      %v1771 = vcombine.high %v1763, %v1763
      %v1772 = vcombine.high %v1770, %v1770
      %v1774 = vunpack.c.l.s4 1966171168
      %v1775 = vunpack.c.0.s8 %v1774
      %v1776 = vlaneseq
      %v1777 = vshrl.u32 %v1776, 7
      %v1778 = vsub.s32 %v1775, %v1777
      %v1779 = vrot.slane %v1763, %v1778
      %v1781 = vunpack.c.l.s4 1966171168
      %v1782 = vunpack.c.0.s8 %v1781
      %v1783 = vlaneseq
      %v1784 = vshrl.u32 %v1783, 7
      %v1785 = vsub.s32 %v1782, %v1784
      %v1786 = vrot.slane %v1770, %v1785
      %v1788 = vunpack.c.l.s4 1966171168
      %v1789 = vunpack.c.0.s8 %v1788
      %v1790 = vlaneseq
      %v1791 = vshrl.u32 %v1790, 7
      %v1792 = vsub.s32 %v1789, %v1791
      %v1793 = vrot.slane %v1771, %v1792
      %v1795 = vunpack.c.l.s4 1966171168
      %v1796 = vunpack.c.0.s8 %v1795
      %v1797 = vlaneseq
      %v1798 = vshrl.u32 %v1797, 7
      %v1799 = vsub.s32 %v1796, %v1798
      %v1800 = vrot.slane %v1772, %v1799
      %v1801 = vcombine.high %v1779, %v1779
      %v1802 = vcombine.high %v1786, %v1786
      %v1803 = vcombine.high %v1793, %v1793
      %v1804 = vcombine.high %v1800, %v1800
      %v1805 = vcombine.high %v795, %v795
      %v1807 = vunpack.c.l.s4 1966171168
      %v1808 = vunpack.c.0.s8 %v1807
      %v1809 = vlaneseq
      %v1810 = vshrl.u32 %v1809, 7
      %v1811 = vsub.s32 %v1808, %v1810
      %v1812 = vrot.slane %v795, %v1811
      %v1814 = vunpack.c.l.s4 1966171168
      %v1815 = vunpack.c.0.s8 %v1814
      %v1816 = vlaneseq
      %v1817 = vshrl.u32 %v1816, 7
      %v1818 = vsub.s32 %v1815, %v1817
      %v1819 = vrot.slane %v1805, %v1818
      %v1820 = vcombine.high %v1812, %v1812
      %v1821 = vcombine.high %v1819, %v1819
      %v1823 = vunpack.c.l.s4 1966171168
      %v1824 = vunpack.c.0.s8 %v1823
      %v1825 = vlaneseq
      %v1826 = vshrl.u32 %v1825, 7
      %v1827 = vsub.s32 %v1824, %v1826
      %v1828 = vrot.slane %v1812, %v1827
      %v1830 = vunpack.c.l.s4 1966171168
      %v1831 = vunpack.c.0.s8 %v1830
      %v1832 = vlaneseq
      %v1833 = vshrl.u32 %v1832, 7
      %v1834 = vsub.s32 %v1831, %v1833
      %v1835 = vrot.slane %v1819, %v1834
      %v1837 = vunpack.c.l.s4 1966171168
      %v1838 = vunpack.c.0.s8 %v1837
      %v1839 = vlaneseq
      %v1840 = vshrl.u32 %v1839, 7
      %v1841 = vsub.s32 %v1838, %v1840
      %v1842 = vrot.slane %v1820, %v1841
      %v1844 = vunpack.c.l.s4 1966171168
      %v1845 = vunpack.c.0.s8 %v1844
      %v1846 = vlaneseq
      %v1847 = vshrl.u32 %v1846, 7
      %v1848 = vsub.s32 %v1845, %v1847
      %v1849 = vrot.slane %v1821, %v1848
      %v1850 = vcombine.high %v1828, %v1828
      %v1851 = vcombine.high %v1835, %v1835
      %v1852 = vcombine.high %v1842, %v1842
      %v1853 = vcombine.high %v1849, %v1849
      %v1854 = vcombine.high %v800, %v800
      %v1856 = vunpack.c.l.s4 1966171168
      %v1857 = vunpack.c.0.s8 %v1856
      %v1858 = vlaneseq
      %v1859 = vshrl.u32 %v1858, 7
      %v1860 = vsub.s32 %v1857, %v1859
      %v1861 = vrot.slane %v800, %v1860
      %v1863 = vunpack.c.l.s4 1966171168
      %v1864 = vunpack.c.0.s8 %v1863
      %v1865 = vlaneseq
      %v1866 = vshrl.u32 %v1865, 7
      %v1867 = vsub.s32 %v1864, %v1866
      %v1868 = vrot.slane %v1854, %v1867
      %v1869 = vcombine.high %v1861, %v1861
      %v1870 = vcombine.high %v1868, %v1868
      %v1872 = vunpack.c.l.s4 1966171168
      %v1873 = vunpack.c.0.s8 %v1872
      %v1874 = vlaneseq
      %v1875 = vshrl.u32 %v1874, 7
      %v1876 = vsub.s32 %v1873, %v1875
      %v1877 = vrot.slane %v1861, %v1876
      %v1879 = vunpack.c.l.s4 1966171168
      %v1880 = vunpack.c.0.s8 %v1879
      %v1881 = vlaneseq
      %v1882 = vshrl.u32 %v1881, 7
      %v1883 = vsub.s32 %v1880, %v1882
      %v1884 = vrot.slane %v1868, %v1883
      %v1886 = vunpack.c.l.s4 1966171168
      %v1887 = vunpack.c.0.s8 %v1886
      %v1888 = vlaneseq
      %v1889 = vshrl.u32 %v1888, 7
      %v1890 = vsub.s32 %v1887, %v1889
      %v1891 = vrot.slane %v1869, %v1890
      %v1893 = vunpack.c.l.s4 1966171168
      %v1894 = vunpack.c.0.s8 %v1893
      %v1895 = vlaneseq
      %v1896 = vshrl.u32 %v1895, 7
      %v1897 = vsub.s32 %v1894, %v1896
      %v1898 = vrot.slane %v1870, %v1897
      %v1899 = vcombine.high %v1877, %v1877
      %v1900 = vcombine.high %v1884, %v1884
      %v1901 = vcombine.high %v1891, %v1891
      %v1902 = vcombine.high %v1898, %v1898
      %v1903 = vcombine.high %v805, %v805
      %v1905 = vunpack.c.l.s4 1966171168
      %v1906 = vunpack.c.0.s8 %v1905
      %v1907 = vlaneseq
      %v1908 = vshrl.u32 %v1907, 7
      %v1909 = vsub.s32 %v1906, %v1908
      %v1910 = vrot.slane %v805, %v1909
      %v1912 = vunpack.c.l.s4 1966171168
      %v1913 = vunpack.c.0.s8 %v1912
      %v1914 = vlaneseq
      %v1915 = vshrl.u32 %v1914, 7
      %v1916 = vsub.s32 %v1913, %v1915
      %v1917 = vrot.slane %v1903, %v1916
      %v1918 = vcombine.high %v1910, %v1910
      %v1919 = vcombine.high %v1917, %v1917
      %v1921 = vunpack.c.l.s4 1966171168
      %v1922 = vunpack.c.0.s8 %v1921
      %v1923 = vlaneseq
      %v1924 = vshrl.u32 %v1923, 7
      %v1925 = vsub.s32 %v1922, %v1924
      %v1926 = vrot.slane %v1910, %v1925
      %v1928 = vunpack.c.l.s4 1966171168
      %v1929 = vunpack.c.0.s8 %v1928
      %v1930 = vlaneseq
      %v1931 = vshrl.u32 %v1930, 7
      %v1932 = vsub.s32 %v1929, %v1931
      %v1933 = vrot.slane %v1917, %v1932
      %v1935 = vunpack.c.l.s4 1966171168
      %v1936 = vunpack.c.0.s8 %v1935
      %v1937 = vlaneseq
      %v1938 = vshrl.u32 %v1937, 7
      %v1939 = vsub.s32 %v1936, %v1938
      %v1940 = vrot.slane %v1918, %v1939
      %v1942 = vunpack.c.l.s4 1966171168
      %v1943 = vunpack.c.0.s8 %v1942
      %v1944 = vlaneseq
      %v1945 = vshrl.u32 %v1944, 7
      %v1946 = vsub.s32 %v1943, %v1945
      %v1947 = vrot.slane %v1919, %v1946
      %v1948 = vcombine.high %v1926, %v1926
      %v1949 = vcombine.high %v1933, %v1933
      %v1950 = vcombine.high %v1940, %v1940
      %v1951 = vcombine.high %v1947, %v1947
      %v1952 = vlaneseq
      %v1953 = vshrl.u32 %v1952, 7
      %v1954 = vsub.s32 0, %v1953
      %v1955 = vrot.slane %v1583, %v1954
      %v1956 = vlaneseq
      %v1957 = vshrl.u32 %v1956, 7
      %v1958 = vsub.s32 0, %v1957
      %v1959 = vrot.slane %v1597, %v1958
      %v1960 = vlaneseq
      %v1961 = vshrl.u32 %v1960, 7
      %v1962 = vsub.s32 0, %v1961
      %v1963 = vrot.slane %v1605, %v1962
      %v1964 = vlaneseq
      %v1965 = vshrl.u32 %v1964, 7
      %v1966 = vsub.s32 0, %v1965
      %v1967 = vrot.slane %v1607, %v1966
      %v1968 = vlaneseq
      %v1969 = vshrl.u32 %v1968, 7
      %v1970 = vsub.s32 0, %v1969
      %v1971 = vrot.slane %v1590, %v1970
      %v1972 = vlaneseq
      %v1973 = vshrl.u32 %v1972, 7
      %v1974 = vsub.s32 0, %v1973
      %v1975 = vrot.slane %v1604, %v1974
      %v1976 = vlaneseq
      %v1977 = vshrl.u32 %v1976, 7
      %v1978 = vsub.s32 0, %v1977
      %v1979 = vrot.slane %v1606, %v1978
      %v1980 = vlaneseq
      %v1981 = vshrl.u32 %v1980, 7
      %v1982 = vsub.s32 0, %v1981
      %v1983 = vrot.slane %v1608, %v1982
      %v1984 = vlaneseq
      %v1985 = vshrl.u32 %v1984, 7
      %v1986 = vsub.s32 0, %v1985
      %v1987 = vrot.slane %v1632, %v1986
      %v1988 = vlaneseq
      %v1989 = vshrl.u32 %v1988, 7
      %v1990 = vsub.s32 0, %v1989
      %v1991 = vrot.slane %v1646, %v1990
      %v1992 = vlaneseq
      %v1993 = vshrl.u32 %v1992, 7
      %v1994 = vsub.s32 0, %v1993
      %v1995 = vrot.slane %v1654, %v1994
      %v1996 = vlaneseq
      %v1997 = vshrl.u32 %v1996, 7
      %v1998 = vsub.s32 0, %v1997
      %v1999 = vrot.slane %v1656, %v1998
      %v2000 = vlaneseq
      %v2001 = vshrl.u32 %v2000, 7
      %v2002 = vsub.s32 0, %v2001
      %v2003 = vrot.slane %v1639, %v2002
      %v2004 = vlaneseq
      %v2005 = vshrl.u32 %v2004, 7
      %v2006 = vsub.s32 0, %v2005
      %v2007 = vrot.slane %v1653, %v2006
      %v2008 = vlaneseq
      %v2009 = vshrl.u32 %v2008, 7
      %v2010 = vsub.s32 0, %v2009
      %v2011 = vrot.slane %v1655, %v2010
      %v2012 = vlaneseq
      %v2013 = vshrl.u32 %v2012, 7
      %v2014 = vsub.s32 0, %v2013
      %v2015 = vrot.slane %v1657, %v2014
      %v2016 = vlaneseq
      %v2017 = vshrl.u32 %v2016, 7
      %v2018 = vsub.s32 0, %v2017
      %v2019 = vrot.slane %v1681, %v2018
      %v2020 = vlaneseq
      %v2021 = vshrl.u32 %v2020, 7
      %v2022 = vsub.s32 0, %v2021
      %v2023 = vrot.slane %v1695, %v2022
      %v2024 = vlaneseq
      %v2025 = vshrl.u32 %v2024, 7
      %v2026 = vsub.s32 0, %v2025
      %v2027 = vrot.slane %v1703, %v2026
      %v2028 = vlaneseq
      %v2029 = vshrl.u32 %v2028, 7
      %v2030 = vsub.s32 0, %v2029
      %v2031 = vrot.slane %v1705, %v2030
      %v2032 = vlaneseq
      %v2033 = vshrl.u32 %v2032, 7
      %v2034 = vsub.s32 0, %v2033
      %v2035 = vrot.slane %v1688, %v2034
      %v2036 = vlaneseq
      %v2037 = vshrl.u32 %v2036, 7
      %v2038 = vsub.s32 0, %v2037
      %v2039 = vrot.slane %v1702, %v2038
      %v2040 = vlaneseq
      %v2041 = vshrl.u32 %v2040, 7
      %v2042 = vsub.s32 0, %v2041
      %v2043 = vrot.slane %v1704, %v2042
      %v2044 = vlaneseq
      %v2045 = vshrl.u32 %v2044, 7
      %v2046 = vsub.s32 0, %v2045
      %v2047 = vrot.slane %v1706, %v2046
      %v2048 = vlaneseq
      %v2049 = vshrl.u32 %v2048, 7
      %v2050 = vsub.s32 0, %v2049
      %v2051 = vrot.slane %v1730, %v2050
      %v2052 = vlaneseq
      %v2053 = vshrl.u32 %v2052, 7
      %v2054 = vsub.s32 0, %v2053
      %v2055 = vrot.slane %v1744, %v2054
      %v2056 = vlaneseq
      %v2057 = vshrl.u32 %v2056, 7
      %v2058 = vsub.s32 0, %v2057
      %v2059 = vrot.slane %v1752, %v2058
      %v2060 = vlaneseq
      %v2061 = vshrl.u32 %v2060, 7
      %v2062 = vsub.s32 0, %v2061
      %v2063 = vrot.slane %v1754, %v2062
      %v2064 = vlaneseq
      %v2065 = vshrl.u32 %v2064, 7
      %v2066 = vsub.s32 0, %v2065
      %v2067 = vrot.slane %v1737, %v2066
      %v2068 = vlaneseq
      %v2069 = vshrl.u32 %v2068, 7
      %v2070 = vsub.s32 0, %v2069
      %v2071 = vrot.slane %v1751, %v2070
      %v2072 = vlaneseq
      %v2073 = vshrl.u32 %v2072, 7
      %v2074 = vsub.s32 0, %v2073
      %v2075 = vrot.slane %v1753, %v2074
      %v2076 = vlaneseq
      %v2077 = vshrl.u32 %v2076, 7
      %v2078 = vsub.s32 0, %v2077
      %v2079 = vrot.slane %v1755, %v2078
      %v2080 = vlaneseq
      %v2081 = vshrl.u32 %v2080, 7
      %v2082 = vsub.s32 0, %v2081
      %v2083 = vrot.slane %v1779, %v2082
      %v2084 = vlaneseq
      %v2085 = vshrl.u32 %v2084, 7
      %v2086 = vsub.s32 0, %v2085
      %v2087 = vrot.slane %v1793, %v2086
      %v2088 = vlaneseq
      %v2089 = vshrl.u32 %v2088, 7
      %v2090 = vsub.s32 0, %v2089
      %v2091 = vrot.slane %v1801, %v2090
      %v2092 = vlaneseq
      %v2093 = vshrl.u32 %v2092, 7
      %v2094 = vsub.s32 0, %v2093
      %v2095 = vrot.slane %v1803, %v2094
      %v2096 = vlaneseq
      %v2097 = vshrl.u32 %v2096, 7
      %v2098 = vsub.s32 0, %v2097
      %v2099 = vrot.slane %v1786, %v2098
      %v2100 = vlaneseq
      %v2101 = vshrl.u32 %v2100, 7
      %v2102 = vsub.s32 0, %v2101
      %v2103 = vrot.slane %v1800, %v2102
      %v2104 = vlaneseq
      %v2105 = vshrl.u32 %v2104, 7
      %v2106 = vsub.s32 0, %v2105
      %v2107 = vrot.slane %v1802, %v2106
      %v2108 = vlaneseq
      %v2109 = vshrl.u32 %v2108, 7
      %v2110 = vsub.s32 0, %v2109
      %v2111 = vrot.slane %v1804, %v2110
      %v2112 = vlaneseq
      %v2113 = vshrl.u32 %v2112, 7
      %v2114 = vsub.s32 0, %v2113
      %v2115 = vrot.slane %v1828, %v2114
      %v2116 = vlaneseq
      %v2117 = vshrl.u32 %v2116, 7
      %v2118 = vsub.s32 0, %v2117
      %v2119 = vrot.slane %v1842, %v2118
      %v2120 = vlaneseq
      %v2121 = vshrl.u32 %v2120, 7
      %v2122 = vsub.s32 0, %v2121
      %v2123 = vrot.slane %v1850, %v2122
      %v2124 = vlaneseq
      %v2125 = vshrl.u32 %v2124, 7
      %v2126 = vsub.s32 0, %v2125
      %v2127 = vrot.slane %v1852, %v2126
      %v2128 = vlaneseq
      %v2129 = vshrl.u32 %v2128, 7
      %v2130 = vsub.s32 0, %v2129
      %v2131 = vrot.slane %v1835, %v2130
      %v2132 = vlaneseq
      %v2133 = vshrl.u32 %v2132, 7
      %v2134 = vsub.s32 0, %v2133
      %v2135 = vrot.slane %v1849, %v2134
      %v2136 = vlaneseq
      %v2137 = vshrl.u32 %v2136, 7
      %v2138 = vsub.s32 0, %v2137
      %v2139 = vrot.slane %v1851, %v2138
      %v2140 = vlaneseq
      %v2141 = vshrl.u32 %v2140, 7
      %v2142 = vsub.s32 0, %v2141
      %v2143 = vrot.slane %v1853, %v2142
      %v2144 = vlaneseq
      %v2145 = vshrl.u32 %v2144, 7
      %v2146 = vsub.s32 0, %v2145
      %v2147 = vrot.slane %v1877, %v2146
      %v2148 = vlaneseq
      %v2149 = vshrl.u32 %v2148, 7
      %v2150 = vsub.s32 0, %v2149
      %v2151 = vrot.slane %v1891, %v2150
      %v2152 = vlaneseq
      %v2153 = vshrl.u32 %v2152, 7
      %v2154 = vsub.s32 0, %v2153
      %v2155 = vrot.slane %v1899, %v2154
      %v2156 = vlaneseq
      %v2157 = vshrl.u32 %v2156, 7
      %v2158 = vsub.s32 0, %v2157
      %v2159 = vrot.slane %v1901, %v2158
      %v2160 = vlaneseq
      %v2161 = vshrl.u32 %v2160, 7
      %v2162 = vsub.s32 0, %v2161
      %v2163 = vrot.slane %v1884, %v2162
      %v2164 = vlaneseq
      %v2165 = vshrl.u32 %v2164, 7
      %v2166 = vsub.s32 0, %v2165
      %v2167 = vrot.slane %v1898, %v2166
      %v2168 = vlaneseq
      %v2169 = vshrl.u32 %v2168, 7
      %v2170 = vsub.s32 0, %v2169
      %v2171 = vrot.slane %v1900, %v2170
      %v2172 = vlaneseq
      %v2173 = vshrl.u32 %v2172, 7
      %v2174 = vsub.s32 0, %v2173
      %v2175 = vrot.slane %v1902, %v2174
      %v2176 = vlaneseq
      %v2177 = vshrl.u32 %v2176, 7
      %v2178 = vsub.s32 0, %v2177
      %v2179 = vrot.slane %v1926, %v2178
      %v2180 = vlaneseq
      %v2181 = vshrl.u32 %v2180, 7
      %v2182 = vsub.s32 0, %v2181
      %v2183 = vrot.slane %v1940, %v2182
      %v2184 = vlaneseq
      %v2185 = vshrl.u32 %v2184, 7
      %v2186 = vsub.s32 0, %v2185
      %v2187 = vrot.slane %v1948, %v2186
      %v2188 = vlaneseq
      %v2189 = vshrl.u32 %v2188, 7
      %v2190 = vsub.s32 0, %v2189
      %v2191 = vrot.slane %v1950, %v2190
      %v2192 = vlaneseq
      %v2193 = vshrl.u32 %v2192, 7
      %v2194 = vsub.s32 0, %v2193
      %v2195 = vrot.slane %v1933, %v2194
      %v2196 = vlaneseq
      %v2197 = vshrl.u32 %v2196, 7
      %v2198 = vsub.s32 0, %v2197
      %v2199 = vrot.slane %v1947, %v2198
      %v2200 = vlaneseq
      %v2201 = vshrl.u32 %v2200, 7
      %v2202 = vsub.s32 0, %v2201
      %v2203 = vrot.slane %v1949, %v2202
      %v2204 = vlaneseq
      %v2205 = vshrl.u32 %v2204, 7
      %v2206 = vsub.s32 0, %v2205
      %v2207 = vrot.slane %v1951, %v2206
      %v2272 = vmul.f32 %v854, %v1955
      %v2273 = vmul.f32 %v858, %v1955
      %v2274 = vmul.f32 %v865, %v1959
      %v2275 = vmul.f32 %v869, %v1959
      %v2276 = vmul.f32 %v876, %v1963
      %v2277 = vmul.f32 %v880, %v1963
      %v2278 = vmul.f32 %v887, %v1967
      %v2279 = vmul.f32 %v891, %v1967
      %v2280 = vmul.f32 %v898, %v1971
      %v2281 = vmul.f32 %v902, %v1971
      %v2282 = vmul.f32 %v909, %v1975
      %v2283 = vmul.f32 %v913, %v1975
      %v2284 = vmul.f32 %v920, %v1979
      %v2285 = vmul.f32 %v924, %v1979
      %v2286 = vmul.f32 %v931, %v1983
      %v2287 = vmul.f32 %v935, %v1983
      %v2288 = vmul.f32 %v942, %v1987
      %v2289 = vmul.f32 %v946, %v1987
      %v2290 = vmul.f32 %v953, %v1991
      %v2291 = vmul.f32 %v957, %v1991
      %v2292 = vmul.f32 %v964, %v1995
      %v2293 = vmul.f32 %v968, %v1995
      %v2294 = vmul.f32 %v975, %v1999
      %v2295 = vmul.f32 %v979, %v1999
      %v2296 = vmul.f32 %v986, %v2003
      %v2297 = vmul.f32 %v990, %v2003
      %v2298 = vmul.f32 %v997, %v2007
      %v2299 = vmul.f32 %v1001, %v2007
      %v2300 = vmul.f32 %v1008, %v2011
      %v2301 = vmul.f32 %v1012, %v2011
      %v2302 = vmul.f32 %v1019, %v2015
      %v2303 = vmul.f32 %v1023, %v2015
      %v2304 = vmul.f32 %v1030, %v2019
      %v2305 = vmul.f32 %v1034, %v2019
      %v2306 = vmul.f32 %v1041, %v2023
      %v2307 = vmul.f32 %v1045, %v2023
      %v2308 = vmul.f32 %v1052, %v2027
      %v2309 = vmul.f32 %v1056, %v2027
      %v2310 = vmul.f32 %v1063, %v2031
      %v2311 = vmul.f32 %v1067, %v2031
      %v2312 = vmul.f32 %v1074, %v2035
      %v2313 = vmul.f32 %v1078, %v2035
      %v2314 = vmul.f32 %v1085, %v2039
      %v2315 = vmul.f32 %v1089, %v2039
      %v2316 = vmul.f32 %v1096, %v2043
      %v2317 = vmul.f32 %v1100, %v2043
      %v2318 = vmul.f32 %v1107, %v2047
      %v2319 = vmul.f32 %v1111, %v2047
      %v2320 = vmul.f32 %v1118, %v2051
      %v2321 = vmul.f32 %v1122, %v2051
      %v2322 = vmul.f32 %v1129, %v2055
      %v2323 = vmul.f32 %v1133, %v2055
      %v2324 = vmul.f32 %v1140, %v2059
      %v2325 = vmul.f32 %v1144, %v2059
      %v2326 = vmul.f32 %v1151, %v2063
      %v2327 = vmul.f32 %v1155, %v2063
      %v2328 = vmul.f32 %v1162, %v2067
      %v2329 = vmul.f32 %v1166, %v2067
      %v2330 = vmul.f32 %v1173, %v2071
      %v2331 = vmul.f32 %v1177, %v2071
      %v2332 = vmul.f32 %v1184, %v2075
      %v2333 = vmul.f32 %v1188, %v2075
      %v2334 = vmul.f32 %v1195, %v2079
      %v2335 = vmul.f32 %v1199, %v2079
      %v2336 = vmul.f32 %v1206, %v2083
      %v2337 = vmul.f32 %v1210, %v2083
      %v2338 = vmul.f32 %v1217, %v2087
      %v2339 = vmul.f32 %v1221, %v2087
      %v2340 = vmul.f32 %v1228, %v2091
      %v2341 = vmul.f32 %v1232, %v2091
      %v2342 = vmul.f32 %v1239, %v2095
      %v2343 = vmul.f32 %v1243, %v2095
      %v2344 = vmul.f32 %v1250, %v2099
      %v2345 = vmul.f32 %v1254, %v2099
      %v2346 = vmul.f32 %v1261, %v2103
      %v2347 = vmul.f32 %v1265, %v2103
      %v2348 = vmul.f32 %v1272, %v2107
      %v2349 = vmul.f32 %v1276, %v2107
      %v2350 = vmul.f32 %v1283, %v2111
      %v2351 = vmul.f32 %v1287, %v2111
      %v2352 = vmul.f32 %v1294, %v2115
      %v2353 = vmul.f32 %v1298, %v2115
      %v2354 = vmul.f32 %v1305, %v2119
      %v2355 = vmul.f32 %v1309, %v2119
      %v2356 = vmul.f32 %v1316, %v2123
      %v2357 = vmul.f32 %v1320, %v2123
      %v2358 = vmul.f32 %v1327, %v2127
      %v2359 = vmul.f32 %v1331, %v2127
      %v2360 = vmul.f32 %v1338, %v2131
      %v2361 = vmul.f32 %v1342, %v2131
      %v2362 = vmul.f32 %v1349, %v2135
      %v2363 = vmul.f32 %v1353, %v2135
      %v2364 = vmul.f32 %v1360, %v2139
      %v2365 = vmul.f32 %v1364, %v2139
      %v2366 = vmul.f32 %v1371, %v2143
      %v2367 = vmul.f32 %v1375, %v2143
      %v2368 = vmul.f32 %v1382, %v2147
      %v2369 = vmul.f32 %v1386, %v2147
      %v2370 = vmul.f32 %v1393, %v2151
      %v2371 = vmul.f32 %v1397, %v2151
      %v2372 = vmul.f32 %v1404, %v2155
      %v2373 = vmul.f32 %v1408, %v2155
      %v2374 = vmul.f32 %v1415, %v2159
      %v2375 = vmul.f32 %v1419, %v2159
      %v2376 = vmul.f32 %v1426, %v2163
      %v2377 = vmul.f32 %v1430, %v2163
      %v2378 = vmul.f32 %v1437, %v2167
      %v2379 = vmul.f32 %v1441, %v2167
      %v2380 = vmul.f32 %v1448, %v2171
      %v2381 = vmul.f32 %v1452, %v2171
      %v2382 = vmul.f32 %v1459, %v2175
      %v2383 = vmul.f32 %v1463, %v2175
      %v2384 = vmul.f32 %v1470, %v2179
      %v2385 = vmul.f32 %v1474, %v2179
      %v2386 = vmul.f32 %v1481, %v2183
      %v2387 = vmul.f32 %v1485, %v2183
      %v2388 = vmul.f32 %v1492, %v2187
      %v2389 = vmul.f32 %v1496, %v2187
      %v2390 = vmul.f32 %v1503, %v2191
      %v2391 = vmul.f32 %v1507, %v2191
      %v2392 = vmul.f32 %v1514, %v2195
      %v2393 = vmul.f32 %v1518, %v2195
      %v2394 = vmul.f32 %v1525, %v2199
      %v2395 = vmul.f32 %v1529, %v2199
      %v2396 = vmul.f32 %v1536, %v2203
      %v2397 = vmul.f32 %v1540, %v2203
      %v2398 = vmul.f32 %v1547, %v2207
      %v2399 = vmul.f32 %v1551, %v2207
      %v2400 = vcombine.low %v2272, %v2276
      %v2401 = vcombine.high %v2272, %v2276
      %v2403 = vunpack.c.l.s4 1983009808
      %v2404 = vunpack.c.0.s8 %v2403
      %v2405 = vlaneseq
      %v2406 = vshrl.u32 %v2405, 7
      %v2407 = vsub.s32 %v2404, %v2406
      %v2408 = vrot.slane %v2400, %v2407
      %v2410 = vunpack.c.l.s4 1983009808
      %v2411 = vunpack.c.0.s8 %v2410
      %v2412 = vlaneseq
      %v2413 = vshrl.u32 %v2412, 7
      %v2414 = vsub.s32 %v2411, %v2413
      %v2415 = vrot.slane %v2401, %v2414
      %v2416 = vcombine.low %v2274, %v2278
      %v2417 = vcombine.high %v2274, %v2278
      %v2419 = vunpack.c.l.s4 1983009808
      %v2420 = vunpack.c.0.s8 %v2419
      %v2421 = vlaneseq
      %v2422 = vshrl.u32 %v2421, 7
      %v2423 = vsub.s32 %v2420, %v2422
      %v2424 = vrot.slane %v2416, %v2423
      %v2426 = vunpack.c.l.s4 1983009808
      %v2427 = vunpack.c.0.s8 %v2426
      %v2428 = vlaneseq
      %v2429 = vshrl.u32 %v2428, 7
      %v2430 = vsub.s32 %v2427, %v2429
      %v2431 = vrot.slane %v2417, %v2430
      %v2432 = vcombine.low %v2280, %v2284
      %v2433 = vcombine.high %v2280, %v2284
      %v2435 = vunpack.c.l.s4 1983009808
      %v2436 = vunpack.c.0.s8 %v2435
      %v2437 = vlaneseq
      %v2438 = vshrl.u32 %v2437, 7
      %v2439 = vsub.s32 %v2436, %v2438
      %v2440 = vrot.slane %v2432, %v2439
      %v2442 = vunpack.c.l.s4 1983009808
      %v2443 = vunpack.c.0.s8 %v2442
      %v2444 = vlaneseq
      %v2445 = vshrl.u32 %v2444, 7
      %v2446 = vsub.s32 %v2443, %v2445
      %v2447 = vrot.slane %v2433, %v2446
      %v2448 = vcombine.low %v2282, %v2286
      %v2449 = vcombine.high %v2282, %v2286
      %v2451 = vunpack.c.l.s4 1983009808
      %v2452 = vunpack.c.0.s8 %v2451
      %v2453 = vlaneseq
      %v2454 = vshrl.u32 %v2453, 7
      %v2455 = vsub.s32 %v2452, %v2454
      %v2456 = vrot.slane %v2448, %v2455
      %v2458 = vunpack.c.l.s4 1983009808
      %v2459 = vunpack.c.0.s8 %v2458
      %v2460 = vlaneseq
      %v2461 = vshrl.u32 %v2460, 7
      %v2462 = vsub.s32 %v2459, %v2461
      %v2463 = vrot.slane %v2449, %v2462
      %v2464 = vcombine.low %v2408, %v2424
      %v2465 = vcombine.high %v2408, %v2424
      %v2467 = vunpack.c.l.s4 1934713408
      %v2468 = vunpack.c.0.s8 %v2467
      %v2469 = vlaneseq
      %v2470 = vshrl.u32 %v2469, 7
      %v2471 = vsub.s32 %v2468, %v2470
      %v2472 = vrot.slane %v2464, %v2471
      %v2474 = vunpack.c.l.s4 1934713408
      %v2475 = vunpack.c.0.s8 %v2474
      %v2476 = vlaneseq
      %v2477 = vshrl.u32 %v2476, 7
      %v2478 = vsub.s32 %v2475, %v2477
      %v2479 = vrot.slane %v2465, %v2478
      %v2480 = vcombine.low %v2415, %v2431
      %v2481 = vcombine.high %v2415, %v2431
      %v2483 = vunpack.c.l.s4 1934713408
      %v2484 = vunpack.c.0.s8 %v2483
      %v2485 = vlaneseq
      %v2486 = vshrl.u32 %v2485, 7
      %v2487 = vsub.s32 %v2484, %v2486
      %v2488 = vrot.slane %v2480, %v2487
      %v2490 = vunpack.c.l.s4 1934713408
      %v2491 = vunpack.c.0.s8 %v2490
      %v2492 = vlaneseq
      %v2493 = vshrl.u32 %v2492, 7
      %v2494 = vsub.s32 %v2491, %v2493
      %v2495 = vrot.slane %v2481, %v2494
      %v2496 = vcombine.low %v2440, %v2456
      %v2497 = vcombine.high %v2440, %v2456
      %v2499 = vunpack.c.l.s4 1934713408
      %v2500 = vunpack.c.0.s8 %v2499
      %v2501 = vlaneseq
      %v2502 = vshrl.u32 %v2501, 7
      %v2503 = vsub.s32 %v2500, %v2502
      %v2504 = vrot.slane %v2496, %v2503
      %v2506 = vunpack.c.l.s4 1934713408
      %v2507 = vunpack.c.0.s8 %v2506
      %v2508 = vlaneseq
      %v2509 = vshrl.u32 %v2508, 7
      %v2510 = vsub.s32 %v2507, %v2509
      %v2511 = vrot.slane %v2497, %v2510
      %v2512 = vcombine.low %v2447, %v2463
      %v2513 = vcombine.high %v2447, %v2463
      %v2515 = vunpack.c.l.s4 1934713408
      %v2516 = vunpack.c.0.s8 %v2515
      %v2517 = vlaneseq
      %v2518 = vshrl.u32 %v2517, 7
      %v2519 = vsub.s32 %v2516, %v2518
      %v2520 = vrot.slane %v2512, %v2519
      %v2522 = vunpack.c.l.s4 1934713408
      %v2523 = vunpack.c.0.s8 %v2522
      %v2524 = vlaneseq
      %v2525 = vshrl.u32 %v2524, 7
      %v2526 = vsub.s32 %v2523, %v2525
      %v2527 = vrot.slane %v2513, %v2526
      %v2528 = vcombine.low %v2472, %v2504
      %v2529 = vcombine.high %v2472, %v2504
      %v2530 = vcombine.low %v2479, %v2511
      %v2531 = vcombine.high %v2479, %v2511
      %v2532 = vcombine.low %v2488, %v2520
      %v2533 = vcombine.high %v2488, %v2520
      %v2534 = vcombine.low %v2495, %v2527
      %v2535 = vcombine.high %v2495, %v2527
      %v2536 = vcombine.low %v2288, %v2292
      %v2537 = vcombine.high %v2288, %v2292
      %v2539 = vunpack.c.l.s4 1983009808
      %v2540 = vunpack.c.0.s8 %v2539
      %v2541 = vlaneseq
      %v2542 = vshrl.u32 %v2541, 7
      %v2543 = vsub.s32 %v2540, %v2542
      %v2544 = vrot.slane %v2536, %v2543
      %v2546 = vunpack.c.l.s4 1983009808
      %v2547 = vunpack.c.0.s8 %v2546
      %v2548 = vlaneseq
      %v2549 = vshrl.u32 %v2548, 7
      %v2550 = vsub.s32 %v2547, %v2549
      %v2551 = vrot.slane %v2537, %v2550
      %v2552 = vcombine.low %v2290, %v2294
      %v2553 = vcombine.high %v2290, %v2294
      %v2555 = vunpack.c.l.s4 1983009808
      %v2556 = vunpack.c.0.s8 %v2555
      %v2557 = vlaneseq
      %v2558 = vshrl.u32 %v2557, 7
      %v2559 = vsub.s32 %v2556, %v2558
      %v2560 = vrot.slane %v2552, %v2559
      %v2562 = vunpack.c.l.s4 1983009808
      %v2563 = vunpack.c.0.s8 %v2562
      %v2564 = vlaneseq
      %v2565 = vshrl.u32 %v2564, 7
      %v2566 = vsub.s32 %v2563, %v2565
      %v2567 = vrot.slane %v2553, %v2566
      %v2568 = vcombine.low %v2296, %v2300
      %v2569 = vcombine.high %v2296, %v2300
      %v2571 = vunpack.c.l.s4 1983009808
      %v2572 = vunpack.c.0.s8 %v2571
      %v2573 = vlaneseq
      %v2574 = vshrl.u32 %v2573, 7
      %v2575 = vsub.s32 %v2572, %v2574
      %v2576 = vrot.slane %v2568, %v2575
      %v2578 = vunpack.c.l.s4 1983009808
      %v2579 = vunpack.c.0.s8 %v2578
      %v2580 = vlaneseq
      %v2581 = vshrl.u32 %v2580, 7
      %v2582 = vsub.s32 %v2579, %v2581
      %v2583 = vrot.slane %v2569, %v2582
      %v2584 = vcombine.low %v2298, %v2302
      %v2585 = vcombine.high %v2298, %v2302
      %v2587 = vunpack.c.l.s4 1983009808
      %v2588 = vunpack.c.0.s8 %v2587
      %v2589 = vlaneseq
      %v2590 = vshrl.u32 %v2589, 7
      %v2591 = vsub.s32 %v2588, %v2590
      %v2592 = vrot.slane %v2584, %v2591
      %v2594 = vunpack.c.l.s4 1983009808
      %v2595 = vunpack.c.0.s8 %v2594
      %v2596 = vlaneseq
      %v2597 = vshrl.u32 %v2596, 7
      %v2598 = vsub.s32 %v2595, %v2597
      %v2599 = vrot.slane %v2585, %v2598
      %v2600 = vcombine.low %v2544, %v2560
      %v2601 = vcombine.high %v2544, %v2560
      %v2603 = vunpack.c.l.s4 1934713408
      %v2604 = vunpack.c.0.s8 %v2603
      %v2605 = vlaneseq
      %v2606 = vshrl.u32 %v2605, 7
      %v2607 = vsub.s32 %v2604, %v2606
      %v2608 = vrot.slane %v2600, %v2607
      %v2610 = vunpack.c.l.s4 1934713408
      %v2611 = vunpack.c.0.s8 %v2610
      %v2612 = vlaneseq
      %v2613 = vshrl.u32 %v2612, 7
      %v2614 = vsub.s32 %v2611, %v2613
      %v2615 = vrot.slane %v2601, %v2614
      %v2616 = vcombine.low %v2551, %v2567
      %v2617 = vcombine.high %v2551, %v2567
      %v2619 = vunpack.c.l.s4 1934713408
      %v2620 = vunpack.c.0.s8 %v2619
      %v2621 = vlaneseq
      %v2622 = vshrl.u32 %v2621, 7
      %v2623 = vsub.s32 %v2620, %v2622
      %v2624 = vrot.slane %v2616, %v2623
      %v2626 = vunpack.c.l.s4 1934713408
      %v2627 = vunpack.c.0.s8 %v2626
      %v2628 = vlaneseq
      %v2629 = vshrl.u32 %v2628, 7
      %v2630 = vsub.s32 %v2627, %v2629
      %v2631 = vrot.slane %v2617, %v2630
      %v2632 = vcombine.low %v2576, %v2592
      %v2633 = vcombine.high %v2576, %v2592
      %v2635 = vunpack.c.l.s4 1934713408
      %v2636 = vunpack.c.0.s8 %v2635
      %v2637 = vlaneseq
      %v2638 = vshrl.u32 %v2637, 7
      %v2639 = vsub.s32 %v2636, %v2638
      %v2640 = vrot.slane %v2632, %v2639
      %v2642 = vunpack.c.l.s4 1934713408
      %v2643 = vunpack.c.0.s8 %v2642
      %v2644 = vlaneseq
      %v2645 = vshrl.u32 %v2644, 7
      %v2646 = vsub.s32 %v2643, %v2645
      %v2647 = vrot.slane %v2633, %v2646
      %v2648 = vcombine.low %v2583, %v2599
      %v2649 = vcombine.high %v2583, %v2599
      %v2651 = vunpack.c.l.s4 1934713408
      %v2652 = vunpack.c.0.s8 %v2651
      %v2653 = vlaneseq
      %v2654 = vshrl.u32 %v2653, 7
      %v2655 = vsub.s32 %v2652, %v2654
      %v2656 = vrot.slane %v2648, %v2655
      %v2658 = vunpack.c.l.s4 1934713408
      %v2659 = vunpack.c.0.s8 %v2658
      %v2660 = vlaneseq
      %v2661 = vshrl.u32 %v2660, 7
      %v2662 = vsub.s32 %v2659, %v2661
      %v2663 = vrot.slane %v2649, %v2662
      %v2664 = vcombine.low %v2608, %v2640
      %v2665 = vcombine.high %v2608, %v2640
      %v2666 = vcombine.low %v2615, %v2647
      %v2667 = vcombine.high %v2615, %v2647
      %v2668 = vcombine.low %v2624, %v2656
      %v2669 = vcombine.high %v2624, %v2656
      %v2670 = vcombine.low %v2631, %v2663
      %v2671 = vcombine.high %v2631, %v2663
      %v2672 = vcombine.low %v2304, %v2308
      %v2673 = vcombine.high %v2304, %v2308
      %v2675 = vunpack.c.l.s4 1983009808
      %v2676 = vunpack.c.0.s8 %v2675
      %v2677 = vlaneseq
      %v2678 = vshrl.u32 %v2677, 7
      %v2679 = vsub.s32 %v2676, %v2678
      %v2680 = vrot.slane %v2672, %v2679
      %v2682 = vunpack.c.l.s4 1983009808
      %v2683 = vunpack.c.0.s8 %v2682
      %v2684 = vlaneseq
      %v2685 = vshrl.u32 %v2684, 7
      %v2686 = vsub.s32 %v2683, %v2685
      %v2687 = vrot.slane %v2673, %v2686
      %v2688 = vcombine.low %v2306, %v2310
      %v2689 = vcombine.high %v2306, %v2310
      %v2691 = vunpack.c.l.s4 1983009808
      %v2692 = vunpack.c.0.s8 %v2691
      %v2693 = vlaneseq
      %v2694 = vshrl.u32 %v2693, 7
      %v2695 = vsub.s32 %v2692, %v2694
      %v2696 = vrot.slane %v2688, %v2695
      %v2698 = vunpack.c.l.s4 1983009808
      %v2699 = vunpack.c.0.s8 %v2698
      %v2700 = vlaneseq
      %v2701 = vshrl.u32 %v2700, 7
      %v2702 = vsub.s32 %v2699, %v2701
      %v2703 = vrot.slane %v2689, %v2702
      %v2704 = vcombine.low %v2312, %v2316
      %v2705 = vcombine.high %v2312, %v2316
      %v2707 = vunpack.c.l.s4 1983009808
      %v2708 = vunpack.c.0.s8 %v2707
      %v2709 = vlaneseq
      %v2710 = vshrl.u32 %v2709, 7
      %v2711 = vsub.s32 %v2708, %v2710
      %v2712 = vrot.slane %v2704, %v2711
      %v2714 = vunpack.c.l.s4 1983009808
      %v2715 = vunpack.c.0.s8 %v2714
      %v2716 = vlaneseq
      %v2717 = vshrl.u32 %v2716, 7
      %v2718 = vsub.s32 %v2715, %v2717
      %v2719 = vrot.slane %v2705, %v2718
      %v2720 = vcombine.low %v2314, %v2318
      %v2721 = vcombine.high %v2314, %v2318
      %v2723 = vunpack.c.l.s4 1983009808
      %v2724 = vunpack.c.0.s8 %v2723
      %v2725 = vlaneseq
      %v2726 = vshrl.u32 %v2725, 7
      %v2727 = vsub.s32 %v2724, %v2726
      %v2728 = vrot.slane %v2720, %v2727
      %v2730 = vunpack.c.l.s4 1983009808
      %v2731 = vunpack.c.0.s8 %v2730
      %v2732 = vlaneseq
      %v2733 = vshrl.u32 %v2732, 7
      %v2734 = vsub.s32 %v2731, %v2733
      %v2735 = vrot.slane %v2721, %v2734
      %v2736 = vcombine.low %v2680, %v2696
      %v2737 = vcombine.high %v2680, %v2696
      %v2739 = vunpack.c.l.s4 1934713408
      %v2740 = vunpack.c.0.s8 %v2739
      %v2741 = vlaneseq
      %v2742 = vshrl.u32 %v2741, 7
      %v2743 = vsub.s32 %v2740, %v2742
      %v2744 = vrot.slane %v2736, %v2743
      %v2746 = vunpack.c.l.s4 1934713408
      %v2747 = vunpack.c.0.s8 %v2746
      %v2748 = vlaneseq
      %v2749 = vshrl.u32 %v2748, 7
      %v2750 = vsub.s32 %v2747, %v2749
      %v2751 = vrot.slane %v2737, %v2750
      %v2752 = vcombine.low %v2687, %v2703
      %v2753 = vcombine.high %v2687, %v2703
      %v2755 = vunpack.c.l.s4 1934713408
      %v2756 = vunpack.c.0.s8 %v2755
      %v2757 = vlaneseq
      %v2758 = vshrl.u32 %v2757, 7
      %v2759 = vsub.s32 %v2756, %v2758
      %v2760 = vrot.slane %v2752, %v2759
      %v2762 = vunpack.c.l.s4 1934713408
      %v2763 = vunpack.c.0.s8 %v2762
      %v2764 = vlaneseq
      %v2765 = vshrl.u32 %v2764, 7
      %v2766 = vsub.s32 %v2763, %v2765
      %v2767 = vrot.slane %v2753, %v2766
      %v2768 = vcombine.low %v2712, %v2728
      %v2769 = vcombine.high %v2712, %v2728
      %v2771 = vunpack.c.l.s4 1934713408
      %v2772 = vunpack.c.0.s8 %v2771
      %v2773 = vlaneseq
      %v2774 = vshrl.u32 %v2773, 7
      %v2775 = vsub.s32 %v2772, %v2774
      %v2776 = vrot.slane %v2768, %v2775
      %v2778 = vunpack.c.l.s4 1934713408
      %v2779 = vunpack.c.0.s8 %v2778
      %v2780 = vlaneseq
      %v2781 = vshrl.u32 %v2780, 7
      %v2782 = vsub.s32 %v2779, %v2781
      %v2783 = vrot.slane %v2769, %v2782
      %v2784 = vcombine.low %v2719, %v2735
      %v2785 = vcombine.high %v2719, %v2735
      %v2787 = vunpack.c.l.s4 1934713408
      %v2788 = vunpack.c.0.s8 %v2787
      %v2789 = vlaneseq
      %v2790 = vshrl.u32 %v2789, 7
      %v2791 = vsub.s32 %v2788, %v2790
      %v2792 = vrot.slane %v2784, %v2791
      %v2794 = vunpack.c.l.s4 1934713408
      %v2795 = vunpack.c.0.s8 %v2794
      %v2796 = vlaneseq
      %v2797 = vshrl.u32 %v2796, 7
      %v2798 = vsub.s32 %v2795, %v2797
      %v2799 = vrot.slane %v2785, %v2798
      %v2800 = vcombine.low %v2744, %v2776
      %v2801 = vcombine.high %v2744, %v2776
      %v2802 = vcombine.low %v2751, %v2783
      %v2803 = vcombine.high %v2751, %v2783
      %v2804 = vcombine.low %v2760, %v2792
      %v2805 = vcombine.high %v2760, %v2792
      %v2806 = vcombine.low %v2767, %v2799
      %v2807 = vcombine.high %v2767, %v2799
      %v2808 = vcombine.low %v2320, %v2324
      %v2809 = vcombine.high %v2320, %v2324
      %v2811 = vunpack.c.l.s4 1983009808
      %v2812 = vunpack.c.0.s8 %v2811
      %v2813 = vlaneseq
      %v2814 = vshrl.u32 %v2813, 7
      %v2815 = vsub.s32 %v2812, %v2814
      %v2816 = vrot.slane %v2808, %v2815
      %v2818 = vunpack.c.l.s4 1983009808
      %v2819 = vunpack.c.0.s8 %v2818
      %v2820 = vlaneseq
      %v2821 = vshrl.u32 %v2820, 7
      %v2822 = vsub.s32 %v2819, %v2821
      %v2823 = vrot.slane %v2809, %v2822
      %v2824 = vcombine.low %v2322, %v2326
      %v2825 = vcombine.high %v2322, %v2326
      %v2827 = vunpack.c.l.s4 1983009808
      %v2828 = vunpack.c.0.s8 %v2827
      %v2829 = vlaneseq
      %v2830 = vshrl.u32 %v2829, 7
      %v2831 = vsub.s32 %v2828, %v2830
      %v2832 = vrot.slane %v2824, %v2831
      %v2834 = vunpack.c.l.s4 1983009808
      %v2835 = vunpack.c.0.s8 %v2834
      %v2836 = vlaneseq
      %v2837 = vshrl.u32 %v2836, 7
      %v2838 = vsub.s32 %v2835, %v2837
      %v2839 = vrot.slane %v2825, %v2838
      %v2840 = vcombine.low %v2328, %v2332
      %v2841 = vcombine.high %v2328, %v2332
      %v2843 = vunpack.c.l.s4 1983009808
      %v2844 = vunpack.c.0.s8 %v2843
      %v2845 = vlaneseq
      %v2846 = vshrl.u32 %v2845, 7
      %v2847 = vsub.s32 %v2844, %v2846
      %v2848 = vrot.slane %v2840, %v2847
      %v2850 = vunpack.c.l.s4 1983009808
      %v2851 = vunpack.c.0.s8 %v2850
      %v2852 = vlaneseq
      %v2853 = vshrl.u32 %v2852, 7
      %v2854 = vsub.s32 %v2851, %v2853
      %v2855 = vrot.slane %v2841, %v2854
      %v2856 = vcombine.low %v2330, %v2334
      %v2857 = vcombine.high %v2330, %v2334
      %v2859 = vunpack.c.l.s4 1983009808
      %v2860 = vunpack.c.0.s8 %v2859
      %v2861 = vlaneseq
      %v2862 = vshrl.u32 %v2861, 7
      %v2863 = vsub.s32 %v2860, %v2862
      %v2864 = vrot.slane %v2856, %v2863
      %v2866 = vunpack.c.l.s4 1983009808
      %v2867 = vunpack.c.0.s8 %v2866
      %v2868 = vlaneseq
      %v2869 = vshrl.u32 %v2868, 7
      %v2870 = vsub.s32 %v2867, %v2869
      %v2871 = vrot.slane %v2857, %v2870
      %v2872 = vcombine.low %v2816, %v2832
      %v2873 = vcombine.high %v2816, %v2832
      %v2875 = vunpack.c.l.s4 1934713408
      %v2876 = vunpack.c.0.s8 %v2875
      %v2877 = vlaneseq
      %v2878 = vshrl.u32 %v2877, 7
      %v2879 = vsub.s32 %v2876, %v2878
      %v2880 = vrot.slane %v2872, %v2879
      %v2882 = vunpack.c.l.s4 1934713408
      %v2883 = vunpack.c.0.s8 %v2882
      %v2884 = vlaneseq
      %v2885 = vshrl.u32 %v2884, 7
      %v2886 = vsub.s32 %v2883, %v2885
      %v2887 = vrot.slane %v2873, %v2886
      %v2888 = vcombine.low %v2823, %v2839
      %v2889 = vcombine.high %v2823, %v2839
      %v2891 = vunpack.c.l.s4 1934713408
      %v2892 = vunpack.c.0.s8 %v2891
      %v2893 = vlaneseq
      %v2894 = vshrl.u32 %v2893, 7
      %v2895 = vsub.s32 %v2892, %v2894
      %v2896 = vrot.slane %v2888, %v2895
      %v2898 = vunpack.c.l.s4 1934713408
      %v2899 = vunpack.c.0.s8 %v2898
      %v2900 = vlaneseq
      %v2901 = vshrl.u32 %v2900, 7
      %v2902 = vsub.s32 %v2899, %v2901
      %v2903 = vrot.slane %v2889, %v2902
      %v2904 = vcombine.low %v2848, %v2864
      %v2905 = vcombine.high %v2848, %v2864
      %v2907 = vunpack.c.l.s4 1934713408
      %v2908 = vunpack.c.0.s8 %v2907
      %v2909 = vlaneseq
      %v2910 = vshrl.u32 %v2909, 7
      %v2911 = vsub.s32 %v2908, %v2910
      %v2912 = vrot.slane %v2904, %v2911
      %v2914 = vunpack.c.l.s4 1934713408
      %v2915 = vunpack.c.0.s8 %v2914
      %v2916 = vlaneseq
      %v2917 = vshrl.u32 %v2916, 7
      %v2918 = vsub.s32 %v2915, %v2917
      %v2919 = vrot.slane %v2905, %v2918
      %v2920 = vcombine.low %v2855, %v2871
      %v2921 = vcombine.high %v2855, %v2871
      %v2923 = vunpack.c.l.s4 1934713408
      %v2924 = vunpack.c.0.s8 %v2923
      %v2925 = vlaneseq
      %v2926 = vshrl.u32 %v2925, 7
      %v2927 = vsub.s32 %v2924, %v2926
      %v2928 = vrot.slane %v2920, %v2927
      %v2930 = vunpack.c.l.s4 1934713408
      %v2931 = vunpack.c.0.s8 %v2930
      %v2932 = vlaneseq
      %v2933 = vshrl.u32 %v2932, 7
      %v2934 = vsub.s32 %v2931, %v2933
      %v2935 = vrot.slane %v2921, %v2934
      %v2936 = vcombine.low %v2880, %v2912
      %v2937 = vcombine.high %v2880, %v2912
      %v2938 = vcombine.low %v2887, %v2919
      %v2939 = vcombine.high %v2887, %v2919
      %v2940 = vcombine.low %v2896, %v2928
      %v2941 = vcombine.high %v2896, %v2928
      %v2942 = vcombine.low %v2903, %v2935
      %v2943 = vcombine.high %v2903, %v2935
      %v2944 = vcombine.low %v2336, %v2340
      %v2945 = vcombine.high %v2336, %v2340
      %v2947 = vunpack.c.l.s4 1983009808
      %v2948 = vunpack.c.0.s8 %v2947
      %v2949 = vlaneseq
      %v2950 = vshrl.u32 %v2949, 7
      %v2951 = vsub.s32 %v2948, %v2950
      %v2952 = vrot.slane %v2944, %v2951
      %v2954 = vunpack.c.l.s4 1983009808
      %v2955 = vunpack.c.0.s8 %v2954
      %v2956 = vlaneseq
      %v2957 = vshrl.u32 %v2956, 7
      %v2958 = vsub.s32 %v2955, %v2957
      %v2959 = vrot.slane %v2945, %v2958
      %v2960 = vcombine.low %v2338, %v2342
      %v2961 = vcombine.high %v2338, %v2342
      %v2963 = vunpack.c.l.s4 1983009808
      %v2964 = vunpack.c.0.s8 %v2963
      %v2965 = vlaneseq
      %v2966 = vshrl.u32 %v2965, 7
      %v2967 = vsub.s32 %v2964, %v2966
      %v2968 = vrot.slane %v2960, %v2967
      %v2970 = vunpack.c.l.s4 1983009808
      %v2971 = vunpack.c.0.s8 %v2970
      %v2972 = vlaneseq
      %v2973 = vshrl.u32 %v2972, 7
      %v2974 = vsub.s32 %v2971, %v2973
      %v2975 = vrot.slane %v2961, %v2974
      %v2976 = vcombine.low %v2344, %v2348
      %v2977 = vcombine.high %v2344, %v2348
      %v2979 = vunpack.c.l.s4 1983009808
      %v2980 = vunpack.c.0.s8 %v2979
      %v2981 = vlaneseq
      %v2982 = vshrl.u32 %v2981, 7
      %v2983 = vsub.s32 %v2980, %v2982
      %v2984 = vrot.slane %v2976, %v2983
      %v2986 = vunpack.c.l.s4 1983009808
      %v2987 = vunpack.c.0.s8 %v2986
      %v2988 = vlaneseq
      %v2989 = vshrl.u32 %v2988, 7
      %v2990 = vsub.s32 %v2987, %v2989
      %v2991 = vrot.slane %v2977, %v2990
      %v2992 = vcombine.low %v2346, %v2350
      %v2993 = vcombine.high %v2346, %v2350
      %v2995 = vunpack.c.l.s4 1983009808
      %v2996 = vunpack.c.0.s8 %v2995
      %v2997 = vlaneseq
      %v2998 = vshrl.u32 %v2997, 7
      %v2999 = vsub.s32 %v2996, %v2998
      %v3000 = vrot.slane %v2992, %v2999
      %v3002 = vunpack.c.l.s4 1983009808
      %v3003 = vunpack.c.0.s8 %v3002
      %v3004 = vlaneseq
      %v3005 = vshrl.u32 %v3004, 7
      %v3006 = vsub.s32 %v3003, %v3005
      %v3007 = vrot.slane %v2993, %v3006
      %v3008 = vcombine.low %v2952, %v2968
      %v3009 = vcombine.high %v2952, %v2968
      %v3011 = vunpack.c.l.s4 1934713408
      %v3012 = vunpack.c.0.s8 %v3011
      %v3013 = vlaneseq
      %v3014 = vshrl.u32 %v3013, 7
      %v3015 = vsub.s32 %v3012, %v3014
      %v3016 = vrot.slane %v3008, %v3015
      %v3018 = vunpack.c.l.s4 1934713408
      %v3019 = vunpack.c.0.s8 %v3018
      %v3020 = vlaneseq
      %v3021 = vshrl.u32 %v3020, 7
      %v3022 = vsub.s32 %v3019, %v3021
      %v3023 = vrot.slane %v3009, %v3022
      %v3024 = vcombine.low %v2959, %v2975
      %v3025 = vcombine.high %v2959, %v2975
      %v3027 = vunpack.c.l.s4 1934713408
      %v3028 = vunpack.c.0.s8 %v3027
      %v3029 = vlaneseq
      %v3030 = vshrl.u32 %v3029, 7
      %v3031 = vsub.s32 %v3028, %v3030
      %v3032 = vrot.slane %v3024, %v3031
      %v3034 = vunpack.c.l.s4 1934713408
      %v3035 = vunpack.c.0.s8 %v3034
      %v3036 = vlaneseq
      %v3037 = vshrl.u32 %v3036, 7
      %v3038 = vsub.s32 %v3035, %v3037
      %v3039 = vrot.slane %v3025, %v3038
      %v3040 = vcombine.low %v2984, %v3000
      %v3041 = vcombine.high %v2984, %v3000
      %v3043 = vunpack.c.l.s4 1934713408
      %v3044 = vunpack.c.0.s8 %v3043
      %v3045 = vlaneseq
      %v3046 = vshrl.u32 %v3045, 7
      %v3047 = vsub.s32 %v3044, %v3046
      %v3048 = vrot.slane %v3040, %v3047
      %v3050 = vunpack.c.l.s4 1934713408
      %v3051 = vunpack.c.0.s8 %v3050
      %v3052 = vlaneseq
      %v3053 = vshrl.u32 %v3052, 7
      %v3054 = vsub.s32 %v3051, %v3053
      %v3055 = vrot.slane %v3041, %v3054
      %v3056 = vcombine.low %v2991, %v3007
      %v3057 = vcombine.high %v2991, %v3007
      %v3059 = vunpack.c.l.s4 1934713408
      %v3060 = vunpack.c.0.s8 %v3059
      %v3061 = vlaneseq
      %v3062 = vshrl.u32 %v3061, 7
      %v3063 = vsub.s32 %v3060, %v3062
      %v3064 = vrot.slane %v3056, %v3063
      %v3066 = vunpack.c.l.s4 1934713408
      %v3067 = vunpack.c.0.s8 %v3066
      %v3068 = vlaneseq
      %v3069 = vshrl.u32 %v3068, 7
      %v3070 = vsub.s32 %v3067, %v3069
      %v3071 = vrot.slane %v3057, %v3070
      %v3072 = vcombine.low %v3016, %v3048
      %v3073 = vcombine.high %v3016, %v3048
      %v3074 = vcombine.low %v3023, %v3055
      %v3075 = vcombine.high %v3023, %v3055
      %v3076 = vcombine.low %v3032, %v3064
      %v3077 = vcombine.high %v3032, %v3064
      %v3078 = vcombine.low %v3039, %v3071
      %v3079 = vcombine.high %v3039, %v3071
      %v3080 = vcombine.low %v2352, %v2356
      %v3081 = vcombine.high %v2352, %v2356
      %v3083 = vunpack.c.l.s4 1983009808
      %v3084 = vunpack.c.0.s8 %v3083
      %v3085 = vlaneseq
      %v3086 = vshrl.u32 %v3085, 7
      %v3087 = vsub.s32 %v3084, %v3086
      %v3088 = vrot.slane %v3080, %v3087
      %v3090 = vunpack.c.l.s4 1983009808
      %v3091 = vunpack.c.0.s8 %v3090
      %v3092 = vlaneseq
      %v3093 = vshrl.u32 %v3092, 7
      %v3094 = vsub.s32 %v3091, %v3093
      %v3095 = vrot.slane %v3081, %v3094
      %v3096 = vcombine.low %v2354, %v2358
      %v3097 = vcombine.high %v2354, %v2358
      %v3099 = vunpack.c.l.s4 1983009808
      %v3100 = vunpack.c.0.s8 %v3099
      %v3101 = vlaneseq
      %v3102 = vshrl.u32 %v3101, 7
      %v3103 = vsub.s32 %v3100, %v3102
      %v3104 = vrot.slane %v3096, %v3103
      %v3106 = vunpack.c.l.s4 1983009808
      %v3107 = vunpack.c.0.s8 %v3106
      %v3108 = vlaneseq
      %v3109 = vshrl.u32 %v3108, 7
      %v3110 = vsub.s32 %v3107, %v3109
      %v3111 = vrot.slane %v3097, %v3110
      %v3112 = vcombine.low %v2360, %v2364
      %v3113 = vcombine.high %v2360, %v2364
      %v3115 = vunpack.c.l.s4 1983009808
      %v3116 = vunpack.c.0.s8 %v3115
      %v3117 = vlaneseq
      %v3118 = vshrl.u32 %v3117, 7
      %v3119 = vsub.s32 %v3116, %v3118
      %v3120 = vrot.slane %v3112, %v3119
      %v3122 = vunpack.c.l.s4 1983009808
      %v3123 = vunpack.c.0.s8 %v3122
      %v3124 = vlaneseq
      %v3125 = vshrl.u32 %v3124, 7
      %v3126 = vsub.s32 %v3123, %v3125
      %v3127 = vrot.slane %v3113, %v3126
      %v3128 = vcombine.low %v2362, %v2366
      %v3129 = vcombine.high %v2362, %v2366
      %v3131 = vunpack.c.l.s4 1983009808
      %v3132 = vunpack.c.0.s8 %v3131
      %v3133 = vlaneseq
      %v3134 = vshrl.u32 %v3133, 7
      %v3135 = vsub.s32 %v3132, %v3134
      %v3136 = vrot.slane %v3128, %v3135
      %v3138 = vunpack.c.l.s4 1983009808
      %v3139 = vunpack.c.0.s8 %v3138
      %v3140 = vlaneseq
      %v3141 = vshrl.u32 %v3140, 7
      %v3142 = vsub.s32 %v3139, %v3141
      %v3143 = vrot.slane %v3129, %v3142
      %v3144 = vcombine.low %v3088, %v3104
      %v3145 = vcombine.high %v3088, %v3104
      %v3147 = vunpack.c.l.s4 1934713408
      %v3148 = vunpack.c.0.s8 %v3147
      %v3149 = vlaneseq
      %v3150 = vshrl.u32 %v3149, 7
      %v3151 = vsub.s32 %v3148, %v3150
      %v3152 = vrot.slane %v3144, %v3151
      %v3154 = vunpack.c.l.s4 1934713408
      %v3155 = vunpack.c.0.s8 %v3154
      %v3156 = vlaneseq
      %v3157 = vshrl.u32 %v3156, 7
      %v3158 = vsub.s32 %v3155, %v3157
      %v3159 = vrot.slane %v3145, %v3158
      %v3160 = vcombine.low %v3095, %v3111
      %v3161 = vcombine.high %v3095, %v3111
      %v3163 = vunpack.c.l.s4 1934713408
      %v3164 = vunpack.c.0.s8 %v3163
      %v3165 = vlaneseq
      %v3166 = vshrl.u32 %v3165, 7
      %v3167 = vsub.s32 %v3164, %v3166
      %v3168 = vrot.slane %v3160, %v3167
      %v3170 = vunpack.c.l.s4 1934713408
      %v3171 = vunpack.c.0.s8 %v3170
      %v3172 = vlaneseq
      %v3173 = vshrl.u32 %v3172, 7
      %v3174 = vsub.s32 %v3171, %v3173
      %v3175 = vrot.slane %v3161, %v3174
      %v3176 = vcombine.low %v3120, %v3136
      %v3177 = vcombine.high %v3120, %v3136
      %v3179 = vunpack.c.l.s4 1934713408
      %v3180 = vunpack.c.0.s8 %v3179
      %v3181 = vlaneseq
      %v3182 = vshrl.u32 %v3181, 7
      %v3183 = vsub.s32 %v3180, %v3182
      %v3184 = vrot.slane %v3176, %v3183
      %v3186 = vunpack.c.l.s4 1934713408
      %v3187 = vunpack.c.0.s8 %v3186
      %v3188 = vlaneseq
      %v3189 = vshrl.u32 %v3188, 7
      %v3190 = vsub.s32 %v3187, %v3189
      %v3191 = vrot.slane %v3177, %v3190
      %v3192 = vcombine.low %v3127, %v3143
      %v3193 = vcombine.high %v3127, %v3143
      %v3195 = vunpack.c.l.s4 1934713408
      %v3196 = vunpack.c.0.s8 %v3195
      %v3197 = vlaneseq
      %v3198 = vshrl.u32 %v3197, 7
      %v3199 = vsub.s32 %v3196, %v3198
      %v3200 = vrot.slane %v3192, %v3199
      %v3202 = vunpack.c.l.s4 1934713408
      %v3203 = vunpack.c.0.s8 %v3202
      %v3204 = vlaneseq
      %v3205 = vshrl.u32 %v3204, 7
      %v3206 = vsub.s32 %v3203, %v3205
      %v3207 = vrot.slane %v3193, %v3206
      %v3208 = vcombine.low %v3152, %v3184
      %v3209 = vcombine.high %v3152, %v3184
      %v3210 = vcombine.low %v3159, %v3191
      %v3211 = vcombine.high %v3159, %v3191
      %v3212 = vcombine.low %v3168, %v3200
      %v3213 = vcombine.high %v3168, %v3200
      %v3214 = vcombine.low %v3175, %v3207
      %v3215 = vcombine.high %v3175, %v3207
      %v3216 = vcombine.low %v2368, %v2372
      %v3217 = vcombine.high %v2368, %v2372
      %v3219 = vunpack.c.l.s4 1983009808
      %v3220 = vunpack.c.0.s8 %v3219
      %v3221 = vlaneseq
      %v3222 = vshrl.u32 %v3221, 7
      %v3223 = vsub.s32 %v3220, %v3222
      %v3224 = vrot.slane %v3216, %v3223
      %v3226 = vunpack.c.l.s4 1983009808
      %v3227 = vunpack.c.0.s8 %v3226
      %v3228 = vlaneseq
      %v3229 = vshrl.u32 %v3228, 7
      %v3230 = vsub.s32 %v3227, %v3229
      %v3231 = vrot.slane %v3217, %v3230
      %v3232 = vcombine.low %v2370, %v2374
      %v3233 = vcombine.high %v2370, %v2374
      %v3235 = vunpack.c.l.s4 1983009808
      %v3236 = vunpack.c.0.s8 %v3235
      %v3237 = vlaneseq
      %v3238 = vshrl.u32 %v3237, 7
      %v3239 = vsub.s32 %v3236, %v3238
      %v3240 = vrot.slane %v3232, %v3239
      %v3242 = vunpack.c.l.s4 1983009808
      %v3243 = vunpack.c.0.s8 %v3242
      %v3244 = vlaneseq
      %v3245 = vshrl.u32 %v3244, 7
      %v3246 = vsub.s32 %v3243, %v3245
      %v3247 = vrot.slane %v3233, %v3246
      %v3248 = vcombine.low %v2376, %v2380
      %v3249 = vcombine.high %v2376, %v2380
      %v3251 = vunpack.c.l.s4 1983009808
      %v3252 = vunpack.c.0.s8 %v3251
      %v3253 = vlaneseq
      %v3254 = vshrl.u32 %v3253, 7
      %v3255 = vsub.s32 %v3252, %v3254
      %v3256 = vrot.slane %v3248, %v3255
      %v3258 = vunpack.c.l.s4 1983009808
      %v3259 = vunpack.c.0.s8 %v3258
      %v3260 = vlaneseq
      %v3261 = vshrl.u32 %v3260, 7
      %v3262 = vsub.s32 %v3259, %v3261
      %v3263 = vrot.slane %v3249, %v3262
      %v3264 = vcombine.low %v2378, %v2382
      %v3265 = vcombine.high %v2378, %v2382
      %v3267 = vunpack.c.l.s4 1983009808
      %v3268 = vunpack.c.0.s8 %v3267
      %v3269 = vlaneseq
      %v3270 = vshrl.u32 %v3269, 7
      %v3271 = vsub.s32 %v3268, %v3270
      %v3272 = vrot.slane %v3264, %v3271
      %v3274 = vunpack.c.l.s4 1983009808
      %v3275 = vunpack.c.0.s8 %v3274
      %v3276 = vlaneseq
      %v3277 = vshrl.u32 %v3276, 7
      %v3278 = vsub.s32 %v3275, %v3277
      %v3279 = vrot.slane %v3265, %v3278
      %v3280 = vcombine.low %v3224, %v3240
      %v3281 = vcombine.high %v3224, %v3240
      %v3283 = vunpack.c.l.s4 1934713408
      %v3284 = vunpack.c.0.s8 %v3283
      %v3285 = vlaneseq
      %v3286 = vshrl.u32 %v3285, 7
      %v3287 = vsub.s32 %v3284, %v3286
      %v3288 = vrot.slane %v3280, %v3287
      %v3290 = vunpack.c.l.s4 1934713408
      %v3291 = vunpack.c.0.s8 %v3290
      %v3292 = vlaneseq
      %v3293 = vshrl.u32 %v3292, 7
      %v3294 = vsub.s32 %v3291, %v3293
      %v3295 = vrot.slane %v3281, %v3294
      %v3296 = vcombine.low %v3231, %v3247
      %v3297 = vcombine.high %v3231, %v3247
      %v3299 = vunpack.c.l.s4 1934713408
      %v3300 = vunpack.c.0.s8 %v3299
      %v3301 = vlaneseq
      %v3302 = vshrl.u32 %v3301, 7
      %v3303 = vsub.s32 %v3300, %v3302
      %v3304 = vrot.slane %v3296, %v3303
      %v3306 = vunpack.c.l.s4 1934713408
      %v3307 = vunpack.c.0.s8 %v3306
      %v3308 = vlaneseq
      %v3309 = vshrl.u32 %v3308, 7
      %v3310 = vsub.s32 %v3307, %v3309
      %v3311 = vrot.slane %v3297, %v3310
      %v3312 = vcombine.low %v3256, %v3272
      %v3313 = vcombine.high %v3256, %v3272
      %v3315 = vunpack.c.l.s4 1934713408
      %v3316 = vunpack.c.0.s8 %v3315
      %v3317 = vlaneseq
      %v3318 = vshrl.u32 %v3317, 7
      %v3319 = vsub.s32 %v3316, %v3318
      %v3320 = vrot.slane %v3312, %v3319
      %v3322 = vunpack.c.l.s4 1934713408
      %v3323 = vunpack.c.0.s8 %v3322
      %v3324 = vlaneseq
      %v3325 = vshrl.u32 %v3324, 7
      %v3326 = vsub.s32 %v3323, %v3325
      %v3327 = vrot.slane %v3313, %v3326
      %v3328 = vcombine.low %v3263, %v3279
      %v3329 = vcombine.high %v3263, %v3279
      %v3331 = vunpack.c.l.s4 1934713408
      %v3332 = vunpack.c.0.s8 %v3331
      %v3333 = vlaneseq
      %v3334 = vshrl.u32 %v3333, 7
      %v3335 = vsub.s32 %v3332, %v3334
      %v3336 = vrot.slane %v3328, %v3335
      %v3338 = vunpack.c.l.s4 1934713408
      %v3339 = vunpack.c.0.s8 %v3338
      %v3340 = vlaneseq
      %v3341 = vshrl.u32 %v3340, 7
      %v3342 = vsub.s32 %v3339, %v3341
      %v3343 = vrot.slane %v3329, %v3342
      %v3344 = vcombine.low %v3288, %v3320
      %v3345 = vcombine.high %v3288, %v3320
      %v3346 = vcombine.low %v3295, %v3327
      %v3347 = vcombine.high %v3295, %v3327
      %v3348 = vcombine.low %v3304, %v3336
      %v3349 = vcombine.high %v3304, %v3336
      %v3350 = vcombine.low %v3311, %v3343
      %v3351 = vcombine.high %v3311, %v3343
      %v3352 = vcombine.low %v2384, %v2388
      %v3353 = vcombine.high %v2384, %v2388
      %v3355 = vunpack.c.l.s4 1983009808
      %v3356 = vunpack.c.0.s8 %v3355
      %v3357 = vlaneseq
      %v3358 = vshrl.u32 %v3357, 7
      %v3359 = vsub.s32 %v3356, %v3358
      %v3360 = vrot.slane %v3352, %v3359
      %v3362 = vunpack.c.l.s4 1983009808
      %v3363 = vunpack.c.0.s8 %v3362
      %v3364 = vlaneseq
      %v3365 = vshrl.u32 %v3364, 7
      %v3366 = vsub.s32 %v3363, %v3365
      %v3367 = vrot.slane %v3353, %v3366
      %v3368 = vcombine.low %v2386, %v2390
      %v3369 = vcombine.high %v2386, %v2390
      %v3371 = vunpack.c.l.s4 1983009808
      %v3372 = vunpack.c.0.s8 %v3371
      %v3373 = vlaneseq
      %v3374 = vshrl.u32 %v3373, 7
      %v3375 = vsub.s32 %v3372, %v3374
      %v3376 = vrot.slane %v3368, %v3375
      %v3378 = vunpack.c.l.s4 1983009808
      %v3379 = vunpack.c.0.s8 %v3378
      %v3380 = vlaneseq
      %v3381 = vshrl.u32 %v3380, 7
      %v3382 = vsub.s32 %v3379, %v3381
      %v3383 = vrot.slane %v3369, %v3382
      %v3384 = vcombine.low %v2392, %v2396
      %v3385 = vcombine.high %v2392, %v2396
      %v3387 = vunpack.c.l.s4 1983009808
      %v3388 = vunpack.c.0.s8 %v3387
      %v3389 = vlaneseq
      %v3390 = vshrl.u32 %v3389, 7
      %v3391 = vsub.s32 %v3388, %v3390
      %v3392 = vrot.slane %v3384, %v3391
      %v3394 = vunpack.c.l.s4 1983009808
      %v3395 = vunpack.c.0.s8 %v3394
      %v3396 = vlaneseq
      %v3397 = vshrl.u32 %v3396, 7
      %v3398 = vsub.s32 %v3395, %v3397
      %v3399 = vrot.slane %v3385, %v3398
      %v3400 = vcombine.low %v2394, %v2398
      %v3401 = vcombine.high %v2394, %v2398
      %v3403 = vunpack.c.l.s4 1983009808
      %v3404 = vunpack.c.0.s8 %v3403
      %v3405 = vlaneseq
      %v3406 = vshrl.u32 %v3405, 7
      %v3407 = vsub.s32 %v3404, %v3406
      %v3408 = vrot.slane %v3400, %v3407
      %v3410 = vunpack.c.l.s4 1983009808
      %v3411 = vunpack.c.0.s8 %v3410
      %v3412 = vlaneseq
      %v3413 = vshrl.u32 %v3412, 7
      %v3414 = vsub.s32 %v3411, %v3413
      %v3415 = vrot.slane %v3401, %v3414
      %v3416 = vcombine.low %v3360, %v3376
      %v3417 = vcombine.high %v3360, %v3376
      %v3419 = vunpack.c.l.s4 1934713408
      %v3420 = vunpack.c.0.s8 %v3419
      %v3421 = vlaneseq
      %v3422 = vshrl.u32 %v3421, 7
      %v3423 = vsub.s32 %v3420, %v3422
      %v3424 = vrot.slane %v3416, %v3423
      %v3426 = vunpack.c.l.s4 1934713408
      %v3427 = vunpack.c.0.s8 %v3426
      %v3428 = vlaneseq
      %v3429 = vshrl.u32 %v3428, 7
      %v3430 = vsub.s32 %v3427, %v3429
      %v3431 = vrot.slane %v3417, %v3430
      %v3432 = vcombine.low %v3367, %v3383
      %v3433 = vcombine.high %v3367, %v3383
      %v3435 = vunpack.c.l.s4 1934713408
      %v3436 = vunpack.c.0.s8 %v3435
      %v3437 = vlaneseq
      %v3438 = vshrl.u32 %v3437, 7
      %v3439 = vsub.s32 %v3436, %v3438
      %v3440 = vrot.slane %v3432, %v3439
      %v3442 = vunpack.c.l.s4 1934713408
      %v3443 = vunpack.c.0.s8 %v3442
      %v3444 = vlaneseq
      %v3445 = vshrl.u32 %v3444, 7
      %v3446 = vsub.s32 %v3443, %v3445
      %v3447 = vrot.slane %v3433, %v3446
      %v3448 = vcombine.low %v3392, %v3408
      %v3449 = vcombine.high %v3392, %v3408
      %v3451 = vunpack.c.l.s4 1934713408
      %v3452 = vunpack.c.0.s8 %v3451
      %v3453 = vlaneseq
      %v3454 = vshrl.u32 %v3453, 7
      %v3455 = vsub.s32 %v3452, %v3454
      %v3456 = vrot.slane %v3448, %v3455
      %v3458 = vunpack.c.l.s4 1934713408
      %v3459 = vunpack.c.0.s8 %v3458
      %v3460 = vlaneseq
      %v3461 = vshrl.u32 %v3460, 7
      %v3462 = vsub.s32 %v3459, %v3461
      %v3463 = vrot.slane %v3449, %v3462
      %v3464 = vcombine.low %v3399, %v3415
      %v3465 = vcombine.high %v3399, %v3415
      %v3467 = vunpack.c.l.s4 1934713408
      %v3468 = vunpack.c.0.s8 %v3467
      %v3469 = vlaneseq
      %v3470 = vshrl.u32 %v3469, 7
      %v3471 = vsub.s32 %v3468, %v3470
      %v3472 = vrot.slane %v3464, %v3471
      %v3474 = vunpack.c.l.s4 1934713408
      %v3475 = vunpack.c.0.s8 %v3474
      %v3476 = vlaneseq
      %v3477 = vshrl.u32 %v3476, 7
      %v3478 = vsub.s32 %v3475, %v3477
      %v3479 = vrot.slane %v3465, %v3478
      %v3480 = vcombine.low %v3424, %v3456
      %v3481 = vcombine.high %v3424, %v3456
      %v3482 = vcombine.low %v3431, %v3463
      %v3483 = vcombine.high %v3431, %v3463
      %v3484 = vcombine.low %v3440, %v3472
      %v3485 = vcombine.high %v3440, %v3472
      %v3486 = vcombine.low %v3447, %v3479
      %v3487 = vcombine.high %v3447, %v3479
      %v3488 = vcombine.low %v2273, %v2277
      %v3489 = vcombine.high %v2273, %v2277
      %v3491 = vunpack.c.l.s4 1983009808
      %v3492 = vunpack.c.0.s8 %v3491
      %v3493 = vlaneseq
      %v3494 = vshrl.u32 %v3493, 7
      %v3495 = vsub.s32 %v3492, %v3494
      %v3496 = vrot.slane %v3488, %v3495
      %v3498 = vunpack.c.l.s4 1983009808
      %v3499 = vunpack.c.0.s8 %v3498
      %v3500 = vlaneseq
      %v3501 = vshrl.u32 %v3500, 7
      %v3502 = vsub.s32 %v3499, %v3501
      %v3503 = vrot.slane %v3489, %v3502
      %v3504 = vcombine.low %v2275, %v2279
      %v3505 = vcombine.high %v2275, %v2279
      %v3507 = vunpack.c.l.s4 1983009808
      %v3508 = vunpack.c.0.s8 %v3507
      %v3509 = vlaneseq
      %v3510 = vshrl.u32 %v3509, 7
      %v3511 = vsub.s32 %v3508, %v3510
      %v3512 = vrot.slane %v3504, %v3511
      %v3514 = vunpack.c.l.s4 1983009808
      %v3515 = vunpack.c.0.s8 %v3514
      %v3516 = vlaneseq
      %v3517 = vshrl.u32 %v3516, 7
      %v3518 = vsub.s32 %v3515, %v3517
      %v3519 = vrot.slane %v3505, %v3518
      %v3520 = vcombine.low %v2281, %v2285
      %v3521 = vcombine.high %v2281, %v2285
      %v3523 = vunpack.c.l.s4 1983009808
      %v3524 = vunpack.c.0.s8 %v3523
      %v3525 = vlaneseq
      %v3526 = vshrl.u32 %v3525, 7
      %v3527 = vsub.s32 %v3524, %v3526
      %v3528 = vrot.slane %v3520, %v3527
      %v3530 = vunpack.c.l.s4 1983009808
      %v3531 = vunpack.c.0.s8 %v3530
      %v3532 = vlaneseq
      %v3533 = vshrl.u32 %v3532, 7
      %v3534 = vsub.s32 %v3531, %v3533
      %v3535 = vrot.slane %v3521, %v3534
      %v3536 = vcombine.low %v2283, %v2287
      %v3537 = vcombine.high %v2283, %v2287
      %v3539 = vunpack.c.l.s4 1983009808
      %v3540 = vunpack.c.0.s8 %v3539
      %v3541 = vlaneseq
      %v3542 = vshrl.u32 %v3541, 7
      %v3543 = vsub.s32 %v3540, %v3542
      %v3544 = vrot.slane %v3536, %v3543
      %v3546 = vunpack.c.l.s4 1983009808
      %v3547 = vunpack.c.0.s8 %v3546
      %v3548 = vlaneseq
      %v3549 = vshrl.u32 %v3548, 7
      %v3550 = vsub.s32 %v3547, %v3549
      %v3551 = vrot.slane %v3537, %v3550
      %v3552 = vcombine.low %v3496, %v3512
      %v3553 = vcombine.high %v3496, %v3512
      %v3555 = vunpack.c.l.s4 1934713408
      %v3556 = vunpack.c.0.s8 %v3555
      %v3557 = vlaneseq
      %v3558 = vshrl.u32 %v3557, 7
      %v3559 = vsub.s32 %v3556, %v3558
      %v3560 = vrot.slane %v3552, %v3559
      %v3562 = vunpack.c.l.s4 1934713408
      %v3563 = vunpack.c.0.s8 %v3562
      %v3564 = vlaneseq
      %v3565 = vshrl.u32 %v3564, 7
      %v3566 = vsub.s32 %v3563, %v3565
      %v3567 = vrot.slane %v3553, %v3566
      %v3568 = vcombine.low %v3503, %v3519
      %v3569 = vcombine.high %v3503, %v3519
      %v3571 = vunpack.c.l.s4 1934713408
      %v3572 = vunpack.c.0.s8 %v3571
      %v3573 = vlaneseq
      %v3574 = vshrl.u32 %v3573, 7
      %v3575 = vsub.s32 %v3572, %v3574
      %v3576 = vrot.slane %v3568, %v3575
      %v3578 = vunpack.c.l.s4 1934713408
      %v3579 = vunpack.c.0.s8 %v3578
      %v3580 = vlaneseq
      %v3581 = vshrl.u32 %v3580, 7
      %v3582 = vsub.s32 %v3579, %v3581
      %v3583 = vrot.slane %v3569, %v3582
      %v3584 = vcombine.low %v3528, %v3544
      %v3585 = vcombine.high %v3528, %v3544
      %v3587 = vunpack.c.l.s4 1934713408
      %v3588 = vunpack.c.0.s8 %v3587
      %v3589 = vlaneseq
      %v3590 = vshrl.u32 %v3589, 7
      %v3591 = vsub.s32 %v3588, %v3590
      %v3592 = vrot.slane %v3584, %v3591
      %v3594 = vunpack.c.l.s4 1934713408
      %v3595 = vunpack.c.0.s8 %v3594
      %v3596 = vlaneseq
      %v3597 = vshrl.u32 %v3596, 7
      %v3598 = vsub.s32 %v3595, %v3597
      %v3599 = vrot.slane %v3585, %v3598
      %v3600 = vcombine.low %v3535, %v3551
      %v3601 = vcombine.high %v3535, %v3551
      %v3603 = vunpack.c.l.s4 1934713408
      %v3604 = vunpack.c.0.s8 %v3603
      %v3605 = vlaneseq
      %v3606 = vshrl.u32 %v3605, 7
      %v3607 = vsub.s32 %v3604, %v3606
      %v3608 = vrot.slane %v3600, %v3607
      %v3610 = vunpack.c.l.s4 1934713408
      %v3611 = vunpack.c.0.s8 %v3610
      %v3612 = vlaneseq
      %v3613 = vshrl.u32 %v3612, 7
      %v3614 = vsub.s32 %v3611, %v3613
      %v3615 = vrot.slane %v3601, %v3614
      %v3616 = vcombine.low %v3560, %v3592
      %v3617 = vcombine.high %v3560, %v3592
      %v3618 = vcombine.low %v3567, %v3599
      %v3619 = vcombine.high %v3567, %v3599
      %v3620 = vcombine.low %v3576, %v3608
      %v3621 = vcombine.high %v3576, %v3608
      %v3622 = vcombine.low %v3583, %v3615
      %v3623 = vcombine.high %v3583, %v3615
      %v3624 = vcombine.low %v2289, %v2293
      %v3625 = vcombine.high %v2289, %v2293
      %v3627 = vunpack.c.l.s4 1983009808
      %v3628 = vunpack.c.0.s8 %v3627
      %v3629 = vlaneseq
      %v3630 = vshrl.u32 %v3629, 7
      %v3631 = vsub.s32 %v3628, %v3630
      %v3632 = vrot.slane %v3624, %v3631
      %v3634 = vunpack.c.l.s4 1983009808
      %v3635 = vunpack.c.0.s8 %v3634
      %v3636 = vlaneseq
      %v3637 = vshrl.u32 %v3636, 7
      %v3638 = vsub.s32 %v3635, %v3637
      %v3639 = vrot.slane %v3625, %v3638
      %v3640 = vcombine.low %v2291, %v2295
      %v3641 = vcombine.high %v2291, %v2295
      %v3643 = vunpack.c.l.s4 1983009808
      %v3644 = vunpack.c.0.s8 %v3643
      %v3645 = vlaneseq
      %v3646 = vshrl.u32 %v3645, 7
      %v3647 = vsub.s32 %v3644, %v3646
      %v3648 = vrot.slane %v3640, %v3647
      %v3650 = vunpack.c.l.s4 1983009808
      %v3651 = vunpack.c.0.s8 %v3650
      %v3652 = vlaneseq
      %v3653 = vshrl.u32 %v3652, 7
      %v3654 = vsub.s32 %v3651, %v3653
      %v3655 = vrot.slane %v3641, %v3654
      %v3656 = vcombine.low %v2297, %v2301
      %v3657 = vcombine.high %v2297, %v2301
      %v3659 = vunpack.c.l.s4 1983009808
      %v3660 = vunpack.c.0.s8 %v3659
      %v3661 = vlaneseq
      %v3662 = vshrl.u32 %v3661, 7
      %v3663 = vsub.s32 %v3660, %v3662
      %v3664 = vrot.slane %v3656, %v3663
      %v3666 = vunpack.c.l.s4 1983009808
      %v3667 = vunpack.c.0.s8 %v3666
      %v3668 = vlaneseq
      %v3669 = vshrl.u32 %v3668, 7
      %v3670 = vsub.s32 %v3667, %v3669
      %v3671 = vrot.slane %v3657, %v3670
      %v3672 = vcombine.low %v2299, %v2303
      %v3673 = vcombine.high %v2299, %v2303
      %v3675 = vunpack.c.l.s4 1983009808
      %v3676 = vunpack.c.0.s8 %v3675
      %v3677 = vlaneseq
      %v3678 = vshrl.u32 %v3677, 7
      %v3679 = vsub.s32 %v3676, %v3678
      %v3680 = vrot.slane %v3672, %v3679
      %v3682 = vunpack.c.l.s4 1983009808
      %v3683 = vunpack.c.0.s8 %v3682
      %v3684 = vlaneseq
      %v3685 = vshrl.u32 %v3684, 7
      %v3686 = vsub.s32 %v3683, %v3685
      %v3687 = vrot.slane %v3673, %v3686
      %v3688 = vcombine.low %v3632, %v3648
      %v3689 = vcombine.high %v3632, %v3648
      %v3691 = vunpack.c.l.s4 1934713408
      %v3692 = vunpack.c.0.s8 %v3691
      %v3693 = vlaneseq
      %v3694 = vshrl.u32 %v3693, 7
      %v3695 = vsub.s32 %v3692, %v3694
      %v3696 = vrot.slane %v3688, %v3695
      %v3698 = vunpack.c.l.s4 1934713408
      %v3699 = vunpack.c.0.s8 %v3698
      %v3700 = vlaneseq
      %v3701 = vshrl.u32 %v3700, 7
      %v3702 = vsub.s32 %v3699, %v3701
      %v3703 = vrot.slane %v3689, %v3702
      %v3704 = vcombine.low %v3639, %v3655
      %v3705 = vcombine.high %v3639, %v3655
      %v3707 = vunpack.c.l.s4 1934713408
      %v3708 = vunpack.c.0.s8 %v3707
      %v3709 = vlaneseq
      %v3710 = vshrl.u32 %v3709, 7
      %v3711 = vsub.s32 %v3708, %v3710
      %v3712 = vrot.slane %v3704, %v3711
      %v3714 = vunpack.c.l.s4 1934713408
      %v3715 = vunpack.c.0.s8 %v3714
      %v3716 = vlaneseq
      %v3717 = vshrl.u32 %v3716, 7
      %v3718 = vsub.s32 %v3715, %v3717
      %v3719 = vrot.slane %v3705, %v3718
      %v3720 = vcombine.low %v3664, %v3680
      %v3721 = vcombine.high %v3664, %v3680
      %v3723 = vunpack.c.l.s4 1934713408
      %v3724 = vunpack.c.0.s8 %v3723
      %v3725 = vlaneseq
      %v3726 = vshrl.u32 %v3725, 7
      %v3727 = vsub.s32 %v3724, %v3726
      %v3728 = vrot.slane %v3720, %v3727
      %v3730 = vunpack.c.l.s4 1934713408
      %v3731 = vunpack.c.0.s8 %v3730
      %v3732 = vlaneseq
      %v3733 = vshrl.u32 %v3732, 7
      %v3734 = vsub.s32 %v3731, %v3733
      %v3735 = vrot.slane %v3721, %v3734
      %v3736 = vcombine.low %v3671, %v3687
      %v3737 = vcombine.high %v3671, %v3687
      %v3739 = vunpack.c.l.s4 1934713408
      %v3740 = vunpack.c.0.s8 %v3739
      %v3741 = vlaneseq
      %v3742 = vshrl.u32 %v3741, 7
      %v3743 = vsub.s32 %v3740, %v3742
      %v3744 = vrot.slane %v3736, %v3743
      %v3746 = vunpack.c.l.s4 1934713408
      %v3747 = vunpack.c.0.s8 %v3746
      %v3748 = vlaneseq
      %v3749 = vshrl.u32 %v3748, 7
      %v3750 = vsub.s32 %v3747, %v3749
      %v3751 = vrot.slane %v3737, %v3750
      %v3752 = vcombine.low %v3696, %v3728
      %v3753 = vcombine.high %v3696, %v3728
      %v3754 = vcombine.low %v3703, %v3735
      %v3755 = vcombine.high %v3703, %v3735
      %v3756 = vcombine.low %v3712, %v3744
      %v3757 = vcombine.high %v3712, %v3744
      %v3758 = vcombine.low %v3719, %v3751
      %v3759 = vcombine.high %v3719, %v3751
      %v3760 = vcombine.low %v2305, %v2309
      %v3761 = vcombine.high %v2305, %v2309
      %v3763 = vunpack.c.l.s4 1983009808
      %v3764 = vunpack.c.0.s8 %v3763
      %v3765 = vlaneseq
      %v3766 = vshrl.u32 %v3765, 7
      %v3767 = vsub.s32 %v3764, %v3766
      %v3768 = vrot.slane %v3760, %v3767
      %v3770 = vunpack.c.l.s4 1983009808
      %v3771 = vunpack.c.0.s8 %v3770
      %v3772 = vlaneseq
      %v3773 = vshrl.u32 %v3772, 7
      %v3774 = vsub.s32 %v3771, %v3773
      %v3775 = vrot.slane %v3761, %v3774
      %v3776 = vcombine.low %v2307, %v2311
      %v3777 = vcombine.high %v2307, %v2311
      %v3779 = vunpack.c.l.s4 1983009808
      %v3780 = vunpack.c.0.s8 %v3779
      %v3781 = vlaneseq
      %v3782 = vshrl.u32 %v3781, 7
      %v3783 = vsub.s32 %v3780, %v3782
      %v3784 = vrot.slane %v3776, %v3783
      %v3786 = vunpack.c.l.s4 1983009808
      %v3787 = vunpack.c.0.s8 %v3786
      %v3788 = vlaneseq
      %v3789 = vshrl.u32 %v3788, 7
      %v3790 = vsub.s32 %v3787, %v3789
      %v3791 = vrot.slane %v3777, %v3790
      %v3792 = vcombine.low %v2313, %v2317
      %v3793 = vcombine.high %v2313, %v2317
      %v3795 = vunpack.c.l.s4 1983009808
      %v3796 = vunpack.c.0.s8 %v3795
      %v3797 = vlaneseq
      %v3798 = vshrl.u32 %v3797, 7
      %v3799 = vsub.s32 %v3796, %v3798
      %v3800 = vrot.slane %v3792, %v3799
      %v3802 = vunpack.c.l.s4 1983009808
      %v3803 = vunpack.c.0.s8 %v3802
      %v3804 = vlaneseq
      %v3805 = vshrl.u32 %v3804, 7
      %v3806 = vsub.s32 %v3803, %v3805
      %v3807 = vrot.slane %v3793, %v3806
      %v3808 = vcombine.low %v2315, %v2319
      %v3809 = vcombine.high %v2315, %v2319
      %v3811 = vunpack.c.l.s4 1983009808
      %v3812 = vunpack.c.0.s8 %v3811
      %v3813 = vlaneseq
      %v3814 = vshrl.u32 %v3813, 7
      %v3815 = vsub.s32 %v3812, %v3814
      %v3816 = vrot.slane %v3808, %v3815
      %v3818 = vunpack.c.l.s4 1983009808
      %v3819 = vunpack.c.0.s8 %v3818
      %v3820 = vlaneseq
      %v3821 = vshrl.u32 %v3820, 7
      %v3822 = vsub.s32 %v3819, %v3821
      %v3823 = vrot.slane %v3809, %v3822
      %v3824 = vcombine.low %v3768, %v3784
      %v3825 = vcombine.high %v3768, %v3784
      %v3827 = vunpack.c.l.s4 1934713408
      %v3828 = vunpack.c.0.s8 %v3827
      %v3829 = vlaneseq
      %v3830 = vshrl.u32 %v3829, 7
      %v3831 = vsub.s32 %v3828, %v3830
      %v3832 = vrot.slane %v3824, %v3831
      %v3834 = vunpack.c.l.s4 1934713408
      %v3835 = vunpack.c.0.s8 %v3834
      %v3836 = vlaneseq
      %v3837 = vshrl.u32 %v3836, 7
      %v3838 = vsub.s32 %v3835, %v3837
      %v3839 = vrot.slane %v3825, %v3838
      %v3840 = vcombine.low %v3775, %v3791
      %v3841 = vcombine.high %v3775, %v3791
      %v3843 = vunpack.c.l.s4 1934713408
      %v3844 = vunpack.c.0.s8 %v3843
      %v3845 = vlaneseq
      %v3846 = vshrl.u32 %v3845, 7
      %v3847 = vsub.s32 %v3844, %v3846
      %v3848 = vrot.slane %v3840, %v3847
      %v3850 = vunpack.c.l.s4 1934713408
      %v3851 = vunpack.c.0.s8 %v3850
      %v3852 = vlaneseq
      %v3853 = vshrl.u32 %v3852, 7
      %v3854 = vsub.s32 %v3851, %v3853
      %v3855 = vrot.slane %v3841, %v3854
      %v3856 = vcombine.low %v3800, %v3816
      %v3857 = vcombine.high %v3800, %v3816
      %v3859 = vunpack.c.l.s4 1934713408
      %v3860 = vunpack.c.0.s8 %v3859
      %v3861 = vlaneseq
      %v3862 = vshrl.u32 %v3861, 7
      %v3863 = vsub.s32 %v3860, %v3862
      %v3864 = vrot.slane %v3856, %v3863
      %v3866 = vunpack.c.l.s4 1934713408
      %v3867 = vunpack.c.0.s8 %v3866
      %v3868 = vlaneseq
      %v3869 = vshrl.u32 %v3868, 7
      %v3870 = vsub.s32 %v3867, %v3869
      %v3871 = vrot.slane %v3857, %v3870
      %v3872 = vcombine.low %v3807, %v3823
      %v3873 = vcombine.high %v3807, %v3823
      %v3875 = vunpack.c.l.s4 1934713408
      %v3876 = vunpack.c.0.s8 %v3875
      %v3877 = vlaneseq
      %v3878 = vshrl.u32 %v3877, 7
      %v3879 = vsub.s32 %v3876, %v3878
      %v3880 = vrot.slane %v3872, %v3879
      %v3882 = vunpack.c.l.s4 1934713408
      %v3883 = vunpack.c.0.s8 %v3882
      %v3884 = vlaneseq
      %v3885 = vshrl.u32 %v3884, 7
      %v3886 = vsub.s32 %v3883, %v3885
      %v3887 = vrot.slane %v3873, %v3886
      %v3888 = vcombine.low %v3832, %v3864
      %v3889 = vcombine.high %v3832, %v3864
      %v3890 = vcombine.low %v3839, %v3871
      %v3891 = vcombine.high %v3839, %v3871
      %v3892 = vcombine.low %v3848, %v3880
      %v3893 = vcombine.high %v3848, %v3880
      %v3894 = vcombine.low %v3855, %v3887
      %v3895 = vcombine.high %v3855, %v3887
      %v3896 = vcombine.low %v2321, %v2325
      %v3897 = vcombine.high %v2321, %v2325
      %v3899 = vunpack.c.l.s4 1983009808
      %v3900 = vunpack.c.0.s8 %v3899
      %v3901 = vlaneseq
      %v3902 = vshrl.u32 %v3901, 7
      %v3903 = vsub.s32 %v3900, %v3902
      %v3904 = vrot.slane %v3896, %v3903
      %v3906 = vunpack.c.l.s4 1983009808
      %v3907 = vunpack.c.0.s8 %v3906
      %v3908 = vlaneseq
      %v3909 = vshrl.u32 %v3908, 7
      %v3910 = vsub.s32 %v3907, %v3909
      %v3911 = vrot.slane %v3897, %v3910
      %v3912 = vcombine.low %v2323, %v2327
      %v3913 = vcombine.high %v2323, %v2327
      %v3915 = vunpack.c.l.s4 1983009808
      %v3916 = vunpack.c.0.s8 %v3915
      %v3917 = vlaneseq
      %v3918 = vshrl.u32 %v3917, 7
      %v3919 = vsub.s32 %v3916, %v3918
      %v3920 = vrot.slane %v3912, %v3919
      %v3922 = vunpack.c.l.s4 1983009808
      %v3923 = vunpack.c.0.s8 %v3922
      %v3924 = vlaneseq
      %v3925 = vshrl.u32 %v3924, 7
      %v3926 = vsub.s32 %v3923, %v3925
      %v3927 = vrot.slane %v3913, %v3926
      %v3928 = vcombine.low %v2329, %v2333
      %v3929 = vcombine.high %v2329, %v2333
      %v3931 = vunpack.c.l.s4 1983009808
      %v3932 = vunpack.c.0.s8 %v3931
      %v3933 = vlaneseq
      %v3934 = vshrl.u32 %v3933, 7
      %v3935 = vsub.s32 %v3932, %v3934
      %v3936 = vrot.slane %v3928, %v3935
      %v3938 = vunpack.c.l.s4 1983009808
      %v3939 = vunpack.c.0.s8 %v3938
      %v3940 = vlaneseq
      %v3941 = vshrl.u32 %v3940, 7
      %v3942 = vsub.s32 %v3939, %v3941
      %v3943 = vrot.slane %v3929, %v3942
      %v3944 = vcombine.low %v2331, %v2335
      %v3945 = vcombine.high %v2331, %v2335
      %v3947 = vunpack.c.l.s4 1983009808
      %v3948 = vunpack.c.0.s8 %v3947
      %v3949 = vlaneseq
      %v3950 = vshrl.u32 %v3949, 7
      %v3951 = vsub.s32 %v3948, %v3950
      %v3952 = vrot.slane %v3944, %v3951
      %v3954 = vunpack.c.l.s4 1983009808
      %v3955 = vunpack.c.0.s8 %v3954
      %v3956 = vlaneseq
      %v3957 = vshrl.u32 %v3956, 7
      %v3958 = vsub.s32 %v3955, %v3957
      %v3959 = vrot.slane %v3945, %v3958
      %v3960 = vcombine.low %v3904, %v3920
      %v3961 = vcombine.high %v3904, %v3920
      %v3963 = vunpack.c.l.s4 1934713408
      %v3964 = vunpack.c.0.s8 %v3963
      %v3965 = vlaneseq
      %v3966 = vshrl.u32 %v3965, 7
      %v3967 = vsub.s32 %v3964, %v3966
      %v3968 = vrot.slane %v3960, %v3967
      %v3970 = vunpack.c.l.s4 1934713408
      %v3971 = vunpack.c.0.s8 %v3970
      %v3972 = vlaneseq
      %v3973 = vshrl.u32 %v3972, 7
      %v3974 = vsub.s32 %v3971, %v3973
      %v3975 = vrot.slane %v3961, %v3974
      %v3976 = vcombine.low %v3911, %v3927
      %v3977 = vcombine.high %v3911, %v3927
      %v3979 = vunpack.c.l.s4 1934713408
      %v3980 = vunpack.c.0.s8 %v3979
      %v3981 = vlaneseq
      %v3982 = vshrl.u32 %v3981, 7
      %v3983 = vsub.s32 %v3980, %v3982
      %v3984 = vrot.slane %v3976, %v3983
      %v3986 = vunpack.c.l.s4 1934713408
      %v3987 = vunpack.c.0.s8 %v3986
      %v3988 = vlaneseq
      %v3989 = vshrl.u32 %v3988, 7
      %v3990 = vsub.s32 %v3987, %v3989
      %v3991 = vrot.slane %v3977, %v3990
      %v3992 = vcombine.low %v3936, %v3952
      %v3993 = vcombine.high %v3936, %v3952
      %v3995 = vunpack.c.l.s4 1934713408
      %v3996 = vunpack.c.0.s8 %v3995
      %v3997 = vlaneseq
      %v3998 = vshrl.u32 %v3997, 7
      %v3999 = vsub.s32 %v3996, %v3998
      %v4000 = vrot.slane %v3992, %v3999
      %v4002 = vunpack.c.l.s4 1934713408
      %v4003 = vunpack.c.0.s8 %v4002
      %v4004 = vlaneseq
      %v4005 = vshrl.u32 %v4004, 7
      %v4006 = vsub.s32 %v4003, %v4005
      %v4007 = vrot.slane %v3993, %v4006
      %v4008 = vcombine.low %v3943, %v3959
      %v4009 = vcombine.high %v3943, %v3959
      %v4011 = vunpack.c.l.s4 1934713408
      %v4012 = vunpack.c.0.s8 %v4011
      %v4013 = vlaneseq
      %v4014 = vshrl.u32 %v4013, 7
      %v4015 = vsub.s32 %v4012, %v4014
      %v4016 = vrot.slane %v4008, %v4015
      %v4018 = vunpack.c.l.s4 1934713408
      %v4019 = vunpack.c.0.s8 %v4018
      %v4020 = vlaneseq
      %v4021 = vshrl.u32 %v4020, 7
      %v4022 = vsub.s32 %v4019, %v4021
      %v4023 = vrot.slane %v4009, %v4022
      %v4024 = vcombine.low %v3968, %v4000
      %v4025 = vcombine.high %v3968, %v4000
      %v4026 = vcombine.low %v3975, %v4007
      %v4027 = vcombine.high %v3975, %v4007
      %v4028 = vcombine.low %v3984, %v4016
      %v4029 = vcombine.high %v3984, %v4016
      %v4030 = vcombine.low %v3991, %v4023
      %v4031 = vcombine.high %v3991, %v4023
      %v4032 = vcombine.low %v2337, %v2341
      %v4033 = vcombine.high %v2337, %v2341
      %v4035 = vunpack.c.l.s4 1983009808
      %v4036 = vunpack.c.0.s8 %v4035
      %v4037 = vlaneseq
      %v4038 = vshrl.u32 %v4037, 7
      %v4039 = vsub.s32 %v4036, %v4038
      %v4040 = vrot.slane %v4032, %v4039
      %v4042 = vunpack.c.l.s4 1983009808
      %v4043 = vunpack.c.0.s8 %v4042
      %v4044 = vlaneseq
      %v4045 = vshrl.u32 %v4044, 7
      %v4046 = vsub.s32 %v4043, %v4045
      %v4047 = vrot.slane %v4033, %v4046
      %v4048 = vcombine.low %v2339, %v2343
      %v4049 = vcombine.high %v2339, %v2343
      %v4051 = vunpack.c.l.s4 1983009808
      %v4052 = vunpack.c.0.s8 %v4051
      %v4053 = vlaneseq
      %v4054 = vshrl.u32 %v4053, 7
      %v4055 = vsub.s32 %v4052, %v4054
      %v4056 = vrot.slane %v4048, %v4055
      %v4058 = vunpack.c.l.s4 1983009808
      %v4059 = vunpack.c.0.s8 %v4058
      %v4060 = vlaneseq
      %v4061 = vshrl.u32 %v4060, 7
      %v4062 = vsub.s32 %v4059, %v4061
      %v4063 = vrot.slane %v4049, %v4062
      %v4064 = vcombine.low %v2345, %v2349
      %v4065 = vcombine.high %v2345, %v2349
      %v4067 = vunpack.c.l.s4 1983009808
      %v4068 = vunpack.c.0.s8 %v4067
      %v4069 = vlaneseq
      %v4070 = vshrl.u32 %v4069, 7
      %v4071 = vsub.s32 %v4068, %v4070
      %v4072 = vrot.slane %v4064, %v4071
      %v4074 = vunpack.c.l.s4 1983009808
      %v4075 = vunpack.c.0.s8 %v4074
      %v4076 = vlaneseq
      %v4077 = vshrl.u32 %v4076, 7
      %v4078 = vsub.s32 %v4075, %v4077
      %v4079 = vrot.slane %v4065, %v4078
      %v4080 = vcombine.low %v2347, %v2351
      %v4081 = vcombine.high %v2347, %v2351
      %v4083 = vunpack.c.l.s4 1983009808
      %v4084 = vunpack.c.0.s8 %v4083
      %v4085 = vlaneseq
      %v4086 = vshrl.u32 %v4085, 7
      %v4087 = vsub.s32 %v4084, %v4086
      %v4088 = vrot.slane %v4080, %v4087
      %v4090 = vunpack.c.l.s4 1983009808
      %v4091 = vunpack.c.0.s8 %v4090
      %v4092 = vlaneseq
      %v4093 = vshrl.u32 %v4092, 7
      %v4094 = vsub.s32 %v4091, %v4093
      %v4095 = vrot.slane %v4081, %v4094
      %v4096 = vcombine.low %v4040, %v4056
      %v4097 = vcombine.high %v4040, %v4056
      %v4099 = vunpack.c.l.s4 1934713408
      %v4100 = vunpack.c.0.s8 %v4099
      %v4101 = vlaneseq
      %v4102 = vshrl.u32 %v4101, 7
      %v4103 = vsub.s32 %v4100, %v4102
      %v4104 = vrot.slane %v4096, %v4103
      %v4106 = vunpack.c.l.s4 1934713408
      %v4107 = vunpack.c.0.s8 %v4106
      %v4108 = vlaneseq
      %v4109 = vshrl.u32 %v4108, 7
      %v4110 = vsub.s32 %v4107, %v4109
      %v4111 = vrot.slane %v4097, %v4110
      %v4112 = vcombine.low %v4047, %v4063
      %v4113 = vcombine.high %v4047, %v4063
      %v4115 = vunpack.c.l.s4 1934713408
      %v4116 = vunpack.c.0.s8 %v4115
      %v4117 = vlaneseq
      %v4118 = vshrl.u32 %v4117, 7
      %v4119 = vsub.s32 %v4116, %v4118
      %v4120 = vrot.slane %v4112, %v4119
      %v4122 = vunpack.c.l.s4 1934713408
      %v4123 = vunpack.c.0.s8 %v4122
      %v4124 = vlaneseq
      %v4125 = vshrl.u32 %v4124, 7
      %v4126 = vsub.s32 %v4123, %v4125
      %v4127 = vrot.slane %v4113, %v4126
      %v4128 = vcombine.low %v4072, %v4088
      %v4129 = vcombine.high %v4072, %v4088
      %v4131 = vunpack.c.l.s4 1934713408
      %v4132 = vunpack.c.0.s8 %v4131
      %v4133 = vlaneseq
      %v4134 = vshrl.u32 %v4133, 7
      %v4135 = vsub.s32 %v4132, %v4134
      %v4136 = vrot.slane %v4128, %v4135
      %v4138 = vunpack.c.l.s4 1934713408
      %v4139 = vunpack.c.0.s8 %v4138
      %v4140 = vlaneseq
      %v4141 = vshrl.u32 %v4140, 7
      %v4142 = vsub.s32 %v4139, %v4141
      %v4143 = vrot.slane %v4129, %v4142
      %v4144 = vcombine.low %v4079, %v4095
      %v4145 = vcombine.high %v4079, %v4095
      %v4147 = vunpack.c.l.s4 1934713408
      %v4148 = vunpack.c.0.s8 %v4147
      %v4149 = vlaneseq
      %v4150 = vshrl.u32 %v4149, 7
      %v4151 = vsub.s32 %v4148, %v4150
      %v4152 = vrot.slane %v4144, %v4151
      %v4154 = vunpack.c.l.s4 1934713408
      %v4155 = vunpack.c.0.s8 %v4154
      %v4156 = vlaneseq
      %v4157 = vshrl.u32 %v4156, 7
      %v4158 = vsub.s32 %v4155, %v4157
      %v4159 = vrot.slane %v4145, %v4158
      %v4160 = vcombine.low %v4104, %v4136
      %v4161 = vcombine.high %v4104, %v4136
      %v4162 = vcombine.low %v4111, %v4143
      %v4163 = vcombine.high %v4111, %v4143
      %v4164 = vcombine.low %v4120, %v4152
      %v4165 = vcombine.high %v4120, %v4152
      %v4166 = vcombine.low %v4127, %v4159
      %v4167 = vcombine.high %v4127, %v4159
      %v4168 = vcombine.low %v2353, %v2357
      %v4169 = vcombine.high %v2353, %v2357
      %v4171 = vunpack.c.l.s4 1983009808
      %v4172 = vunpack.c.0.s8 %v4171
      %v4173 = vlaneseq
      %v4174 = vshrl.u32 %v4173, 7
      %v4175 = vsub.s32 %v4172, %v4174
      %v4176 = vrot.slane %v4168, %v4175
      %v4178 = vunpack.c.l.s4 1983009808
      %v4179 = vunpack.c.0.s8 %v4178
      %v4180 = vlaneseq
      %v4181 = vshrl.u32 %v4180, 7
      %v4182 = vsub.s32 %v4179, %v4181
      %v4183 = vrot.slane %v4169, %v4182
      %v4184 = vcombine.low %v2355, %v2359
      %v4185 = vcombine.high %v2355, %v2359
      %v4187 = vunpack.c.l.s4 1983009808
      %v4188 = vunpack.c.0.s8 %v4187
      %v4189 = vlaneseq
      %v4190 = vshrl.u32 %v4189, 7
      %v4191 = vsub.s32 %v4188, %v4190
      %v4192 = vrot.slane %v4184, %v4191
      %v4194 = vunpack.c.l.s4 1983009808
      %v4195 = vunpack.c.0.s8 %v4194
      %v4196 = vlaneseq
      %v4197 = vshrl.u32 %v4196, 7
      %v4198 = vsub.s32 %v4195, %v4197
      %v4199 = vrot.slane %v4185, %v4198
      %v4200 = vcombine.low %v2361, %v2365
      %v4201 = vcombine.high %v2361, %v2365
      %v4203 = vunpack.c.l.s4 1983009808
      %v4204 = vunpack.c.0.s8 %v4203
      %v4205 = vlaneseq
      %v4206 = vshrl.u32 %v4205, 7
      %v4207 = vsub.s32 %v4204, %v4206
      %v4208 = vrot.slane %v4200, %v4207
      %v4210 = vunpack.c.l.s4 1983009808
      %v4211 = vunpack.c.0.s8 %v4210
      %v4212 = vlaneseq
      %v4213 = vshrl.u32 %v4212, 7
      %v4214 = vsub.s32 %v4211, %v4213
      %v4215 = vrot.slane %v4201, %v4214
      %v4216 = vcombine.low %v2363, %v2367
      %v4217 = vcombine.high %v2363, %v2367
      %v4219 = vunpack.c.l.s4 1983009808
      %v4220 = vunpack.c.0.s8 %v4219
      %v4221 = vlaneseq
      %v4222 = vshrl.u32 %v4221, 7
      %v4223 = vsub.s32 %v4220, %v4222
      %v4224 = vrot.slane %v4216, %v4223
      %v4226 = vunpack.c.l.s4 1983009808
      %v4227 = vunpack.c.0.s8 %v4226
      %v4228 = vlaneseq
      %v4229 = vshrl.u32 %v4228, 7
      %v4230 = vsub.s32 %v4227, %v4229
      %v4231 = vrot.slane %v4217, %v4230
      %v4232 = vcombine.low %v4176, %v4192
      %v4233 = vcombine.high %v4176, %v4192
      %v4235 = vunpack.c.l.s4 1934713408
      %v4236 = vunpack.c.0.s8 %v4235
      %v4237 = vlaneseq
      %v4238 = vshrl.u32 %v4237, 7
      %v4239 = vsub.s32 %v4236, %v4238
      %v4240 = vrot.slane %v4232, %v4239
      %v4242 = vunpack.c.l.s4 1934713408
      %v4243 = vunpack.c.0.s8 %v4242
      %v4244 = vlaneseq
      %v4245 = vshrl.u32 %v4244, 7
      %v4246 = vsub.s32 %v4243, %v4245
      %v4247 = vrot.slane %v4233, %v4246
      %v4248 = vcombine.low %v4183, %v4199
      %v4249 = vcombine.high %v4183, %v4199
      %v4251 = vunpack.c.l.s4 1934713408
      %v4252 = vunpack.c.0.s8 %v4251
      %v4253 = vlaneseq
      %v4254 = vshrl.u32 %v4253, 7
      %v4255 = vsub.s32 %v4252, %v4254
      %v4256 = vrot.slane %v4248, %v4255
      %v4258 = vunpack.c.l.s4 1934713408
      %v4259 = vunpack.c.0.s8 %v4258
      %v4260 = vlaneseq
      %v4261 = vshrl.u32 %v4260, 7
      %v4262 = vsub.s32 %v4259, %v4261
      %v4263 = vrot.slane %v4249, %v4262
      %v4264 = vcombine.low %v4208, %v4224
      %v4265 = vcombine.high %v4208, %v4224
      %v4267 = vunpack.c.l.s4 1934713408
      %v4268 = vunpack.c.0.s8 %v4267
      %v4269 = vlaneseq
      %v4270 = vshrl.u32 %v4269, 7
      %v4271 = vsub.s32 %v4268, %v4270
      %v4272 = vrot.slane %v4264, %v4271
      %v4274 = vunpack.c.l.s4 1934713408
      %v4275 = vunpack.c.0.s8 %v4274
      %v4276 = vlaneseq
      %v4277 = vshrl.u32 %v4276, 7
      %v4278 = vsub.s32 %v4275, %v4277
      %v4279 = vrot.slane %v4265, %v4278
      %v4280 = vcombine.low %v4215, %v4231
      %v4281 = vcombine.high %v4215, %v4231
      %v4283 = vunpack.c.l.s4 1934713408
      %v4284 = vunpack.c.0.s8 %v4283
      %v4285 = vlaneseq
      %v4286 = vshrl.u32 %v4285, 7
      %v4287 = vsub.s32 %v4284, %v4286
      %v4288 = vrot.slane %v4280, %v4287
      %v4290 = vunpack.c.l.s4 1934713408
      %v4291 = vunpack.c.0.s8 %v4290
      %v4292 = vlaneseq
      %v4293 = vshrl.u32 %v4292, 7
      %v4294 = vsub.s32 %v4291, %v4293
      %v4295 = vrot.slane %v4281, %v4294
      %v4296 = vcombine.low %v4240, %v4272
      %v4297 = vcombine.high %v4240, %v4272
      %v4298 = vcombine.low %v4247, %v4279
      %v4299 = vcombine.high %v4247, %v4279
      %v4300 = vcombine.low %v4256, %v4288
      %v4301 = vcombine.high %v4256, %v4288
      %v4302 = vcombine.low %v4263, %v4295
      %v4303 = vcombine.high %v4263, %v4295
      %v4304 = vcombine.low %v2369, %v2373
      %v4305 = vcombine.high %v2369, %v2373
      %v4307 = vunpack.c.l.s4 1983009808
      %v4308 = vunpack.c.0.s8 %v4307
      %v4309 = vlaneseq
      %v4310 = vshrl.u32 %v4309, 7
      %v4311 = vsub.s32 %v4308, %v4310
      %v4312 = vrot.slane %v4304, %v4311
      %v4314 = vunpack.c.l.s4 1983009808
      %v4315 = vunpack.c.0.s8 %v4314
      %v4316 = vlaneseq
      %v4317 = vshrl.u32 %v4316, 7
      %v4318 = vsub.s32 %v4315, %v4317
      %v4319 = vrot.slane %v4305, %v4318
      %v4320 = vcombine.low %v2371, %v2375
      %v4321 = vcombine.high %v2371, %v2375
      %v4323 = vunpack.c.l.s4 1983009808
      %v4324 = vunpack.c.0.s8 %v4323
      %v4325 = vlaneseq
      %v4326 = vshrl.u32 %v4325, 7
      %v4327 = vsub.s32 %v4324, %v4326
      %v4328 = vrot.slane %v4320, %v4327
      %v4330 = vunpack.c.l.s4 1983009808
      %v4331 = vunpack.c.0.s8 %v4330
      %v4332 = vlaneseq
      %v4333 = vshrl.u32 %v4332, 7
      %v4334 = vsub.s32 %v4331, %v4333
      %v4335 = vrot.slane %v4321, %v4334
      %v4336 = vcombine.low %v2377, %v2381
      %v4337 = vcombine.high %v2377, %v2381
      %v4339 = vunpack.c.l.s4 1983009808
      %v4340 = vunpack.c.0.s8 %v4339
      %v4341 = vlaneseq
      %v4342 = vshrl.u32 %v4341, 7
      %v4343 = vsub.s32 %v4340, %v4342
      %v4344 = vrot.slane %v4336, %v4343
      %v4346 = vunpack.c.l.s4 1983009808
      %v4347 = vunpack.c.0.s8 %v4346
      %v4348 = vlaneseq
      %v4349 = vshrl.u32 %v4348, 7
      %v4350 = vsub.s32 %v4347, %v4349
      %v4351 = vrot.slane %v4337, %v4350
      %v4352 = vcombine.low %v2379, %v2383
      %v4353 = vcombine.high %v2379, %v2383
      %v4355 = vunpack.c.l.s4 1983009808
      %v4356 = vunpack.c.0.s8 %v4355
      %v4357 = vlaneseq
      %v4358 = vshrl.u32 %v4357, 7
      %v4359 = vsub.s32 %v4356, %v4358
      %v4360 = vrot.slane %v4352, %v4359
      %v4362 = vunpack.c.l.s4 1983009808
      %v4363 = vunpack.c.0.s8 %v4362
      %v4364 = vlaneseq
      %v4365 = vshrl.u32 %v4364, 7
      %v4366 = vsub.s32 %v4363, %v4365
      %v4367 = vrot.slane %v4353, %v4366
      %v4368 = vcombine.low %v4312, %v4328
      %v4369 = vcombine.high %v4312, %v4328
      %v4371 = vunpack.c.l.s4 1934713408
      %v4372 = vunpack.c.0.s8 %v4371
      %v4373 = vlaneseq
      %v4374 = vshrl.u32 %v4373, 7
      %v4375 = vsub.s32 %v4372, %v4374
      %v4376 = vrot.slane %v4368, %v4375
      %v4378 = vunpack.c.l.s4 1934713408
      %v4379 = vunpack.c.0.s8 %v4378
      %v4380 = vlaneseq
      %v4381 = vshrl.u32 %v4380, 7
      %v4382 = vsub.s32 %v4379, %v4381
      %v4383 = vrot.slane %v4369, %v4382
      %v4384 = vcombine.low %v4319, %v4335
      %v4385 = vcombine.high %v4319, %v4335
      %v4387 = vunpack.c.l.s4 1934713408
      %v4388 = vunpack.c.0.s8 %v4387
      %v4389 = vlaneseq
      %v4390 = vshrl.u32 %v4389, 7
      %v4391 = vsub.s32 %v4388, %v4390
      %v4392 = vrot.slane %v4384, %v4391
      %v4394 = vunpack.c.l.s4 1934713408
      %v4395 = vunpack.c.0.s8 %v4394
      %v4396 = vlaneseq
      %v4397 = vshrl.u32 %v4396, 7
      %v4398 = vsub.s32 %v4395, %v4397
      %v4399 = vrot.slane %v4385, %v4398
      %v4400 = vcombine.low %v4344, %v4360
      %v4401 = vcombine.high %v4344, %v4360
      %v4403 = vunpack.c.l.s4 1934713408
      %v4404 = vunpack.c.0.s8 %v4403
      %v4405 = vlaneseq
      %v4406 = vshrl.u32 %v4405, 7
      %v4407 = vsub.s32 %v4404, %v4406
      %v4408 = vrot.slane %v4400, %v4407
      %v4410 = vunpack.c.l.s4 1934713408
      %v4411 = vunpack.c.0.s8 %v4410
      %v4412 = vlaneseq
      %v4413 = vshrl.u32 %v4412, 7
      %v4414 = vsub.s32 %v4411, %v4413
      %v4415 = vrot.slane %v4401, %v4414
      %v4416 = vcombine.low %v4351, %v4367
      %v4417 = vcombine.high %v4351, %v4367
      %v4419 = vunpack.c.l.s4 1934713408
      %v4420 = vunpack.c.0.s8 %v4419
      %v4421 = vlaneseq
      %v4422 = vshrl.u32 %v4421, 7
      %v4423 = vsub.s32 %v4420, %v4422
      %v4424 = vrot.slane %v4416, %v4423
      %v4426 = vunpack.c.l.s4 1934713408
      %v4427 = vunpack.c.0.s8 %v4426
      %v4428 = vlaneseq
      %v4429 = vshrl.u32 %v4428, 7
      %v4430 = vsub.s32 %v4427, %v4429
      %v4431 = vrot.slane %v4417, %v4430
      %v4432 = vcombine.low %v4376, %v4408
      %v4433 = vcombine.high %v4376, %v4408
      %v4434 = vcombine.low %v4383, %v4415
      %v4435 = vcombine.high %v4383, %v4415
      %v4436 = vcombine.low %v4392, %v4424
      %v4437 = vcombine.high %v4392, %v4424
      %v4438 = vcombine.low %v4399, %v4431
      %v4439 = vcombine.high %v4399, %v4431
      %v4440 = vcombine.low %v2385, %v2389
      %v4441 = vcombine.high %v2385, %v2389
      %v4443 = vunpack.c.l.s4 1983009808
      %v4444 = vunpack.c.0.s8 %v4443
      %v4445 = vlaneseq
      %v4446 = vshrl.u32 %v4445, 7
      %v4447 = vsub.s32 %v4444, %v4446
      %v4448 = vrot.slane %v4440, %v4447
      %v4450 = vunpack.c.l.s4 1983009808
      %v4451 = vunpack.c.0.s8 %v4450
      %v4452 = vlaneseq
      %v4453 = vshrl.u32 %v4452, 7
      %v4454 = vsub.s32 %v4451, %v4453
      %v4455 = vrot.slane %v4441, %v4454
      %v4456 = vcombine.low %v2387, %v2391
      %v4457 = vcombine.high %v2387, %v2391
      %v4459 = vunpack.c.l.s4 1983009808
      %v4460 = vunpack.c.0.s8 %v4459
      %v4461 = vlaneseq
      %v4462 = vshrl.u32 %v4461, 7
      %v4463 = vsub.s32 %v4460, %v4462
      %v4464 = vrot.slane %v4456, %v4463
      %v4466 = vunpack.c.l.s4 1983009808
      %v4467 = vunpack.c.0.s8 %v4466
      %v4468 = vlaneseq
      %v4469 = vshrl.u32 %v4468, 7
      %v4470 = vsub.s32 %v4467, %v4469
      %v4471 = vrot.slane %v4457, %v4470
      %v4472 = vcombine.low %v2393, %v2397
      %v4473 = vcombine.high %v2393, %v2397
      %v4475 = vunpack.c.l.s4 1983009808
      %v4476 = vunpack.c.0.s8 %v4475
      %v4477 = vlaneseq
      %v4478 = vshrl.u32 %v4477, 7
      %v4479 = vsub.s32 %v4476, %v4478
      %v4480 = vrot.slane %v4472, %v4479
      %v4482 = vunpack.c.l.s4 1983009808
      %v4483 = vunpack.c.0.s8 %v4482
      %v4484 = vlaneseq
      %v4485 = vshrl.u32 %v4484, 7
      %v4486 = vsub.s32 %v4483, %v4485
      %v4487 = vrot.slane %v4473, %v4486
      %v4488 = vcombine.low %v2395, %v2399
      %v4489 = vcombine.high %v2395, %v2399
      %v4491 = vunpack.c.l.s4 1983009808
      %v4492 = vunpack.c.0.s8 %v4491
      %v4493 = vlaneseq
      %v4494 = vshrl.u32 %v4493, 7
      %v4495 = vsub.s32 %v4492, %v4494
      %v4496 = vrot.slane %v4488, %v4495
      %v4498 = vunpack.c.l.s4 1983009808
      %v4499 = vunpack.c.0.s8 %v4498
      %v4500 = vlaneseq
      %v4501 = vshrl.u32 %v4500, 7
      %v4502 = vsub.s32 %v4499, %v4501
      %v4503 = vrot.slane %v4489, %v4502
      %v4504 = vcombine.low %v4448, %v4464
      %v4505 = vcombine.high %v4448, %v4464
      %v4507 = vunpack.c.l.s4 1934713408
      %v4508 = vunpack.c.0.s8 %v4507
      %v4509 = vlaneseq
      %v4510 = vshrl.u32 %v4509, 7
      %v4511 = vsub.s32 %v4508, %v4510
      %v4512 = vrot.slane %v4504, %v4511
      %v4514 = vunpack.c.l.s4 1934713408
      %v4515 = vunpack.c.0.s8 %v4514
      %v4516 = vlaneseq
      %v4517 = vshrl.u32 %v4516, 7
      %v4518 = vsub.s32 %v4515, %v4517
      %v4519 = vrot.slane %v4505, %v4518
      %v4520 = vcombine.low %v4455, %v4471
      %v4521 = vcombine.high %v4455, %v4471
      %v4523 = vunpack.c.l.s4 1934713408
      %v4524 = vunpack.c.0.s8 %v4523
      %v4525 = vlaneseq
      %v4526 = vshrl.u32 %v4525, 7
      %v4527 = vsub.s32 %v4524, %v4526
      %v4528 = vrot.slane %v4520, %v4527
      %v4530 = vunpack.c.l.s4 1934713408
      %v4531 = vunpack.c.0.s8 %v4530
      %v4532 = vlaneseq
      %v4533 = vshrl.u32 %v4532, 7
      %v4534 = vsub.s32 %v4531, %v4533
      %v4535 = vrot.slane %v4521, %v4534
      %v4536 = vcombine.low %v4480, %v4496
      %v4537 = vcombine.high %v4480, %v4496
      %v4539 = vunpack.c.l.s4 1934713408
      %v4540 = vunpack.c.0.s8 %v4539
      %v4541 = vlaneseq
      %v4542 = vshrl.u32 %v4541, 7
      %v4543 = vsub.s32 %v4540, %v4542
      %v4544 = vrot.slane %v4536, %v4543
      %v4546 = vunpack.c.l.s4 1934713408
      %v4547 = vunpack.c.0.s8 %v4546
      %v4548 = vlaneseq
      %v4549 = vshrl.u32 %v4548, 7
      %v4550 = vsub.s32 %v4547, %v4549
      %v4551 = vrot.slane %v4537, %v4550
      %v4552 = vcombine.low %v4487, %v4503
      %v4553 = vcombine.high %v4487, %v4503
      %v4555 = vunpack.c.l.s4 1934713408
      %v4556 = vunpack.c.0.s8 %v4555
      %v4557 = vlaneseq
      %v4558 = vshrl.u32 %v4557, 7
      %v4559 = vsub.s32 %v4556, %v4558
      %v4560 = vrot.slane %v4552, %v4559
      %v4562 = vunpack.c.l.s4 1934713408
      %v4563 = vunpack.c.0.s8 %v4562
      %v4564 = vlaneseq
      %v4565 = vshrl.u32 %v4564, 7
      %v4566 = vsub.s32 %v4563, %v4565
      %v4567 = vrot.slane %v4553, %v4566
      %v4568 = vcombine.low %v4512, %v4544
      %v4569 = vcombine.high %v4512, %v4544
      %v4570 = vcombine.low %v4519, %v4551
      %v4571 = vcombine.high %v4519, %v4551
      %v4572 = vcombine.low %v4528, %v4560
      %v4573 = vcombine.high %v4528, %v4560
      %v4574 = vcombine.low %v4535, %v4567
      %v4575 = vcombine.high %v4535, %v4567
      %4584 = vrot.lane.b32.xlu0 %v2529, 16
      %v4585 = vpop.permute.xlu0 %4584
      %4586 = vrot.lane.b32.xlu0 %v2665, 16
      %v4587 = vpop.permute.xlu0 %4586
      %4588 = vrot.lane.b32.xlu0 %v2801, 16
      %v4589 = vpop.permute.xlu0 %4588
      %4590 = vrot.lane.b32.xlu0 %v2937, 16
      %v4591 = vpop.permute.xlu0 %4590
      %4592 = vrot.lane.b32.xlu0 %v3073, 16
      %v4593 = vpop.permute.xlu0 %4592
      %4594 = vrot.lane.b32.xlu0 %v3209, 16
      %v4595 = vpop.permute.xlu0 %4594
      %4596 = vrot.lane.b32.xlu0 %v3345, 16
      %v4597 = vpop.permute.xlu0 %4596
      %4598 = vrot.lane.b32.xlu0 %v3481, 16
      %v4599 = vpop.permute.xlu0 %4598
      %4616 = vrot.lane.b32.xlu0 %v2530, 32
      %v4617 = vpop.permute.xlu0 %4616
      %4618 = vrot.lane.b32.xlu0 %v2666, 32
      %v4619 = vpop.permute.xlu0 %4618
      %4620 = vrot.lane.b32.xlu0 %v2802, 32
      %v4621 = vpop.permute.xlu0 %4620
      %4622 = vrot.lane.b32.xlu0 %v2938, 32
      %v4623 = vpop.permute.xlu0 %4622
      %4624 = vrot.lane.b32.xlu0 %v3074, 32
      %v4625 = vpop.permute.xlu0 %4624
      %4626 = vrot.lane.b32.xlu0 %v3210, 32
      %v4627 = vpop.permute.xlu0 %4626
      %4628 = vrot.lane.b32.xlu0 %v3346, 32
      %v4629 = vpop.permute.xlu0 %4628
      %4630 = vrot.lane.b32.xlu0 %v3482, 32
      %v4631 = vpop.permute.xlu0 %4630
      %4648 = vrot.lane.b32.xlu0 %v2531, 48
      %v4649 = vpop.permute.xlu0 %4648
      %4650 = vrot.lane.b32.xlu0 %v2667, 48
      %v4651 = vpop.permute.xlu0 %4650
      %4652 = vrot.lane.b32.xlu0 %v2803, 48
      %v4653 = vpop.permute.xlu0 %4652
      %4654 = vrot.lane.b32.xlu0 %v2939, 48
      %v4655 = vpop.permute.xlu0 %4654
      %4656 = vrot.lane.b32.xlu0 %v3075, 48
      %v4657 = vpop.permute.xlu0 %4656
      %4658 = vrot.lane.b32.xlu0 %v3211, 48
      %v4659 = vpop.permute.xlu0 %4658
      %4660 = vrot.lane.b32.xlu0 %v3347, 48
      %v4661 = vpop.permute.xlu0 %4660
      %4662 = vrot.lane.b32.xlu0 %v3483, 48
      %v4663 = vpop.permute.xlu0 %4662
      %4680 = vrot.lane.b32.xlu0 %v2532, 64
      %v4681 = vpop.permute.xlu0 %4680
      %4682 = vrot.lane.b32.xlu0 %v2668, 64
      %v4683 = vpop.permute.xlu0 %4682
      %4684 = vrot.lane.b32.xlu0 %v2804, 64
      %v4685 = vpop.permute.xlu0 %4684
      %4686 = vrot.lane.b32.xlu0 %v2940, 64
      %v4687 = vpop.permute.xlu0 %4686
      %4688 = vrot.lane.b32.xlu0 %v3076, 64
      %v4689 = vpop.permute.xlu0 %4688
      %4690 = vrot.lane.b32.xlu0 %v3212, 64
      %v4691 = vpop.permute.xlu0 %4690
      %4692 = vrot.lane.b32.xlu0 %v3348, 64
      %v4693 = vpop.permute.xlu0 %4692
      %4694 = vrot.lane.b32.xlu0 %v3484, 64
      %v4695 = vpop.permute.xlu0 %4694
      %4712 = vrot.lane.b32.xlu0 %v2533, 80
      %v4713 = vpop.permute.xlu0 %4712
      %4714 = vrot.lane.b32.xlu0 %v2669, 80
      %v4715 = vpop.permute.xlu0 %4714
      %4716 = vrot.lane.b32.xlu0 %v2805, 80
      %v4717 = vpop.permute.xlu0 %4716
      %4718 = vrot.lane.b32.xlu0 %v2941, 80
      %v4719 = vpop.permute.xlu0 %4718
      %4720 = vrot.lane.b32.xlu0 %v3077, 80
      %v4721 = vpop.permute.xlu0 %4720
      %4722 = vrot.lane.b32.xlu0 %v3213, 80
      %v4723 = vpop.permute.xlu0 %4722
      %4724 = vrot.lane.b32.xlu0 %v3349, 80
      %v4725 = vpop.permute.xlu0 %4724
      %4726 = vrot.lane.b32.xlu0 %v3485, 80
      %v4727 = vpop.permute.xlu0 %4726
      %4744 = vrot.lane.b32.xlu0 %v2534, 96
      %v4745 = vpop.permute.xlu0 %4744
      %4746 = vrot.lane.b32.xlu0 %v2670, 96
      %v4747 = vpop.permute.xlu0 %4746
      %4748 = vrot.lane.b32.xlu0 %v2806, 96
      %v4749 = vpop.permute.xlu0 %4748
      %4750 = vrot.lane.b32.xlu0 %v2942, 96
      %v4751 = vpop.permute.xlu0 %4750
      %4752 = vrot.lane.b32.xlu0 %v3078, 96
      %v4753 = vpop.permute.xlu0 %4752
      %4754 = vrot.lane.b32.xlu0 %v3214, 96
      %v4755 = vpop.permute.xlu0 %4754
      %4756 = vrot.lane.b32.xlu0 %v3350, 96
      %v4757 = vpop.permute.xlu0 %4756
      %4758 = vrot.lane.b32.xlu0 %v3486, 96
      %v4759 = vpop.permute.xlu0 %4758
      %4776 = vrot.lane.b32.xlu0 %v2535, 112
      %v4777 = vpop.permute.xlu0 %4776
      %4778 = vrot.lane.b32.xlu0 %v2671, 112
      %v4779 = vpop.permute.xlu0 %4778
      %4780 = vrot.lane.b32.xlu0 %v2807, 112
      %v4781 = vpop.permute.xlu0 %4780
      %4782 = vrot.lane.b32.xlu0 %v2943, 112
      %v4783 = vpop.permute.xlu0 %4782
      %4784 = vrot.lane.b32.xlu0 %v3079, 112
      %v4785 = vpop.permute.xlu0 %4784
      %4786 = vrot.lane.b32.xlu0 %v3215, 112
      %v4787 = vpop.permute.xlu0 %4786
      %4788 = vrot.lane.b32.xlu0 %v3351, 112
      %v4789 = vpop.permute.xlu0 %4788
      %4790 = vrot.lane.b32.xlu0 %v3487, 112
      %v4791 = vpop.permute.xlu0 %4790
      %4808 = vrot.lane.b32.xlu0 %v3617, 16
      %v4809 = vpop.permute.xlu0 %4808
      %4810 = vrot.lane.b32.xlu0 %v3753, 16
      %v4811 = vpop.permute.xlu0 %4810
      %4812 = vrot.lane.b32.xlu0 %v3889, 16
      %v4813 = vpop.permute.xlu0 %4812
      %4814 = vrot.lane.b32.xlu0 %v4025, 16
      %v4815 = vpop.permute.xlu0 %4814
      %4816 = vrot.lane.b32.xlu0 %v4161, 16
      %v4817 = vpop.permute.xlu0 %4816
      %4818 = vrot.lane.b32.xlu0 %v4297, 16
      %v4819 = vpop.permute.xlu0 %4818
      %4820 = vrot.lane.b32.xlu0 %v4433, 16
      %v4821 = vpop.permute.xlu0 %4820
      %4822 = vrot.lane.b32.xlu0 %v4569, 16
      %v4823 = vpop.permute.xlu0 %4822
      %4840 = vrot.lane.b32.xlu0 %v3618, 32
      %v4841 = vpop.permute.xlu0 %4840
      %4842 = vrot.lane.b32.xlu0 %v3754, 32
      %v4843 = vpop.permute.xlu0 %4842
      %4844 = vrot.lane.b32.xlu0 %v3890, 32
      %v4845 = vpop.permute.xlu0 %4844
      %4846 = vrot.lane.b32.xlu0 %v4026, 32
      %v4847 = vpop.permute.xlu0 %4846
      %4848 = vrot.lane.b32.xlu0 %v4162, 32
      %v4849 = vpop.permute.xlu0 %4848
      %4850 = vrot.lane.b32.xlu0 %v4298, 32
      %v4851 = vpop.permute.xlu0 %4850
      %4852 = vrot.lane.b32.xlu0 %v4434, 32
      %v4853 = vpop.permute.xlu0 %4852
      %4854 = vrot.lane.b32.xlu0 %v4570, 32
      %v4855 = vpop.permute.xlu0 %4854
      %4872 = vrot.lane.b32.xlu0 %v3619, 48
      %v4873 = vpop.permute.xlu0 %4872
      %4874 = vrot.lane.b32.xlu0 %v3755, 48
      %v4875 = vpop.permute.xlu0 %4874
      %4876 = vrot.lane.b32.xlu0 %v3891, 48
      %v4877 = vpop.permute.xlu0 %4876
      %4878 = vrot.lane.b32.xlu0 %v4027, 48
      %v4879 = vpop.permute.xlu0 %4878
      %4880 = vrot.lane.b32.xlu0 %v4163, 48
      %v4881 = vpop.permute.xlu0 %4880
      %4882 = vrot.lane.b32.xlu0 %v4299, 48
      %v4883 = vpop.permute.xlu0 %4882
      %4884 = vrot.lane.b32.xlu0 %v4435, 48
      %v4885 = vpop.permute.xlu0 %4884
      %4886 = vrot.lane.b32.xlu0 %v4571, 48
      %v4887 = vpop.permute.xlu0 %4886
      %4904 = vrot.lane.b32.xlu0 %v3620, 64
      %v4905 = vpop.permute.xlu0 %4904
      %4906 = vrot.lane.b32.xlu0 %v3756, 64
      %v4907 = vpop.permute.xlu0 %4906
      %4908 = vrot.lane.b32.xlu0 %v3892, 64
      %v4909 = vpop.permute.xlu0 %4908
      %4910 = vrot.lane.b32.xlu0 %v4028, 64
      %v4911 = vpop.permute.xlu0 %4910
      %4912 = vrot.lane.b32.xlu0 %v4164, 64
      %v4913 = vpop.permute.xlu0 %4912
      %4914 = vrot.lane.b32.xlu0 %v4300, 64
      %v4915 = vpop.permute.xlu0 %4914
      %4916 = vrot.lane.b32.xlu0 %v4436, 64
      %v4917 = vpop.permute.xlu0 %4916
      %4918 = vrot.lane.b32.xlu0 %v4572, 64
      %v4919 = vpop.permute.xlu0 %4918
      %4936 = vrot.lane.b32.xlu0 %v3621, 80
      %v4937 = vpop.permute.xlu0 %4936
      %4938 = vrot.lane.b32.xlu0 %v3757, 80
      %v4939 = vpop.permute.xlu0 %4938
      %4940 = vrot.lane.b32.xlu0 %v3893, 80
      %v4941 = vpop.permute.xlu0 %4940
      %4942 = vrot.lane.b32.xlu0 %v4029, 80
      %v4943 = vpop.permute.xlu0 %4942
      %4944 = vrot.lane.b32.xlu0 %v4165, 80
      %v4945 = vpop.permute.xlu0 %4944
      %4946 = vrot.lane.b32.xlu0 %v4301, 80
      %v4947 = vpop.permute.xlu0 %4946
      %4948 = vrot.lane.b32.xlu0 %v4437, 80
      %v4949 = vpop.permute.xlu0 %4948
      %4950 = vrot.lane.b32.xlu0 %v4573, 80
      %v4951 = vpop.permute.xlu0 %4950
      %4968 = vrot.lane.b32.xlu0 %v3622, 96
      %v4969 = vpop.permute.xlu0 %4968
      %4970 = vrot.lane.b32.xlu0 %v3758, 96
      %v4971 = vpop.permute.xlu0 %4970
      %4972 = vrot.lane.b32.xlu0 %v3894, 96
      %v4973 = vpop.permute.xlu0 %4972
      %4974 = vrot.lane.b32.xlu0 %v4030, 96
      %v4975 = vpop.permute.xlu0 %4974
      %4976 = vrot.lane.b32.xlu0 %v4166, 96
      %v4977 = vpop.permute.xlu0 %4976
      %4978 = vrot.lane.b32.xlu0 %v4302, 96
      %v4979 = vpop.permute.xlu0 %4978
      %4980 = vrot.lane.b32.xlu0 %v4438, 96
      %v4981 = vpop.permute.xlu0 %4980
      %4982 = vrot.lane.b32.xlu0 %v4574, 96
      %v4983 = vpop.permute.xlu0 %4982
      %5000 = vrot.lane.b32.xlu0 %v3623, 112
      %v5001 = vpop.permute.xlu0 %5000
      %5002 = vrot.lane.b32.xlu0 %v3759, 112
      %v5003 = vpop.permute.xlu0 %5002
      %5004 = vrot.lane.b32.xlu0 %v3895, 112
      %v5005 = vpop.permute.xlu0 %5004
      %5006 = vrot.lane.b32.xlu0 %v4031, 112
      %v5007 = vpop.permute.xlu0 %5006
      %5008 = vrot.lane.b32.xlu0 %v4167, 112
      %v5009 = vpop.permute.xlu0 %5008
      %5010 = vrot.lane.b32.xlu0 %v4303, 112
      %v5011 = vpop.permute.xlu0 %5010
      %5012 = vrot.lane.b32.xlu0 %v4439, 112
      %v5013 = vpop.permute.xlu0 %5012
      %5014 = vrot.lane.b32.xlu0 %v4575, 112
      %v5015 = vpop.permute.xlu0 %5014
      %v5024 = vsel %vm606, %v2528, %v4585
      %v5025 = vsel %vm606, %v2664, %v4587
      %v5026 = vsel %vm606, %v2800, %v4589
      %v5027 = vsel %vm606, %v2936, %v4591
      %v5028 = vsel %vm606, %v3072, %v4593
      %v5029 = vsel %vm606, %v3208, %v4595
      %v5030 = vsel %vm606, %v3344, %v4597
      %v5031 = vsel %vm606, %v3480, %v4599
      %v5032 = vsel %vm624, %v5024, %v4617
      %v5033 = vsel %vm624, %v5025, %v4619
      %v5034 = vsel %vm624, %v5026, %v4621
      %v5035 = vsel %vm624, %v5027, %v4623
      %v5036 = vsel %vm624, %v5028, %v4625
      %v5037 = vsel %vm624, %v5029, %v4627
      %v5038 = vsel %vm624, %v5030, %v4629
      %v5039 = vsel %vm624, %v5031, %v4631
      %v5040 = vsel %vm642, %v5032, %v4649
      %v5041 = vsel %vm642, %v5033, %v4651
      %v5042 = vsel %vm642, %v5034, %v4653
      %v5043 = vsel %vm642, %v5035, %v4655
      %v5044 = vsel %vm642, %v5036, %v4657
      %v5045 = vsel %vm642, %v5037, %v4659
      %v5046 = vsel %vm642, %v5038, %v4661
      %v5047 = vsel %vm642, %v5039, %v4663
      %v5048 = vsel %vm660, %v5040, %v4681
      %v5049 = vsel %vm660, %v5041, %v4683
      %v5050 = vsel %vm660, %v5042, %v4685
      %v5051 = vsel %vm660, %v5043, %v4687
      %v5052 = vsel %vm660, %v5044, %v4689
      %v5053 = vsel %vm660, %v5045, %v4691
      %v5054 = vsel %vm660, %v5046, %v4693
      %v5055 = vsel %vm660, %v5047, %v4695
      %vm5056 = vcmask 654336
      %v5057 = vsel %vm5056, %v5048, %v4713
      %v5058 = vsel %vm5056, %v5049, %v4715
      %v5059 = vsel %vm5056, %v5050, %v4717
      %v5060 = vsel %vm5056, %v5051, %v4719
      %v5061 = vsel %vm5056, %v5052, %v4721
      %v5062 = vsel %vm5056, %v5053, %v4723
      %v5063 = vsel %vm5056, %v5054, %v4725
      %v5064 = vsel %vm5056, %v5055, %v4727
      %vm5065 = vcmask 785408
      %v5066 = vsel %vm5065, %v5057, %v4745
      %v5067 = vsel %vm5065, %v5058, %v4747
      %v5068 = vsel %vm5065, %v5059, %v4749
      %v5069 = vsel %vm5065, %v5060, %v4751
      %v5070 = vsel %vm5065, %v5061, %v4753
      %v5071 = vsel %vm5065, %v5062, %v4755
      %v5072 = vsel %vm5065, %v5063, %v4757
      %v5073 = vsel %vm5065, %v5064, %v4759
      %vm5074 = vcmask 916480
      %v5075 = vsel %vm5074, %v5066, %v4777
      %v5076 = vsel %vm5074, %v5067, %v4779
      %v5077 = vsel %vm5074, %v5068, %v4781
      %v5078 = vsel %vm5074, %v5069, %v4783
      %v5079 = vsel %vm5074, %v5070, %v4785
      %v5080 = vsel %vm5074, %v5071, %v4787
      %v5081 = vsel %vm5074, %v5072, %v4789
      %v5082 = vsel %vm5074, %v5073, %v4791
      %v5083 = vsel %vm606, %v3616, %v4809
      %v5084 = vsel %vm606, %v3752, %v4811
      %v5085 = vsel %vm606, %v3888, %v4813
      %v5086 = vsel %vm606, %v4024, %v4815
      %v5087 = vsel %vm606, %v4160, %v4817
      %v5088 = vsel %vm606, %v4296, %v4819
      %v5089 = vsel %vm606, %v4432, %v4821
      %v5090 = vsel %vm606, %v4568, %v4823
      %v5091 = vsel %vm624, %v5083, %v4841
      %v5092 = vsel %vm624, %v5084, %v4843
      %v5093 = vsel %vm624, %v5085, %v4845
      %v5094 = vsel %vm624, %v5086, %v4847
      %v5095 = vsel %vm624, %v5087, %v4849
      %v5096 = vsel %vm624, %v5088, %v4851
      %v5097 = vsel %vm624, %v5089, %v4853
      %v5098 = vsel %vm624, %v5090, %v4855
      %v5099 = vsel %vm642, %v5091, %v4873
      %v5100 = vsel %vm642, %v5092, %v4875
      %v5101 = vsel %vm642, %v5093, %v4877
      %v5102 = vsel %vm642, %v5094, %v4879
      %v5103 = vsel %vm642, %v5095, %v4881
      %v5104 = vsel %vm642, %v5096, %v4883
      %v5105 = vsel %vm642, %v5097, %v4885
      %v5106 = vsel %vm642, %v5098, %v4887
      %v5107 = vsel %vm660, %v5099, %v4905
      %v5108 = vsel %vm660, %v5100, %v4907
      %v5109 = vsel %vm660, %v5101, %v4909
      %v5110 = vsel %vm660, %v5102, %v4911
      %v5111 = vsel %vm660, %v5103, %v4913
      %v5112 = vsel %vm660, %v5104, %v4915
      %v5113 = vsel %vm660, %v5105, %v4917
      %v5114 = vsel %vm660, %v5106, %v4919
      %v5115 = vsel %vm5056, %v5107, %v4937
      %v5116 = vsel %vm5056, %v5108, %v4939
      %v5117 = vsel %vm5056, %v5109, %v4941
      %v5118 = vsel %vm5056, %v5110, %v4943
      %v5119 = vsel %vm5056, %v5111, %v4945
      %v5120 = vsel %vm5056, %v5112, %v4947
      %v5121 = vsel %vm5056, %v5113, %v4949
      %v5122 = vsel %vm5056, %v5114, %v4951
      %v5123 = vsel %vm5065, %v5115, %v4969
      %v5124 = vsel %vm5065, %v5116, %v4971
      %v5125 = vsel %vm5065, %v5117, %v4973
      %v5126 = vsel %vm5065, %v5118, %v4975
      %v5127 = vsel %vm5065, %v5119, %v4977
      %v5128 = vsel %vm5065, %v5120, %v4979
      %v5129 = vsel %vm5065, %v5121, %v4981
      %v5130 = vsel %vm5065, %v5122, %v4983
      %v5131 = vsel %vm5074, %v5123, %v5001
      %v5132 = vsel %vm5074, %v5124, %v5003
      %v5133 = vsel %vm5074, %v5125, %v5005
      %v5134 = vsel %vm5074, %v5126, %v5007
      %v5135 = vsel %vm5074, %v5127, %v5009
      %v5136 = vsel %vm5074, %v5128, %v5011
      %v5137 = vsel %vm5074, %v5129, %v5013
      %v5138 = vsel %vm5074, %v5130, %v5015
      %5139 = vmatprep.subr.mxu0 0.0
      %5140 = vmatpush1.msra.mxu0 %v816
      %5141 = vmatprep.subr.mxu0 0.0
      %5142 = vmatpush1.msra.mxu0 %v817
      %5143 = vmatprep.subr.mxu0 0.0
      %5144 = vmatpush1.msra.mxu0 %v818
      %5145 = vmatprep.subr.mxu0 0.0
      %5146 = vmatpush1.msra.mxu0 %v819
      %5147 = vmatprep.subr.mxu0 0.0
      %5148 = vmatpush1.msra.mxu0 %v820
      %5149 = vmatprep.subr.mxu0 0.0
      %5150 = vmatpush1.msra.mxu0 %v821
      %5151 = vmatprep.subr.mxu0 0.0
      %5152 = vmatpush1.msra.mxu0 %v822
      %5153 = vmatprep.subr.mxu0 0.0
      %5154 = vmatpush1.msra.mxu0 %v823
      %5155 = vmatprep.subr.mxu0 0.0
      %5156 = vmatpush1.msra.mxu0 %v824
      %5157 = vmatprep.subr.mxu0 0.0
      %5158 = vmatpush1.msra.mxu0 %v825
      %5159 = vmatprep.subr.mxu0 0.0
      %5160 = vmatpush1.msra.mxu0 %v826
      %5161 = vmatprep.subr.mxu0 0.0
      %5162 = vmatpush1.msra.mxu0 %v827
      %5163 = vmatprep.subr.mxu0 0.0
      %5164 = vmatpush1.msra.mxu0 %v828
      %5165 = vmatprep.subr.mxu0 0.0
      %5166 = vmatpush1.msra.mxu0 %v829
      %5167 = vmatprep.subr.mxu0 0.0
      %5168 = vmatpush1.msra.mxu0 %v830
      %5169 = vmatprep.subr.mxu0 0.0
      %5170 = vmatpush1.msra.mxu0 %v831
      %5171 = vmatprep.subr.mxu0 0.0
      %5172 = vmatpush1.msra.mxu0 %v832
      %5173 = vmatprep.subr.mxu0 0.0
      %5174 = vmatpush1.msra.mxu0 %v833
      %5175 = vmatprep.subr.mxu0 0.0
      %5176 = vmatpush1.msra.mxu0 %v834
      %5177 = vmatprep.subr.mxu0 0.0
      %5178 = vmatpush1.msra.mxu0 %v835
      %5179 = vmatprep.subr.mxu0 0.0
      %5180 = vmatpush1.msra.mxu0 %v836
      %5181 = vmatprep.subr.mxu0 0.0
      %5182 = vmatpush1.msra.mxu0 %v837
      %5183 = vmatprep.subr.mxu0 0.0
      %5184 = vmatpush1.msra.mxu0 %v838
      %5185 = vmatprep.subr.mxu0 0.0
      %5186 = vmatpush1.msra.mxu0 %v839
      %5187 = vmatprep.subr.mxu0 0.0
      %5188 = vmatpush1.msra.mxu0 %v840
      %5189 = vmatprep.subr.mxu0 0.0
      %5190 = vmatpush1.msra.mxu0 %v841
      %5191 = vmatprep.subr.mxu0 0.0
      %5192 = vmatpush1.msra.mxu0 %v842
      %5193 = vmatprep.subr.mxu0 0.0
      %5194 = vmatpush1.msra.mxu0 %v843
      %5195 = vmatprep.subr.mxu0 0.0
      %5196 = vmatpush1.msra.mxu0 %v844
      %5197 = vmatprep.subr.mxu0 0.0
      %5198 = vmatpush1.msra.mxu0 %v845
      %5199 = vmatprep.subr.mxu0 0.0
      %5200 = vmatpush1.msra.mxu0 %v846
      %5201 = vmatprep.subr.mxu0 0.0
      %5202 = vmatpush1.msra.mxu0 %v847
      %5203 = vmatprep.mubr.f32.mxu0 %v5131
      %5204 = vmatmul.mubr.f32.gmra.mrb[0].mxu0 %v5075
      %v5205 = vpop.f32.mrb[0].mxu0
      %v5206 = vadd.f32 0.0, %v5205
      %v5207 = vpop.f32.mrb[0].mxu0
      %5208 = vmatprep.mubr.f32.mxu0 %v5132
      %5209 = vmatmul.mubr.f32.gmra.mrb[0].mxu0 %v5076
      %v5210 = vpop.f32.mrb[0].mxu0
      %v5211 = vadd.f32 0.0, %v5210
      %v5212 = vpop.f32.mrb[0].mxu0
      %5213 = vmatprep.mubr.f32.mxu0 %v5133
      %5214 = vmatmul.mubr.f32.gmra.mrb[0].mxu0 %v5077
      %v5215 = vpop.f32.mrb[0].mxu0
      %v5216 = vadd.f32 0.0, %v5215
      %v5217 = vpop.f32.mrb[0].mxu0
      %5218 = vmatprep.mubr.f32.mxu0 %v5134
      %5219 = vmatmul.mubr.f32.gmra.mrb[0].mxu0 %v5078
      %v5220 = vpop.f32.mrb[0].mxu0
      %v5221 = vadd.f32 0.0, %v5220
      %v5222 = vpop.f32.mrb[0].mxu0
      %5223 = vmatprep.mubr.f32.mxu0 %v5135
      %5224 = vmatmul.mubr.f32.gmra.mrb[0].mxu0 %v5079
      %v5225 = vpop.f32.mrb[0].mxu0
      %v5226 = vadd.f32 0.0, %v5225
      %v5227 = vpop.f32.mrb[0].mxu0
      %5228 = vmatprep.mubr.f32.mxu0 %v5136
      %5229 = vmatmul.mubr.f32.gmra.mrb[0].mxu0 %v5080
      %v5230 = vpop.f32.mrb[0].mxu0
      %v5231 = vadd.f32 0.0, %v5230
      %v5232 = vpop.f32.mrb[0].mxu0
      %5233 = vmatprep.mubr.f32.mxu0 %v5137
      %5234 = vmatmul.mubr.f32.gmra.mrb[0].mxu0 %v5081
      %v5235 = vpop.f32.mrb[0].mxu0
      %v5236 = vadd.f32 0.0, %v5235
      %v5237 = vpop.f32.mrb[0].mxu0
      %5238 = vmatprep.mubr.f32.mxu0 %v5138
      %5239 = vmatmul.mubr.f32.gmra.mrb[0].mxu0 %v5082
      %v5240 = vpop.f32.mrb[0].mxu0
      %v5241 = vadd.f32 0.0, %v5240
      %v5242 = vpop.f32.mrb[0].mxu0
      %5243 = vdwg.mxu0
      %5244 = vrot.lane.b32.xlu0 %v770, 96
      %v5245 = vpop.permute.xlu0 %5244
      %5246 = vrot.lane.b32.xlu0 %v775, 96
      %v5247 = vpop.permute.xlu0 %5246
      %5248 = vrot.lane.b32.xlu0 %v780, 96
      %v5249 = vpop.permute.xlu0 %5248
      %5250 = vrot.lane.b32.xlu0 %v785, 96
      %v5251 = vpop.permute.xlu0 %5250
      %5252 = vrot.lane.b32.xlu0 %v790, 96
      %v5253 = vpop.permute.xlu0 %5252
      %5254 = vrot.lane.b32.xlu0 %v795, 96
      %v5255 = vpop.permute.xlu0 %5254
      %5256 = vrot.lane.b32.xlu0 %v800, 96
      %v5257 = vpop.permute.xlu0 %5256
      %5258 = vrot.lane.b32.xlu0 %v805, 96
      %v5259 = vpop.permute.xlu0 %5258
      %v5260 = vsel %vm606, %v770, 0
      %v5262 = vsel %vm606, %v775, 0
      %v5264 = vsel %vm606, %v780, 0
      %v5266 = vsel %vm606, %v785, 0
      %v5268 = vsel %vm606, %v790, 0
      %v5270 = vsel %vm606, %v795, 0
      %v5272 = vsel %vm606, %v800, 0
      %v5274 = vsel %vm606, %v805, 0
      %v5276 = vsel %vm606, %v5245, 0
      %v5278 = vsel %vm606, %v5247, 0
      %v5280 = vsel %vm606, %v5249, 0
      %v5282 = vsel %vm606, %v5251, 0
      %v5284 = vsel %vm606, %v5253, 0
      %v5286 = vsel %vm606, %v5255, 0
      %v5288 = vsel %vm606, %v5257, 0
      %v5290 = vsel %vm606, %v5259, 0
      %5292 = vmatprep.subr.mxu0 0.0
      %5293 = vmatpush1.xpose.msra.mxu0 %v5276
      %5294 = vmatprep.subr.mxu0 0.0
      %5295 = vmatpush1.xpose.msra.mxu0 %v5278
      %5296 = vmatprep.subr.mxu0 0.0
      %5297 = vmatpush1.xpose.msra.mxu0 %v5280
      %5298 = vmatprep.subr.mxu0 0.0
      %5299 = vmatpush1.xpose.msra.mxu0 %v5282
      %5300 = vmatprep.subr.mxu0 0.0
      %5301 = vmatpush1.xpose.msra.mxu0 %v5284
      %5302 = vmatprep.subr.mxu0 0.0
      %5303 = vmatpush1.xpose.msra.mxu0 %v5286
      %5304 = vmatprep.subr.mxu0 0.0
      %5305 = vmatpush1.xpose.msra.mxu0 %v5288
      %5306 = vmatprep.subr.mxu0 0.0
      %5307 = vmatpush1.xpose.msra.mxu0 %v5290
      %5308 = vmatprep.subr.mxu0 0.0
      %5309 = vmatpush1.xpose.msra.mxu0 0.0
      %5310 = vmatprep.subr.mxu0 0.0
      %5311 = vmatpush1.xpose.msra.mxu0 0.0
      %5312 = vmatprep.subr.mxu0 0.0
      %5313 = vmatpush1.xpose.msra.mxu0 0.0
      %5314 = vmatprep.subr.mxu0 0.0
      %5315 = vmatpush1.xpose.msra.mxu0 0.0
      %5316 = vmatprep.subr.mxu0 0.0
      %5317 = vmatpush1.xpose.msra.mxu0 0.0
      %5318 = vmatprep.subr.mxu0 0.0
      %5319 = vmatpush1.xpose.msra.mxu0 0.0
      %5320 = vmatprep.subr.mxu0 0.0
      %5321 = vmatpush1.xpose.msra.mxu0 0.0
      %5322 = vmatprep.subr.mxu0 0.0
      %5323 = vmatpush1.xpose.msra.mxu0 0.0
      %5324 = vmatprep.subr.mxu0 0.0
      %5325 = vmatpush1.xpose.msra.mxu0 0.0
      %5326 = vmatprep.subr.mxu0 0.0
      %5327 = vmatpush1.xpose.msra.mxu0 0.0
      %5328 = vmatprep.subr.mxu0 0.0
      %5329 = vmatpush1.xpose.msra.mxu0 0.0
      %5330 = vmatprep.subr.mxu0 0.0
      %5331 = vmatpush1.xpose.msra.mxu0 0.0
      %5332 = vmatprep.subr.mxu0 0.0
      %5333 = vmatpush1.xpose.msra.mxu0 0.0
      %5334 = vmatprep.subr.mxu0 0.0
      %5335 = vmatpush1.xpose.msra.mxu0 0.0
      %5336 = vmatprep.subr.mxu0 0.0
      %5337 = vmatpush1.xpose.msra.mxu0 0.0
      %5338 = vmatprep.subr.mxu0 0.0
      %5339 = vmatpush1.xpose.msra.mxu0 0.0
      %5340 = vmatprep.subr.mxu0 0.0
      %5341 = vmatpush1.xpose.msra.mxu0 0.0
      %5342 = vmatprep.subr.mxu0 0.0
      %5343 = vmatpush1.xpose.msra.mxu0 0.0
      %5344 = vmatprep.subr.mxu0 0.0
      %5345 = vmatpush1.xpose.msra.mxu0 0.0
      %5346 = vmatprep.subr.mxu0 0.0
      %5347 = vmatpush1.xpose.msra.mxu0 0.0
      %5348 = vmatprep.subr.mxu0 0.0
      %5349 = vmatpush1.xpose.msra.mxu0 0.0
      %5350 = vmatprep.subr.mxu0 0.0
      %5351 = vmatpush1.xpose.msra.mxu0 0.0
      %5352 = vmatprep.subr.mxu0 0.0
      %5353 = vmatpush1.xpose.msra.mxu0 0.0
      %5354 = vmatprep.subr.mxu0 0.0
      %5355 = vmatpush1.xpose.msra.mxu0 0.0
      %5356 = vmatprep.mubr.f32.mxu0 0.0
      %5357 = vmatmul.mubr.f32.gmra.mrb[0].mxu0 %v5260
      %v5358 = vpop.f32.mrb[0].mxu0
      %v5359 = vadd.f32 %v5206, %v5358
      %v5360 = vpop.f32.mrb[0].mxu0
      %5361 = vmatprep.mubr.f32.mxu0 0.0
      %5362 = vmatmul.mubr.f32.gmra.mrb[0].mxu0 %v5262
      %v5363 = vpop.f32.mrb[0].mxu0
      %v5364 = vadd.f32 %v5211, %v5363
      %v5365 = vpop.f32.mrb[0].mxu0
      %5366 = vmatprep.mubr.f32.mxu0 0.0
      %5367 = vmatmul.mubr.f32.gmra.mrb[0].mxu0 %v5264
      %v5368 = vpop.f32.mrb[0].mxu0
      %v5369 = vadd.f32 %v5216, %v5368
      %v5370 = vpop.f32.mrb[0].mxu0
      %5371 = vmatprep.mubr.f32.mxu0 0.0
      %5372 = vmatmul.mubr.f32.gmra.mrb[0].mxu0 %v5266
      %v5373 = vpop.f32.mrb[0].mxu0
      %v5374 = vadd.f32 %v5221, %v5373
      %v5375 = vpop.f32.mrb[0].mxu0
      %5376 = vmatprep.mubr.f32.mxu0 0.0
      %5377 = vmatmul.mubr.f32.gmra.mrb[0].mxu0 %v5268
      %v5378 = vpop.f32.mrb[0].mxu0
      %v5379 = vadd.f32 %v5226, %v5378
      %v5380 = vpop.f32.mrb[0].mxu0
      %5381 = vmatprep.mubr.f32.mxu0 0.0
      %5382 = vmatmul.mubr.f32.gmra.mrb[0].mxu0 %v5270
      %v5383 = vpop.f32.mrb[0].mxu0
      %v5384 = vadd.f32 %v5231, %v5383
      %v5385 = vpop.f32.mrb[0].mxu0
      %5386 = vmatprep.mubr.f32.mxu0 0.0
      %5387 = vmatmul.mubr.f32.gmra.mrb[0].mxu0 %v5272
      %v5388 = vpop.f32.mrb[0].mxu0
      %v5389 = vadd.f32 %v5236, %v5388
      %v5390 = vpop.f32.mrb[0].mxu0
      %5391 = vmatprep.mubr.f32.mxu0 0.0
      %5392 = vmatmul.mubr.f32.gmra.mrb[0].mxu0 %v5274
      %v5393 = vpop.f32.mrb[0].mxu0
      %v5394 = vadd.f32 %v5241, %v5393
      %v5395 = vpop.f32.mrb[0].mxu0
      %5396 = vdwg.mxu0
      %v5397 = vmul.f32 %v5359, 0.25
      %v5398 = vmul.f32 %v5364, 0.25
      %v5399 = vmul.f32 %v5369, 0.25
      %v5400 = vmul.f32 %v5374, 0.25
      %v5401 = vmul.f32 %v5379, 0.25
      %v5402 = vmul.f32 %v5384, 0.25
      %v5403 = vmul.f32 %v5389, 0.25
      %v5404 = vmul.f32 %v5394, 0.25
      %v5405 = vsel %vm660, %v5397, -inf
      %5406 = vmax.xlane.f32.xlu0 %v5405
      %v5407 = vpop.xlane.xlu0 %5406
      %v5408 = vsel %vm660, %v5398, -inf
      %5409 = vmax.xlane.f32.xlu0 %v5408
      %v5410 = vpop.xlane.xlu0 %5409
      %v5411 = vsel %vm660, %v5399, -inf
      %5412 = vmax.xlane.f32.xlu0 %v5411
      %v5413 = vpop.xlane.xlu0 %5412
      %v5414 = vsel %vm660, %v5400, -inf
      %5415 = vmax.xlane.f32.xlu0 %v5414
      %v5416 = vpop.xlane.xlu0 %5415
      %v5417 = vsel %vm660, %v5401, -inf
      %5418 = vmax.xlane.f32.xlu0 %v5417
      %v5419 = vpop.xlane.xlu0 %5418
      %v5420 = vsel %vm660, %v5402, -inf
      %5421 = vmax.xlane.f32.xlu0 %v5420
      %v5422 = vpop.xlane.xlu0 %5421
      %v5423 = vsel %vm660, %v5403, -inf
      %5424 = vmax.xlane.f32.xlu0 %v5423
      %v5425 = vpop.xlane.xlu0 %5424
      %v5426 = vsel %vm660, %v5404, -inf
      %5427 = vmax.xlane.f32.xlu0 %v5426
      %v5428 = vpop.xlane.xlu0 %5427
      %v5429 = vsub.f32 %v5397, %v5407
      %v5430 = vsub.f32 %v5398, %v5410
      %v5431 = vsub.f32 %v5399, %v5413
      %v5432 = vsub.f32 %v5400, %v5416
      %v5433 = vsub.f32 %v5401, %v5419
      %v5434 = vsub.f32 %v5402, %v5422
      %v5435 = vsub.f32 %v5403, %v5425
      %v5436 = vsub.f32 %v5404, %v5428
      %v5437 = vmul.f32 %v5429, 1.442695
      %v5438 = vpow.pop %v5437
      %v5439 = vmul.f32 %v5430, 1.442695
      %v5440 = vpow.pop %v5439
      %v5441 = vmul.f32 %v5431, 1.442695
      %v5442 = vpow.pop %v5441
      %v5443 = vmul.f32 %v5432, 1.442695
      %v5444 = vpow.pop %v5443
      %v5445 = vmul.f32 %v5433, 1.442695
      %v5446 = vpow.pop %v5445
      %v5447 = vmul.f32 %v5434, 1.442695
      %v5448 = vpow.pop %v5447
      %v5449 = vmul.f32 %v5435, 1.442695
      %v5450 = vpow.pop %v5449
      %v5451 = vmul.f32 %v5436, 1.442695
      %v5452 = vpow.pop %v5451
      %v5453 = vsel %vm660, %v5438, 0.0
      %5454 = vadd.xlane.f32.xlu0 %v5453
      %v5455 = vpop.xlane.xlu0 %5454
      %v5456 = vsel %vm660, %v5440, 0.0
      %5457 = vadd.xlane.f32.xlu0 %v5456
      %v5458 = vpop.xlane.xlu0 %5457
      %v5459 = vsel %vm660, %v5442, 0.0
      %5460 = vadd.xlane.f32.xlu0 %v5459
      %v5461 = vpop.xlane.xlu0 %5460
      %v5462 = vsel %vm660, %v5444, 0.0
      %5463 = vadd.xlane.f32.xlu0 %v5462
      %v5464 = vpop.xlane.xlu0 %5463
      %v5465 = vsel %vm660, %v5446, 0.0
      %5466 = vadd.xlane.f32.xlu0 %v5465
      %v5467 = vpop.xlane.xlu0 %5466
      %v5468 = vsel %vm660, %v5448, 0.0
      %5469 = vadd.xlane.f32.xlu0 %v5468
      %v5470 = vpop.xlane.xlu0 %5469
      %v5471 = vsel %vm660, %v5450, 0.0
      %5472 = vadd.xlane.f32.xlu0 %v5471
      %v5473 = vpop.xlane.xlu0 %5472
      %v5474 = vsel %vm660, %v5452, 0.0
      %5475 = vadd.xlane.f32.xlu0 %v5474
      %v5476 = vpop.xlane.xlu0 %5475
      %v5477 = vrcp.pop %v5455
      %v5478 = vrcp.pop %v5458
      %v5479 = vrcp.pop %v5461
      %v5480 = vrcp.pop %v5464
      %v5481 = vrcp.pop %v5467
      %v5482 = vrcp.pop %v5470
      %v5483 = vrcp.pop %v5473
      %v5484 = vrcp.pop %v5476
      %v5485 = vmul.f32 %v5438, %v5477
      %v5486 = vmul.f32 %v5440, %v5478
      %v5487 = vmul.f32 %v5442, %v5479
      %v5488 = vmul.f32 %v5444, %v5480
      %v5489 = vmul.f32 %v5446, %v5481
      %v5490 = vmul.f32 %v5448, %v5482
      %v5491 = vmul.f32 %v5450, %v5483
      %v5492 = vmul.f32 %v5452, %v5484
      %5493 = vrot.lane.b32.xlu0 %v770, 64
      %v5494 = vpop.permute.xlu0 %5493
      %5495 = vrot.lane.b32.xlu0 %v775, 64
      %v5496 = vpop.permute.xlu0 %5495
      %5497 = vrot.lane.b32.xlu0 %v780, 64
      %v5498 = vpop.permute.xlu0 %5497
      %5499 = vrot.lane.b32.xlu0 %v785, 64
      %v5500 = vpop.permute.xlu0 %5499
      %5501 = vrot.lane.b32.xlu0 %v790, 64
      %v5502 = vpop.permute.xlu0 %5501
      %5503 = vrot.lane.b32.xlu0 %v795, 64
      %v5504 = vpop.permute.xlu0 %5503
      %5505 = vrot.lane.b32.xlu0 %v800, 64
      %v5506 = vpop.permute.xlu0 %5505
      %5507 = vrot.lane.b32.xlu0 %v805, 64
      %v5508 = vpop.permute.xlu0 %5507
      %v5518 = vsel %vm660, %v5485, 0
      %v5521 = vsel %vm660, %v5486, 0
      %v5524 = vsel %vm660, %v5487, 0
      %v5527 = vsel %vm660, %v5488, 0
      %v5530 = vsel %vm660, %v5489, 0
      %v5533 = vsel %vm660, %v5490, 0
      %v5536 = vsel %vm660, %v5491, 0
      %v5539 = vsel %vm660, %v5492, 0
      %5541 = vmatprep.subr.mxu0 0.0
      %5542 = vmatpush1.msra.mxu0 %v5494
      %5543 = vmatprep.subr.mxu0 0.0
      %5544 = vmatpush1.msra.mxu0 %v5496
      %5545 = vmatprep.subr.mxu0 0.0
      %5546 = vmatpush1.msra.mxu0 %v5498
      %5547 = vmatprep.subr.mxu0 0.0
      %5548 = vmatpush1.msra.mxu0 %v5500
      %5549 = vmatprep.subr.mxu0 0.0
      %5550 = vmatpush1.msra.mxu0 %v5502
      %5551 = vmatprep.subr.mxu0 0.0
      %5552 = vmatpush1.msra.mxu0 %v5504
      %5553 = vmatprep.subr.mxu0 0.0
      %5554 = vmatpush1.msra.mxu0 %v5506
      %5555 = vmatprep.subr.mxu0 0.0
      %5556 = vmatpush1.msra.mxu0 %v5508
      %5557 = vmatprep.subr.mxu0 0.0
      %5558 = vmatpush1.msra.mxu0 0.0
      %5559 = vmatprep.subr.mxu0 0.0
      %5560 = vmatpush1.msra.mxu0 0.0
      %5561 = vmatprep.subr.mxu0 0.0
      %5562 = vmatpush1.msra.mxu0 0.0
      %5563 = vmatprep.subr.mxu0 0.0
      %5564 = vmatpush1.msra.mxu0 0.0
      %5565 = vmatprep.subr.mxu0 0.0
      %5566 = vmatpush1.msra.mxu0 0.0
      %5567 = vmatprep.subr.mxu0 0.0
      %5568 = vmatpush1.msra.mxu0 0.0
      %5569 = vmatprep.subr.mxu0 0.0
      %5570 = vmatpush1.msra.mxu0 0.0
      %5571 = vmatprep.subr.mxu0 0.0
      %5572 = vmatpush1.msra.mxu0 0.0
      %5573 = vmatprep.subr.mxu0 0.0
      %5574 = vmatpush1.msra.mxu0 0.0
      %5575 = vmatprep.subr.mxu0 0.0
      %5576 = vmatpush1.msra.mxu0 0.0
      %5577 = vmatprep.subr.mxu0 0.0
      %5578 = vmatpush1.msra.mxu0 0.0
      %5579 = vmatprep.subr.mxu0 0.0
      %5580 = vmatpush1.msra.mxu0 0.0
      %5581 = vmatprep.subr.mxu0 0.0
      %5582 = vmatpush1.msra.mxu0 0.0
      %5583 = vmatprep.subr.mxu0 0.0
      %5584 = vmatpush1.msra.mxu0 0.0
      %5585 = vmatprep.subr.mxu0 0.0
      %5586 = vmatpush1.msra.mxu0 0.0
      %5587 = vmatprep.subr.mxu0 0.0
      %5588 = vmatpush1.msra.mxu0 0.0
      %5589 = vmatprep.subr.mxu0 0.0
      %5590 = vmatpush1.msra.mxu0 0.0
      %5591 = vmatprep.subr.mxu0 0.0
      %5592 = vmatpush1.msra.mxu0 0.0
      %5593 = vmatprep.subr.mxu0 0.0
      %5594 = vmatpush1.msra.mxu0 0.0
      %5595 = vmatprep.subr.mxu0 0.0
      %5596 = vmatpush1.msra.mxu0 0.0
      %5597 = vmatprep.subr.mxu0 0.0
      %5598 = vmatpush1.msra.mxu0 0.0
      %5599 = vmatprep.subr.mxu0 0.0
      %5600 = vmatpush1.msra.mxu0 0.0
      %5601 = vmatprep.subr.mxu0 0.0
      %5602 = vmatpush1.msra.mxu0 0.0
      %5603 = vmatprep.subr.mxu0 0.0
      %5604 = vmatpush1.msra.mxu0 0.0
      %5605 = vmatprep.mubr.f32.mxu0 0.0
      %5606 = vmatmul.mubr.f32.gmra.mrb[0].mxu0 %v5518
      %v5607 = vpop.f32.mrb[0].mxu0
      %v5608 = vadd.f32 0.0, %v5607
      %v5609 = vpop.f32.mrb[0].mxu0
      %5610 = vmatprep.mubr.f32.mxu0 0.0
      %5611 = vmatmul.mubr.f32.gmra.mrb[0].mxu0 %v5521
      %v5612 = vpop.f32.mrb[0].mxu0
      %v5613 = vadd.f32 0.0, %v5612
      %v5614 = vpop.f32.mrb[0].mxu0
      %5615 = vmatprep.mubr.f32.mxu0 0.0
      %5616 = vmatmul.mubr.f32.gmra.mrb[0].mxu0 %v5524
      %v5617 = vpop.f32.mrb[0].mxu0
      %v5618 = vadd.f32 0.0, %v5617
      %v5619 = vpop.f32.mrb[0].mxu0
      %5620 = vmatprep.mubr.f32.mxu0 0.0
      %5621 = vmatmul.mubr.f32.gmra.mrb[0].mxu0 %v5527
      %v5622 = vpop.f32.mrb[0].mxu0
      %v5623 = vadd.f32 0.0, %v5622
      %v5624 = vpop.f32.mrb[0].mxu0
      %5625 = vmatprep.mubr.f32.mxu0 0.0
      %5626 = vmatmul.mubr.f32.gmra.mrb[0].mxu0 %v5530
      %v5627 = vpop.f32.mrb[0].mxu0
      %v5628 = vadd.f32 0.0, %v5627
      %v5629 = vpop.f32.mrb[0].mxu0
      %5630 = vmatprep.mubr.f32.mxu0 0.0
      %5631 = vmatmul.mubr.f32.gmra.mrb[0].mxu0 %v5533
      %v5632 = vpop.f32.mrb[0].mxu0
      %v5633 = vadd.f32 0.0, %v5632
      %v5634 = vpop.f32.mrb[0].mxu0
      %5635 = vmatprep.mubr.f32.mxu0 0.0
      %5636 = vmatmul.mubr.f32.gmra.mrb[0].mxu0 %v5536
      %v5637 = vpop.f32.mrb[0].mxu0
      %v5638 = vadd.f32 0.0, %v5637
      %v5639 = vpop.f32.mrb[0].mxu0
      %5640 = vmatprep.mubr.f32.mxu0 0.0
      %5641 = vmatmul.mubr.f32.gmra.mrb[0].mxu0 %v5539
      %v5642 = vpop.f32.mrb[0].mxu0
      %v5643 = vadd.f32 0.0, %v5642
      %v5644 = vpop.f32.mrb[0].mxu0
      %5645 = vdwg.mxu0
      %5774 = vrot.lane.b32.xlu0 %v2272, 112
      %v5775 = vpop.permute.xlu0 %5774
      %5776 = vrot.lane.b32.xlu0 %v2273, 112
      %v5777 = vpop.permute.xlu0 %5776
      %5778 = vrot.lane.b32.xlu0 %v2274, 112
      %v5779 = vpop.permute.xlu0 %5778
      %5780 = vrot.lane.b32.xlu0 %v2275, 112
      %v5781 = vpop.permute.xlu0 %5780
      %5782 = vrot.lane.b32.xlu0 %v2276, 112
      %v5783 = vpop.permute.xlu0 %5782
      %5784 = vrot.lane.b32.xlu0 %v2277, 112
      %v5785 = vpop.permute.xlu0 %5784
      %5786 = vrot.lane.b32.xlu0 %v2278, 112
      %v5787 = vpop.permute.xlu0 %5786
      %5788 = vrot.lane.b32.xlu0 %v2279, 112
      %v5789 = vpop.permute.xlu0 %5788
      %5790 = vrot.lane.b32.xlu0 %v2280, 112
      %v5791 = vpop.permute.xlu0 %5790
      %5792 = vrot.lane.b32.xlu0 %v2281, 112
      %v5793 = vpop.permute.xlu0 %5792
      %5794 = vrot.lane.b32.xlu0 %v2282, 112
      %v5795 = vpop.permute.xlu0 %5794
      %5796 = vrot.lane.b32.xlu0 %v2283, 112
      %v5797 = vpop.permute.xlu0 %5796
      %5798 = vrot.lane.b32.xlu0 %v2284, 112
      %v5799 = vpop.permute.xlu0 %5798
      %5800 = vrot.lane.b32.xlu0 %v2285, 112
      %v5801 = vpop.permute.xlu0 %5800
      %5802 = vrot.lane.b32.xlu0 %v2286, 112
      %v5803 = vpop.permute.xlu0 %5802
      %5804 = vrot.lane.b32.xlu0 %v2287, 112
      %v5805 = vpop.permute.xlu0 %5804
      %5806 = vrot.lane.b32.xlu0 %v2288, 112
      %v5807 = vpop.permute.xlu0 %5806
      %5808 = vrot.lane.b32.xlu0 %v2289, 112
      %v5809 = vpop.permute.xlu0 %5808
      %5810 = vrot.lane.b32.xlu0 %v2290, 112
      %v5811 = vpop.permute.xlu0 %5810
      %5812 = vrot.lane.b32.xlu0 %v2291, 112
      %v5813 = vpop.permute.xlu0 %5812
      %5814 = vrot.lane.b32.xlu0 %v2292, 112
      %v5815 = vpop.permute.xlu0 %5814
      %5816 = vrot.lane.b32.xlu0 %v2293, 112
      %v5817 = vpop.permute.xlu0 %5816
      %5818 = vrot.lane.b32.xlu0 %v2294, 112
      %v5819 = vpop.permute.xlu0 %5818
      %5820 = vrot.lane.b32.xlu0 %v2295, 112
      %v5821 = vpop.permute.xlu0 %5820
      %5822 = vrot.lane.b32.xlu0 %v2296, 112
      %v5823 = vpop.permute.xlu0 %5822
      %5824 = vrot.lane.b32.xlu0 %v2297, 112
      %v5825 = vpop.permute.xlu0 %5824
      %5826 = vrot.lane.b32.xlu0 %v2298, 112
      %v5827 = vpop.permute.xlu0 %5826
      %5828 = vrot.lane.b32.xlu0 %v2299, 112
      %v5829 = vpop.permute.xlu0 %5828
      %5830 = vrot.lane.b32.xlu0 %v2300, 112
      %v5831 = vpop.permute.xlu0 %5830
      %5832 = vrot.lane.b32.xlu0 %v2301, 112
      %v5833 = vpop.permute.xlu0 %5832
      %5834 = vrot.lane.b32.xlu0 %v2302, 112
      %v5835 = vpop.permute.xlu0 %5834
      %5836 = vrot.lane.b32.xlu0 %v2303, 112
      %v5837 = vpop.permute.xlu0 %5836
      %5838 = vrot.lane.b32.xlu0 %v2304, 112
      %v5839 = vpop.permute.xlu0 %5838
      %5840 = vrot.lane.b32.xlu0 %v2305, 112
      %v5841 = vpop.permute.xlu0 %5840
      %5842 = vrot.lane.b32.xlu0 %v2306, 112
      %v5843 = vpop.permute.xlu0 %5842
      %5844 = vrot.lane.b32.xlu0 %v2307, 112
      %v5845 = vpop.permute.xlu0 %5844
      %5846 = vrot.lane.b32.xlu0 %v2308, 112
      %v5847 = vpop.permute.xlu0 %5846
      %5848 = vrot.lane.b32.xlu0 %v2309, 112
      %v5849 = vpop.permute.xlu0 %5848
      %5850 = vrot.lane.b32.xlu0 %v2310, 112
      %v5851 = vpop.permute.xlu0 %5850
      %5852 = vrot.lane.b32.xlu0 %v2311, 112
      %v5853 = vpop.permute.xlu0 %5852
      %5854 = vrot.lane.b32.xlu0 %v2312, 112
      %v5855 = vpop.permute.xlu0 %5854
      %5856 = vrot.lane.b32.xlu0 %v2313, 112
      %v5857 = vpop.permute.xlu0 %5856
      %5858 = vrot.lane.b32.xlu0 %v2314, 112
      %v5859 = vpop.permute.xlu0 %5858
      %5860 = vrot.lane.b32.xlu0 %v2315, 112
      %v5861 = vpop.permute.xlu0 %5860
      %5862 = vrot.lane.b32.xlu0 %v2316, 112
      %v5863 = vpop.permute.xlu0 %5862
      %5864 = vrot.lane.b32.xlu0 %v2317, 112
      %v5865 = vpop.permute.xlu0 %5864
      %5866 = vrot.lane.b32.xlu0 %v2318, 112
      %v5867 = vpop.permute.xlu0 %5866
      %5868 = vrot.lane.b32.xlu0 %v2319, 112
      %v5869 = vpop.permute.xlu0 %5868
      %5870 = vrot.lane.b32.xlu0 %v2320, 112
      %v5871 = vpop.permute.xlu0 %5870
      %5872 = vrot.lane.b32.xlu0 %v2321, 112
      %v5873 = vpop.permute.xlu0 %5872
      %5874 = vrot.lane.b32.xlu0 %v2322, 112
      %v5875 = vpop.permute.xlu0 %5874
      %5876 = vrot.lane.b32.xlu0 %v2323, 112
      %v5877 = vpop.permute.xlu0 %5876
      %5878 = vrot.lane.b32.xlu0 %v2324, 112
      %v5879 = vpop.permute.xlu0 %5878
      %5880 = vrot.lane.b32.xlu0 %v2325, 112
      %v5881 = vpop.permute.xlu0 %5880
      %5882 = vrot.lane.b32.xlu0 %v2326, 112
      %v5883 = vpop.permute.xlu0 %5882
      %5884 = vrot.lane.b32.xlu0 %v2327, 112
      %v5885 = vpop.permute.xlu0 %5884
      %5886 = vrot.lane.b32.xlu0 %v2328, 112
      %v5887 = vpop.permute.xlu0 %5886
      %5888 = vrot.lane.b32.xlu0 %v2329, 112
      %v5889 = vpop.permute.xlu0 %5888
      %5890 = vrot.lane.b32.xlu0 %v2330, 112
      %v5891 = vpop.permute.xlu0 %5890
      %5892 = vrot.lane.b32.xlu0 %v2331, 112
      %v5893 = vpop.permute.xlu0 %5892
      %5894 = vrot.lane.b32.xlu0 %v2332, 112
      %v5895 = vpop.permute.xlu0 %5894
      %5896 = vrot.lane.b32.xlu0 %v2333, 112
      %v5897 = vpop.permute.xlu0 %5896
      %5898 = vrot.lane.b32.xlu0 %v2334, 112
      %v5899 = vpop.permute.xlu0 %5898
      %5900 = vrot.lane.b32.xlu0 %v2335, 112
      %v5901 = vpop.permute.xlu0 %5900
      %5902 = vrot.lane.b32.xlu0 %v2336, 112
      %v5903 = vpop.permute.xlu0 %5902
      %5904 = vrot.lane.b32.xlu0 %v2337, 112
      %v5905 = vpop.permute.xlu0 %5904
      %5906 = vrot.lane.b32.xlu0 %v2338, 112
      %v5907 = vpop.permute.xlu0 %5906
      %5908 = vrot.lane.b32.xlu0 %v2339, 112
      %v5909 = vpop.permute.xlu0 %5908
      %5910 = vrot.lane.b32.xlu0 %v2340, 112
      %v5911 = vpop.permute.xlu0 %5910
      %5912 = vrot.lane.b32.xlu0 %v2341, 112
      %v5913 = vpop.permute.xlu0 %5912
      %5914 = vrot.lane.b32.xlu0 %v2342, 112
      %v5915 = vpop.permute.xlu0 %5914
      %5916 = vrot.lane.b32.xlu0 %v2343, 112
      %v5917 = vpop.permute.xlu0 %5916
      %5918 = vrot.lane.b32.xlu0 %v2344, 112
      %v5919 = vpop.permute.xlu0 %5918
      %5920 = vrot.lane.b32.xlu0 %v2345, 112
      %v5921 = vpop.permute.xlu0 %5920
      %5922 = vrot.lane.b32.xlu0 %v2346, 112
      %v5923 = vpop.permute.xlu0 %5922
      %5924 = vrot.lane.b32.xlu0 %v2347, 112
      %v5925 = vpop.permute.xlu0 %5924
      %5926 = vrot.lane.b32.xlu0 %v2348, 112
      %v5927 = vpop.permute.xlu0 %5926
      %5928 = vrot.lane.b32.xlu0 %v2349, 112
      %v5929 = vpop.permute.xlu0 %5928
      %5930 = vrot.lane.b32.xlu0 %v2350, 112
      %v5931 = vpop.permute.xlu0 %5930
      %5932 = vrot.lane.b32.xlu0 %v2351, 112
      %v5933 = vpop.permute.xlu0 %5932
      %5934 = vrot.lane.b32.xlu0 %v2352, 112
      %v5935 = vpop.permute.xlu0 %5934
      %5936 = vrot.lane.b32.xlu0 %v2353, 112
      %v5937 = vpop.permute.xlu0 %5936
      %5938 = vrot.lane.b32.xlu0 %v2354, 112
      %v5939 = vpop.permute.xlu0 %5938
      %5940 = vrot.lane.b32.xlu0 %v2355, 112
      %v5941 = vpop.permute.xlu0 %5940
      %5942 = vrot.lane.b32.xlu0 %v2356, 112
      %v5943 = vpop.permute.xlu0 %5942
      %5944 = vrot.lane.b32.xlu0 %v2357, 112
      %v5945 = vpop.permute.xlu0 %5944
      %5946 = vrot.lane.b32.xlu0 %v2358, 112
      %v5947 = vpop.permute.xlu0 %5946
      %5948 = vrot.lane.b32.xlu0 %v2359, 112
      %v5949 = vpop.permute.xlu0 %5948
      %5950 = vrot.lane.b32.xlu0 %v2360, 112
      %v5951 = vpop.permute.xlu0 %5950
      %5952 = vrot.lane.b32.xlu0 %v2361, 112
      %v5953 = vpop.permute.xlu0 %5952
      %5954 = vrot.lane.b32.xlu0 %v2362, 112
      %v5955 = vpop.permute.xlu0 %5954
      %5956 = vrot.lane.b32.xlu0 %v2363, 112
      %v5957 = vpop.permute.xlu0 %5956
      %5958 = vrot.lane.b32.xlu0 %v2364, 112
      %v5959 = vpop.permute.xlu0 %5958
      %5960 = vrot.lane.b32.xlu0 %v2365, 112
      %v5961 = vpop.permute.xlu0 %5960
      %5962 = vrot.lane.b32.xlu0 %v2366, 112
      %v5963 = vpop.permute.xlu0 %5962
      %5964 = vrot.lane.b32.xlu0 %v2367, 112
      %v5965 = vpop.permute.xlu0 %5964
      %5966 = vrot.lane.b32.xlu0 %v2368, 112
      %v5967 = vpop.permute.xlu0 %5966
      %5968 = vrot.lane.b32.xlu0 %v2369, 112
      %v5969 = vpop.permute.xlu0 %5968
      %5970 = vrot.lane.b32.xlu0 %v2370, 112
      %v5971 = vpop.permute.xlu0 %5970
      %5972 = vrot.lane.b32.xlu0 %v2371, 112
      %v5973 = vpop.permute.xlu0 %5972
      %5974 = vrot.lane.b32.xlu0 %v2372, 112
      %v5975 = vpop.permute.xlu0 %5974
      %5976 = vrot.lane.b32.xlu0 %v2373, 112
      %v5977 = vpop.permute.xlu0 %5976
      %5978 = vrot.lane.b32.xlu0 %v2374, 112
      %v5979 = vpop.permute.xlu0 %5978
      %5980 = vrot.lane.b32.xlu0 %v2375, 112
      %v5981 = vpop.permute.xlu0 %5980
      %5982 = vrot.lane.b32.xlu0 %v2376, 112
      %v5983 = vpop.permute.xlu0 %5982
      %5984 = vrot.lane.b32.xlu0 %v2377, 112
      %v5985 = vpop.permute.xlu0 %5984
      %5986 = vrot.lane.b32.xlu0 %v2378, 112
      %v5987 = vpop.permute.xlu0 %5986
      %5988 = vrot.lane.b32.xlu0 %v2379, 112
      %v5989 = vpop.permute.xlu0 %5988
      %5990 = vrot.lane.b32.xlu0 %v2380, 112
      %v5991 = vpop.permute.xlu0 %5990
      %5992 = vrot.lane.b32.xlu0 %v2381, 112
      %v5993 = vpop.permute.xlu0 %5992
      %5994 = vrot.lane.b32.xlu0 %v2382, 112
      %v5995 = vpop.permute.xlu0 %5994
      %5996 = vrot.lane.b32.xlu0 %v2383, 112
      %v5997 = vpop.permute.xlu0 %5996
      %5998 = vrot.lane.b32.xlu0 %v2384, 112
      %v5999 = vpop.permute.xlu0 %5998
      %6000 = vrot.lane.b32.xlu0 %v2385, 112
      %v6001 = vpop.permute.xlu0 %6000
      %6002 = vrot.lane.b32.xlu0 %v2386, 112
      %v6003 = vpop.permute.xlu0 %6002
      %6004 = vrot.lane.b32.xlu0 %v2387, 112
      %v6005 = vpop.permute.xlu0 %6004
      %6006 = vrot.lane.b32.xlu0 %v2388, 112
      %v6007 = vpop.permute.xlu0 %6006
      %6008 = vrot.lane.b32.xlu0 %v2389, 112
      %v6009 = vpop.permute.xlu0 %6008
      %6010 = vrot.lane.b32.xlu0 %v2390, 112
      %v6011 = vpop.permute.xlu0 %6010
      %6012 = vrot.lane.b32.xlu0 %v2391, 112
      %v6013 = vpop.permute.xlu0 %6012
      %6014 = vrot.lane.b32.xlu0 %v2392, 112
      %v6015 = vpop.permute.xlu0 %6014
      %6016 = vrot.lane.b32.xlu0 %v2393, 112
      %v6017 = vpop.permute.xlu0 %6016
      %6018 = vrot.lane.b32.xlu0 %v2394, 112
      %v6019 = vpop.permute.xlu0 %6018
      %6020 = vrot.lane.b32.xlu0 %v2395, 112
      %v6021 = vpop.permute.xlu0 %6020
      %6022 = vrot.lane.b32.xlu0 %v2396, 112
      %v6023 = vpop.permute.xlu0 %6022
      %6024 = vrot.lane.b32.xlu0 %v2397, 112
      %v6025 = vpop.permute.xlu0 %6024
      %6026 = vrot.lane.b32.xlu0 %v2398, 112
      %v6027 = vpop.permute.xlu0 %6026
      %6028 = vrot.lane.b32.xlu0 %v2399, 112
      %v6029 = vpop.permute.xlu0 %6028
      %v6158 = vcombine.low %v5775, %v5783
      %v6159 = vcombine.high %v5775, %v5783
      %v6161 = vunpack.c.l.s4 1983009808
      %v6162 = vunpack.c.0.s8 %v6161
      %v6163 = vlaneseq
      %v6164 = vshrl.u32 %v6163, 7
      %v6165 = vsub.s32 %v6162, %v6164
      %v6166 = vrot.slane %v6158, %v6165
      %v6168 = vunpack.c.l.s4 1983009808
      %v6169 = vunpack.c.0.s8 %v6168
      %v6170 = vlaneseq
      %v6171 = vshrl.u32 %v6170, 7
      %v6172 = vsub.s32 %v6169, %v6171
      %v6173 = vrot.slane %v6159, %v6172
      %v6174 = vcombine.low %v5779, %v5787
      %v6175 = vcombine.high %v5779, %v5787
      %v6177 = vunpack.c.l.s4 1983009808
      %v6178 = vunpack.c.0.s8 %v6177
      %v6179 = vlaneseq
      %v6180 = vshrl.u32 %v6179, 7
      %v6181 = vsub.s32 %v6178, %v6180
      %v6182 = vrot.slane %v6174, %v6181
      %v6184 = vunpack.c.l.s4 1983009808
      %v6185 = vunpack.c.0.s8 %v6184
      %v6186 = vlaneseq
      %v6187 = vshrl.u32 %v6186, 7
      %v6188 = vsub.s32 %v6185, %v6187
      %v6189 = vrot.slane %v6175, %v6188
      %v6190 = vcombine.low %v5791, %v5799
      %v6191 = vcombine.high %v5791, %v5799
      %v6193 = vunpack.c.l.s4 1983009808
      %v6194 = vunpack.c.0.s8 %v6193
      %v6195 = vlaneseq
      %v6196 = vshrl.u32 %v6195, 7
      %v6197 = vsub.s32 %v6194, %v6196
      %v6198 = vrot.slane %v6190, %v6197
      %v6200 = vunpack.c.l.s4 1983009808
      %v6201 = vunpack.c.0.s8 %v6200
      %v6202 = vlaneseq
      %v6203 = vshrl.u32 %v6202, 7
      %v6204 = vsub.s32 %v6201, %v6203
      %v6205 = vrot.slane %v6191, %v6204
      %v6206 = vcombine.low %v5795, %v5803
      %v6207 = vcombine.high %v5795, %v5803
      %v6209 = vunpack.c.l.s4 1983009808
      %v6210 = vunpack.c.0.s8 %v6209
      %v6211 = vlaneseq
      %v6212 = vshrl.u32 %v6211, 7
      %v6213 = vsub.s32 %v6210, %v6212
      %v6214 = vrot.slane %v6206, %v6213
      %v6216 = vunpack.c.l.s4 1983009808
      %v6217 = vunpack.c.0.s8 %v6216
      %v6218 = vlaneseq
      %v6219 = vshrl.u32 %v6218, 7
      %v6220 = vsub.s32 %v6217, %v6219
      %v6221 = vrot.slane %v6207, %v6220
      %v6222 = vcombine.low %v6166, %v6182
      %v6223 = vcombine.high %v6166, %v6182
      %v6225 = vunpack.c.l.s4 1934713408
      %v6226 = vunpack.c.0.s8 %v6225
      %v6227 = vlaneseq
      %v6228 = vshrl.u32 %v6227, 7
      %v6229 = vsub.s32 %v6226, %v6228
      %v6230 = vrot.slane %v6222, %v6229
      %v6232 = vunpack.c.l.s4 1934713408
      %v6233 = vunpack.c.0.s8 %v6232
      %v6234 = vlaneseq
      %v6235 = vshrl.u32 %v6234, 7
      %v6236 = vsub.s32 %v6233, %v6235
      %v6237 = vrot.slane %v6223, %v6236
      %v6238 = vcombine.low %v6173, %v6189
      %v6239 = vcombine.high %v6173, %v6189
      %v6241 = vunpack.c.l.s4 1934713408
      %v6242 = vunpack.c.0.s8 %v6241
      %v6243 = vlaneseq
      %v6244 = vshrl.u32 %v6243, 7
      %v6245 = vsub.s32 %v6242, %v6244
      %v6246 = vrot.slane %v6238, %v6245
      %v6248 = vunpack.c.l.s4 1934713408
      %v6249 = vunpack.c.0.s8 %v6248
      %v6250 = vlaneseq
      %v6251 = vshrl.u32 %v6250, 7
      %v6252 = vsub.s32 %v6249, %v6251
      %v6253 = vrot.slane %v6239, %v6252
      %v6254 = vcombine.low %v6198, %v6214
      %v6255 = vcombine.high %v6198, %v6214
      %v6257 = vunpack.c.l.s4 1934713408
      %v6258 = vunpack.c.0.s8 %v6257
      %v6259 = vlaneseq
      %v6260 = vshrl.u32 %v6259, 7
      %v6261 = vsub.s32 %v6258, %v6260
      %v6262 = vrot.slane %v6254, %v6261
      %v6264 = vunpack.c.l.s4 1934713408
      %v6265 = vunpack.c.0.s8 %v6264
      %v6266 = vlaneseq
      %v6267 = vshrl.u32 %v6266, 7
      %v6268 = vsub.s32 %v6265, %v6267
      %v6269 = vrot.slane %v6255, %v6268
      %v6270 = vcombine.low %v6205, %v6221
      %v6271 = vcombine.high %v6205, %v6221
      %v6273 = vunpack.c.l.s4 1934713408
      %v6274 = vunpack.c.0.s8 %v6273
      %v6275 = vlaneseq
      %v6276 = vshrl.u32 %v6275, 7
      %v6277 = vsub.s32 %v6274, %v6276
      %v6278 = vrot.slane %v6270, %v6277
      %v6280 = vunpack.c.l.s4 1934713408
      %v6281 = vunpack.c.0.s8 %v6280
      %v6282 = vlaneseq
      %v6283 = vshrl.u32 %v6282, 7
      %v6284 = vsub.s32 %v6281, %v6283
      %v6285 = vrot.slane %v6271, %v6284
      %v6286 = vcombine.low %v6230, %v6262
      %v6287 = vcombine.high %v6230, %v6262
      %v6288 = vcombine.low %v6237, %v6269
      %v6289 = vcombine.high %v6237, %v6269
      %v6290 = vcombine.low %v6246, %v6278
      %v6291 = vcombine.high %v6246, %v6278
      %v6292 = vcombine.low %v6253, %v6285
      %v6293 = vcombine.high %v6253, %v6285
      %v6294 = vcombine.low %v5807, %v5815
      %v6295 = vcombine.high %v5807, %v5815
      %v6297 = vunpack.c.l.s4 1983009808
      %v6298 = vunpack.c.0.s8 %v6297
      %v6299 = vlaneseq
      %v6300 = vshrl.u32 %v6299, 7
      %v6301 = vsub.s32 %v6298, %v6300
      %v6302 = vrot.slane %v6294, %v6301
      %v6304 = vunpack.c.l.s4 1983009808
      %v6305 = vunpack.c.0.s8 %v6304
      %v6306 = vlaneseq
      %v6307 = vshrl.u32 %v6306, 7
      %v6308 = vsub.s32 %v6305, %v6307
      %v6309 = vrot.slane %v6295, %v6308
      %v6310 = vcombine.low %v5811, %v5819
      %v6311 = vcombine.high %v5811, %v5819
      %v6313 = vunpack.c.l.s4 1983009808
      %v6314 = vunpack.c.0.s8 %v6313
      %v6315 = vlaneseq
      %v6316 = vshrl.u32 %v6315, 7
      %v6317 = vsub.s32 %v6314, %v6316
      %v6318 = vrot.slane %v6310, %v6317
      %v6320 = vunpack.c.l.s4 1983009808
      %v6321 = vunpack.c.0.s8 %v6320
      %v6322 = vlaneseq
      %v6323 = vshrl.u32 %v6322, 7
      %v6324 = vsub.s32 %v6321, %v6323
      %v6325 = vrot.slane %v6311, %v6324
      %v6326 = vcombine.low %v5823, %v5831
      %v6327 = vcombine.high %v5823, %v5831
      %v6329 = vunpack.c.l.s4 1983009808
      %v6330 = vunpack.c.0.s8 %v6329
      %v6331 = vlaneseq
      %v6332 = vshrl.u32 %v6331, 7
      %v6333 = vsub.s32 %v6330, %v6332
      %v6334 = vrot.slane %v6326, %v6333
      %v6336 = vunpack.c.l.s4 1983009808
      %v6337 = vunpack.c.0.s8 %v6336
      %v6338 = vlaneseq
      %v6339 = vshrl.u32 %v6338, 7
      %v6340 = vsub.s32 %v6337, %v6339
      %v6341 = vrot.slane %v6327, %v6340
      %v6342 = vcombine.low %v5827, %v5835
      %v6343 = vcombine.high %v5827, %v5835
      %v6345 = vunpack.c.l.s4 1983009808
      %v6346 = vunpack.c.0.s8 %v6345
      %v6347 = vlaneseq
      %v6348 = vshrl.u32 %v6347, 7
      %v6349 = vsub.s32 %v6346, %v6348
      %v6350 = vrot.slane %v6342, %v6349
      %v6352 = vunpack.c.l.s4 1983009808
      %v6353 = vunpack.c.0.s8 %v6352
      %v6354 = vlaneseq
      %v6355 = vshrl.u32 %v6354, 7
      %v6356 = vsub.s32 %v6353, %v6355
      %v6357 = vrot.slane %v6343, %v6356
      %v6358 = vcombine.low %v6302, %v6318
      %v6359 = vcombine.high %v6302, %v6318
      %v6361 = vunpack.c.l.s4 1934713408
      %v6362 = vunpack.c.0.s8 %v6361
      %v6363 = vlaneseq
      %v6364 = vshrl.u32 %v6363, 7
      %v6365 = vsub.s32 %v6362, %v6364
      %v6366 = vrot.slane %v6358, %v6365
      %v6368 = vunpack.c.l.s4 1934713408
      %v6369 = vunpack.c.0.s8 %v6368
      %v6370 = vlaneseq
      %v6371 = vshrl.u32 %v6370, 7
      %v6372 = vsub.s32 %v6369, %v6371
      %v6373 = vrot.slane %v6359, %v6372
      %v6374 = vcombine.low %v6309, %v6325
      %v6375 = vcombine.high %v6309, %v6325
      %v6377 = vunpack.c.l.s4 1934713408
      %v6378 = vunpack.c.0.s8 %v6377
      %v6379 = vlaneseq
      %v6380 = vshrl.u32 %v6379, 7
      %v6381 = vsub.s32 %v6378, %v6380
      %v6382 = vrot.slane %v6374, %v6381
      %v6384 = vunpack.c.l.s4 1934713408
      %v6385 = vunpack.c.0.s8 %v6384
      %v6386 = vlaneseq
      %v6387 = vshrl.u32 %v6386, 7
      %v6388 = vsub.s32 %v6385, %v6387
      %v6389 = vrot.slane %v6375, %v6388
      %v6390 = vcombine.low %v6334, %v6350
      %v6391 = vcombine.high %v6334, %v6350
      %v6393 = vunpack.c.l.s4 1934713408
      %v6394 = vunpack.c.0.s8 %v6393
      %v6395 = vlaneseq
      %v6396 = vshrl.u32 %v6395, 7
      %v6397 = vsub.s32 %v6394, %v6396
      %v6398 = vrot.slane %v6390, %v6397
      %v6400 = vunpack.c.l.s4 1934713408
      %v6401 = vunpack.c.0.s8 %v6400
      %v6402 = vlaneseq
      %v6403 = vshrl.u32 %v6402, 7
      %v6404 = vsub.s32 %v6401, %v6403
      %v6405 = vrot.slane %v6391, %v6404
      %v6406 = vcombine.low %v6341, %v6357
      %v6407 = vcombine.high %v6341, %v6357
      %v6409 = vunpack.c.l.s4 1934713408
      %v6410 = vunpack.c.0.s8 %v6409
      %v6411 = vlaneseq
      %v6412 = vshrl.u32 %v6411, 7
      %v6413 = vsub.s32 %v6410, %v6412
      %v6414 = vrot.slane %v6406, %v6413
      %v6416 = vunpack.c.l.s4 1934713408
      %v6417 = vunpack.c.0.s8 %v6416
      %v6418 = vlaneseq
      %v6419 = vshrl.u32 %v6418, 7
      %v6420 = vsub.s32 %v6417, %v6419
      %v6421 = vrot.slane %v6407, %v6420
      %v6422 = vcombine.low %v6366, %v6398
      %v6423 = vcombine.high %v6366, %v6398
      %v6424 = vcombine.low %v6373, %v6405
      %v6425 = vcombine.high %v6373, %v6405
      %v6426 = vcombine.low %v6382, %v6414
      %v6427 = vcombine.high %v6382, %v6414
      %v6428 = vcombine.low %v6389, %v6421
      %v6429 = vcombine.high %v6389, %v6421
      %v6430 = vcombine.low %v5839, %v5847
      %v6431 = vcombine.high %v5839, %v5847
      %v6433 = vunpack.c.l.s4 1983009808
      %v6434 = vunpack.c.0.s8 %v6433
      %v6435 = vlaneseq
      %v6436 = vshrl.u32 %v6435, 7
      %v6437 = vsub.s32 %v6434, %v6436
      %v6438 = vrot.slane %v6430, %v6437
      %v6440 = vunpack.c.l.s4 1983009808
      %v6441 = vunpack.c.0.s8 %v6440
      %v6442 = vlaneseq
      %v6443 = vshrl.u32 %v6442, 7
      %v6444 = vsub.s32 %v6441, %v6443
      %v6445 = vrot.slane %v6431, %v6444
      %v6446 = vcombine.low %v5843, %v5851
      %v6447 = vcombine.high %v5843, %v5851
      %v6449 = vunpack.c.l.s4 1983009808
      %v6450 = vunpack.c.0.s8 %v6449
      %v6451 = vlaneseq
      %v6452 = vshrl.u32 %v6451, 7
      %v6453 = vsub.s32 %v6450, %v6452
      %v6454 = vrot.slane %v6446, %v6453
      %v6456 = vunpack.c.l.s4 1983009808
      %v6457 = vunpack.c.0.s8 %v6456
      %v6458 = vlaneseq
      %v6459 = vshrl.u32 %v6458, 7
      %v6460 = vsub.s32 %v6457, %v6459
      %v6461 = vrot.slane %v6447, %v6460
      %v6462 = vcombine.low %v5855, %v5863
      %v6463 = vcombine.high %v5855, %v5863
      %v6465 = vunpack.c.l.s4 1983009808
      %v6466 = vunpack.c.0.s8 %v6465
      %v6467 = vlaneseq
      %v6468 = vshrl.u32 %v6467, 7
      %v6469 = vsub.s32 %v6466, %v6468
      %v6470 = vrot.slane %v6462, %v6469
      %v6472 = vunpack.c.l.s4 1983009808
      %v6473 = vunpack.c.0.s8 %v6472
      %v6474 = vlaneseq
      %v6475 = vshrl.u32 %v6474, 7
      %v6476 = vsub.s32 %v6473, %v6475
      %v6477 = vrot.slane %v6463, %v6476
      %v6478 = vcombine.low %v5859, %v5867
      %v6479 = vcombine.high %v5859, %v5867
      %v6481 = vunpack.c.l.s4 1983009808
      %v6482 = vunpack.c.0.s8 %v6481
      %v6483 = vlaneseq
      %v6484 = vshrl.u32 %v6483, 7
      %v6485 = vsub.s32 %v6482, %v6484
      %v6486 = vrot.slane %v6478, %v6485
      %v6488 = vunpack.c.l.s4 1983009808
      %v6489 = vunpack.c.0.s8 %v6488
      %v6490 = vlaneseq
      %v6491 = vshrl.u32 %v6490, 7
      %v6492 = vsub.s32 %v6489, %v6491
      %v6493 = vrot.slane %v6479, %v6492
      %v6494 = vcombine.low %v6438, %v6454
      %v6495 = vcombine.high %v6438, %v6454
      %v6497 = vunpack.c.l.s4 1934713408
      %v6498 = vunpack.c.0.s8 %v6497
      %v6499 = vlaneseq
      %v6500 = vshrl.u32 %v6499, 7
      %v6501 = vsub.s32 %v6498, %v6500
      %v6502 = vrot.slane %v6494, %v6501
      %v6504 = vunpack.c.l.s4 1934713408
      %v6505 = vunpack.c.0.s8 %v6504
      %v6506 = vlaneseq
      %v6507 = vshrl.u32 %v6506, 7
      %v6508 = vsub.s32 %v6505, %v6507
      %v6509 = vrot.slane %v6495, %v6508
      %v6510 = vcombine.low %v6445, %v6461
      %v6511 = vcombine.high %v6445, %v6461
      %v6513 = vunpack.c.l.s4 1934713408
      %v6514 = vunpack.c.0.s8 %v6513
      %v6515 = vlaneseq
      %v6516 = vshrl.u32 %v6515, 7
      %v6517 = vsub.s32 %v6514, %v6516
      %v6518 = vrot.slane %v6510, %v6517
      %v6520 = vunpack.c.l.s4 1934713408
      %v6521 = vunpack.c.0.s8 %v6520
      %v6522 = vlaneseq
      %v6523 = vshrl.u32 %v6522, 7
      %v6524 = vsub.s32 %v6521, %v6523
      %v6525 = vrot.slane %v6511, %v6524
      %v6526 = vcombine.low %v6470, %v6486
      %v6527 = vcombine.high %v6470, %v6486
      %v6529 = vunpack.c.l.s4 1934713408
      %v6530 = vunpack.c.0.s8 %v6529
      %v6531 = vlaneseq
      %v6532 = vshrl.u32 %v6531, 7
      %v6533 = vsub.s32 %v6530, %v6532
      %v6534 = vrot.slane %v6526, %v6533
      %v6536 = vunpack.c.l.s4 1934713408
      %v6537 = vunpack.c.0.s8 %v6536
      %v6538 = vlaneseq
      %v6539 = vshrl.u32 %v6538, 7
      %v6540 = vsub.s32 %v6537, %v6539
      %v6541 = vrot.slane %v6527, %v6540
      %v6542 = vcombine.low %v6477, %v6493
      %v6543 = vcombine.high %v6477, %v6493
      %v6545 = vunpack.c.l.s4 1934713408
      %v6546 = vunpack.c.0.s8 %v6545
      %v6547 = vlaneseq
      %v6548 = vshrl.u32 %v6547, 7
      %v6549 = vsub.s32 %v6546, %v6548
      %v6550 = vrot.slane %v6542, %v6549
      %v6552 = vunpack.c.l.s4 1934713408
      %v6553 = vunpack.c.0.s8 %v6552
      %v6554 = vlaneseq
      %v6555 = vshrl.u32 %v6554, 7
      %v6556 = vsub.s32 %v6553, %v6555
      %v6557 = vrot.slane %v6543, %v6556
      %v6558 = vcombine.low %v6502, %v6534
      %v6559 = vcombine.high %v6502, %v6534
      %v6560 = vcombine.low %v6509, %v6541
      %v6561 = vcombine.high %v6509, %v6541
      %v6562 = vcombine.low %v6518, %v6550
      %v6563 = vcombine.high %v6518, %v6550
      %v6564 = vcombine.low %v6525, %v6557
      %v6565 = vcombine.high %v6525, %v6557
      %v6566 = vcombine.low %v5871, %v5879
      %v6567 = vcombine.high %v5871, %v5879
      %v6569 = vunpack.c.l.s4 1983009808
      %v6570 = vunpack.c.0.s8 %v6569
      %v6571 = vlaneseq
      %v6572 = vshrl.u32 %v6571, 7
      %v6573 = vsub.s32 %v6570, %v6572
      %v6574 = vrot.slane %v6566, %v6573
      %v6576 = vunpack.c.l.s4 1983009808
      %v6577 = vunpack.c.0.s8 %v6576
      %v6578 = vlaneseq
      %v6579 = vshrl.u32 %v6578, 7
      %v6580 = vsub.s32 %v6577, %v6579
      %v6581 = vrot.slane %v6567, %v6580
      %v6582 = vcombine.low %v5875, %v5883
      %v6583 = vcombine.high %v5875, %v5883
      %v6585 = vunpack.c.l.s4 1983009808
      %v6586 = vunpack.c.0.s8 %v6585
      %v6587 = vlaneseq
      %v6588 = vshrl.u32 %v6587, 7
      %v6589 = vsub.s32 %v6586, %v6588
      %v6590 = vrot.slane %v6582, %v6589
      %v6592 = vunpack.c.l.s4 1983009808
      %v6593 = vunpack.c.0.s8 %v6592
      %v6594 = vlaneseq
      %v6595 = vshrl.u32 %v6594, 7
      %v6596 = vsub.s32 %v6593, %v6595
      %v6597 = vrot.slane %v6583, %v6596
      %v6598 = vcombine.low %v5887, %v5895
      %v6599 = vcombine.high %v5887, %v5895
      %v6601 = vunpack.c.l.s4 1983009808
      %v6602 = vunpack.c.0.s8 %v6601
      %v6603 = vlaneseq
      %v6604 = vshrl.u32 %v6603, 7
      %v6605 = vsub.s32 %v6602, %v6604
      %v6606 = vrot.slane %v6598, %v6605
      %v6608 = vunpack.c.l.s4 1983009808
      %v6609 = vunpack.c.0.s8 %v6608
      %v6610 = vlaneseq
      %v6611 = vshrl.u32 %v6610, 7
      %v6612 = vsub.s32 %v6609, %v6611
      %v6613 = vrot.slane %v6599, %v6612
      %v6614 = vcombine.low %v5891, %v5899
      %v6615 = vcombine.high %v5891, %v5899
      %v6617 = vunpack.c.l.s4 1983009808
      %v6618 = vunpack.c.0.s8 %v6617
      %v6619 = vlaneseq
      %v6620 = vshrl.u32 %v6619, 7
      %v6621 = vsub.s32 %v6618, %v6620
      %v6622 = vrot.slane %v6614, %v6621
      %v6624 = vunpack.c.l.s4 1983009808
      %v6625 = vunpack.c.0.s8 %v6624
      %v6626 = vlaneseq
      %v6627 = vshrl.u32 %v6626, 7
      %v6628 = vsub.s32 %v6625, %v6627
      %v6629 = vrot.slane %v6615, %v6628
      %v6630 = vcombine.low %v6574, %v6590
      %v6631 = vcombine.high %v6574, %v6590
      %v6633 = vunpack.c.l.s4 1934713408
      %v6634 = vunpack.c.0.s8 %v6633
      %v6635 = vlaneseq
      %v6636 = vshrl.u32 %v6635, 7
      %v6637 = vsub.s32 %v6634, %v6636
      %v6638 = vrot.slane %v6630, %v6637
      %v6640 = vunpack.c.l.s4 1934713408
      %v6641 = vunpack.c.0.s8 %v6640
      %v6642 = vlaneseq
      %v6643 = vshrl.u32 %v6642, 7
      %v6644 = vsub.s32 %v6641, %v6643
      %v6645 = vrot.slane %v6631, %v6644
      %v6646 = vcombine.low %v6581, %v6597
      %v6647 = vcombine.high %v6581, %v6597
      %v6649 = vunpack.c.l.s4 1934713408
      %v6650 = vunpack.c.0.s8 %v6649
      %v6651 = vlaneseq
      %v6652 = vshrl.u32 %v6651, 7
      %v6653 = vsub.s32 %v6650, %v6652
      %v6654 = vrot.slane %v6646, %v6653
      %v6656 = vunpack.c.l.s4 1934713408
      %v6657 = vunpack.c.0.s8 %v6656
      %v6658 = vlaneseq
      %v6659 = vshrl.u32 %v6658, 7
      %v6660 = vsub.s32 %v6657, %v6659
      %v6661 = vrot.slane %v6647, %v6660
      %v6662 = vcombine.low %v6606, %v6622
      %v6663 = vcombine.high %v6606, %v6622
      %v6665 = vunpack.c.l.s4 1934713408
      %v6666 = vunpack.c.0.s8 %v6665
      %v6667 = vlaneseq
      %v6668 = vshrl.u32 %v6667, 7
      %v6669 = vsub.s32 %v6666, %v6668
      %v6670 = vrot.slane %v6662, %v6669
      %v6672 = vunpack.c.l.s4 1934713408
      %v6673 = vunpack.c.0.s8 %v6672
      %v6674 = vlaneseq
      %v6675 = vshrl.u32 %v6674, 7
      %v6676 = vsub.s32 %v6673, %v6675
      %v6677 = vrot.slane %v6663, %v6676
      %v6678 = vcombine.low %v6613, %v6629
      %v6679 = vcombine.high %v6613, %v6629
      %v6681 = vunpack.c.l.s4 1934713408
      %v6682 = vunpack.c.0.s8 %v6681
      %v6683 = vlaneseq
      %v6684 = vshrl.u32 %v6683, 7
      %v6685 = vsub.s32 %v6682, %v6684
      %v6686 = vrot.slane %v6678, %v6685
      %v6688 = vunpack.c.l.s4 1934713408
      %v6689 = vunpack.c.0.s8 %v6688
      %v6690 = vlaneseq
      %v6691 = vshrl.u32 %v6690, 7
      %v6692 = vsub.s32 %v6689, %v6691
      %v6693 = vrot.slane %v6679, %v6692
      %v6694 = vcombine.low %v6638, %v6670
      %v6695 = vcombine.high %v6638, %v6670
      %v6696 = vcombine.low %v6645, %v6677
      %v6697 = vcombine.high %v6645, %v6677
      %v6698 = vcombine.low %v6654, %v6686
      %v6699 = vcombine.high %v6654, %v6686
      %v6700 = vcombine.low %v6661, %v6693
      %v6701 = vcombine.high %v6661, %v6693
      %v6702 = vcombine.low %v5903, %v5911
      %v6703 = vcombine.high %v5903, %v5911
      %v6705 = vunpack.c.l.s4 1983009808
      %v6706 = vunpack.c.0.s8 %v6705
      %v6707 = vlaneseq
      %v6708 = vshrl.u32 %v6707, 7
      %v6709 = vsub.s32 %v6706, %v6708
      %v6710 = vrot.slane %v6702, %v6709
      %v6712 = vunpack.c.l.s4 1983009808
      %v6713 = vunpack.c.0.s8 %v6712
      %v6714 = vlaneseq
      %v6715 = vshrl.u32 %v6714, 7
      %v6716 = vsub.s32 %v6713, %v6715
      %v6717 = vrot.slane %v6703, %v6716
      %v6718 = vcombine.low %v5907, %v5915
      %v6719 = vcombine.high %v5907, %v5915
      %v6721 = vunpack.c.l.s4 1983009808
      %v6722 = vunpack.c.0.s8 %v6721
      %v6723 = vlaneseq
      %v6724 = vshrl.u32 %v6723, 7
      %v6725 = vsub.s32 %v6722, %v6724
      %v6726 = vrot.slane %v6718, %v6725
      %v6728 = vunpack.c.l.s4 1983009808
      %v6729 = vunpack.c.0.s8 %v6728
      %v6730 = vlaneseq
      %v6731 = vshrl.u32 %v6730, 7
      %v6732 = vsub.s32 %v6729, %v6731
      %v6733 = vrot.slane %v6719, %v6732
      %v6734 = vcombine.low %v5919, %v5927
      %v6735 = vcombine.high %v5919, %v5927
      %v6737 = vunpack.c.l.s4 1983009808
      %v6738 = vunpack.c.0.s8 %v6737
      %v6739 = vlaneseq
      %v6740 = vshrl.u32 %v6739, 7
      %v6741 = vsub.s32 %v6738, %v6740
      %v6742 = vrot.slane %v6734, %v6741
      %v6744 = vunpack.c.l.s4 1983009808
      %v6745 = vunpack.c.0.s8 %v6744
      %v6746 = vlaneseq
      %v6747 = vshrl.u32 %v6746, 7
      %v6748 = vsub.s32 %v6745, %v6747
      %v6749 = vrot.slane %v6735, %v6748
      %v6750 = vcombine.low %v5923, %v5931
      %v6751 = vcombine.high %v5923, %v5931
      %v6753 = vunpack.c.l.s4 1983009808
      %v6754 = vunpack.c.0.s8 %v6753
      %v6755 = vlaneseq
      %v6756 = vshrl.u32 %v6755, 7
      %v6757 = vsub.s32 %v6754, %v6756
      %v6758 = vrot.slane %v6750, %v6757
      %v6760 = vunpack.c.l.s4 1983009808
      %v6761 = vunpack.c.0.s8 %v6760
      %v6762 = vlaneseq
      %v6763 = vshrl.u32 %v6762, 7
      %v6764 = vsub.s32 %v6761, %v6763
      %v6765 = vrot.slane %v6751, %v6764
      %v6766 = vcombine.low %v6710, %v6726
      %v6767 = vcombine.high %v6710, %v6726
      %v6769 = vunpack.c.l.s4 1934713408
      %v6770 = vunpack.c.0.s8 %v6769
      %v6771 = vlaneseq
      %v6772 = vshrl.u32 %v6771, 7
      %v6773 = vsub.s32 %v6770, %v6772
      %v6774 = vrot.slane %v6766, %v6773
      %v6776 = vunpack.c.l.s4 1934713408
      %v6777 = vunpack.c.0.s8 %v6776
      %v6778 = vlaneseq
      %v6779 = vshrl.u32 %v6778, 7
      %v6780 = vsub.s32 %v6777, %v6779
      %v6781 = vrot.slane %v6767, %v6780
      %v6782 = vcombine.low %v6717, %v6733
      %v6783 = vcombine.high %v6717, %v6733
      %v6785 = vunpack.c.l.s4 1934713408
      %v6786 = vunpack.c.0.s8 %v6785
      %v6787 = vlaneseq
      %v6788 = vshrl.u32 %v6787, 7
      %v6789 = vsub.s32 %v6786, %v6788
      %v6790 = vrot.slane %v6782, %v6789
      %v6792 = vunpack.c.l.s4 1934713408
      %v6793 = vunpack.c.0.s8 %v6792
      %v6794 = vlaneseq
      %v6795 = vshrl.u32 %v6794, 7
      %v6796 = vsub.s32 %v6793, %v6795
      %v6797 = vrot.slane %v6783, %v6796
      %v6798 = vcombine.low %v6742, %v6758
      %v6799 = vcombine.high %v6742, %v6758
      %v6801 = vunpack.c.l.s4 1934713408
      %v6802 = vunpack.c.0.s8 %v6801
      %v6803 = vlaneseq
      %v6804 = vshrl.u32 %v6803, 7
      %v6805 = vsub.s32 %v6802, %v6804
      %v6806 = vrot.slane %v6798, %v6805
      %v6808 = vunpack.c.l.s4 1934713408
      %v6809 = vunpack.c.0.s8 %v6808
      %v6810 = vlaneseq
      %v6811 = vshrl.u32 %v6810, 7
      %v6812 = vsub.s32 %v6809, %v6811
      %v6813 = vrot.slane %v6799, %v6812
      %v6814 = vcombine.low %v6749, %v6765
      %v6815 = vcombine.high %v6749, %v6765
      %v6817 = vunpack.c.l.s4 1934713408
      %v6818 = vunpack.c.0.s8 %v6817
      %v6819 = vlaneseq
      %v6820 = vshrl.u32 %v6819, 7
      %v6821 = vsub.s32 %v6818, %v6820
      %v6822 = vrot.slane %v6814, %v6821
      %v6824 = vunpack.c.l.s4 1934713408
      %v6825 = vunpack.c.0.s8 %v6824
      %v6826 = vlaneseq
      %v6827 = vshrl.u32 %v6826, 7
      %v6828 = vsub.s32 %v6825, %v6827
      %v6829 = vrot.slane %v6815, %v6828
      %v6830 = vcombine.low %v6774, %v6806
      %v6831 = vcombine.high %v6774, %v6806
      %v6832 = vcombine.low %v6781, %v6813
      %v6833 = vcombine.high %v6781, %v6813
      %v6834 = vcombine.low %v6790, %v6822
      %v6835 = vcombine.high %v6790, %v6822
      %v6836 = vcombine.low %v6797, %v6829
      %v6837 = vcombine.high %v6797, %v6829
      %v6838 = vcombine.low %v5935, %v5943
      %v6839 = vcombine.high %v5935, %v5943
      %v6841 = vunpack.c.l.s4 1983009808
      %v6842 = vunpack.c.0.s8 %v6841
      %v6843 = vlaneseq
      %v6844 = vshrl.u32 %v6843, 7
      %v6845 = vsub.s32 %v6842, %v6844
      %v6846 = vrot.slane %v6838, %v6845
      %v6848 = vunpack.c.l.s4 1983009808
      %v6849 = vunpack.c.0.s8 %v6848
      %v6850 = vlaneseq
      %v6851 = vshrl.u32 %v6850, 7
      %v6852 = vsub.s32 %v6849, %v6851
      %v6853 = vrot.slane %v6839, %v6852
      %v6854 = vcombine.low %v5939, %v5947
      %v6855 = vcombine.high %v5939, %v5947
      %v6857 = vunpack.c.l.s4 1983009808
      %v6858 = vunpack.c.0.s8 %v6857
      %v6859 = vlaneseq
      %v6860 = vshrl.u32 %v6859, 7
      %v6861 = vsub.s32 %v6858, %v6860
      %v6862 = vrot.slane %v6854, %v6861
      %v6864 = vunpack.c.l.s4 1983009808
      %v6865 = vunpack.c.0.s8 %v6864
      %v6866 = vlaneseq
      %v6867 = vshrl.u32 %v6866, 7
      %v6868 = vsub.s32 %v6865, %v6867
      %v6869 = vrot.slane %v6855, %v6868
      %v6870 = vcombine.low %v5951, %v5959
      %v6871 = vcombine.high %v5951, %v5959
      %v6873 = vunpack.c.l.s4 1983009808
      %v6874 = vunpack.c.0.s8 %v6873
      %v6875 = vlaneseq
      %v6876 = vshrl.u32 %v6875, 7
      %v6877 = vsub.s32 %v6874, %v6876
      %v6878 = vrot.slane %v6870, %v6877
      %v6880 = vunpack.c.l.s4 1983009808
      %v6881 = vunpack.c.0.s8 %v6880
      %v6882 = vlaneseq
      %v6883 = vshrl.u32 %v6882, 7
      %v6884 = vsub.s32 %v6881, %v6883
      %v6885 = vrot.slane %v6871, %v6884
      %v6886 = vcombine.low %v5955, %v5963
      %v6887 = vcombine.high %v5955, %v5963
      %v6889 = vunpack.c.l.s4 1983009808
      %v6890 = vunpack.c.0.s8 %v6889
      %v6891 = vlaneseq
      %v6892 = vshrl.u32 %v6891, 7
      %v6893 = vsub.s32 %v6890, %v6892
      %v6894 = vrot.slane %v6886, %v6893
      %v6896 = vunpack.c.l.s4 1983009808
      %v6897 = vunpack.c.0.s8 %v6896
      %v6898 = vlaneseq
      %v6899 = vshrl.u32 %v6898, 7
      %v6900 = vsub.s32 %v6897, %v6899
      %v6901 = vrot.slane %v6887, %v6900
      %v6902 = vcombine.low %v6846, %v6862
      %v6903 = vcombine.high %v6846, %v6862
      %v6905 = vunpack.c.l.s4 1934713408
      %v6906 = vunpack.c.0.s8 %v6905
      %v6907 = vlaneseq
      %v6908 = vshrl.u32 %v6907, 7
      %v6909 = vsub.s32 %v6906, %v6908
      %v6910 = vrot.slane %v6902, %v6909
      %v6912 = vunpack.c.l.s4 1934713408
      %v6913 = vunpack.c.0.s8 %v6912
      %v6914 = vlaneseq
      %v6915 = vshrl.u32 %v6914, 7
      %v6916 = vsub.s32 %v6913, %v6915
      %v6917 = vrot.slane %v6903, %v6916
      %v6918 = vcombine.low %v6853, %v6869
      %v6919 = vcombine.high %v6853, %v6869
      %v6921 = vunpack.c.l.s4 1934713408
      %v6922 = vunpack.c.0.s8 %v6921
      %v6923 = vlaneseq
      %v6924 = vshrl.u32 %v6923, 7
      %v6925 = vsub.s32 %v6922, %v6924
      %v6926 = vrot.slane %v6918, %v6925
      %v6928 = vunpack.c.l.s4 1934713408
      %v6929 = vunpack.c.0.s8 %v6928
      %v6930 = vlaneseq
      %v6931 = vshrl.u32 %v6930, 7
      %v6932 = vsub.s32 %v6929, %v6931
      %v6933 = vrot.slane %v6919, %v6932
      %v6934 = vcombine.low %v6878, %v6894
      %v6935 = vcombine.high %v6878, %v6894
      %v6937 = vunpack.c.l.s4 1934713408
      %v6938 = vunpack.c.0.s8 %v6937
      %v6939 = vlaneseq
      %v6940 = vshrl.u32 %v6939, 7
      %v6941 = vsub.s32 %v6938, %v6940
      %v6942 = vrot.slane %v6934, %v6941
      %v6944 = vunpack.c.l.s4 1934713408
      %v6945 = vunpack.c.0.s8 %v6944
      %v6946 = vlaneseq
      %v6947 = vshrl.u32 %v6946, 7
      %v6948 = vsub.s32 %v6945, %v6947
      %v6949 = vrot.slane %v6935, %v6948
      %v6950 = vcombine.low %v6885, %v6901
      %v6951 = vcombine.high %v6885, %v6901
      %v6953 = vunpack.c.l.s4 1934713408
      %v6954 = vunpack.c.0.s8 %v6953
      %v6955 = vlaneseq
      %v6956 = vshrl.u32 %v6955, 7
      %v6957 = vsub.s32 %v6954, %v6956
      %v6958 = vrot.slane %v6950, %v6957
      %v6960 = vunpack.c.l.s4 1934713408
      %v6961 = vunpack.c.0.s8 %v6960
      %v6962 = vlaneseq
      %v6963 = vshrl.u32 %v6962, 7
      %v6964 = vsub.s32 %v6961, %v6963
      %v6965 = vrot.slane %v6951, %v6964
      %v6966 = vcombine.low %v6910, %v6942
      %v6967 = vcombine.high %v6910, %v6942
      %v6968 = vcombine.low %v6917, %v6949
      %v6969 = vcombine.high %v6917, %v6949
      %v6970 = vcombine.low %v6926, %v6958
      %v6971 = vcombine.high %v6926, %v6958
      %v6972 = vcombine.low %v6933, %v6965
      %v6973 = vcombine.high %v6933, %v6965
      %v6974 = vcombine.low %v5967, %v5975
      %v6975 = vcombine.high %v5967, %v5975
      %v6977 = vunpack.c.l.s4 1983009808
      %v6978 = vunpack.c.0.s8 %v6977
      %v6979 = vlaneseq
      %v6980 = vshrl.u32 %v6979, 7
      %v6981 = vsub.s32 %v6978, %v6980
      %v6982 = vrot.slane %v6974, %v6981
      %v6984 = vunpack.c.l.s4 1983009808
      %v6985 = vunpack.c.0.s8 %v6984
      %v6986 = vlaneseq
      %v6987 = vshrl.u32 %v6986, 7
      %v6988 = vsub.s32 %v6985, %v6987
      %v6989 = vrot.slane %v6975, %v6988
      %v6990 = vcombine.low %v5971, %v5979
      %v6991 = vcombine.high %v5971, %v5979
      %v6993 = vunpack.c.l.s4 1983009808
      %v6994 = vunpack.c.0.s8 %v6993
      %v6995 = vlaneseq
      %v6996 = vshrl.u32 %v6995, 7
      %v6997 = vsub.s32 %v6994, %v6996
      %v6998 = vrot.slane %v6990, %v6997
      %v7000 = vunpack.c.l.s4 1983009808
      %v7001 = vunpack.c.0.s8 %v7000
      %v7002 = vlaneseq
      %v7003 = vshrl.u32 %v7002, 7
      %v7004 = vsub.s32 %v7001, %v7003
      %v7005 = vrot.slane %v6991, %v7004
      %v7006 = vcombine.low %v5983, %v5991
      %v7007 = vcombine.high %v5983, %v5991
      %v7009 = vunpack.c.l.s4 1983009808
      %v7010 = vunpack.c.0.s8 %v7009
      %v7011 = vlaneseq
      %v7012 = vshrl.u32 %v7011, 7
      %v7013 = vsub.s32 %v7010, %v7012
      %v7014 = vrot.slane %v7006, %v7013
      %v7016 = vunpack.c.l.s4 1983009808
      %v7017 = vunpack.c.0.s8 %v7016
      %v7018 = vlaneseq
      %v7019 = vshrl.u32 %v7018, 7
      %v7020 = vsub.s32 %v7017, %v7019
      %v7021 = vrot.slane %v7007, %v7020
      %v7022 = vcombine.low %v5987, %v5995
      %v7023 = vcombine.high %v5987, %v5995
      %v7025 = vunpack.c.l.s4 1983009808
      %v7026 = vunpack.c.0.s8 %v7025
      %v7027 = vlaneseq
      %v7028 = vshrl.u32 %v7027, 7
      %v7029 = vsub.s32 %v7026, %v7028
      %v7030 = vrot.slane %v7022, %v7029
      %v7032 = vunpack.c.l.s4 1983009808
      %v7033 = vunpack.c.0.s8 %v7032
      %v7034 = vlaneseq
      %v7035 = vshrl.u32 %v7034, 7
      %v7036 = vsub.s32 %v7033, %v7035
      %v7037 = vrot.slane %v7023, %v7036
      %v7038 = vcombine.low %v6982, %v6998
      %v7039 = vcombine.high %v6982, %v6998
      %v7041 = vunpack.c.l.s4 1934713408
      %v7042 = vunpack.c.0.s8 %v7041
      %v7043 = vlaneseq
      %v7044 = vshrl.u32 %v7043, 7
      %v7045 = vsub.s32 %v7042, %v7044
      %v7046 = vrot.slane %v7038, %v7045
      %v7048 = vunpack.c.l.s4 1934713408
      %v7049 = vunpack.c.0.s8 %v7048
      %v7050 = vlaneseq
      %v7051 = vshrl.u32 %v7050, 7
      %v7052 = vsub.s32 %v7049, %v7051
      %v7053 = vrot.slane %v7039, %v7052
      %v7054 = vcombine.low %v6989, %v7005
      %v7055 = vcombine.high %v6989, %v7005
      %v7057 = vunpack.c.l.s4 1934713408
      %v7058 = vunpack.c.0.s8 %v7057
      %v7059 = vlaneseq
      %v7060 = vshrl.u32 %v7059, 7
      %v7061 = vsub.s32 %v7058, %v7060
      %v7062 = vrot.slane %v7054, %v7061
      %v7064 = vunpack.c.l.s4 1934713408
      %v7065 = vunpack.c.0.s8 %v7064
      %v7066 = vlaneseq
      %v7067 = vshrl.u32 %v7066, 7
      %v7068 = vsub.s32 %v7065, %v7067
      %v7069 = vrot.slane %v7055, %v7068
      %v7070 = vcombine.low %v7014, %v7030
      %v7071 = vcombine.high %v7014, %v7030
      %v7073 = vunpack.c.l.s4 1934713408
      %v7074 = vunpack.c.0.s8 %v7073
      %v7075 = vlaneseq
      %v7076 = vshrl.u32 %v7075, 7
      %v7077 = vsub.s32 %v7074, %v7076
      %v7078 = vrot.slane %v7070, %v7077
      %v7080 = vunpack.c.l.s4 1934713408
      %v7081 = vunpack.c.0.s8 %v7080
      %v7082 = vlaneseq
      %v7083 = vshrl.u32 %v7082, 7
      %v7084 = vsub.s32 %v7081, %v7083
      %v7085 = vrot.slane %v7071, %v7084
      %v7086 = vcombine.low %v7021, %v7037
      %v7087 = vcombine.high %v7021, %v7037
      %v7089 = vunpack.c.l.s4 1934713408
      %v7090 = vunpack.c.0.s8 %v7089
      %v7091 = vlaneseq
      %v7092 = vshrl.u32 %v7091, 7
      %v7093 = vsub.s32 %v7090, %v7092
      %v7094 = vrot.slane %v7086, %v7093
      %v7096 = vunpack.c.l.s4 1934713408
      %v7097 = vunpack.c.0.s8 %v7096
      %v7098 = vlaneseq
      %v7099 = vshrl.u32 %v7098, 7
      %v7100 = vsub.s32 %v7097, %v7099
      %v7101 = vrot.slane %v7087, %v7100
      %v7102 = vcombine.low %v7046, %v7078
      %v7103 = vcombine.high %v7046, %v7078
      %v7104 = vcombine.low %v7053, %v7085
      %v7105 = vcombine.high %v7053, %v7085
      %v7106 = vcombine.low %v7062, %v7094
      %v7107 = vcombine.high %v7062, %v7094
      %v7108 = vcombine.low %v7069, %v7101
      %v7109 = vcombine.high %v7069, %v7101
      %v7110 = vcombine.low %v5999, %v6007
      %v7111 = vcombine.high %v5999, %v6007
      %v7113 = vunpack.c.l.s4 1983009808
      %v7114 = vunpack.c.0.s8 %v7113
      %v7115 = vlaneseq
      %v7116 = vshrl.u32 %v7115, 7
      %v7117 = vsub.s32 %v7114, %v7116
      %v7118 = vrot.slane %v7110, %v7117
      %v7120 = vunpack.c.l.s4 1983009808
      %v7121 = vunpack.c.0.s8 %v7120
      %v7122 = vlaneseq
      %v7123 = vshrl.u32 %v7122, 7
      %v7124 = vsub.s32 %v7121, %v7123
      %v7125 = vrot.slane %v7111, %v7124
      %v7126 = vcombine.low %v6003, %v6011
      %v7127 = vcombine.high %v6003, %v6011
      %v7129 = vunpack.c.l.s4 1983009808
      %v7130 = vunpack.c.0.s8 %v7129
      %v7131 = vlaneseq
      %v7132 = vshrl.u32 %v7131, 7
      %v7133 = vsub.s32 %v7130, %v7132
      %v7134 = vrot.slane %v7126, %v7133
      %v7136 = vunpack.c.l.s4 1983009808
      %v7137 = vunpack.c.0.s8 %v7136
      %v7138 = vlaneseq
      %v7139 = vshrl.u32 %v7138, 7
      %v7140 = vsub.s32 %v7137, %v7139
      %v7141 = vrot.slane %v7127, %v7140
      %v7142 = vcombine.low %v6015, %v6023
      %v7143 = vcombine.high %v6015, %v6023
      %v7145 = vunpack.c.l.s4 1983009808
      %v7146 = vunpack.c.0.s8 %v7145
      %v7147 = vlaneseq
      %v7148 = vshrl.u32 %v7147, 7
      %v7149 = vsub.s32 %v7146, %v7148
      %v7150 = vrot.slane %v7142, %v7149
      %v7152 = vunpack.c.l.s4 1983009808
      %v7153 = vunpack.c.0.s8 %v7152
      %v7154 = vlaneseq
      %v7155 = vshrl.u32 %v7154, 7
      %v7156 = vsub.s32 %v7153, %v7155
      %v7157 = vrot.slane %v7143, %v7156
      %v7158 = vcombine.low %v6019, %v6027
      %v7159 = vcombine.high %v6019, %v6027
      %v7161 = vunpack.c.l.s4 1983009808
      %v7162 = vunpack.c.0.s8 %v7161
      %v7163 = vlaneseq
      %v7164 = vshrl.u32 %v7163, 7
      %v7165 = vsub.s32 %v7162, %v7164
      %v7166 = vrot.slane %v7158, %v7165
      %v7168 = vunpack.c.l.s4 1983009808
      %v7169 = vunpack.c.0.s8 %v7168
      %v7170 = vlaneseq
      %v7171 = vshrl.u32 %v7170, 7
      %v7172 = vsub.s32 %v7169, %v7171
      %v7173 = vrot.slane %v7159, %v7172
      %v7174 = vcombine.low %v7118, %v7134
      %v7175 = vcombine.high %v7118, %v7134
      %v7177 = vunpack.c.l.s4 1934713408
      %v7178 = vunpack.c.0.s8 %v7177
      %v7179 = vlaneseq
      %v7180 = vshrl.u32 %v7179, 7
      %v7181 = vsub.s32 %v7178, %v7180
      %v7182 = vrot.slane %v7174, %v7181
      %v7184 = vunpack.c.l.s4 1934713408
      %v7185 = vunpack.c.0.s8 %v7184
      %v7186 = vlaneseq
      %v7187 = vshrl.u32 %v7186, 7
      %v7188 = vsub.s32 %v7185, %v7187
      %v7189 = vrot.slane %v7175, %v7188
      %v7190 = vcombine.low %v7125, %v7141
      %v7191 = vcombine.high %v7125, %v7141
      %v7193 = vunpack.c.l.s4 1934713408
      %v7194 = vunpack.c.0.s8 %v7193
      %v7195 = vlaneseq
      %v7196 = vshrl.u32 %v7195, 7
      %v7197 = vsub.s32 %v7194, %v7196
      %v7198 = vrot.slane %v7190, %v7197
      %v7200 = vunpack.c.l.s4 1934713408
      %v7201 = vunpack.c.0.s8 %v7200
      %v7202 = vlaneseq
      %v7203 = vshrl.u32 %v7202, 7
      %v7204 = vsub.s32 %v7201, %v7203
      %v7205 = vrot.slane %v7191, %v7204
      %v7206 = vcombine.low %v7150, %v7166
      %v7207 = vcombine.high %v7150, %v7166
      %v7209 = vunpack.c.l.s4 1934713408
      %v7210 = vunpack.c.0.s8 %v7209
      %v7211 = vlaneseq
      %v7212 = vshrl.u32 %v7211, 7
      %v7213 = vsub.s32 %v7210, %v7212
      %v7214 = vrot.slane %v7206, %v7213
      %v7216 = vunpack.c.l.s4 1934713408
      %v7217 = vunpack.c.0.s8 %v7216
      %v7218 = vlaneseq
      %v7219 = vshrl.u32 %v7218, 7
      %v7220 = vsub.s32 %v7217, %v7219
      %v7221 = vrot.slane %v7207, %v7220
      %v7222 = vcombine.low %v7157, %v7173
      %v7223 = vcombine.high %v7157, %v7173
      %v7225 = vunpack.c.l.s4 1934713408
      %v7226 = vunpack.c.0.s8 %v7225
      %v7227 = vlaneseq
      %v7228 = vshrl.u32 %v7227, 7
      %v7229 = vsub.s32 %v7226, %v7228
      %v7230 = vrot.slane %v7222, %v7229
      %v7232 = vunpack.c.l.s4 1934713408
      %v7233 = vunpack.c.0.s8 %v7232
      %v7234 = vlaneseq
      %v7235 = vshrl.u32 %v7234, 7
      %v7236 = vsub.s32 %v7233, %v7235
      %v7237 = vrot.slane %v7223, %v7236
      %v7238 = vcombine.low %v7182, %v7214
      %v7239 = vcombine.high %v7182, %v7214
      %v7240 = vcombine.low %v7189, %v7221
      %v7241 = vcombine.high %v7189, %v7221
      %v7242 = vcombine.low %v7198, %v7230
      %v7243 = vcombine.high %v7198, %v7230
      %v7244 = vcombine.low %v7205, %v7237
      %v7245 = vcombine.high %v7205, %v7237
      %v7246 = vcombine.low %v5777, %v5785
      %v7247 = vcombine.high %v5777, %v5785
      %v7249 = vunpack.c.l.s4 1983009808
      %v7250 = vunpack.c.0.s8 %v7249
      %v7251 = vlaneseq
      %v7252 = vshrl.u32 %v7251, 7
      %v7253 = vsub.s32 %v7250, %v7252
      %v7254 = vrot.slane %v7246, %v7253
      %v7256 = vunpack.c.l.s4 1983009808
      %v7257 = vunpack.c.0.s8 %v7256
      %v7258 = vlaneseq
      %v7259 = vshrl.u32 %v7258, 7
      %v7260 = vsub.s32 %v7257, %v7259
      %v7261 = vrot.slane %v7247, %v7260
      %v7262 = vcombine.low %v5781, %v5789
      %v7263 = vcombine.high %v5781, %v5789
      %v7265 = vunpack.c.l.s4 1983009808
      %v7266 = vunpack.c.0.s8 %v7265
      %v7267 = vlaneseq
      %v7268 = vshrl.u32 %v7267, 7
      %v7269 = vsub.s32 %v7266, %v7268
      %v7270 = vrot.slane %v7262, %v7269
      %v7272 = vunpack.c.l.s4 1983009808
      %v7273 = vunpack.c.0.s8 %v7272
      %v7274 = vlaneseq
      %v7275 = vshrl.u32 %v7274, 7
      %v7276 = vsub.s32 %v7273, %v7275
      %v7277 = vrot.slane %v7263, %v7276
      %v7278 = vcombine.low %v5793, %v5801
      %v7279 = vcombine.high %v5793, %v5801
      %v7281 = vunpack.c.l.s4 1983009808
      %v7282 = vunpack.c.0.s8 %v7281
      %v7283 = vlaneseq
      %v7284 = vshrl.u32 %v7283, 7
      %v7285 = vsub.s32 %v7282, %v7284
      %v7286 = vrot.slane %v7278, %v7285
      %v7288 = vunpack.c.l.s4 1983009808
      %v7289 = vunpack.c.0.s8 %v7288
      %v7290 = vlaneseq
      %v7291 = vshrl.u32 %v7290, 7
      %v7292 = vsub.s32 %v7289, %v7291
      %v7293 = vrot.slane %v7279, %v7292
      %v7294 = vcombine.low %v5797, %v5805
      %v7295 = vcombine.high %v5797, %v5805
      %v7297 = vunpack.c.l.s4 1983009808
      %v7298 = vunpack.c.0.s8 %v7297
      %v7299 = vlaneseq
      %v7300 = vshrl.u32 %v7299, 7
      %v7301 = vsub.s32 %v7298, %v7300
      %v7302 = vrot.slane %v7294, %v7301
      %v7304 = vunpack.c.l.s4 1983009808
      %v7305 = vunpack.c.0.s8 %v7304
      %v7306 = vlaneseq
      %v7307 = vshrl.u32 %v7306, 7
      %v7308 = vsub.s32 %v7305, %v7307
      %v7309 = vrot.slane %v7295, %v7308
      %v7310 = vcombine.low %v7254, %v7270
      %v7311 = vcombine.high %v7254, %v7270
      %v7313 = vunpack.c.l.s4 1934713408
      %v7314 = vunpack.c.0.s8 %v7313
      %v7315 = vlaneseq
      %v7316 = vshrl.u32 %v7315, 7
      %v7317 = vsub.s32 %v7314, %v7316
      %v7318 = vrot.slane %v7310, %v7317
      %v7320 = vunpack.c.l.s4 1934713408
      %v7321 = vunpack.c.0.s8 %v7320
      %v7322 = vlaneseq
      %v7323 = vshrl.u32 %v7322, 7
      %v7324 = vsub.s32 %v7321, %v7323
      %v7325 = vrot.slane %v7311, %v7324
      %v7326 = vcombine.low %v7261, %v7277
      %v7327 = vcombine.high %v7261, %v7277
      %v7329 = vunpack.c.l.s4 1934713408
      %v7330 = vunpack.c.0.s8 %v7329
      %v7331 = vlaneseq
      %v7332 = vshrl.u32 %v7331, 7
      %v7333 = vsub.s32 %v7330, %v7332
      %v7334 = vrot.slane %v7326, %v7333
      %v7336 = vunpack.c.l.s4 1934713408
      %v7337 = vunpack.c.0.s8 %v7336
      %v7338 = vlaneseq
      %v7339 = vshrl.u32 %v7338, 7
      %v7340 = vsub.s32 %v7337, %v7339
      %v7341 = vrot.slane %v7327, %v7340
      %v7342 = vcombine.low %v7286, %v7302
      %v7343 = vcombine.high %v7286, %v7302
      %v7345 = vunpack.c.l.s4 1934713408
      %v7346 = vunpack.c.0.s8 %v7345
      %v7347 = vlaneseq
      %v7348 = vshrl.u32 %v7347, 7
      %v7349 = vsub.s32 %v7346, %v7348
      %v7350 = vrot.slane %v7342, %v7349
      %v7352 = vunpack.c.l.s4 1934713408
      %v7353 = vunpack.c.0.s8 %v7352
      %v7354 = vlaneseq
      %v7355 = vshrl.u32 %v7354, 7
      %v7356 = vsub.s32 %v7353, %v7355
      %v7357 = vrot.slane %v7343, %v7356
      %v7358 = vcombine.low %v7293, %v7309
      %v7359 = vcombine.high %v7293, %v7309
      %v7361 = vunpack.c.l.s4 1934713408
      %v7362 = vunpack.c.0.s8 %v7361
      %v7363 = vlaneseq
      %v7364 = vshrl.u32 %v7363, 7
      %v7365 = vsub.s32 %v7362, %v7364
      %v7366 = vrot.slane %v7358, %v7365
      %v7368 = vunpack.c.l.s4 1934713408
      %v7369 = vunpack.c.0.s8 %v7368
      %v7370 = vlaneseq
      %v7371 = vshrl.u32 %v7370, 7
      %v7372 = vsub.s32 %v7369, %v7371
      %v7373 = vrot.slane %v7359, %v7372
      %v7374 = vcombine.low %v7318, %v7350
      %v7375 = vcombine.high %v7318, %v7350
      %v7376 = vcombine.low %v7325, %v7357
      %v7377 = vcombine.high %v7325, %v7357
      %v7378 = vcombine.low %v7334, %v7366
      %v7379 = vcombine.high %v7334, %v7366
      %v7380 = vcombine.low %v7341, %v7373
      %v7381 = vcombine.high %v7341, %v7373
      %v7382 = vcombine.low %v5809, %v5817
      %v7383 = vcombine.high %v5809, %v5817
      %v7385 = vunpack.c.l.s4 1983009808
      %v7386 = vunpack.c.0.s8 %v7385
      %v7387 = vlaneseq
      %v7388 = vshrl.u32 %v7387, 7
      %v7389 = vsub.s32 %v7386, %v7388
      %v7390 = vrot.slane %v7382, %v7389
      %v7392 = vunpack.c.l.s4 1983009808
      %v7393 = vunpack.c.0.s8 %v7392
      %v7394 = vlaneseq
      %v7395 = vshrl.u32 %v7394, 7
      %v7396 = vsub.s32 %v7393, %v7395
      %v7397 = vrot.slane %v7383, %v7396
      %v7398 = vcombine.low %v5813, %v5821
      %v7399 = vcombine.high %v5813, %v5821
      %v7401 = vunpack.c.l.s4 1983009808
      %v7402 = vunpack.c.0.s8 %v7401
      %v7403 = vlaneseq
      %v7404 = vshrl.u32 %v7403, 7
      %v7405 = vsub.s32 %v7402, %v7404
      %v7406 = vrot.slane %v7398, %v7405
      %v7408 = vunpack.c.l.s4 1983009808
      %v7409 = vunpack.c.0.s8 %v7408
      %v7410 = vlaneseq
      %v7411 = vshrl.u32 %v7410, 7
      %v7412 = vsub.s32 %v7409, %v7411
      %v7413 = vrot.slane %v7399, %v7412
      %v7414 = vcombine.low %v5825, %v5833
      %v7415 = vcombine.high %v5825, %v5833
      %v7417 = vunpack.c.l.s4 1983009808
      %v7418 = vunpack.c.0.s8 %v7417
      %v7419 = vlaneseq
      %v7420 = vshrl.u32 %v7419, 7
      %v7421 = vsub.s32 %v7418, %v7420
      %v7422 = vrot.slane %v7414, %v7421
      %v7424 = vunpack.c.l.s4 1983009808
      %v7425 = vunpack.c.0.s8 %v7424
      %v7426 = vlaneseq
      %v7427 = vshrl.u32 %v7426, 7
      %v7428 = vsub.s32 %v7425, %v7427
      %v7429 = vrot.slane %v7415, %v7428
      %v7430 = vcombine.low %v5829, %v5837
      %v7431 = vcombine.high %v5829, %v5837
      %v7433 = vunpack.c.l.s4 1983009808
      %v7434 = vunpack.c.0.s8 %v7433
      %v7435 = vlaneseq
      %v7436 = vshrl.u32 %v7435, 7
      %v7437 = vsub.s32 %v7434, %v7436
      %v7438 = vrot.slane %v7430, %v7437
      %v7440 = vunpack.c.l.s4 1983009808
      %v7441 = vunpack.c.0.s8 %v7440
      %v7442 = vlaneseq
      %v7443 = vshrl.u32 %v7442, 7
      %v7444 = vsub.s32 %v7441, %v7443
      %v7445 = vrot.slane %v7431, %v7444
      %v7446 = vcombine.low %v7390, %v7406
      %v7447 = vcombine.high %v7390, %v7406
      %v7449 = vunpack.c.l.s4 1934713408
      %v7450 = vunpack.c.0.s8 %v7449
      %v7451 = vlaneseq
      %v7452 = vshrl.u32 %v7451, 7
      %v7453 = vsub.s32 %v7450, %v7452
      %v7454 = vrot.slane %v7446, %v7453
      %v7456 = vunpack.c.l.s4 1934713408
      %v7457 = vunpack.c.0.s8 %v7456
      %v7458 = vlaneseq
      %v7459 = vshrl.u32 %v7458, 7
      %v7460 = vsub.s32 %v7457, %v7459
      %v7461 = vrot.slane %v7447, %v7460
      %v7462 = vcombine.low %v7397, %v7413
      %v7463 = vcombine.high %v7397, %v7413
      %v7465 = vunpack.c.l.s4 1934713408
      %v7466 = vunpack.c.0.s8 %v7465
      %v7467 = vlaneseq
      %v7468 = vshrl.u32 %v7467, 7
      %v7469 = vsub.s32 %v7466, %v7468
      %v7470 = vrot.slane %v7462, %v7469
      %v7472 = vunpack.c.l.s4 1934713408
      %v7473 = vunpack.c.0.s8 %v7472
      %v7474 = vlaneseq
      %v7475 = vshrl.u32 %v7474, 7
      %v7476 = vsub.s32 %v7473, %v7475
      %v7477 = vrot.slane %v7463, %v7476
      %v7478 = vcombine.low %v7422, %v7438
      %v7479 = vcombine.high %v7422, %v7438
      %v7481 = vunpack.c.l.s4 1934713408
      %v7482 = vunpack.c.0.s8 %v7481
      %v7483 = vlaneseq
      %v7484 = vshrl.u32 %v7483, 7
      %v7485 = vsub.s32 %v7482, %v7484
      %v7486 = vrot.slane %v7478, %v7485
      %v7488 = vunpack.c.l.s4 1934713408
      %v7489 = vunpack.c.0.s8 %v7488
      %v7490 = vlaneseq
      %v7491 = vshrl.u32 %v7490, 7
      %v7492 = vsub.s32 %v7489, %v7491
      %v7493 = vrot.slane %v7479, %v7492
      %v7494 = vcombine.low %v7429, %v7445
      %v7495 = vcombine.high %v7429, %v7445
      %v7497 = vunpack.c.l.s4 1934713408
      %v7498 = vunpack.c.0.s8 %v7497
      %v7499 = vlaneseq
      %v7500 = vshrl.u32 %v7499, 7
      %v7501 = vsub.s32 %v7498, %v7500
      %v7502 = vrot.slane %v7494, %v7501
      %v7504 = vunpack.c.l.s4 1934713408
      %v7505 = vunpack.c.0.s8 %v7504
      %v7506 = vlaneseq
      %v7507 = vshrl.u32 %v7506, 7
      %v7508 = vsub.s32 %v7505, %v7507
      %v7509 = vrot.slane %v7495, %v7508
      %v7510 = vcombine.low %v7454, %v7486
      %v7511 = vcombine.high %v7454, %v7486
      %v7512 = vcombine.low %v7461, %v7493
      %v7513 = vcombine.high %v7461, %v7493
      %v7514 = vcombine.low %v7470, %v7502
      %v7515 = vcombine.high %v7470, %v7502
      %v7516 = vcombine.low %v7477, %v7509
      %v7517 = vcombine.high %v7477, %v7509
      %v7518 = vcombine.low %v5841, %v5849
      %v7519 = vcombine.high %v5841, %v5849
      %v7521 = vunpack.c.l.s4 1983009808
      %v7522 = vunpack.c.0.s8 %v7521
      %v7523 = vlaneseq
      %v7524 = vshrl.u32 %v7523, 7
      %v7525 = vsub.s32 %v7522, %v7524
      %v7526 = vrot.slane %v7518, %v7525
      %v7528 = vunpack.c.l.s4 1983009808
      %v7529 = vunpack.c.0.s8 %v7528
      %v7530 = vlaneseq
      %v7531 = vshrl.u32 %v7530, 7
      %v7532 = vsub.s32 %v7529, %v7531
      %v7533 = vrot.slane %v7519, %v7532
      %v7534 = vcombine.low %v5845, %v5853
      %v7535 = vcombine.high %v5845, %v5853
      %v7537 = vunpack.c.l.s4 1983009808
      %v7538 = vunpack.c.0.s8 %v7537
      %v7539 = vlaneseq
      %v7540 = vshrl.u32 %v7539, 7
      %v7541 = vsub.s32 %v7538, %v7540
      %v7542 = vrot.slane %v7534, %v7541
      %v7544 = vunpack.c.l.s4 1983009808
      %v7545 = vunpack.c.0.s8 %v7544
      %v7546 = vlaneseq
      %v7547 = vshrl.u32 %v7546, 7
      %v7548 = vsub.s32 %v7545, %v7547
      %v7549 = vrot.slane %v7535, %v7548
      %v7550 = vcombine.low %v5857, %v5865
      %v7551 = vcombine.high %v5857, %v5865
      %v7553 = vunpack.c.l.s4 1983009808
      %v7554 = vunpack.c.0.s8 %v7553
      %v7555 = vlaneseq
      %v7556 = vshrl.u32 %v7555, 7
      %v7557 = vsub.s32 %v7554, %v7556
      %v7558 = vrot.slane %v7550, %v7557
      %v7560 = vunpack.c.l.s4 1983009808
      %v7561 = vunpack.c.0.s8 %v7560
      %v7562 = vlaneseq
      %v7563 = vshrl.u32 %v7562, 7
      %v7564 = vsub.s32 %v7561, %v7563
      %v7565 = vrot.slane %v7551, %v7564
      %v7566 = vcombine.low %v5861, %v5869
      %v7567 = vcombine.high %v5861, %v5869
      %v7569 = vunpack.c.l.s4 1983009808
      %v7570 = vunpack.c.0.s8 %v7569
      %v7571 = vlaneseq
      %v7572 = vshrl.u32 %v7571, 7
      %v7573 = vsub.s32 %v7570, %v7572
      %v7574 = vrot.slane %v7566, %v7573
      %v7576 = vunpack.c.l.s4 1983009808
      %v7577 = vunpack.c.0.s8 %v7576
      %v7578 = vlaneseq
      %v7579 = vshrl.u32 %v7578, 7
      %v7580 = vsub.s32 %v7577, %v7579
      %v7581 = vrot.slane %v7567, %v7580
      %v7582 = vcombine.low %v7526, %v7542
      %v7583 = vcombine.high %v7526, %v7542
      %v7585 = vunpack.c.l.s4 1934713408
      %v7586 = vunpack.c.0.s8 %v7585
      %v7587 = vlaneseq
      %v7588 = vshrl.u32 %v7587, 7
      %v7589 = vsub.s32 %v7586, %v7588
      %v7590 = vrot.slane %v7582, %v7589
      %v7592 = vunpack.c.l.s4 1934713408
      %v7593 = vunpack.c.0.s8 %v7592
      %v7594 = vlaneseq
      %v7595 = vshrl.u32 %v7594, 7
      %v7596 = vsub.s32 %v7593, %v7595
      %v7597 = vrot.slane %v7583, %v7596
      %v7598 = vcombine.low %v7533, %v7549
      %v7599 = vcombine.high %v7533, %v7549
      %v7601 = vunpack.c.l.s4 1934713408
      %v7602 = vunpack.c.0.s8 %v7601
      %v7603 = vlaneseq
      %v7604 = vshrl.u32 %v7603, 7
      %v7605 = vsub.s32 %v7602, %v7604
      %v7606 = vrot.slane %v7598, %v7605
      %v7608 = vunpack.c.l.s4 1934713408
      %v7609 = vunpack.c.0.s8 %v7608
      %v7610 = vlaneseq
      %v7611 = vshrl.u32 %v7610, 7
      %v7612 = vsub.s32 %v7609, %v7611
      %v7613 = vrot.slane %v7599, %v7612
      %v7614 = vcombine.low %v7558, %v7574
      %v7615 = vcombine.high %v7558, %v7574
      %v7617 = vunpack.c.l.s4 1934713408
      %v7618 = vunpack.c.0.s8 %v7617
      %v7619 = vlaneseq
      %v7620 = vshrl.u32 %v7619, 7
      %v7621 = vsub.s32 %v7618, %v7620
      %v7622 = vrot.slane %v7614, %v7621
      %v7624 = vunpack.c.l.s4 1934713408
      %v7625 = vunpack.c.0.s8 %v7624
      %v7626 = vlaneseq
      %v7627 = vshrl.u32 %v7626, 7
      %v7628 = vsub.s32 %v7625, %v7627
      %v7629 = vrot.slane %v7615, %v7628
      %v7630 = vcombine.low %v7565, %v7581
      %v7631 = vcombine.high %v7565, %v7581
      %v7633 = vunpack.c.l.s4 1934713408
      %v7634 = vunpack.c.0.s8 %v7633
      %v7635 = vlaneseq
      %v7636 = vshrl.u32 %v7635, 7
      %v7637 = vsub.s32 %v7634, %v7636
      %v7638 = vrot.slane %v7630, %v7637
      %v7640 = vunpack.c.l.s4 1934713408
      %v7641 = vunpack.c.0.s8 %v7640
      %v7642 = vlaneseq
      %v7643 = vshrl.u32 %v7642, 7
      %v7644 = vsub.s32 %v7641, %v7643
      %v7645 = vrot.slane %v7631, %v7644
      %v7646 = vcombine.low %v7590, %v7622
      %v7647 = vcombine.high %v7590, %v7622
      %v7648 = vcombine.low %v7597, %v7629
      %v7649 = vcombine.high %v7597, %v7629
      %v7650 = vcombine.low %v7606, %v7638
      %v7651 = vcombine.high %v7606, %v7638
      %v7652 = vcombine.low %v7613, %v7645
      %v7653 = vcombine.high %v7613, %v7645
      %v7654 = vcombine.low %v5873, %v5881
      %v7655 = vcombine.high %v5873, %v5881
      %v7657 = vunpack.c.l.s4 1983009808
      %v7658 = vunpack.c.0.s8 %v7657
      %v7659 = vlaneseq
      %v7660 = vshrl.u32 %v7659, 7
      %v7661 = vsub.s32 %v7658, %v7660
      %v7662 = vrot.slane %v7654, %v7661
      %v7664 = vunpack.c.l.s4 1983009808
      %v7665 = vunpack.c.0.s8 %v7664
      %v7666 = vlaneseq
      %v7667 = vshrl.u32 %v7666, 7
      %v7668 = vsub.s32 %v7665, %v7667
      %v7669 = vrot.slane %v7655, %v7668
      %v7670 = vcombine.low %v5877, %v5885
      %v7671 = vcombine.high %v5877, %v5885
      %v7673 = vunpack.c.l.s4 1983009808
      %v7674 = vunpack.c.0.s8 %v7673
      %v7675 = vlaneseq
      %v7676 = vshrl.u32 %v7675, 7
      %v7677 = vsub.s32 %v7674, %v7676
      %v7678 = vrot.slane %v7670, %v7677
      %v7680 = vunpack.c.l.s4 1983009808
      %v7681 = vunpack.c.0.s8 %v7680
      %v7682 = vlaneseq
      %v7683 = vshrl.u32 %v7682, 7
      %v7684 = vsub.s32 %v7681, %v7683
      %v7685 = vrot.slane %v7671, %v7684
      %v7686 = vcombine.low %v5889, %v5897
      %v7687 = vcombine.high %v5889, %v5897
      %v7689 = vunpack.c.l.s4 1983009808
      %v7690 = vunpack.c.0.s8 %v7689
      %v7691 = vlaneseq
      %v7692 = vshrl.u32 %v7691, 7
      %v7693 = vsub.s32 %v7690, %v7692
      %v7694 = vrot.slane %v7686, %v7693
      %v7696 = vunpack.c.l.s4 1983009808
      %v7697 = vunpack.c.0.s8 %v7696
      %v7698 = vlaneseq
      %v7699 = vshrl.u32 %v7698, 7
      %v7700 = vsub.s32 %v7697, %v7699
      %v7701 = vrot.slane %v7687, %v7700
      %v7702 = vcombine.low %v5893, %v5901
      %v7703 = vcombine.high %v5893, %v5901
      %v7705 = vunpack.c.l.s4 1983009808
      %v7706 = vunpack.c.0.s8 %v7705
      %v7707 = vlaneseq
      %v7708 = vshrl.u32 %v7707, 7
      %v7709 = vsub.s32 %v7706, %v7708
      %v7710 = vrot.slane %v7702, %v7709
      %v7712 = vunpack.c.l.s4 1983009808
      %v7713 = vunpack.c.0.s8 %v7712
      %v7714 = vlaneseq
      %v7715 = vshrl.u32 %v7714, 7
      %v7716 = vsub.s32 %v7713, %v7715
      %v7717 = vrot.slane %v7703, %v7716
      %v7718 = vcombine.low %v7662, %v7678
      %v7719 = vcombine.high %v7662, %v7678
      %v7721 = vunpack.c.l.s4 1934713408
      %v7722 = vunpack.c.0.s8 %v7721
      %v7723 = vlaneseq
      %v7724 = vshrl.u32 %v7723, 7
      %v7725 = vsub.s32 %v7722, %v7724
      %v7726 = vrot.slane %v7718, %v7725
      %v7728 = vunpack.c.l.s4 1934713408
      %v7729 = vunpack.c.0.s8 %v7728
      %v7730 = vlaneseq
      %v7731 = vshrl.u32 %v7730, 7
      %v7732 = vsub.s32 %v7729, %v7731
      %v7733 = vrot.slane %v7719, %v7732
      %v7734 = vcombine.low %v7669, %v7685
      %v7735 = vcombine.high %v7669, %v7685
      %v7737 = vunpack.c.l.s4 1934713408
      %v7738 = vunpack.c.0.s8 %v7737
      %v7739 = vlaneseq
      %v7740 = vshrl.u32 %v7739, 7
      %v7741 = vsub.s32 %v7738, %v7740
      %v7742 = vrot.slane %v7734, %v7741
      %v7744 = vunpack.c.l.s4 1934713408
      %v7745 = vunpack.c.0.s8 %v7744
      %v7746 = vlaneseq
      %v7747 = vshrl.u32 %v7746, 7
      %v7748 = vsub.s32 %v7745, %v7747
      %v7749 = vrot.slane %v7735, %v7748
      %v7750 = vcombine.low %v7694, %v7710
      %v7751 = vcombine.high %v7694, %v7710
      %v7753 = vunpack.c.l.s4 1934713408
      %v7754 = vunpack.c.0.s8 %v7753
      %v7755 = vlaneseq
      %v7756 = vshrl.u32 %v7755, 7
      %v7757 = vsub.s32 %v7754, %v7756
      %v7758 = vrot.slane %v7750, %v7757
      %v7760 = vunpack.c.l.s4 1934713408
      %v7761 = vunpack.c.0.s8 %v7760
      %v7762 = vlaneseq
      %v7763 = vshrl.u32 %v7762, 7
      %v7764 = vsub.s32 %v7761, %v7763
      %v7765 = vrot.slane %v7751, %v7764
      %v7766 = vcombine.low %v7701, %v7717
      %v7767 = vcombine.high %v7701, %v7717
      %v7769 = vunpack.c.l.s4 1934713408
      %v7770 = vunpack.c.0.s8 %v7769
      %v7771 = vlaneseq
      %v7772 = vshrl.u32 %v7771, 7
      %v7773 = vsub.s32 %v7770, %v7772
      %v7774 = vrot.slane %v7766, %v7773
      %v7776 = vunpack.c.l.s4 1934713408
      %v7777 = vunpack.c.0.s8 %v7776
      %v7778 = vlaneseq
      %v7779 = vshrl.u32 %v7778, 7
      %v7780 = vsub.s32 %v7777, %v7779
      %v7781 = vrot.slane %v7767, %v7780
      %v7782 = vcombine.low %v7726, %v7758
      %v7783 = vcombine.high %v7726, %v7758
      %v7784 = vcombine.low %v7733, %v7765
      %v7785 = vcombine.high %v7733, %v7765
      %v7786 = vcombine.low %v7742, %v7774
      %v7787 = vcombine.high %v7742, %v7774
      %v7788 = vcombine.low %v7749, %v7781
      %v7789 = vcombine.high %v7749, %v7781
      %v7790 = vcombine.low %v5905, %v5913
      %v7791 = vcombine.high %v5905, %v5913
      %v7793 = vunpack.c.l.s4 1983009808
      %v7794 = vunpack.c.0.s8 %v7793
      %v7795 = vlaneseq
      %v7796 = vshrl.u32 %v7795, 7
      %v7797 = vsub.s32 %v7794, %v7796
      %v7798 = vrot.slane %v7790, %v7797
      %v7800 = vunpack.c.l.s4 1983009808
      %v7801 = vunpack.c.0.s8 %v7800
      %v7802 = vlaneseq
      %v7803 = vshrl.u32 %v7802, 7
      %v7804 = vsub.s32 %v7801, %v7803
      %v7805 = vrot.slane %v7791, %v7804
      %v7806 = vcombine.low %v5909, %v5917
      %v7807 = vcombine.high %v5909, %v5917
      %v7809 = vunpack.c.l.s4 1983009808
      %v7810 = vunpack.c.0.s8 %v7809
      %v7811 = vlaneseq
      %v7812 = vshrl.u32 %v7811, 7
      %v7813 = vsub.s32 %v7810, %v7812
      %v7814 = vrot.slane %v7806, %v7813
      %v7816 = vunpack.c.l.s4 1983009808
      %v7817 = vunpack.c.0.s8 %v7816
      %v7818 = vlaneseq
      %v7819 = vshrl.u32 %v7818, 7
      %v7820 = vsub.s32 %v7817, %v7819
      %v7821 = vrot.slane %v7807, %v7820
      %v7822 = vcombine.low %v5921, %v5929
      %v7823 = vcombine.high %v5921, %v5929
      %v7825 = vunpack.c.l.s4 1983009808
      %v7826 = vunpack.c.0.s8 %v7825
      %v7827 = vlaneseq
      %v7828 = vshrl.u32 %v7827, 7
      %v7829 = vsub.s32 %v7826, %v7828
      %v7830 = vrot.slane %v7822, %v7829
      %v7832 = vunpack.c.l.s4 1983009808
      %v7833 = vunpack.c.0.s8 %v7832
      %v7834 = vlaneseq
      %v7835 = vshrl.u32 %v7834, 7
      %v7836 = vsub.s32 %v7833, %v7835
      %v7837 = vrot.slane %v7823, %v7836
      %v7838 = vcombine.low %v5925, %v5933
      %v7839 = vcombine.high %v5925, %v5933
      %v7841 = vunpack.c.l.s4 1983009808
      %v7842 = vunpack.c.0.s8 %v7841
      %v7843 = vlaneseq
      %v7844 = vshrl.u32 %v7843, 7
      %v7845 = vsub.s32 %v7842, %v7844
      %v7846 = vrot.slane %v7838, %v7845
      %v7848 = vunpack.c.l.s4 1983009808
      %v7849 = vunpack.c.0.s8 %v7848
      %v7850 = vlaneseq
      %v7851 = vshrl.u32 %v7850, 7
      %v7852 = vsub.s32 %v7849, %v7851
      %v7853 = vrot.slane %v7839, %v7852
      %v7854 = vcombine.low %v7798, %v7814
      %v7855 = vcombine.high %v7798, %v7814
      %v7857 = vunpack.c.l.s4 1934713408
      %v7858 = vunpack.c.0.s8 %v7857
      %v7859 = vlaneseq
      %v7860 = vshrl.u32 %v7859, 7
      %v7861 = vsub.s32 %v7858, %v7860
      %v7862 = vrot.slane %v7854, %v7861
      %v7864 = vunpack.c.l.s4 1934713408
      %v7865 = vunpack.c.0.s8 %v7864
      %v7866 = vlaneseq
      %v7867 = vshrl.u32 %v7866, 7
      %v7868 = vsub.s32 %v7865, %v7867
      %v7869 = vrot.slane %v7855, %v7868
      %v7870 = vcombine.low %v7805, %v7821
      %v7871 = vcombine.high %v7805, %v7821
      %v7873 = vunpack.c.l.s4 1934713408
      %v7874 = vunpack.c.0.s8 %v7873
      %v7875 = vlaneseq
      %v7876 = vshrl.u32 %v7875, 7
      %v7877 = vsub.s32 %v7874, %v7876
      %v7878 = vrot.slane %v7870, %v7877
      %v7880 = vunpack.c.l.s4 1934713408
      %v7881 = vunpack.c.0.s8 %v7880
      %v7882 = vlaneseq
      %v7883 = vshrl.u32 %v7882, 7
      %v7884 = vsub.s32 %v7881, %v7883
      %v7885 = vrot.slane %v7871, %v7884
      %v7886 = vcombine.low %v7830, %v7846
      %v7887 = vcombine.high %v7830, %v7846
      %v7889 = vunpack.c.l.s4 1934713408
      %v7890 = vunpack.c.0.s8 %v7889
      %v7891 = vlaneseq
      %v7892 = vshrl.u32 %v7891, 7
      %v7893 = vsub.s32 %v7890, %v7892
      %v7894 = vrot.slane %v7886, %v7893
      %v7896 = vunpack.c.l.s4 1934713408
      %v7897 = vunpack.c.0.s8 %v7896
      %v7898 = vlaneseq
      %v7899 = vshrl.u32 %v7898, 7
      %v7900 = vsub.s32 %v7897, %v7899
      %v7901 = vrot.slane %v7887, %v7900
      %v7902 = vcombine.low %v7837, %v7853
      %v7903 = vcombine.high %v7837, %v7853
      %v7905 = vunpack.c.l.s4 1934713408
      %v7906 = vunpack.c.0.s8 %v7905
      %v7907 = vlaneseq
      %v7908 = vshrl.u32 %v7907, 7
      %v7909 = vsub.s32 %v7906, %v7908
      %v7910 = vrot.slane %v7902, %v7909
      %v7912 = vunpack.c.l.s4 1934713408
      %v7913 = vunpack.c.0.s8 %v7912
      %v7914 = vlaneseq
      %v7915 = vshrl.u32 %v7914, 7
      %v7916 = vsub.s32 %v7913, %v7915
      %v7917 = vrot.slane %v7903, %v7916
      %v7918 = vcombine.low %v7862, %v7894
      %v7919 = vcombine.high %v7862, %v7894
      %v7920 = vcombine.low %v7869, %v7901
      %v7921 = vcombine.high %v7869, %v7901
      %v7922 = vcombine.low %v7878, %v7910
      %v7923 = vcombine.high %v7878, %v7910
      %v7924 = vcombine.low %v7885, %v7917
      %v7925 = vcombine.high %v7885, %v7917
      %v7926 = vcombine.low %v5937, %v5945
      %v7927 = vcombine.high %v5937, %v5945
      %v7929 = vunpack.c.l.s4 1983009808
      %v7930 = vunpack.c.0.s8 %v7929
      %v7931 = vlaneseq
      %v7932 = vshrl.u32 %v7931, 7
      %v7933 = vsub.s32 %v7930, %v7932
      %v7934 = vrot.slane %v7926, %v7933
      %v7936 = vunpack.c.l.s4 1983009808
      %v7937 = vunpack.c.0.s8 %v7936
      %v7938 = vlaneseq
      %v7939 = vshrl.u32 %v7938, 7
      %v7940 = vsub.s32 %v7937, %v7939
      %v7941 = vrot.slane %v7927, %v7940
      %v7942 = vcombine.low %v5941, %v5949
      %v7943 = vcombine.high %v5941, %v5949
      %v7945 = vunpack.c.l.s4 1983009808
      %v7946 = vunpack.c.0.s8 %v7945
      %v7947 = vlaneseq
      %v7948 = vshrl.u32 %v7947, 7
      %v7949 = vsub.s32 %v7946, %v7948
      %v7950 = vrot.slane %v7942, %v7949
      %v7952 = vunpack.c.l.s4 1983009808
      %v7953 = vunpack.c.0.s8 %v7952
      %v7954 = vlaneseq
      %v7955 = vshrl.u32 %v7954, 7
      %v7956 = vsub.s32 %v7953, %v7955
      %v7957 = vrot.slane %v7943, %v7956
      %v7958 = vcombine.low %v5953, %v5961
      %v7959 = vcombine.high %v5953, %v5961
      %v7961 = vunpack.c.l.s4 1983009808
      %v7962 = vunpack.c.0.s8 %v7961
      %v7963 = vlaneseq
      %v7964 = vshrl.u32 %v7963, 7
      %v7965 = vsub.s32 %v7962, %v7964
      %v7966 = vrot.slane %v7958, %v7965
      %v7968 = vunpack.c.l.s4 1983009808
      %v7969 = vunpack.c.0.s8 %v7968
      %v7970 = vlaneseq
      %v7971 = vshrl.u32 %v7970, 7
      %v7972 = vsub.s32 %v7969, %v7971
      %v7973 = vrot.slane %v7959, %v7972
      %v7974 = vcombine.low %v5957, %v5965
      %v7975 = vcombine.high %v5957, %v5965
      %v7977 = vunpack.c.l.s4 1983009808
      %v7978 = vunpack.c.0.s8 %v7977
      %v7979 = vlaneseq
      %v7980 = vshrl.u32 %v7979, 7
      %v7981 = vsub.s32 %v7978, %v7980
      %v7982 = vrot.slane %v7974, %v7981
      %v7984 = vunpack.c.l.s4 1983009808
      %v7985 = vunpack.c.0.s8 %v7984
      %v7986 = vlaneseq
      %v7987 = vshrl.u32 %v7986, 7
      %v7988 = vsub.s32 %v7985, %v7987
      %v7989 = vrot.slane %v7975, %v7988
      %v7990 = vcombine.low %v7934, %v7950
      %v7991 = vcombine.high %v7934, %v7950
      %v7993 = vunpack.c.l.s4 1934713408
      %v7994 = vunpack.c.0.s8 %v7993
      %v7995 = vlaneseq
      %v7996 = vshrl.u32 %v7995, 7
      %v7997 = vsub.s32 %v7994, %v7996
      %v7998 = vrot.slane %v7990, %v7997
      %v8000 = vunpack.c.l.s4 1934713408
      %v8001 = vunpack.c.0.s8 %v8000
      %v8002 = vlaneseq
      %v8003 = vshrl.u32 %v8002, 7
      %v8004 = vsub.s32 %v8001, %v8003
      %v8005 = vrot.slane %v7991, %v8004
      %v8006 = vcombine.low %v7941, %v7957
      %v8007 = vcombine.high %v7941, %v7957
      %v8009 = vunpack.c.l.s4 1934713408
      %v8010 = vunpack.c.0.s8 %v8009
      %v8011 = vlaneseq
      %v8012 = vshrl.u32 %v8011, 7
      %v8013 = vsub.s32 %v8010, %v8012
      %v8014 = vrot.slane %v8006, %v8013
      %v8016 = vunpack.c.l.s4 1934713408
      %v8017 = vunpack.c.0.s8 %v8016
      %v8018 = vlaneseq
      %v8019 = vshrl.u32 %v8018, 7
      %v8020 = vsub.s32 %v8017, %v8019
      %v8021 = vrot.slane %v8007, %v8020
      %v8022 = vcombine.low %v7966, %v7982
      %v8023 = vcombine.high %v7966, %v7982
      %v8025 = vunpack.c.l.s4 1934713408
      %v8026 = vunpack.c.0.s8 %v8025
      %v8027 = vlaneseq
      %v8028 = vshrl.u32 %v8027, 7
      %v8029 = vsub.s32 %v8026, %v8028
      %v8030 = vrot.slane %v8022, %v8029
      %v8032 = vunpack.c.l.s4 1934713408
      %v8033 = vunpack.c.0.s8 %v8032
      %v8034 = vlaneseq
      %v8035 = vshrl.u32 %v8034, 7
      %v8036 = vsub.s32 %v8033, %v8035
      %v8037 = vrot.slane %v8023, %v8036
      %v8038 = vcombine.low %v7973, %v7989
      %v8039 = vcombine.high %v7973, %v7989
      %v8041 = vunpack.c.l.s4 1934713408
      %v8042 = vunpack.c.0.s8 %v8041
      %v8043 = vlaneseq
      %v8044 = vshrl.u32 %v8043, 7
      %v8045 = vsub.s32 %v8042, %v8044
      %v8046 = vrot.slane %v8038, %v8045
      %v8048 = vunpack.c.l.s4 1934713408
      %v8049 = vunpack.c.0.s8 %v8048
      %v8050 = vlaneseq
      %v8051 = vshrl.u32 %v8050, 7
      %v8052 = vsub.s32 %v8049, %v8051
      %v8053 = vrot.slane %v8039, %v8052
      %v8054 = vcombine.low %v7998, %v8030
      %v8055 = vcombine.high %v7998, %v8030
      %v8056 = vcombine.low %v8005, %v8037
      %v8057 = vcombine.high %v8005, %v8037
      %v8058 = vcombine.low %v8014, %v8046
      %v8059 = vcombine.high %v8014, %v8046
      %v8060 = vcombine.low %v8021, %v8053
      %v8061 = vcombine.high %v8021, %v8053
      %v8062 = vcombine.low %v5969, %v5977
      %v8063 = vcombine.high %v5969, %v5977
      %v8065 = vunpack.c.l.s4 1983009808
      %v8066 = vunpack.c.0.s8 %v8065
      %v8067 = vlaneseq
      %v8068 = vshrl.u32 %v8067, 7
      %v8069 = vsub.s32 %v8066, %v8068
      %v8070 = vrot.slane %v8062, %v8069
      %v8072 = vunpack.c.l.s4 1983009808
      %v8073 = vunpack.c.0.s8 %v8072
      %v8074 = vlaneseq
      %v8075 = vshrl.u32 %v8074, 7
      %v8076 = vsub.s32 %v8073, %v8075
      %v8077 = vrot.slane %v8063, %v8076
      %v8078 = vcombine.low %v5973, %v5981
      %v8079 = vcombine.high %v5973, %v5981
      %v8081 = vunpack.c.l.s4 1983009808
      %v8082 = vunpack.c.0.s8 %v8081
      %v8083 = vlaneseq
      %v8084 = vshrl.u32 %v8083, 7
      %v8085 = vsub.s32 %v8082, %v8084
      %v8086 = vrot.slane %v8078, %v8085
      %v8088 = vunpack.c.l.s4 1983009808
      %v8089 = vunpack.c.0.s8 %v8088
      %v8090 = vlaneseq
      %v8091 = vshrl.u32 %v8090, 7
      %v8092 = vsub.s32 %v8089, %v8091
      %v8093 = vrot.slane %v8079, %v8092
      %v8094 = vcombine.low %v5985, %v5993
      %v8095 = vcombine.high %v5985, %v5993
      %v8097 = vunpack.c.l.s4 1983009808
      %v8098 = vunpack.c.0.s8 %v8097
      %v8099 = vlaneseq
      %v8100 = vshrl.u32 %v8099, 7
      %v8101 = vsub.s32 %v8098, %v8100
      %v8102 = vrot.slane %v8094, %v8101
      %v8104 = vunpack.c.l.s4 1983009808
      %v8105 = vunpack.c.0.s8 %v8104
      %v8106 = vlaneseq
      %v8107 = vshrl.u32 %v8106, 7
      %v8108 = vsub.s32 %v8105, %v8107
      %v8109 = vrot.slane %v8095, %v8108
      %v8110 = vcombine.low %v5989, %v5997
      %v8111 = vcombine.high %v5989, %v5997
      %v8113 = vunpack.c.l.s4 1983009808
      %v8114 = vunpack.c.0.s8 %v8113
      %v8115 = vlaneseq
      %v8116 = vshrl.u32 %v8115, 7
      %v8117 = vsub.s32 %v8114, %v8116
      %v8118 = vrot.slane %v8110, %v8117
      %v8120 = vunpack.c.l.s4 1983009808
      %v8121 = vunpack.c.0.s8 %v8120
      %v8122 = vlaneseq
      %v8123 = vshrl.u32 %v8122, 7
      %v8124 = vsub.s32 %v8121, %v8123
      %v8125 = vrot.slane %v8111, %v8124
      %v8126 = vcombine.low %v8070, %v8086
      %v8127 = vcombine.high %v8070, %v8086
      %v8129 = vunpack.c.l.s4 1934713408
      %v8130 = vunpack.c.0.s8 %v8129
      %v8131 = vlaneseq
      %v8132 = vshrl.u32 %v8131, 7
      %v8133 = vsub.s32 %v8130, %v8132
      %v8134 = vrot.slane %v8126, %v8133
      %v8136 = vunpack.c.l.s4 1934713408
      %v8137 = vunpack.c.0.s8 %v8136
      %v8138 = vlaneseq
      %v8139 = vshrl.u32 %v8138, 7
      %v8140 = vsub.s32 %v8137, %v8139
      %v8141 = vrot.slane %v8127, %v8140
      %v8142 = vcombine.low %v8077, %v8093
      %v8143 = vcombine.high %v8077, %v8093
      %v8145 = vunpack.c.l.s4 1934713408
      %v8146 = vunpack.c.0.s8 %v8145
      %v8147 = vlaneseq
      %v8148 = vshrl.u32 %v8147, 7
      %v8149 = vsub.s32 %v8146, %v8148
      %v8150 = vrot.slane %v8142, %v8149
      %v8152 = vunpack.c.l.s4 1934713408
      %v8153 = vunpack.c.0.s8 %v8152
      %v8154 = vlaneseq
      %v8155 = vshrl.u32 %v8154, 7
      %v8156 = vsub.s32 %v8153, %v8155
      %v8157 = vrot.slane %v8143, %v8156
      %v8158 = vcombine.low %v8102, %v8118
      %v8159 = vcombine.high %v8102, %v8118
      %v8161 = vunpack.c.l.s4 1934713408
      %v8162 = vunpack.c.0.s8 %v8161
      %v8163 = vlaneseq
      %v8164 = vshrl.u32 %v8163, 7
      %v8165 = vsub.s32 %v8162, %v8164
      %v8166 = vrot.slane %v8158, %v8165
      %v8168 = vunpack.c.l.s4 1934713408
      %v8169 = vunpack.c.0.s8 %v8168
      %v8170 = vlaneseq
      %v8171 = vshrl.u32 %v8170, 7
      %v8172 = vsub.s32 %v8169, %v8171
      %v8173 = vrot.slane %v8159, %v8172
      %v8174 = vcombine.low %v8109, %v8125
      %v8175 = vcombine.high %v8109, %v8125
      %v8177 = vunpack.c.l.s4 1934713408
      %v8178 = vunpack.c.0.s8 %v8177
      %v8179 = vlaneseq
      %v8180 = vshrl.u32 %v8179, 7
      %v8181 = vsub.s32 %v8178, %v8180
      %v8182 = vrot.slane %v8174, %v8181
      %v8184 = vunpack.c.l.s4 1934713408
      %v8185 = vunpack.c.0.s8 %v8184
      %v8186 = vlaneseq
      %v8187 = vshrl.u32 %v8186, 7
      %v8188 = vsub.s32 %v8185, %v8187
      %v8189 = vrot.slane %v8175, %v8188
      %v8190 = vcombine.low %v8134, %v8166
      %v8191 = vcombine.high %v8134, %v8166
      %v8192 = vcombine.low %v8141, %v8173
      %v8193 = vcombine.high %v8141, %v8173
      %v8194 = vcombine.low %v8150, %v8182
      %v8195 = vcombine.high %v8150, %v8182
      %v8196 = vcombine.low %v8157, %v8189
      %v8197 = vcombine.high %v8157, %v8189
      %v8198 = vcombine.low %v6001, %v6009
      %v8199 = vcombine.high %v6001, %v6009
      %v8201 = vunpack.c.l.s4 1983009808
      %v8202 = vunpack.c.0.s8 %v8201
      %v8203 = vlaneseq
      %v8204 = vshrl.u32 %v8203, 7
      %v8205 = vsub.s32 %v8202, %v8204
      %v8206 = vrot.slane %v8198, %v8205
      %v8208 = vunpack.c.l.s4 1983009808
      %v8209 = vunpack.c.0.s8 %v8208
      %v8210 = vlaneseq
      %v8211 = vshrl.u32 %v8210, 7
      %v8212 = vsub.s32 %v8209, %v8211
      %v8213 = vrot.slane %v8199, %v8212
      %v8214 = vcombine.low %v6005, %v6013
      %v8215 = vcombine.high %v6005, %v6013
      %v8217 = vunpack.c.l.s4 1983009808
      %v8218 = vunpack.c.0.s8 %v8217
      %v8219 = vlaneseq
      %v8220 = vshrl.u32 %v8219, 7
      %v8221 = vsub.s32 %v8218, %v8220
      %v8222 = vrot.slane %v8214, %v8221
      %v8224 = vunpack.c.l.s4 1983009808
      %v8225 = vunpack.c.0.s8 %v8224
      %v8226 = vlaneseq
      %v8227 = vshrl.u32 %v8226, 7
      %v8228 = vsub.s32 %v8225, %v8227
      %v8229 = vrot.slane %v8215, %v8228
      %v8230 = vcombine.low %v6017, %v6025
      %v8231 = vcombine.high %v6017, %v6025
      %v8233 = vunpack.c.l.s4 1983009808
      %v8234 = vunpack.c.0.s8 %v8233
      %v8235 = vlaneseq
      %v8236 = vshrl.u32 %v8235, 7
      %v8237 = vsub.s32 %v8234, %v8236
      %v8238 = vrot.slane %v8230, %v8237
      %v8240 = vunpack.c.l.s4 1983009808
      %v8241 = vunpack.c.0.s8 %v8240
      %v8242 = vlaneseq
      %v8243 = vshrl.u32 %v8242, 7
      %v8244 = vsub.s32 %v8241, %v8243
      %v8245 = vrot.slane %v8231, %v8244
      %v8246 = vcombine.low %v6021, %v6029
      %v8247 = vcombine.high %v6021, %v6029
      %v8249 = vunpack.c.l.s4 1983009808
      %v8250 = vunpack.c.0.s8 %v8249
      %v8251 = vlaneseq
      %v8252 = vshrl.u32 %v8251, 7
      %v8253 = vsub.s32 %v8250, %v8252
      %v8254 = vrot.slane %v8246, %v8253
      %v8256 = vunpack.c.l.s4 1983009808
      %v8257 = vunpack.c.0.s8 %v8256
      %v8258 = vlaneseq
      %v8259 = vshrl.u32 %v8258, 7
      %v8260 = vsub.s32 %v8257, %v8259
      %v8261 = vrot.slane %v8247, %v8260
      %v8262 = vcombine.low %v8206, %v8222
      %v8263 = vcombine.high %v8206, %v8222
      %v8265 = vunpack.c.l.s4 1934713408
      %v8266 = vunpack.c.0.s8 %v8265
      %v8267 = vlaneseq
      %v8268 = vshrl.u32 %v8267, 7
      %v8269 = vsub.s32 %v8266, %v8268
      %v8270 = vrot.slane %v8262, %v8269
      %v8272 = vunpack.c.l.s4 1934713408
      %v8273 = vunpack.c.0.s8 %v8272
      %v8274 = vlaneseq
      %v8275 = vshrl.u32 %v8274, 7
      %v8276 = vsub.s32 %v8273, %v8275
      %v8277 = vrot.slane %v8263, %v8276
      %v8278 = vcombine.low %v8213, %v8229
      %v8279 = vcombine.high %v8213, %v8229
      %v8281 = vunpack.c.l.s4 1934713408
      %v8282 = vunpack.c.0.s8 %v8281
      %v8283 = vlaneseq
      %v8284 = vshrl.u32 %v8283, 7
      %v8285 = vsub.s32 %v8282, %v8284
      %v8286 = vrot.slane %v8278, %v8285
      %v8288 = vunpack.c.l.s4 1934713408
      %v8289 = vunpack.c.0.s8 %v8288
      %v8290 = vlaneseq
      %v8291 = vshrl.u32 %v8290, 7
      %v8292 = vsub.s32 %v8289, %v8291
      %v8293 = vrot.slane %v8279, %v8292
      %v8294 = vcombine.low %v8238, %v8254
      %v8295 = vcombine.high %v8238, %v8254
      %v8297 = vunpack.c.l.s4 1934713408
      %v8298 = vunpack.c.0.s8 %v8297
      %v8299 = vlaneseq
      %v8300 = vshrl.u32 %v8299, 7
      %v8301 = vsub.s32 %v8298, %v8300
      %v8302 = vrot.slane %v8294, %v8301
      %v8304 = vunpack.c.l.s4 1934713408
      %v8305 = vunpack.c.0.s8 %v8304
      %v8306 = vlaneseq
      %v8307 = vshrl.u32 %v8306, 7
      %v8308 = vsub.s32 %v8305, %v8307
      %v8309 = vrot.slane %v8295, %v8308
      %v8310 = vcombine.low %v8245, %v8261
      %v8311 = vcombine.high %v8245, %v8261
      %v8313 = vunpack.c.l.s4 1934713408
      %v8314 = vunpack.c.0.s8 %v8313
      %v8315 = vlaneseq
      %v8316 = vshrl.u32 %v8315, 7
      %v8317 = vsub.s32 %v8314, %v8316
      %v8318 = vrot.slane %v8310, %v8317
      %v8320 = vunpack.c.l.s4 1934713408
      %v8321 = vunpack.c.0.s8 %v8320
      %v8322 = vlaneseq
      %v8323 = vshrl.u32 %v8322, 7
      %v8324 = vsub.s32 %v8321, %v8323
      %v8325 = vrot.slane %v8311, %v8324
      %v8326 = vcombine.low %v8270, %v8302
      %v8327 = vcombine.high %v8270, %v8302
      %v8328 = vcombine.low %v8277, %v8309
      %v8329 = vcombine.high %v8277, %v8309
      %v8330 = vcombine.low %v8286, %v8318
      %v8331 = vcombine.high %v8286, %v8318
      %v8332 = vcombine.low %v8293, %v8325
      %v8333 = vcombine.high %v8293, %v8325
      %8342 = vrot.lane.b32.xlu0 %v6287, 16
      %v8343 = vpop.permute.xlu0 %8342
      %8344 = vrot.lane.b32.xlu0 %v6423, 16
      %v8345 = vpop.permute.xlu0 %8344
      %8346 = vrot.lane.b32.xlu0 %v6559, 16
      %v8347 = vpop.permute.xlu0 %8346
      %8348 = vrot.lane.b32.xlu0 %v6695, 16
      %v8349 = vpop.permute.xlu0 %8348
      %8350 = vrot.lane.b32.xlu0 %v6831, 16
      %v8351 = vpop.permute.xlu0 %8350
      %8352 = vrot.lane.b32.xlu0 %v6967, 16
      %v8353 = vpop.permute.xlu0 %8352
      %8354 = vrot.lane.b32.xlu0 %v7103, 16
      %v8355 = vpop.permute.xlu0 %8354
      %8356 = vrot.lane.b32.xlu0 %v7239, 16
      %v8357 = vpop.permute.xlu0 %8356
      %8374 = vrot.lane.b32.xlu0 %v6288, 32
      %v8375 = vpop.permute.xlu0 %8374
      %8376 = vrot.lane.b32.xlu0 %v6424, 32
      %v8377 = vpop.permute.xlu0 %8376
      %8378 = vrot.lane.b32.xlu0 %v6560, 32
      %v8379 = vpop.permute.xlu0 %8378
      %8380 = vrot.lane.b32.xlu0 %v6696, 32
      %v8381 = vpop.permute.xlu0 %8380
      %8382 = vrot.lane.b32.xlu0 %v6832, 32
      %v8383 = vpop.permute.xlu0 %8382
      %8384 = vrot.lane.b32.xlu0 %v6968, 32
      %v8385 = vpop.permute.xlu0 %8384
      %8386 = vrot.lane.b32.xlu0 %v7104, 32
      %v8387 = vpop.permute.xlu0 %8386
      %8388 = vrot.lane.b32.xlu0 %v7240, 32
      %v8389 = vpop.permute.xlu0 %8388
      %8406 = vrot.lane.b32.xlu0 %v6289, 48
      %v8407 = vpop.permute.xlu0 %8406
      %8408 = vrot.lane.b32.xlu0 %v6425, 48
      %v8409 = vpop.permute.xlu0 %8408
      %8410 = vrot.lane.b32.xlu0 %v6561, 48
      %v8411 = vpop.permute.xlu0 %8410
      %8412 = vrot.lane.b32.xlu0 %v6697, 48
      %v8413 = vpop.permute.xlu0 %8412
      %8414 = vrot.lane.b32.xlu0 %v6833, 48
      %v8415 = vpop.permute.xlu0 %8414
      %8416 = vrot.lane.b32.xlu0 %v6969, 48
      %v8417 = vpop.permute.xlu0 %8416
      %8418 = vrot.lane.b32.xlu0 %v7105, 48
      %v8419 = vpop.permute.xlu0 %8418
      %8420 = vrot.lane.b32.xlu0 %v7241, 48
      %v8421 = vpop.permute.xlu0 %8420
      %8438 = vrot.lane.b32.xlu0 %v6290, 64
      %v8439 = vpop.permute.xlu0 %8438
      %8440 = vrot.lane.b32.xlu0 %v6426, 64
      %v8441 = vpop.permute.xlu0 %8440
      %8442 = vrot.lane.b32.xlu0 %v6562, 64
      %v8443 = vpop.permute.xlu0 %8442
      %8444 = vrot.lane.b32.xlu0 %v6698, 64
      %v8445 = vpop.permute.xlu0 %8444
      %8446 = vrot.lane.b32.xlu0 %v6834, 64
      %v8447 = vpop.permute.xlu0 %8446
      %8448 = vrot.lane.b32.xlu0 %v6970, 64
      %v8449 = vpop.permute.xlu0 %8448
      %8450 = vrot.lane.b32.xlu0 %v7106, 64
      %v8451 = vpop.permute.xlu0 %8450
      %8452 = vrot.lane.b32.xlu0 %v7242, 64
      %v8453 = vpop.permute.xlu0 %8452
      %8470 = vrot.lane.b32.xlu0 %v6291, 80
      %v8471 = vpop.permute.xlu0 %8470
      %8472 = vrot.lane.b32.xlu0 %v6427, 80
      %v8473 = vpop.permute.xlu0 %8472
      %8474 = vrot.lane.b32.xlu0 %v6563, 80
      %v8475 = vpop.permute.xlu0 %8474
      %8476 = vrot.lane.b32.xlu0 %v6699, 80
      %v8477 = vpop.permute.xlu0 %8476
      %8478 = vrot.lane.b32.xlu0 %v6835, 80
      %v8479 = vpop.permute.xlu0 %8478
      %8480 = vrot.lane.b32.xlu0 %v6971, 80
      %v8481 = vpop.permute.xlu0 %8480
      %8482 = vrot.lane.b32.xlu0 %v7107, 80
      %v8483 = vpop.permute.xlu0 %8482
      %8484 = vrot.lane.b32.xlu0 %v7243, 80
      %v8485 = vpop.permute.xlu0 %8484
      %8502 = vrot.lane.b32.xlu0 %v6292, 96
      %v8503 = vpop.permute.xlu0 %8502
      %8504 = vrot.lane.b32.xlu0 %v6428, 96
      %v8505 = vpop.permute.xlu0 %8504
      %8506 = vrot.lane.b32.xlu0 %v6564, 96
      %v8507 = vpop.permute.xlu0 %8506
      %8508 = vrot.lane.b32.xlu0 %v6700, 96
      %v8509 = vpop.permute.xlu0 %8508
      %8510 = vrot.lane.b32.xlu0 %v6836, 96
      %v8511 = vpop.permute.xlu0 %8510
      %8512 = vrot.lane.b32.xlu0 %v6972, 96
      %v8513 = vpop.permute.xlu0 %8512
      %8514 = vrot.lane.b32.xlu0 %v7108, 96
      %v8515 = vpop.permute.xlu0 %8514
      %8516 = vrot.lane.b32.xlu0 %v7244, 96
      %v8517 = vpop.permute.xlu0 %8516
      %8534 = vrot.lane.b32.xlu0 %v6293, 112
      %v8535 = vpop.permute.xlu0 %8534
      %8536 = vrot.lane.b32.xlu0 %v6429, 112
      %v8537 = vpop.permute.xlu0 %8536
      %8538 = vrot.lane.b32.xlu0 %v6565, 112
      %v8539 = vpop.permute.xlu0 %8538
      %8540 = vrot.lane.b32.xlu0 %v6701, 112
      %v8541 = vpop.permute.xlu0 %8540
      %8542 = vrot.lane.b32.xlu0 %v6837, 112
      %v8543 = vpop.permute.xlu0 %8542
      %8544 = vrot.lane.b32.xlu0 %v6973, 112
      %v8545 = vpop.permute.xlu0 %8544
      %8546 = vrot.lane.b32.xlu0 %v7109, 112
      %v8547 = vpop.permute.xlu0 %8546
      %8548 = vrot.lane.b32.xlu0 %v7245, 112
      %v8549 = vpop.permute.xlu0 %8548
      %8566 = vrot.lane.b32.xlu0 %v7375, 16
      %v8567 = vpop.permute.xlu0 %8566
      %8568 = vrot.lane.b32.xlu0 %v7511, 16
      %v8569 = vpop.permute.xlu0 %8568
      %8570 = vrot.lane.b32.xlu0 %v7647, 16
      %v8571 = vpop.permute.xlu0 %8570
      %8572 = vrot.lane.b32.xlu0 %v7783, 16
      %v8573 = vpop.permute.xlu0 %8572
      %8574 = vrot.lane.b32.xlu0 %v7919, 16
      %v8575 = vpop.permute.xlu0 %8574
      %8576 = vrot.lane.b32.xlu0 %v8055, 16
      %v8577 = vpop.permute.xlu0 %8576
      %8578 = vrot.lane.b32.xlu0 %v8191, 16
      %v8579 = vpop.permute.xlu0 %8578
      %8580 = vrot.lane.b32.xlu0 %v8327, 16
      %v8581 = vpop.permute.xlu0 %8580
      %8598 = vrot.lane.b32.xlu0 %v7376, 32
      %v8599 = vpop.permute.xlu0 %8598
      %8600 = vrot.lane.b32.xlu0 %v7512, 32
      %v8601 = vpop.permute.xlu0 %8600
      %8602 = vrot.lane.b32.xlu0 %v7648, 32
      %v8603 = vpop.permute.xlu0 %8602
      %8604 = vrot.lane.b32.xlu0 %v7784, 32
      %v8605 = vpop.permute.xlu0 %8604
      %8606 = vrot.lane.b32.xlu0 %v7920, 32
      %v8607 = vpop.permute.xlu0 %8606
      %8608 = vrot.lane.b32.xlu0 %v8056, 32
      %v8609 = vpop.permute.xlu0 %8608
      %8610 = vrot.lane.b32.xlu0 %v8192, 32
      %v8611 = vpop.permute.xlu0 %8610
      %8612 = vrot.lane.b32.xlu0 %v8328, 32
      %v8613 = vpop.permute.xlu0 %8612
      %8630 = vrot.lane.b32.xlu0 %v7377, 48
      %v8631 = vpop.permute.xlu0 %8630
      %8632 = vrot.lane.b32.xlu0 %v7513, 48
      %v8633 = vpop.permute.xlu0 %8632
      %8634 = vrot.lane.b32.xlu0 %v7649, 48
      %v8635 = vpop.permute.xlu0 %8634
      %8636 = vrot.lane.b32.xlu0 %v7785, 48
      %v8637 = vpop.permute.xlu0 %8636
      %8638 = vrot.lane.b32.xlu0 %v7921, 48
      %v8639 = vpop.permute.xlu0 %8638
      %8640 = vrot.lane.b32.xlu0 %v8057, 48
      %v8641 = vpop.permute.xlu0 %8640
      %8642 = vrot.lane.b32.xlu0 %v8193, 48
      %v8643 = vpop.permute.xlu0 %8642
      %8644 = vrot.lane.b32.xlu0 %v8329, 48
      %v8645 = vpop.permute.xlu0 %8644
      %8662 = vrot.lane.b32.xlu0 %v7378, 64
      %v8663 = vpop.permute.xlu0 %8662
      %8664 = vrot.lane.b32.xlu0 %v7514, 64
      %v8665 = vpop.permute.xlu0 %8664
      %8666 = vrot.lane.b32.xlu0 %v7650, 64
      %v8667 = vpop.permute.xlu0 %8666
      %8668 = vrot.lane.b32.xlu0 %v7786, 64
      %v8669 = vpop.permute.xlu0 %8668
      %8670 = vrot.lane.b32.xlu0 %v7922, 64
      %v8671 = vpop.permute.xlu0 %8670
      %8672 = vrot.lane.b32.xlu0 %v8058, 64
      %v8673 = vpop.permute.xlu0 %8672
      %8674 = vrot.lane.b32.xlu0 %v8194, 64
      %v8675 = vpop.permute.xlu0 %8674
      %8676 = vrot.lane.b32.xlu0 %v8330, 64
      %v8677 = vpop.permute.xlu0 %8676
      %8694 = vrot.lane.b32.xlu0 %v7379, 80
      %v8695 = vpop.permute.xlu0 %8694
      %8696 = vrot.lane.b32.xlu0 %v7515, 80
      %v8697 = vpop.permute.xlu0 %8696
      %8698 = vrot.lane.b32.xlu0 %v7651, 80
      %v8699 = vpop.permute.xlu0 %8698
      %8700 = vrot.lane.b32.xlu0 %v7787, 80
      %v8701 = vpop.permute.xlu0 %8700
      %8702 = vrot.lane.b32.xlu0 %v7923, 80
      %v8703 = vpop.permute.xlu0 %8702
      %8704 = vrot.lane.b32.xlu0 %v8059, 80
      %v8705 = vpop.permute.xlu0 %8704
      %8706 = vrot.lane.b32.xlu0 %v8195, 80
      %v8707 = vpop.permute.xlu0 %8706
      %8708 = vrot.lane.b32.xlu0 %v8331, 80
      %v8709 = vpop.permute.xlu0 %8708
      %8726 = vrot.lane.b32.xlu0 %v7380, 96
      %v8727 = vpop.permute.xlu0 %8726
      %8728 = vrot.lane.b32.xlu0 %v7516, 96
      %v8729 = vpop.permute.xlu0 %8728
      %8730 = vrot.lane.b32.xlu0 %v7652, 96
      %v8731 = vpop.permute.xlu0 %8730
      %8732 = vrot.lane.b32.xlu0 %v7788, 96
      %v8733 = vpop.permute.xlu0 %8732
      %8734 = vrot.lane.b32.xlu0 %v7924, 96
      %v8735 = vpop.permute.xlu0 %8734
      %8736 = vrot.lane.b32.xlu0 %v8060, 96
      %v8737 = vpop.permute.xlu0 %8736
      %8738 = vrot.lane.b32.xlu0 %v8196, 96
      %v8739 = vpop.permute.xlu0 %8738
      %8740 = vrot.lane.b32.xlu0 %v8332, 96
      %v8741 = vpop.permute.xlu0 %8740
      %8758 = vrot.lane.b32.xlu0 %v7381, 112
      %v8759 = vpop.permute.xlu0 %8758
      %8760 = vrot.lane.b32.xlu0 %v7517, 112
      %v8761 = vpop.permute.xlu0 %8760
      %8762 = vrot.lane.b32.xlu0 %v7653, 112
      %v8763 = vpop.permute.xlu0 %8762
      %8764 = vrot.lane.b32.xlu0 %v7789, 112
      %v8765 = vpop.permute.xlu0 %8764
      %8766 = vrot.lane.b32.xlu0 %v7925, 112
      %v8767 = vpop.permute.xlu0 %8766
      %8768 = vrot.lane.b32.xlu0 %v8061, 112
      %v8769 = vpop.permute.xlu0 %8768
      %8770 = vrot.lane.b32.xlu0 %v8197, 112
      %v8771 = vpop.permute.xlu0 %8770
      %8772 = vrot.lane.b32.xlu0 %v8333, 112
      %v8773 = vpop.permute.xlu0 %8772
      %v8782 = vsel %vm606, %v6286, %v8343
      %v8783 = vsel %vm606, %v6422, %v8345
      %v8784 = vsel %vm606, %v6558, %v8347
      %v8785 = vsel %vm606, %v6694, %v8349
      %v8786 = vsel %vm606, %v6830, %v8351
      %v8787 = vsel %vm606, %v6966, %v8353
      %v8788 = vsel %vm606, %v7102, %v8355
      %v8789 = vsel %vm606, %v7238, %v8357
      %v8790 = vsel %vm624, %v8782, %v8375
      %v8791 = vsel %vm624, %v8783, %v8377
      %v8792 = vsel %vm624, %v8784, %v8379
      %v8793 = vsel %vm624, %v8785, %v8381
      %v8794 = vsel %vm624, %v8786, %v8383
      %v8795 = vsel %vm624, %v8787, %v8385
      %v8796 = vsel %vm624, %v8788, %v8387
      %v8797 = vsel %vm624, %v8789, %v8389
      %v8798 = vsel %vm642, %v8790, %v8407
      %v8799 = vsel %vm642, %v8791, %v8409
      %v8800 = vsel %vm642, %v8792, %v8411
      %v8801 = vsel %vm642, %v8793, %v8413
      %v8802 = vsel %vm642, %v8794, %v8415
      %v8803 = vsel %vm642, %v8795, %v8417
      %v8804 = vsel %vm642, %v8796, %v8419
      %v8805 = vsel %vm642, %v8797, %v8421
      %v8806 = vsel %vm660, %v8798, %v8439
      %v8807 = vsel %vm660, %v8799, %v8441
      %v8808 = vsel %vm660, %v8800, %v8443
      %v8809 = vsel %vm660, %v8801, %v8445
      %v8810 = vsel %vm660, %v8802, %v8447
      %v8811 = vsel %vm660, %v8803, %v8449
      %v8812 = vsel %vm660, %v8804, %v8451
      %v8813 = vsel %vm660, %v8805, %v8453
      %v8814 = vsel %vm5056, %v8806, %v8471
      %v8815 = vsel %vm5056, %v8807, %v8473
      %v8816 = vsel %vm5056, %v8808, %v8475
      %v8817 = vsel %vm5056, %v8809, %v8477
      %v8818 = vsel %vm5056, %v8810, %v8479
      %v8819 = vsel %vm5056, %v8811, %v8481
      %v8820 = vsel %vm5056, %v8812, %v8483
      %v8821 = vsel %vm5056, %v8813, %v8485
      %v8822 = vsel %vm5065, %v8814, %v8503
      %v8823 = vsel %vm5065, %v8815, %v8505
      %v8824 = vsel %vm5065, %v8816, %v8507
      %v8825 = vsel %vm5065, %v8817, %v8509
      %v8826 = vsel %vm5065, %v8818, %v8511
      %v8827 = vsel %vm5065, %v8819, %v8513
      %v8828 = vsel %vm5065, %v8820, %v8515
      %v8829 = vsel %vm5065, %v8821, %v8517
      %v8830 = vsel %vm5074, %v8822, %v8535
      %v8831 = vsel %vm5074, %v8823, %v8537
      %v8832 = vsel %vm5074, %v8824, %v8539
      %v8833 = vsel %vm5074, %v8825, %v8541
      %v8834 = vsel %vm5074, %v8826, %v8543
      %v8835 = vsel %vm5074, %v8827, %v8545
      %v8836 = vsel %vm5074, %v8828, %v8547
      %v8837 = vsel %vm5074, %v8829, %v8549
      %v8838 = vsel %vm606, %v7374, %v8567
      %v8839 = vsel %vm606, %v7510, %v8569
      %v8840 = vsel %vm606, %v7646, %v8571
      %v8841 = vsel %vm606, %v7782, %v8573
      %v8842 = vsel %vm606, %v7918, %v8575
      %v8843 = vsel %vm606, %v8054, %v8577
      %v8844 = vsel %vm606, %v8190, %v8579
      %v8845 = vsel %vm606, %v8326, %v8581
      %v8846 = vsel %vm624, %v8838, %v8599
      %v8847 = vsel %vm624, %v8839, %v8601
      %v8848 = vsel %vm624, %v8840, %v8603
      %v8849 = vsel %vm624, %v8841, %v8605
      %v8850 = vsel %vm624, %v8842, %v8607
      %v8851 = vsel %vm624, %v8843, %v8609
      %v8852 = vsel %vm624, %v8844, %v8611
      %v8853 = vsel %vm624, %v8845, %v8613
      %v8854 = vsel %vm642, %v8846, %v8631
      %v8855 = vsel %vm642, %v8847, %v8633
      %v8856 = vsel %vm642, %v8848, %v8635
      %v8857 = vsel %vm642, %v8849, %v8637
      %v8858 = vsel %vm642, %v8850, %v8639
      %v8859 = vsel %vm642, %v8851, %v8641
      %v8860 = vsel %vm642, %v8852, %v8643
      %v8861 = vsel %vm642, %v8853, %v8645
      %v8862 = vsel %vm660, %v8854, %v8663
      %v8863 = vsel %vm660, %v8855, %v8665
      %v8864 = vsel %vm660, %v8856, %v8667
      %v8865 = vsel %vm660, %v8857, %v8669
      %v8866 = vsel %vm660, %v8858, %v8671
      %v8867 = vsel %vm660, %v8859, %v8673
      %v8868 = vsel %vm660, %v8860, %v8675
      %v8869 = vsel %vm660, %v8861, %v8677
      %v8870 = vsel %vm5056, %v8862, %v8695
      %v8871 = vsel %vm5056, %v8863, %v8697
      %v8872 = vsel %vm5056, %v8864, %v8699
      %v8873 = vsel %vm5056, %v8865, %v8701
      %v8874 = vsel %vm5056, %v8866, %v8703
      %v8875 = vsel %vm5056, %v8867, %v8705
      %v8876 = vsel %vm5056, %v8868, %v8707
      %v8877 = vsel %vm5056, %v8869, %v8709
      %v8878 = vsel %vm5065, %v8870, %v8727
      %v8879 = vsel %vm5065, %v8871, %v8729
      %v8880 = vsel %vm5065, %v8872, %v8731
      %v8881 = vsel %vm5065, %v8873, %v8733
      %v8882 = vsel %vm5065, %v8874, %v8735
      %v8883 = vsel %vm5065, %v8875, %v8737
      %v8884 = vsel %vm5065, %v8876, %v8739
      %v8885 = vsel %vm5065, %v8877, %v8741
      %v8886 = vsel %vm5074, %v8878, %v8759
      %v8887 = vsel %vm5074, %v8879, %v8761
      %v8888 = vsel %vm5074, %v8880, %v8763
      %v8889 = vsel %vm5074, %v8881, %v8765
      %v8890 = vsel %vm5074, %v8882, %v8767
      %v8891 = vsel %vm5074, %v8883, %v8769
      %v8892 = vsel %vm5074, %v8884, %v8771
      %v8893 = vsel %vm5074, %v8885, %v8773
      %8894 = vmatprep.subr.mxu0 0.0
      %8895 = vmatpush1.msra.mxu0 %v816
      %8896 = vmatprep.subr.mxu0 0.0
      %8897 = vmatpush1.msra.mxu0 %v817
      %8898 = vmatprep.subr.mxu0 0.0
      %8899 = vmatpush1.msra.mxu0 %v818
      %8900 = vmatprep.subr.mxu0 0.0
      %8901 = vmatpush1.msra.mxu0 %v819
      %8902 = vmatprep.subr.mxu0 0.0
      %8903 = vmatpush1.msra.mxu0 %v820
      %8904 = vmatprep.subr.mxu0 0.0
      %8905 = vmatpush1.msra.mxu0 %v821
      %8906 = vmatprep.subr.mxu0 0.0
      %8907 = vmatpush1.msra.mxu0 %v822
      %8908 = vmatprep.subr.mxu0 0.0
      %8909 = vmatpush1.msra.mxu0 %v823
      %8910 = vmatprep.subr.mxu0 0.0
      %8911 = vmatpush1.msra.mxu0 %v824
      %8912 = vmatprep.subr.mxu0 0.0
      %8913 = vmatpush1.msra.mxu0 %v825
      %8914 = vmatprep.subr.mxu0 0.0
      %8915 = vmatpush1.msra.mxu0 %v826
      %8916 = vmatprep.subr.mxu0 0.0
      %8917 = vmatpush1.msra.mxu0 %v827
      %8918 = vmatprep.subr.mxu0 0.0
      %8919 = vmatpush1.msra.mxu0 %v828
      %8920 = vmatprep.subr.mxu0 0.0
      %8921 = vmatpush1.msra.mxu0 %v829
      %8922 = vmatprep.subr.mxu0 0.0
      %8923 = vmatpush1.msra.mxu0 %v830
      %8924 = vmatprep.subr.mxu0 0.0
      %8925 = vmatpush1.msra.mxu0 %v831
      %8926 = vmatprep.subr.mxu0 0.0
      %8927 = vmatpush1.msra.mxu0 %v832
      %8928 = vmatprep.subr.mxu0 0.0
      %8929 = vmatpush1.msra.mxu0 %v833
      %8930 = vmatprep.subr.mxu0 0.0
      %8931 = vmatpush1.msra.mxu0 %v834
      %8932 = vmatprep.subr.mxu0 0.0
      %8933 = vmatpush1.msra.mxu0 %v835
      %8934 = vmatprep.subr.mxu0 0.0
      %8935 = vmatpush1.msra.mxu0 %v836
      %8936 = vmatprep.subr.mxu0 0.0
      %8937 = vmatpush1.msra.mxu0 %v837
      %8938 = vmatprep.subr.mxu0 0.0
      %8939 = vmatpush1.msra.mxu0 %v838
      %8940 = vmatprep.subr.mxu0 0.0
      %8941 = vmatpush1.msra.mxu0 %v839
      %8942 = vmatprep.subr.mxu0 0.0
      %8943 = vmatpush1.msra.mxu0 %v840
      %8944 = vmatprep.subr.mxu0 0.0
      %8945 = vmatpush1.msra.mxu0 %v841
      %8946 = vmatprep.subr.mxu0 0.0
      %8947 = vmatpush1.msra.mxu0 %v842
      %8948 = vmatprep.subr.mxu0 0.0
      %8949 = vmatpush1.msra.mxu0 %v843
      %8950 = vmatprep.subr.mxu0 0.0
      %8951 = vmatpush1.msra.mxu0 %v844
      %8952 = vmatprep.subr.mxu0 0.0
      %8953 = vmatpush1.msra.mxu0 %v845
      %8954 = vmatprep.subr.mxu0 0.0
      %8955 = vmatpush1.msra.mxu0 %v846
      %8956 = vmatprep.subr.mxu0 0.0
      %8957 = vmatpush1.msra.mxu0 %v847
      %8958 = vmatprep.mubr.f32.mxu0 %v8886
      %8959 = vmatmul.mubr.f32.gmra.mrb[0].mxu0 %v8830
      %v8960 = vpop.f32.mrb[0].mxu0
      %v8961 = vadd.f32 0.0, %v8960
      %v8962 = vpop.f32.mrb[0].mxu0
      %8963 = vmatprep.mubr.f32.mxu0 %v8887
      %8964 = vmatmul.mubr.f32.gmra.mrb[0].mxu0 %v8831
      %v8965 = vpop.f32.mrb[0].mxu0
      %v8966 = vadd.f32 0.0, %v8965
      %v8967 = vpop.f32.mrb[0].mxu0
      %8968 = vmatprep.mubr.f32.mxu0 %v8888
      %8969 = vmatmul.mubr.f32.gmra.mrb[0].mxu0 %v8832
      %v8970 = vpop.f32.mrb[0].mxu0
      %v8971 = vadd.f32 0.0, %v8970
      %v8972 = vpop.f32.mrb[0].mxu0
      %8973 = vmatprep.mubr.f32.mxu0 %v8889
      %8974 = vmatmul.mubr.f32.gmra.mrb[0].mxu0 %v8833
      %v8975 = vpop.f32.mrb[0].mxu0
      %v8976 = vadd.f32 0.0, %v8975
      %v8977 = vpop.f32.mrb[0].mxu0
      %8978 = vmatprep.mubr.f32.mxu0 %v8890
      %8979 = vmatmul.mubr.f32.gmra.mrb[0].mxu0 %v8834
      %v8980 = vpop.f32.mrb[0].mxu0
      %v8981 = vadd.f32 0.0, %v8980
      %v8982 = vpop.f32.mrb[0].mxu0
      %8983 = vmatprep.mubr.f32.mxu0 %v8891
      %8984 = vmatmul.mubr.f32.gmra.mrb[0].mxu0 %v8835
      %v8985 = vpop.f32.mrb[0].mxu0
      %v8986 = vadd.f32 0.0, %v8985
      %v8987 = vpop.f32.mrb[0].mxu0
      %8988 = vmatprep.mubr.f32.mxu0 %v8892
      %8989 = vmatmul.mubr.f32.gmra.mrb[0].mxu0 %v8836
      %v8990 = vpop.f32.mrb[0].mxu0
      %v8991 = vadd.f32 0.0, %v8990
      %v8992 = vpop.f32.mrb[0].mxu0
      %8993 = vmatprep.mubr.f32.mxu0 %v8893
      %8994 = vmatmul.mubr.f32.gmra.mrb[0].mxu0 %v8837
      %v8995 = vpop.f32.mrb[0].mxu0
      %v8996 = vadd.f32 0.0, %v8995
      %v8997 = vpop.f32.mrb[0].mxu0
      %8998 = vdwg.mxu0
      %8999 = vrot.lane.b32.xlu0 %v770, 112
      %v9000 = vpop.permute.xlu0 %8999
      %9001 = vrot.lane.b32.xlu0 %v775, 112
      %v9002 = vpop.permute.xlu0 %9001
      %9003 = vrot.lane.b32.xlu0 %v780, 112
      %v9004 = vpop.permute.xlu0 %9003
      %9005 = vrot.lane.b32.xlu0 %v785, 112
      %v9006 = vpop.permute.xlu0 %9005
      %9007 = vrot.lane.b32.xlu0 %v790, 112
      %v9008 = vpop.permute.xlu0 %9007
      %9009 = vrot.lane.b32.xlu0 %v795, 112
      %v9010 = vpop.permute.xlu0 %9009
      %9011 = vrot.lane.b32.xlu0 %v800, 112
      %v9012 = vpop.permute.xlu0 %9011
      %9013 = vrot.lane.b32.xlu0 %v805, 112
      %v9014 = vpop.permute.xlu0 %9013
      %9015 = vrot.lane.b32.xlu0 %v770, 80
      %v9016 = vpop.permute.xlu0 %9015
      %9017 = vrot.lane.b32.xlu0 %v775, 80
      %v9018 = vpop.permute.xlu0 %9017
      %9019 = vrot.lane.b32.xlu0 %v780, 80
      %v9020 = vpop.permute.xlu0 %9019
      %9021 = vrot.lane.b32.xlu0 %v785, 80
      %v9022 = vpop.permute.xlu0 %9021
      %9023 = vrot.lane.b32.xlu0 %v790, 80
      %v9024 = vpop.permute.xlu0 %9023
      %9025 = vrot.lane.b32.xlu0 %v795, 80
      %v9026 = vpop.permute.xlu0 %9025
      %9027 = vrot.lane.b32.xlu0 %v800, 80
      %v9028 = vpop.permute.xlu0 %9027
      %9029 = vrot.lane.b32.xlu0 %v805, 80
      %v9030 = vpop.permute.xlu0 %9029
      %v9031 = vsel %vm606, %v9000, 0
      %v9033 = vsel %vm606, %v9002, 0
      %v9035 = vsel %vm606, %v9004, 0
      %v9037 = vsel %vm606, %v9006, 0
      %v9039 = vsel %vm606, %v9008, 0
      %v9041 = vsel %vm606, %v9010, 0
      %v9043 = vsel %vm606, %v9012, 0
      %v9045 = vsel %vm606, %v9014, 0
      %v9047 = vsel %vm606, %v9016, 0
      %v9049 = vsel %vm606, %v9018, 0
      %v9051 = vsel %vm606, %v9020, 0
      %v9053 = vsel %vm606, %v9022, 0
      %v9055 = vsel %vm606, %v9024, 0
      %v9057 = vsel %vm606, %v9026, 0
      %v9059 = vsel %vm606, %v9028, 0
      %v9061 = vsel %vm606, %v9030, 0
      %9063 = vmatprep.subr.mxu0 0.0
      %9064 = vmatpush1.xpose.msra.mxu0 %v9047
      %9065 = vmatprep.subr.mxu0 0.0
      %9066 = vmatpush1.xpose.msra.mxu0 %v9049
      %9067 = vmatprep.subr.mxu0 0.0
      %9068 = vmatpush1.xpose.msra.mxu0 %v9051
      %9069 = vmatprep.subr.mxu0 0.0
      %9070 = vmatpush1.xpose.msra.mxu0 %v9053
      %9071 = vmatprep.subr.mxu0 0.0
      %9072 = vmatpush1.xpose.msra.mxu0 %v9055
      %9073 = vmatprep.subr.mxu0 0.0
      %9074 = vmatpush1.xpose.msra.mxu0 %v9057
      %9075 = vmatprep.subr.mxu0 0.0
      %9076 = vmatpush1.xpose.msra.mxu0 %v9059
      %9077 = vmatprep.subr.mxu0 0.0
      %9078 = vmatpush1.xpose.msra.mxu0 %v9061
      %9079 = vmatprep.subr.mxu0 0.0
      %9080 = vmatpush1.xpose.msra.mxu0 0.0
      %9081 = vmatprep.subr.mxu0 0.0
      %9082 = vmatpush1.xpose.msra.mxu0 0.0
      %9083 = vmatprep.subr.mxu0 0.0
      %9084 = vmatpush1.xpose.msra.mxu0 0.0
      %9085 = vmatprep.subr.mxu0 0.0
      %9086 = vmatpush1.xpose.msra.mxu0 0.0
      %9087 = vmatprep.subr.mxu0 0.0
      %9088 = vmatpush1.xpose.msra.mxu0 0.0
      %9089 = vmatprep.subr.mxu0 0.0
      %9090 = vmatpush1.xpose.msra.mxu0 0.0
      %9091 = vmatprep.subr.mxu0 0.0
      %9092 = vmatpush1.xpose.msra.mxu0 0.0
      %9093 = vmatprep.subr.mxu0 0.0
      %9094 = vmatpush1.xpose.msra.mxu0 0.0
      %9095 = vmatprep.subr.mxu0 0.0
      %9096 = vmatpush1.xpose.msra.mxu0 0.0
      %9097 = vmatprep.subr.mxu0 0.0
      %9098 = vmatpush1.xpose.msra.mxu0 0.0
      %9099 = vmatprep.subr.mxu0 0.0
      %9100 = vmatpush1.xpose.msra.mxu0 0.0
      %9101 = vmatprep.subr.mxu0 0.0
      %9102 = vmatpush1.xpose.msra.mxu0 0.0
      %9103 = vmatprep.subr.mxu0 0.0
      %9104 = vmatpush1.xpose.msra.mxu0 0.0
      %9105 = vmatprep.subr.mxu0 0.0
      %9106 = vmatpush1.xpose.msra.mxu0 0.0
      %9107 = vmatprep.subr.mxu0 0.0
      %9108 = vmatpush1.xpose.msra.mxu0 0.0
      %9109 = vmatprep.subr.mxu0 0.0
      %9110 = vmatpush1.xpose.msra.mxu0 0.0
      %9111 = vmatprep.subr.mxu0 0.0
      %9112 = vmatpush1.xpose.msra.mxu0 0.0
      %9113 = vmatprep.subr.mxu0 0.0
      %9114 = vmatpush1.xpose.msra.mxu0 0.0
      %9115 = vmatprep.subr.mxu0 0.0
      %9116 = vmatpush1.xpose.msra.mxu0 0.0
      %9117 = vmatprep.subr.mxu0 0.0
      %9118 = vmatpush1.xpose.msra.mxu0 0.0
      %9119 = vmatprep.subr.mxu0 0.0
      %9120 = vmatpush1.xpose.msra.mxu0 0.0
      %9121 = vmatprep.subr.mxu0 0.0
      %9122 = vmatpush1.xpose.msra.mxu0 0.0
      %9123 = vmatprep.subr.mxu0 0.0
      %9124 = vmatpush1.xpose.msra.mxu0 0.0
      %9125 = vmatprep.subr.mxu0 0.0
      %9126 = vmatpush1.xpose.msra.mxu0 0.0
      %9127 = vmatprep.mubr.f32.mxu0 0.0
      %9128 = vmatmul.mubr.f32.gmra.mrb[0].mxu0 %v9031
      %v9129 = vpop.f32.mrb[0].mxu0
      %v9130 = vadd.f32 %v8961, %v9129
      %v9131 = vpop.f32.mrb[0].mxu0
      %9132 = vmatprep.mubr.f32.mxu0 0.0
      %9133 = vmatmul.mubr.f32.gmra.mrb[0].mxu0 %v9033
      %v9134 = vpop.f32.mrb[0].mxu0
      %v9135 = vadd.f32 %v8966, %v9134
      %v9136 = vpop.f32.mrb[0].mxu0
      %9137 = vmatprep.mubr.f32.mxu0 0.0
      %9138 = vmatmul.mubr.f32.gmra.mrb[0].mxu0 %v9035
      %v9139 = vpop.f32.mrb[0].mxu0
      %v9140 = vadd.f32 %v8971, %v9139
      %v9141 = vpop.f32.mrb[0].mxu0
      %9142 = vmatprep.mubr.f32.mxu0 0.0
      %9143 = vmatmul.mubr.f32.gmra.mrb[0].mxu0 %v9037
      %v9144 = vpop.f32.mrb[0].mxu0
      %v9145 = vadd.f32 %v8976, %v9144
      %v9146 = vpop.f32.mrb[0].mxu0
      %9147 = vmatprep.mubr.f32.mxu0 0.0
      %9148 = vmatmul.mubr.f32.gmra.mrb[0].mxu0 %v9039
      %v9149 = vpop.f32.mrb[0].mxu0
      %v9150 = vadd.f32 %v8981, %v9149
      %v9151 = vpop.f32.mrb[0].mxu0
      %9152 = vmatprep.mubr.f32.mxu0 0.0
      %9153 = vmatmul.mubr.f32.gmra.mrb[0].mxu0 %v9041
      %v9154 = vpop.f32.mrb[0].mxu0
      %v9155 = vadd.f32 %v8986, %v9154
      %v9156 = vpop.f32.mrb[0].mxu0
      %9157 = vmatprep.mubr.f32.mxu0 0.0
      %9158 = vmatmul.mubr.f32.gmra.mrb[0].mxu0 %v9043
      %v9159 = vpop.f32.mrb[0].mxu0
      %v9160 = vadd.f32 %v8991, %v9159
      %v9161 = vpop.f32.mrb[0].mxu0
      %9162 = vmatprep.mubr.f32.mxu0 0.0
      %9163 = vmatmul.mubr.f32.gmra.mrb[0].mxu0 %v9045
      %v9164 = vpop.f32.mrb[0].mxu0
      %v9165 = vadd.f32 %v8996, %v9164
      %v9166 = vpop.f32.mrb[0].mxu0
      %9167 = vdwg.mxu0
      %v9168 = vmul.f32 %v9130, 0.25
      %v9169 = vmul.f32 %v9135, 0.25
      %v9170 = vmul.f32 %v9140, 0.25
      %v9171 = vmul.f32 %v9145, 0.25
      %v9172 = vmul.f32 %v9150, 0.25
      %v9173 = vmul.f32 %v9155, 0.25
      %v9174 = vmul.f32 %v9160, 0.25
      %v9175 = vmul.f32 %v9165, 0.25
      %v9176 = vsel %vm660, %v9168, -inf
      %9177 = vmax.xlane.f32.xlu0 %v9176
      %v9178 = vpop.xlane.xlu0 %9177
      %v9179 = vsel %vm660, %v9169, -inf
      %9180 = vmax.xlane.f32.xlu0 %v9179
      %v9181 = vpop.xlane.xlu0 %9180
      %v9182 = vsel %vm660, %v9170, -inf
      %9183 = vmax.xlane.f32.xlu0 %v9182
      %v9184 = vpop.xlane.xlu0 %9183
      %v9185 = vsel %vm660, %v9171, -inf
      %9186 = vmax.xlane.f32.xlu0 %v9185
      %v9187 = vpop.xlane.xlu0 %9186
      %v9188 = vsel %vm660, %v9172, -inf
      %9189 = vmax.xlane.f32.xlu0 %v9188
      %v9190 = vpop.xlane.xlu0 %9189
      %v9191 = vsel %vm660, %v9173, -inf
      %9192 = vmax.xlane.f32.xlu0 %v9191
      %v9193 = vpop.xlane.xlu0 %9192
      %v9194 = vsel %vm660, %v9174, -inf
      %9195 = vmax.xlane.f32.xlu0 %v9194
      %v9196 = vpop.xlane.xlu0 %9195
      %v9197 = vsel %vm660, %v9175, -inf
      %9198 = vmax.xlane.f32.xlu0 %v9197
      %v9199 = vpop.xlane.xlu0 %9198
      %v9200 = vsub.f32 %v9168, %v9178
      %v9201 = vsub.f32 %v9169, %v9181
      %v9202 = vsub.f32 %v9170, %v9184
      %v9203 = vsub.f32 %v9171, %v9187
      %v9204 = vsub.f32 %v9172, %v9190
      %v9205 = vsub.f32 %v9173, %v9193
      %v9206 = vsub.f32 %v9174, %v9196
      %v9207 = vsub.f32 %v9175, %v9199
      %v9208 = vmul.f32 %v9200, 1.442695
      %v9209 = vpow.pop %v9208
      %v9210 = vmul.f32 %v9201, 1.442695
      %v9211 = vpow.pop %v9210
      %v9212 = vmul.f32 %v9202, 1.442695
      %v9213 = vpow.pop %v9212
      %v9214 = vmul.f32 %v9203, 1.442695
      %v9215 = vpow.pop %v9214
      %v9216 = vmul.f32 %v9204, 1.442695
      %v9217 = vpow.pop %v9216
      %v9218 = vmul.f32 %v9205, 1.442695
      %v9219 = vpow.pop %v9218
      %v9220 = vmul.f32 %v9206, 1.442695
      %v9221 = vpow.pop %v9220
      %v9222 = vmul.f32 %v9207, 1.442695
      %v9223 = vpow.pop %v9222
      %v9224 = vsel %vm660, %v9209, 0.0
      %9225 = vadd.xlane.f32.xlu0 %v9224
      %v9226 = vpop.xlane.xlu0 %9225
      %v9227 = vsel %vm660, %v9211, 0.0
      %9228 = vadd.xlane.f32.xlu0 %v9227
      %v9229 = vpop.xlane.xlu0 %9228
      %v9230 = vsel %vm660, %v9213, 0.0
      %9231 = vadd.xlane.f32.xlu0 %v9230
      %v9232 = vpop.xlane.xlu0 %9231
      %v9233 = vsel %vm660, %v9215, 0.0
      %9234 = vadd.xlane.f32.xlu0 %v9233
      %v9235 = vpop.xlane.xlu0 %9234
      %v9236 = vsel %vm660, %v9217, 0.0
      %9237 = vadd.xlane.f32.xlu0 %v9236
      %v9238 = vpop.xlane.xlu0 %9237
      %v9239 = vsel %vm660, %v9219, 0.0
      %9240 = vadd.xlane.f32.xlu0 %v9239
      %v9241 = vpop.xlane.xlu0 %9240
      %v9242 = vsel %vm660, %v9221, 0.0
      %9243 = vadd.xlane.f32.xlu0 %v9242
      %v9244 = vpop.xlane.xlu0 %9243
      %v9245 = vsel %vm660, %v9223, 0.0
      %9246 = vadd.xlane.f32.xlu0 %v9245
      %v9247 = vpop.xlane.xlu0 %9246
      %v9248 = vrcp.pop %v9226
      %v9249 = vrcp.pop %v9229
      %v9250 = vrcp.pop %v9232
      %v9251 = vrcp.pop %v9235
      %v9252 = vrcp.pop %v9238
      %v9253 = vrcp.pop %v9241
      %v9254 = vrcp.pop %v9244
      %v9255 = vrcp.pop %v9247
      %v9256 = vmul.f32 %v9209, %v9248
      %v9257 = vmul.f32 %v9211, %v9249
      %v9258 = vmul.f32 %v9213, %v9250
      %v9259 = vmul.f32 %v9215, %v9251
      %v9260 = vmul.f32 %v9217, %v9252
      %v9261 = vmul.f32 %v9219, %v9253
      %v9262 = vmul.f32 %v9221, %v9254
      %v9263 = vmul.f32 %v9223, %v9255
      %9264 = vrot.lane.b32.xlu0 %v770, 48
      %v9265 = vpop.permute.xlu0 %9264
      %9266 = vrot.lane.b32.xlu0 %v775, 48
      %v9267 = vpop.permute.xlu0 %9266
      %9268 = vrot.lane.b32.xlu0 %v780, 48
      %v9269 = vpop.permute.xlu0 %9268
      %9270 = vrot.lane.b32.xlu0 %v785, 48
      %v9271 = vpop.permute.xlu0 %9270
      %9272 = vrot.lane.b32.xlu0 %v790, 48
      %v9273 = vpop.permute.xlu0 %9272
      %9274 = vrot.lane.b32.xlu0 %v795, 48
      %v9275 = vpop.permute.xlu0 %9274
      %9276 = vrot.lane.b32.xlu0 %v800, 48
      %v9277 = vpop.permute.xlu0 %9276
      %9278 = vrot.lane.b32.xlu0 %v805, 48
      %v9279 = vpop.permute.xlu0 %9278
      %v9289 = vsel %vm660, %v9256, 0
      %v9292 = vsel %vm660, %v9257, 0
      %v9295 = vsel %vm660, %v9258, 0
      %v9298 = vsel %vm660, %v9259, 0
      %v9301 = vsel %vm660, %v9260, 0
      %v9304 = vsel %vm660, %v9261, 0
      %v9307 = vsel %vm660, %v9262, 0
      %v9310 = vsel %vm660, %v9263, 0
      %9312 = vmatprep.subr.mxu0 0.0
      %9313 = vmatpush1.msra.mxu0 %v9265
      %9314 = vmatprep.subr.mxu0 0.0
      %9315 = vmatpush1.msra.mxu0 %v9267
      %9316 = vmatprep.subr.mxu0 0.0
      %9317 = vmatpush1.msra.mxu0 %v9269
      %9318 = vmatprep.subr.mxu0 0.0
      %9319 = vmatpush1.msra.mxu0 %v9271
      %9320 = vmatprep.subr.mxu0 0.0
      %9321 = vmatpush1.msra.mxu0 %v9273
      %9322 = vmatprep.subr.mxu0 0.0
      %9323 = vmatpush1.msra.mxu0 %v9275
      %9324 = vmatprep.subr.mxu0 0.0
      %9325 = vmatpush1.msra.mxu0 %v9277
      %9326 = vmatprep.subr.mxu0 0.0
      %9327 = vmatpush1.msra.mxu0 %v9279
      %9328 = vmatprep.subr.mxu0 0.0
      %9329 = vmatpush1.msra.mxu0 0.0
      %9330 = vmatprep.subr.mxu0 0.0
      %9331 = vmatpush1.msra.mxu0 0.0
      %9332 = vmatprep.subr.mxu0 0.0
      %9333 = vmatpush1.msra.mxu0 0.0
      %9334 = vmatprep.subr.mxu0 0.0
      %9335 = vmatpush1.msra.mxu0 0.0
      %9336 = vmatprep.subr.mxu0 0.0
      %9337 = vmatpush1.msra.mxu0 0.0
      %9338 = vmatprep.subr.mxu0 0.0
      %9339 = vmatpush1.msra.mxu0 0.0
      %9340 = vmatprep.subr.mxu0 0.0
      %9341 = vmatpush1.msra.mxu0 0.0
      %9342 = vmatprep.subr.mxu0 0.0
      %9343 = vmatpush1.msra.mxu0 0.0
      %9344 = vmatprep.subr.mxu0 0.0
      %9345 = vmatpush1.msra.mxu0 0.0
      %9346 = vmatprep.subr.mxu0 0.0
      %9347 = vmatpush1.msra.mxu0 0.0
      %9348 = vmatprep.subr.mxu0 0.0
      %9349 = vmatpush1.msra.mxu0 0.0
      %9350 = vmatprep.subr.mxu0 0.0
      %9351 = vmatpush1.msra.mxu0 0.0
      %9352 = vmatprep.subr.mxu0 0.0
      %9353 = vmatpush1.msra.mxu0 0.0
      %9354 = vmatprep.subr.mxu0 0.0
      %9355 = vmatpush1.msra.mxu0 0.0
      %9356 = vmatprep.subr.mxu0 0.0
      %9357 = vmatpush1.msra.mxu0 0.0
      %9358 = vmatprep.subr.mxu0 0.0
      %9359 = vmatpush1.msra.mxu0 0.0
      %9360 = vmatprep.subr.mxu0 0.0
      %9361 = vmatpush1.msra.mxu0 0.0
      %9362 = vmatprep.subr.mxu0 0.0
      %9363 = vmatpush1.msra.mxu0 0.0
      %9364 = vmatprep.subr.mxu0 0.0
      %9365 = vmatpush1.msra.mxu0 0.0
      %9366 = vmatprep.subr.mxu0 0.0
      %9367 = vmatpush1.msra.mxu0 0.0
      %9368 = vmatprep.subr.mxu0 0.0
      %9369 = vmatpush1.msra.mxu0 0.0
      %9370 = vmatprep.subr.mxu0 0.0
      %9371 = vmatpush1.msra.mxu0 0.0
      %9372 = vmatprep.subr.mxu0 0.0
      %9373 = vmatpush1.msra.mxu0 0.0
      %9374 = vmatprep.subr.mxu0 0.0
      %9375 = vmatpush1.msra.mxu0 0.0
      %9376 = vmatprep.mubr.f32.mxu0 0.0
      %9377 = vmatmul.mubr.f32.gmra.mrb[0].mxu0 %v9289
      %v9378 = vpop.f32.mrb[0].mxu0
      %v9379 = vadd.f32 0.0, %v9378
      %v9380 = vpop.f32.mrb[0].mxu0
      %9381 = vmatprep.mubr.f32.mxu0 0.0
      %9382 = vmatmul.mubr.f32.gmra.mrb[0].mxu0 %v9292
      %v9383 = vpop.f32.mrb[0].mxu0
      %v9384 = vadd.f32 0.0, %v9383
      %v9385 = vpop.f32.mrb[0].mxu0
      %9386 = vmatprep.mubr.f32.mxu0 0.0
      %9387 = vmatmul.mubr.f32.gmra.mrb[0].mxu0 %v9295
      %v9388 = vpop.f32.mrb[0].mxu0
      %v9389 = vadd.f32 0.0, %v9388
      %v9390 = vpop.f32.mrb[0].mxu0
      %9391 = vmatprep.mubr.f32.mxu0 0.0
      %9392 = vmatmul.mubr.f32.gmra.mrb[0].mxu0 %v9298
      %v9393 = vpop.f32.mrb[0].mxu0
      %v9394 = vadd.f32 0.0, %v9393
      %v9395 = vpop.f32.mrb[0].mxu0
      %9396 = vmatprep.mubr.f32.mxu0 0.0
      %9397 = vmatmul.mubr.f32.gmra.mrb[0].mxu0 %v9301
      %v9398 = vpop.f32.mrb[0].mxu0
      %v9399 = vadd.f32 0.0, %v9398
      %v9400 = vpop.f32.mrb[0].mxu0
      %9401 = vmatprep.mubr.f32.mxu0 0.0
      %9402 = vmatmul.mubr.f32.gmra.mrb[0].mxu0 %v9304
      %v9403 = vpop.f32.mrb[0].mxu0
      %v9404 = vadd.f32 0.0, %v9403
      %v9405 = vpop.f32.mrb[0].mxu0
      %9406 = vmatprep.mubr.f32.mxu0 0.0
      %9407 = vmatmul.mubr.f32.gmra.mrb[0].mxu0 %v9307
      %v9408 = vpop.f32.mrb[0].mxu0
      %v9409 = vadd.f32 0.0, %v9408
      %v9410 = vpop.f32.mrb[0].mxu0
      %9411 = vmatprep.mubr.f32.mxu0 0.0
      %9412 = vmatmul.mubr.f32.gmra.mrb[0].mxu0 %v9310
      %v9413 = vpop.f32.mrb[0].mxu0
      %v9414 = vadd.f32 0.0, %v9413
      %v9415 = vpop.f32.mrb[0].mxu0
      %9416 = vdwg.mxu0
      %9417 = vrot.lane.b32.xlu0 %v9256, 64
      %v9418 = vpop.permute.xlu0 %9417
      %9419 = vrot.lane.b32.xlu0 %v9257, 64
      %v9420 = vpop.permute.xlu0 %9419
      %9421 = vrot.lane.b32.xlu0 %v9258, 64
      %v9422 = vpop.permute.xlu0 %9421
      %9423 = vrot.lane.b32.xlu0 %v9259, 64
      %v9424 = vpop.permute.xlu0 %9423
      %9425 = vrot.lane.b32.xlu0 %v9260, 64
      %v9426 = vpop.permute.xlu0 %9425
      %9427 = vrot.lane.b32.xlu0 %v9261, 64
      %v9428 = vpop.permute.xlu0 %9427
      %9429 = vrot.lane.b32.xlu0 %v9262, 64
      %v9430 = vpop.permute.xlu0 %9429
      %9431 = vrot.lane.b32.xlu0 %v9263, 64
      %v9432 = vpop.permute.xlu0 %9431
      %v9441 = vsel %vm660, %v5485, %v9418
      %v9442 = vsel %vm660, %v5486, %v9420
      %v9443 = vsel %vm660, %v5487, %v9422
      %v9444 = vsel %vm660, %v5488, %v9424
      %v9445 = vsel %vm660, %v5489, %v9426
      %v9446 = vsel %vm660, %v5490, %v9428
      %v9447 = vsel %vm660, %v5491, %v9430
      %v9448 = vsel %vm660, %v5492, %v9432
      %9449 = vst [vmem:[%s264] sm:$0xff] %v9441
      %9450 = vst [vmem:[%s264 + $0x8] sm:$0xff] %v9442
      %9451 = vst [vmem:[%s264 + $0x10] sm:$0xff] %v9443
      %9452 = vst [vmem:[%s264 + $0x18] sm:$0xff] %v9444
      %9453 = vst [vmem:[%s264 + $0x20] sm:$0xff] %v9445
      %9454 = vst [vmem:[%s264 + $0x28] sm:$0xff] %v9446
      %9455 = vst [vmem:[%s264 + $0x30] sm:$0xff] %v9447
      %9456 = vst [vmem:[%s264 + $0x38] sm:$0xff] %v9448
      %9465 = vrot.lane.b32.xlu0 %v9379, 16
      %v9466 = vpop.permute.xlu0 %9465
      %9467 = vrot.lane.b32.xlu0 %v9384, 16
      %v9468 = vpop.permute.xlu0 %9467
      %9469 = vrot.lane.b32.xlu0 %v9389, 16
      %v9470 = vpop.permute.xlu0 %9469
      %9471 = vrot.lane.b32.xlu0 %v9394, 16
      %v9472 = vpop.permute.xlu0 %9471
      %9473 = vrot.lane.b32.xlu0 %v9399, 16
      %v9474 = vpop.permute.xlu0 %9473
      %9475 = vrot.lane.b32.xlu0 %v9404, 16
      %v9476 = vpop.permute.xlu0 %9475
      %9477 = vrot.lane.b32.xlu0 %v9409, 16
      %v9478 = vpop.permute.xlu0 %9477
      %9479 = vrot.lane.b32.xlu0 %v9414, 16
      %v9480 = vpop.permute.xlu0 %9479
      %v9489 = vsel %vm606, %v5608, %v9466
      %v9490 = vsel %vm606, %v5613, %v9468
      %v9491 = vsel %vm606, %v5618, %v9470
      %v9492 = vsel %vm606, %v5623, %v9472
      %v9493 = vsel %vm606, %v5628, %v9474
      %v9494 = vsel %vm606, %v5633, %v9476
      %v9495 = vsel %vm606, %v5638, %v9478
      %v9496 = vsel %vm606, %v5643, %v9480
      %9497 = vst.msk [vmem:[#allocation3] sm:$0xff] %vm624, 0.0
      %vm9498 = vcmask 254976
      %9499 = vst.msk [vmem:[#allocation3 + $0x8] sm:$0x3] %vm9498, 0.0
      %9500 = vst.msk [vmem:[#allocation3 + $0x10] sm:$0xff] %vm624, 0.0
      %9501 = vst.msk [vmem:[#allocation3 + $0x18] sm:$0x3] %vm9498, 0.0
      %9502 = vst.msk [vmem:[#allocation3 + $0x20] sm:$0xff] %vm624, 0.0
      %9503 = vst.msk [vmem:[#allocation3 + $0x28] sm:$0x3] %vm9498, 0.0
      %9504 = vst.msk [vmem:[#allocation3 + $0x30] sm:$0xff] %vm624, 0.0
      %9505 = vst.msk [vmem:[#allocation3 + $0x38] sm:$0x3] %vm9498, 0.0
      %9506 = vst.msk [vmem:[#allocation3 + $0x40] sm:$0xff] %vm624, 0.0
      %9507 = vst.msk [vmem:[#allocation3 + $0x48] sm:$0x3] %vm9498, 0.0
      %9508 = vst.msk [vmem:[#allocation3 + $0x50] sm:$0xff] %vm624, 0.0
      %9509 = vst.msk [vmem:[#allocation3 + $0x58] sm:$0x3] %vm9498, 0.0
      %9510 = vst.msk [vmem:[#allocation3 + $0x60] sm:$0xff] %vm624, 0.0
      %9511 = vst.msk [vmem:[#allocation3 + $0x68] sm:$0x3] %vm9498, 0.0
      %9512 = vst.msk [vmem:[#allocation3 + $0x70] sm:$0xff] %vm624, 0.0
      %9513 = vst.msk [vmem:[#allocation3 + $0x78] sm:$0x3] %vm9498, 0.0
      %9514 = vst.msk [vmem:[#allocation3 + $0x80] sm:$0xff] %vm624, 0.0
      %9515 = vst.msk [vmem:[#allocation3 + $0x88] sm:$0x3] %vm9498, 0.0
      %9516 = vst.msk [vmem:[#allocation3 + $0x90] sm:$0xff] %vm624, 0.0
      %9517 = vst.msk [vmem:[#allocation3 + $0x98] sm:$0x3] %vm9498, 0.0
      %s9518 = scalar_lea.vmem [#allocation3], 16
      %9519 = vst.msk [vmem:[%s9518 + $0x1] sm:$0xff] %vm624, %v9489
      %9520 = vst.msk [vmem:[%s9518 + $0x11] sm:$0xff] %vm624, %v9490
      %9521 = vst.msk [vmem:[%s9518 + $0x21] sm:$0xff] %vm624, %v9491
      %9522 = vst.msk [vmem:[%s9518 + $0x31] sm:$0xff] %vm624, %v9492
      %9523 = vst.msk [vmem:[%s9518 + $0x41] sm:$0xff] %vm624, %v9493
      %9524 = vst.msk [vmem:[%s9518 + $0x51] sm:$0xff] %vm624, %v9494
      %9525 = vst.msk [vmem:[%s9518 + $0x61] sm:$0xff] %vm624, %v9495
      %9526 = vst.msk [vmem:[%s9518 + $0x71] sm:$0xff] %vm624, %v9496
      %v9527 = vld [vmem:[#allocation3] sm:$0xff]
      %v9528 = vld [vmem:[#allocation3 + $0x8] sm:$0x3]
      %v9529 = vld [vmem:[#allocation3 + $0x10] sm:$0xff]
      %v9530 = vld [vmem:[#allocation3 + $0x18] sm:$0x3]
      %v9531 = vld [vmem:[#allocation3 + $0x20] sm:$0xff]
      %v9532 = vld [vmem:[#allocation3 + $0x28] sm:$0x3]
      %v9533 = vld [vmem:[#allocation3 + $0x30] sm:$0xff]
      %v9534 = vld [vmem:[#allocation3 + $0x38] sm:$0x3]
      %v9535 = vld [vmem:[#allocation3 + $0x40] sm:$0xff]
      %v9536 = vld [vmem:[#allocation3 + $0x48] sm:$0x3]
      %v9537 = vld [vmem:[#allocation3 + $0x50] sm:$0xff]
      %v9538 = vld [vmem:[#allocation3 + $0x58] sm:$0x3]
      %v9539 = vld [vmem:[#allocation3 + $0x60] sm:$0xff]
      %v9540 = vld [vmem:[#allocation3 + $0x68] sm:$0x3]
      %v9541 = vld [vmem:[#allocation3 + $0x70] sm:$0xff]
      %v9542 = vld [vmem:[#allocation3 + $0x78] sm:$0x3]
      %v9543 = vld [vmem:[#allocation3 + $0x80] sm:$0xff]
      %v9544 = vld [vmem:[#allocation3 + $0x88] sm:$0x3]
      %v9545 = vld [vmem:[#allocation3 + $0x90] sm:$0xff]
      %v9546 = vld [vmem:[#allocation3 + $0x98] sm:$0x3]
      %v9563 = vrot.slane %v9527, 1
      %v9564 = vrot.slane %v9528, 1
      %v9565 = vsel %vm340, %v9563, %v9564
      %v9566 = vrot.slane %v9529, 1
      %v9567 = vrot.slane %v9530, 1
      %v9568 = vsel %vm340, %v9566, %v9567
      %v9569 = vrot.slane %v9531, 1
      %v9570 = vrot.slane %v9532, 1
      %v9571 = vsel %vm340, %v9569, %v9570
      %v9572 = vrot.slane %v9533, 1
      %v9573 = vrot.slane %v9534, 1
      %v9574 = vsel %vm340, %v9572, %v9573
      %v9575 = vrot.slane %v9535, 1
      %v9576 = vrot.slane %v9536, 1
      %v9577 = vsel %vm340, %v9575, %v9576
      %v9578 = vrot.slane %v9537, 1
      %v9579 = vrot.slane %v9538, 1
      %v9580 = vsel %vm340, %v9578, %v9579
      %v9581 = vrot.slane %v9539, 1
      %v9582 = vrot.slane %v9540, 1
      %v9583 = vsel %vm340, %v9581, %v9582
      %v9584 = vrot.slane %v9541, 1
      %v9585 = vrot.slane %v9542, 1
      %v9586 = vsel %vm340, %v9584, %v9585
      %9587 = vrot.lane.b32.xlu0 %v9565, 32
      %v9588 = vpop.permute.xlu0 %9587
      %9589 = vrot.lane.b32.xlu0 %v9568, 32
      %v9590 = vpop.permute.xlu0 %9589
      %9591 = vrot.lane.b32.xlu0 %v9571, 32
      %v9592 = vpop.permute.xlu0 %9591
      %9593 = vrot.lane.b32.xlu0 %v9574, 32
      %v9594 = vpop.permute.xlu0 %9593
      %9595 = vrot.lane.b32.xlu0 %v9577, 32
      %v9596 = vpop.permute.xlu0 %9595
      %9597 = vrot.lane.b32.xlu0 %v9580, 32
      %v9598 = vpop.permute.xlu0 %9597
      %9599 = vrot.lane.b32.xlu0 %v9583, 32
      %v9600 = vpop.permute.xlu0 %9599
      %9601 = vrot.lane.b32.xlu0 %v9586, 32
      %v9602 = vpop.permute.xlu0 %9601
      %v9611 = vrot.slane %v9527, 2
      %v9612 = vrot.slane %v9528, 2
      %v9613 = vsel %vm389, %v9611, %v9612
      %v9614 = vrot.slane %v9529, 2
      %v9615 = vrot.slane %v9530, 2
      %v9616 = vsel %vm389, %v9614, %v9615
      %v9617 = vrot.slane %v9531, 2
      %v9618 = vrot.slane %v9532, 2
      %v9619 = vsel %vm389, %v9617, %v9618
      %v9620 = vrot.slane %v9533, 2
      %v9621 = vrot.slane %v9534, 2
      %v9622 = vsel %vm389, %v9620, %v9621
      %v9623 = vrot.slane %v9535, 2
      %v9624 = vrot.slane %v9536, 2
      %v9625 = vsel %vm389, %v9623, %v9624
      %v9626 = vrot.slane %v9537, 2
      %v9627 = vrot.slane %v9538, 2
      %v9628 = vsel %vm389, %v9626, %v9627
      %v9629 = vrot.slane %v9539, 2
      %v9630 = vrot.slane %v9540, 2
      %v9631 = vsel %vm389, %v9629, %v9630
      %v9632 = vrot.slane %v9541, 2
      %v9633 = vrot.slane %v9542, 2
      %v9634 = vsel %vm389, %v9632, %v9633
      %9635 = vrot.lane.b32.xlu0 %v9613, 64
      %v9636 = vpop.permute.xlu0 %9635
      %9637 = vrot.lane.b32.xlu0 %v9616, 64
      %v9638 = vpop.permute.xlu0 %9637
      %9639 = vrot.lane.b32.xlu0 %v9619, 64
      %v9640 = vpop.permute.xlu0 %9639
      %9641 = vrot.lane.b32.xlu0 %v9622, 64
      %v9642 = vpop.permute.xlu0 %9641
      %9643 = vrot.lane.b32.xlu0 %v9625, 64
      %v9644 = vpop.permute.xlu0 %9643
      %9645 = vrot.lane.b32.xlu0 %v9628, 64
      %v9646 = vpop.permute.xlu0 %9645
      %9647 = vrot.lane.b32.xlu0 %v9631, 64
      %v9648 = vpop.permute.xlu0 %9647
      %9649 = vrot.lane.b32.xlu0 %v9634, 64
      %v9650 = vpop.permute.xlu0 %9649
      %9660 = vrot.lane.b32.xlu0 %v9529, 96
      %v9661 = vpop.permute.xlu0 %9660
      %9662 = vrot.lane.b32.xlu0 %v9531, 96
      %v9663 = vpop.permute.xlu0 %9662
      %9664 = vrot.lane.b32.xlu0 %v9533, 96
      %v9665 = vpop.permute.xlu0 %9664
      %9666 = vrot.lane.b32.xlu0 %v9535, 96
      %v9667 = vpop.permute.xlu0 %9666
      %9668 = vrot.lane.b32.xlu0 %v9537, 96
      %v9669 = vpop.permute.xlu0 %9668
      %9670 = vrot.lane.b32.xlu0 %v9539, 96
      %v9671 = vpop.permute.xlu0 %9670
      %9672 = vrot.lane.b32.xlu0 %v9541, 96
      %v9673 = vpop.permute.xlu0 %9672
      %9674 = vrot.lane.b32.xlu0 %v9543, 96
      %v9675 = vpop.permute.xlu0 %9674
      %v9685 = vrot.slane %v9543, 1
      %v9686 = vrot.slane %v9544, 1
      %v9687 = vsel %vm340, %v9685, %v9686
      %v9696 = vrot.slane %v9543, 2
      %v9697 = vrot.slane %v9544, 2
      %v9698 = vsel %vm389, %v9696, %v9697
      %9699 = vrot.lane.b32.xlu0 %v9616, 32
      %v9700 = vpop.permute.xlu0 %9699
      %9701 = vrot.lane.b32.xlu0 %v9619, 32
      %v9702 = vpop.permute.xlu0 %9701
      %9703 = vrot.lane.b32.xlu0 %v9622, 32
      %v9704 = vpop.permute.xlu0 %9703
      %9705 = vrot.lane.b32.xlu0 %v9625, 32
      %v9706 = vpop.permute.xlu0 %9705
      %9707 = vrot.lane.b32.xlu0 %v9628, 32
      %v9708 = vpop.permute.xlu0 %9707
      %9709 = vrot.lane.b32.xlu0 %v9631, 32
      %v9710 = vpop.permute.xlu0 %9709
      %9711 = vrot.lane.b32.xlu0 %v9634, 32
      %v9712 = vpop.permute.xlu0 %9711
      %9713 = vrot.lane.b32.xlu0 %v9698, 32
      %v9714 = vpop.permute.xlu0 %9713
      %9724 = vrot.lane.b32.xlu0 %v9531, 64
      %v9725 = vpop.permute.xlu0 %9724
      %9726 = vrot.lane.b32.xlu0 %v9533, 64
      %v9727 = vpop.permute.xlu0 %9726
      %9728 = vrot.lane.b32.xlu0 %v9535, 64
      %v9729 = vpop.permute.xlu0 %9728
      %9730 = vrot.lane.b32.xlu0 %v9537, 64
      %v9731 = vpop.permute.xlu0 %9730
      %9732 = vrot.lane.b32.xlu0 %v9539, 64
      %v9733 = vpop.permute.xlu0 %9732
      %9734 = vrot.lane.b32.xlu0 %v9541, 64
      %v9735 = vpop.permute.xlu0 %9734
      %9736 = vrot.lane.b32.xlu0 %v9543, 64
      %v9737 = vpop.permute.xlu0 %9736
      %9738 = vrot.lane.b32.xlu0 %v9545, 64
      %v9739 = vpop.permute.xlu0 %9738
      %v9749 = vrot.slane %v9545, 1
      %v9750 = vrot.slane %v9546, 1
      %v9751 = vsel %vm340, %v9749, %v9750
      %9752 = vrot.lane.b32.xlu0 %v9571, 96
      %v9753 = vpop.permute.xlu0 %9752
      %9754 = vrot.lane.b32.xlu0 %v9574, 96
      %v9755 = vpop.permute.xlu0 %9754
      %9756 = vrot.lane.b32.xlu0 %v9577, 96
      %v9757 = vpop.permute.xlu0 %9756
      %9758 = vrot.lane.b32.xlu0 %v9580, 96
      %v9759 = vpop.permute.xlu0 %9758
      %9760 = vrot.lane.b32.xlu0 %v9583, 96
      %v9761 = vpop.permute.xlu0 %9760
      %9762 = vrot.lane.b32.xlu0 %v9586, 96
      %v9763 = vpop.permute.xlu0 %9762
      %9764 = vrot.lane.b32.xlu0 %v9687, 96
      %v9765 = vpop.permute.xlu0 %9764
      %9766 = vrot.lane.b32.xlu0 %v9751, 96
      %v9767 = vpop.permute.xlu0 %9766
      %v9776 = vrot.slane %v9545, 2
      %v9777 = vrot.slane %v9546, 2
      %v9778 = vsel %vm389, %v9776, %v9777
      %v9779 = vsel %vm624, %v9527, %v9588
      %v9780 = vsel %vm624, %v9529, %v9590
      %v9781 = vsel %vm624, %v9531, %v9592
      %v9782 = vsel %vm624, %v9533, %v9594
      %v9783 = vsel %vm624, %v9535, %v9596
      %v9784 = vsel %vm624, %v9537, %v9598
      %v9785 = vsel %vm624, %v9539, %v9600
      %v9786 = vsel %vm624, %v9541, %v9602
      %v9787 = vsel %vm660, %v9779, %v9636
      %v9788 = vsel %vm660, %v9780, %v9638
      %v9789 = vsel %vm660, %v9781, %v9640
      %v9790 = vsel %vm660, %v9782, %v9642
      %v9791 = vsel %vm660, %v9783, %v9644
      %v9792 = vsel %vm660, %v9784, %v9646
      %v9793 = vsel %vm660, %v9785, %v9648
      %v9794 = vsel %vm660, %v9786, %v9650
      %v9795 = vsel %vm5065, %v9787, %v9661
      %v9796 = vsel %vm5065, %v9788, %v9663
      %v9797 = vsel %vm5065, %v9789, %v9665
      %v9798 = vsel %vm5065, %v9790, %v9667
      %v9799 = vsel %vm5065, %v9791, %v9669
      %v9800 = vsel %vm5065, %v9792, %v9671
      %v9801 = vsel %vm5065, %v9793, %v9673
      %v9802 = vsel %vm5065, %v9794, %v9675
      %v9803 = vsel %vm624, %v9568, %v9700
      %v9804 = vsel %vm624, %v9571, %v9702
      %v9805 = vsel %vm624, %v9574, %v9704
      %v9806 = vsel %vm624, %v9577, %v9706
      %v9807 = vsel %vm624, %v9580, %v9708
      %v9808 = vsel %vm624, %v9583, %v9710
      %v9809 = vsel %vm624, %v9586, %v9712
      %v9810 = vsel %vm624, %v9687, %v9714
      %v9811 = vsel %vm660, %v9803, %v9725
      %v9812 = vsel %vm660, %v9804, %v9727
      %v9813 = vsel %vm660, %v9805, %v9729
      %v9814 = vsel %vm660, %v9806, %v9731
      %v9815 = vsel %vm660, %v9807, %v9733
      %v9816 = vsel %vm660, %v9808, %v9735
      %v9817 = vsel %vm660, %v9809, %v9737
      %v9818 = vsel %vm660, %v9810, %v9739
      %v9819 = vsel %vm5065, %v9811, %v9753
      %v9820 = vsel %vm5065, %v9812, %v9755
      %v9821 = vsel %vm5065, %v9813, %v9757
      %v9822 = vsel %vm5065, %v9814, %v9759
      %v9823 = vsel %vm5065, %v9815, %v9761
      %v9824 = vsel %vm5065, %v9816, %v9763
      %v9825 = vsel %vm5065, %v9817, %v9765
      %v9826 = vsel %vm5065, %v9818, %v9767
      %v9827 = vld [vmem:[%s2] sm:$0xff]
      %v9828 = vld [vmem:[%s2 + $0x8] sm:$0xff]
      %v9829 = vld [vmem:[%s2 + $0x10] sm:$0xff]
      %v9830 = vld [vmem:[%s2 + $0x18] sm:$0xff]
      %v9831 = vld [vmem:[%s2 + $0x20] sm:$0xff]
      %v9832 = vld [vmem:[%s2 + $0x28] sm:$0xff]
      %v9833 = vld [vmem:[%s2 + $0x30] sm:$0xff]
      %v9834 = vld [vmem:[%s2 + $0x38] sm:$0xff]
      %v9835 = vld [vmem:[%s2 + $0x40] sm:$0xff]
      %v9836 = vld [vmem:[%s2 + $0x48] sm:$0xff]
      %v9837 = vld [vmem:[%s2 + $0x50] sm:$0xff]
      %v9838 = vld [vmem:[%s2 + $0x58] sm:$0xff]
      %v9839 = vld [vmem:[%s2 + $0x60] sm:$0xff]
      %v9840 = vld [vmem:[%s2 + $0x68] sm:$0xff]
      %v9841 = vld [vmem:[%s2 + $0x70] sm:$0xff]
      %v9842 = vld [vmem:[%s2 + $0x78] sm:$0xff]
      %v9843 = vld [vmem:[%s2 + $0x80] sm:$0xff]
      %v9844 = vld [vmem:[%s2 + $0x88] sm:$0xff]
      %v9845 = vld [vmem:[%s2 + $0x90] sm:$0xff]
      %v9846 = vld [vmem:[%s2 + $0x98] sm:$0xff]
      %v9847 = vld [vmem:[%s2 + $0xa0] sm:$0xff]
      %v9848 = vld [vmem:[%s2 + $0xa8] sm:$0xff]
      %v9849 = vld [vmem:[%s2 + $0xb0] sm:$0xff]
      %v9850 = vld [vmem:[%s2 + $0xb8] sm:$0xff]
      %v9851 = vld [vmem:[%s2 + $0xc0] sm:$0xff]
      %v9852 = vld [vmem:[%s2 + $0xc8] sm:$0xff]
      %v9853 = vld [vmem:[%s2 + $0xd0] sm:$0xff]
      %v9854 = vld [vmem:[%s2 + $0xd8] sm:$0xff]
      %v9855 = vld [vmem:[%s2 + $0xe0] sm:$0xff]
      %v9856 = vld [vmem:[%s2 + $0xe8] sm:$0xff]
      %v9857 = vld [vmem:[%s2 + $0xf0] sm:$0xff]
      %v9858 = vld [vmem:[%s2 + $0xf8] sm:$0xff]
      %v9859 = vld [vmem:[%s2 + $0x100] sm:$0xff]
      %v9860 = vld [vmem:[%s2 + $0x108] sm:$0xff]
      %v9861 = vld [vmem:[%s2 + $0x110] sm:$0xff]
      %v9862 = vld [vmem:[%s2 + $0x118] sm:$0xff]
      %v9863 = vsel %vm624, %v9619, 0
      %v9865 = vsel %vm624, %v9622, 0
      %v9867 = vsel %vm624, %v9625, 0
      %v9869 = vsel %vm624, %v9628, 0
      %v9871 = vsel %vm624, %v9631, 0
      %v9873 = vsel %vm624, %v9634, 0
      %v9875 = vsel %vm624, %v9698, 0
      %v9877 = vsel %vm624, %v9778, 0
      %9879 = vmatprep.subr.mxu0 0.0
      %9880 = vmatpush1.msra.mxu0 %v9827
      %9881 = vmatprep.subr.mxu0 0.0
      %9882 = vmatpush1.msra.mxu0 %v9828
      %9883 = vmatprep.subr.mxu0 0.0
      %9884 = vmatpush1.msra.mxu0 %v9829
      %9885 = vmatprep.subr.mxu0 0.0
      %9886 = vmatpush1.msra.mxu0 %v9830
      %9887 = vmatprep.subr.mxu0 0.0
      %9888 = vmatpush1.msra.mxu0 %v9831
      %9889 = vmatprep.subr.mxu0 0.0
      %9890 = vmatpush1.msra.mxu0 %v9832
      %9891 = vmatprep.subr.mxu0 0.0
      %9892 = vmatpush1.msra.mxu0 %v9833
      %9893 = vmatprep.subr.mxu0 0.0
      %9894 = vmatpush1.msra.mxu0 %v9834
      %9895 = vmatprep.subr.mxu0 0.0
      %9896 = vmatpush1.msra.mxu0 %v9835
      %9897 = vmatprep.subr.mxu0 0.0
      %9898 = vmatpush1.msra.mxu0 %v9836
      %9899 = vmatprep.subr.mxu0 0.0
      %9900 = vmatpush1.msra.mxu0 %v9837
      %9901 = vmatprep.subr.mxu0 0.0
      %9902 = vmatpush1.msra.mxu0 %v9838
      %9903 = vmatprep.subr.mxu0 0.0
      %9904 = vmatpush1.msra.mxu0 %v9839
      %9905 = vmatprep.subr.mxu0 0.0
      %9906 = vmatpush1.msra.mxu0 %v9840
      %9907 = vmatprep.subr.mxu0 0.0
      %9908 = vmatpush1.msra.mxu0 %v9841
      %9909 = vmatprep.subr.mxu0 0.0
      %9910 = vmatpush1.msra.mxu0 %v9842
      %9911 = vmatprep.subr.mxu0 0.0
      %9912 = vmatpush1.msra.mxu0 %v9843
      %9913 = vmatprep.subr.mxu0 0.0
      %9914 = vmatpush1.msra.mxu0 %v9844
      %9915 = vmatprep.subr.mxu0 0.0
      %9916 = vmatpush1.msra.mxu0 %v9845
      %9917 = vmatprep.subr.mxu0 0.0
      %9918 = vmatpush1.msra.mxu0 %v9846
      %9919 = vmatprep.subr.mxu0 0.0
      %9920 = vmatpush1.msra.mxu0 %v9847
      %9921 = vmatprep.subr.mxu0 0.0
      %9922 = vmatpush1.msra.mxu0 %v9848
      %9923 = vmatprep.subr.mxu0 0.0
      %9924 = vmatpush1.msra.mxu0 %v9849
      %9925 = vmatprep.subr.mxu0 0.0
      %9926 = vmatpush1.msra.mxu0 %v9850
      %9927 = vmatprep.subr.mxu0 0.0
      %9928 = vmatpush1.msra.mxu0 %v9851
      %9929 = vmatprep.subr.mxu0 0.0
      %9930 = vmatpush1.msra.mxu0 %v9852
      %9931 = vmatprep.subr.mxu0 0.0
      %9932 = vmatpush1.msra.mxu0 %v9853
      %9933 = vmatprep.subr.mxu0 0.0
      %9934 = vmatpush1.msra.mxu0 %v9854
      %9935 = vmatprep.subr.mxu0 0.0
      %9936 = vmatpush1.msra.mxu0 %v9855
      %9937 = vmatprep.subr.mxu0 0.0
      %9938 = vmatpush1.msra.mxu0 %v9856
      %9939 = vmatprep.subr.mxu0 0.0
      %9940 = vmatpush1.msra.mxu0 %v9857
      %9941 = vmatprep.subr.mxu0 0.0
      %9942 = vmatpush1.msra.mxu0 %v9858
      %9943 = vmatprep.mubr.f32.mxu0 %v9819
      %9944 = vmatmul.mubr.f32.gmra.mrb[0].mxu0 %v9795
      %v9945 = vpop.f32.mrb[0].mxu0
      %v9946 = vadd.f32 0.0, %v9945
      %v9947 = vpop.f32.mrb[0].mxu0
      %9948 = vmatprep.mubr.f32.mxu0 %v9820
      %9949 = vmatmul.mubr.f32.gmra.mrb[0].mxu0 %v9796
      %v9950 = vpop.f32.mrb[0].mxu0
      %v9951 = vadd.f32 0.0, %v9950
      %v9952 = vpop.f32.mrb[0].mxu0
      %9953 = vmatprep.mubr.f32.mxu0 %v9821
      %9954 = vmatmul.mubr.f32.gmra.mrb[0].mxu0 %v9797
      %v9955 = vpop.f32.mrb[0].mxu0
      %v9956 = vadd.f32 0.0, %v9955
      %v9957 = vpop.f32.mrb[0].mxu0
      %9958 = vmatprep.mubr.f32.mxu0 %v9822
      %9959 = vmatmul.mubr.f32.gmra.mrb[0].mxu0 %v9798
      %v9960 = vpop.f32.mrb[0].mxu0
      %v9961 = vadd.f32 0.0, %v9960
      %v9962 = vpop.f32.mrb[0].mxu0
      %9963 = vmatprep.mubr.f32.mxu0 %v9823
      %9964 = vmatmul.mubr.f32.gmra.mrb[0].mxu0 %v9799
      %v9965 = vpop.f32.mrb[0].mxu0
      %v9966 = vadd.f32 0.0, %v9965
      %v9967 = vpop.f32.mrb[0].mxu0
      %9968 = vmatprep.mubr.f32.mxu0 %v9824
      %9969 = vmatmul.mubr.f32.gmra.mrb[0].mxu0 %v9800
      %v9970 = vpop.f32.mrb[0].mxu0
      %v9971 = vadd.f32 0.0, %v9970
      %v9972 = vpop.f32.mrb[0].mxu0
      %9973 = vmatprep.mubr.f32.mxu0 %v9825
      %9974 = vmatmul.mubr.f32.gmra.mrb[0].mxu0 %v9801
      %v9975 = vpop.f32.mrb[0].mxu0
      %v9976 = vadd.f32 0.0, %v9975
      %v9977 = vpop.f32.mrb[0].mxu0
      %9978 = vmatprep.mubr.f32.mxu0 %v9826
      %9979 = vmatmul.mubr.f32.gmra.mrb[0].mxu0 %v9802
      %v9980 = vpop.f32.mrb[0].mxu0
      %v9981 = vadd.f32 0.0, %v9980
      %v9982 = vpop.f32.mrb[0].mxu0
      %9983 = vdwg.mxu0
      %9984 = vmatprep.subr.mxu0 0.0
      %9985 = vmatpush1.msra.mxu0 %v9859
      %9986 = vmatprep.subr.mxu0 0.0
      %9987 = vmatpush1.msra.mxu0 %v9860
      %9988 = vmatprep.subr.mxu0 0.0
      %9989 = vmatpush1.msra.mxu0 %v9861
      %9990 = vmatprep.subr.mxu0 0.0
      %9991 = vmatpush1.msra.mxu0 %v9862
      %9992 = vmatprep.subr.mxu0 0.0
      %9993 = vmatpush1.msra.mxu0 0.0
      %9994 = vmatprep.subr.mxu0 0.0
      %9995 = vmatpush1.msra.mxu0 0.0
      %9996 = vmatprep.subr.mxu0 0.0
      %9997 = vmatpush1.msra.mxu0 0.0
      %9998 = vmatprep.subr.mxu0 0.0
      %9999 = vmatpush1.msra.mxu0 0.0
      %10000 = vmatprep.subr.mxu0 0.0
      %10001 = vmatpush1.msra.mxu0 0.0
      %10002 = vmatprep.subr.mxu0 0.0
      %10003 = vmatpush1.msra.mxu0 0.0
      %10004 = vmatprep.subr.mxu0 0.0
      %10005 = vmatpush1.msra.mxu0 0.0
      %10006 = vmatprep.subr.mxu0 0.0
      %10007 = vmatpush1.msra.mxu0 0.0
      %10008 = vmatprep.subr.mxu0 0.0
      %10009 = vmatpush1.msra.mxu0 0.0
      %10010 = vmatprep.subr.mxu0 0.0
      %10011 = vmatpush1.msra.mxu0 0.0
      %10012 = vmatprep.subr.mxu0 0.0
      %10013 = vmatpush1.msra.mxu0 0.0
      %10014 = vmatprep.subr.mxu0 0.0
      %10015 = vmatpush1.msra.mxu0 0.0
      %10016 = vmatprep.subr.mxu0 0.0
      %10017 = vmatpush1.msra.mxu0 0.0
      %10018 = vmatprep.subr.mxu0 0.0
      %10019 = vmatpush1.msra.mxu0 0.0
      %10020 = vmatprep.subr.mxu0 0.0
      %10021 = vmatpush1.msra.mxu0 0.0
      %10022 = vmatprep.subr.mxu0 0.0
      %10023 = vmatpush1.msra.mxu0 0.0
      %10024 = vmatprep.subr.mxu0 0.0
      %10025 = vmatpush1.msra.mxu0 0.0
      %10026 = vmatprep.subr.mxu0 0.0
      %10027 = vmatpush1.msra.mxu0 0.0
      %10028 = vmatprep.subr.mxu0 0.0
      %10029 = vmatpush1.msra.mxu0 0.0
      %10030 = vmatprep.subr.mxu0 0.0
      %10031 = vmatpush1.msra.mxu0 0.0
      %10032 = vmatprep.subr.mxu0 0.0
      %10033 = vmatpush1.msra.mxu0 0.0
      %10034 = vmatprep.subr.mxu0 0.0
      %10035 = vmatpush1.msra.mxu0 0.0
      %10036 = vmatprep.subr.mxu0 0.0
      %10037 = vmatpush1.msra.mxu0 0.0
      %10038 = vmatprep.subr.mxu0 0.0
      %10039 = vmatpush1.msra.mxu0 0.0
      %10040 = vmatprep.subr.mxu0 0.0
      %10041 = vmatpush1.msra.mxu0 0.0
      %10042 = vmatprep.subr.mxu0 0.0
      %10043 = vmatpush1.msra.mxu0 0.0
      %10044 = vmatprep.subr.mxu0 0.0
      %10045 = vmatpush1.msra.mxu0 0.0
      %10046 = vmatprep.subr.mxu0 0.0
      %10047 = vmatpush1.msra.mxu0 0.0
      %10048 = vmatprep.mubr.f32.mxu0 0.0
      %10049 = vmatmul.mubr.f32.gmra.mrb[0].mxu0 %v9863
      %v10050 = vpop.f32.mrb[0].mxu0
      %v10051 = vadd.f32 %v9946, %v10050
      %v10052 = vpop.f32.mrb[0].mxu0
      %10053 = vmatprep.mubr.f32.mxu0 0.0
      %10054 = vmatmul.mubr.f32.gmra.mrb[0].mxu0 %v9865
      %v10055 = vpop.f32.mrb[0].mxu0
      %v10056 = vadd.f32 %v9951, %v10055
      %v10057 = vpop.f32.mrb[0].mxu0
      %10058 = vmatprep.mubr.f32.mxu0 0.0
      %10059 = vmatmul.mubr.f32.gmra.mrb[0].mxu0 %v9867
      %v10060 = vpop.f32.mrb[0].mxu0
      %v10061 = vadd.f32 %v9956, %v10060
      %v10062 = vpop.f32.mrb[0].mxu0
      %10063 = vmatprep.mubr.f32.mxu0 0.0
      %10064 = vmatmul.mubr.f32.gmra.mrb[0].mxu0 %v9869
      %v10065 = vpop.f32.mrb[0].mxu0
      %v10066 = vadd.f32 %v9961, %v10065
      %v10067 = vpop.f32.mrb[0].mxu0
      %10068 = vmatprep.mubr.f32.mxu0 0.0
      %10069 = vmatmul.mubr.f32.gmra.mrb[0].mxu0 %v9871
      %v10070 = vpop.f32.mrb[0].mxu0
      %v10071 = vadd.f32 %v9966, %v10070
      %v10072 = vpop.f32.mrb[0].mxu0
      %10073 = vmatprep.mubr.f32.mxu0 0.0
      %10074 = vmatmul.mubr.f32.gmra.mrb[0].mxu0 %v9873
      %v10075 = vpop.f32.mrb[0].mxu0
      %v10076 = vadd.f32 %v9971, %v10075
      %v10077 = vpop.f32.mrb[0].mxu0
      %10078 = vmatprep.mubr.f32.mxu0 0.0
      %10079 = vmatmul.mubr.f32.gmra.mrb[0].mxu0 %v9875
      %v10080 = vpop.f32.mrb[0].mxu0
      %v10081 = vadd.f32 %v9976, %v10080
      %v10082 = vpop.f32.mrb[0].mxu0
      %10083 = vmatprep.mubr.f32.mxu0 0.0
      %10084 = vmatmul.mubr.f32.gmra.mrb[0].mxu0 %v9877
      %v10085 = vpop.f32.mrb[0].mxu0
      %v10086 = vadd.f32 %v9981, %v10085
      %v10087 = vpop.f32.mrb[0].mxu0
      %10088 = vdwg.mxu0
      %10089 = vst.msk [vmem:[%s259] sm:$0xff] %vm265, %v10051
      %10090 = vst.msk [vmem:[%s259 + $0x8] sm:$0xff] %vm265, %v10056
      %10091 = vst.msk [vmem:[%s259 + $0x10] sm:$0xff] %vm265, %v10061
      %10092 = vst.msk [vmem:[%s259 + $0x18] sm:$0xff] %vm265, %v10066
      %10093 = vst.msk [vmem:[%s259 + $0x20] sm:$0xff] %vm265, %v10071
      %10094 = vst.msk [vmem:[%s259 + $0x28] sm:$0xff] %vm265, %v10076
      %10095 = vst.msk [vmem:[%s259 + $0x30] sm:$0xff] %vm265, %v10081
      %10096 = vst.msk [vmem:[%s259 + $0x38] sm:$0xff] %vm265, %v10086
      %p10097 = scmp.lt.s32.totalorder %s18, 1
      %s10098 = scalar_select %p10097, %s18, 1
      %s10099 = smul.addr %s10098, 8
      %s10100 = smul.addr %s10099, 8
      %s10101 = scalar_lea.vmem %s5, %s10100
      %p10102 = scmp.lt.s32.totalorder %s18, 1
      %s10103 = scalar_select %p10102, %s18, 1
      %s10104 = smul.addr %s10103, 8
      %s10105 = smul.addr %s10104, 8
      %s10106 = scalar_lea.vmem %s6, %s10105
      // Predicated region
      $region41: #{linear_attention_forward.1} parent=39 // pred_check
        %p10107 = pneg %p146
      $region42: #{linear_attention_forward.1} parent=39 // pred_check_branch
        %10109 = sbr.rel (%p10107) target = $region44
      $region43: #{linear_attention_forward.1} parent=39 // pred_region
        _
      $region44: #{linear_attention_forward.1} parent=39 // pred_fallthru
        _
      // Predicated region
      $region45: #{linear_attention_forward.1} parent=39 // pred_check
        %p10110 = pneg %p172
      $region46: #{linear_attention_forward.1} parent=39 // pred_check_branch
        %10112 = sbr.rel (%p10110) target = $region48
      $region47: #{linear_attention_forward.1} parent=39 // pred_region
        _
      $region48: #{linear_attention_forward.1} parent=39 // pred_fallthru
        _
    $region40: #{linear_attention_forward.1} parent=5 // pred_fallthru
      _
    %p10113 = scmp.le.s32.totalorder 2, %s13
    // Predicated region
    $region49: #{linear_attention_forward.1} parent=5 // pred_check
      %p10114 = pneg %p10113
    $region50: #{linear_attention_forward.1} parent=5 // pred_check_branch
      %10116 = sbr.rel (%p10114) target = $region52
    $region51: #{linear_attention_forward.1} parent=5 // pred_region
      %s10117 = ssub.s32 %s13, 2
      // Predicated region
      $region53: #{linear_attention_forward.1} parent=51 // pred_check
        %p10118 = pneg %p152
      $region54: #{linear_attention_forward.1} parent=51 // pred_check_branch
        %10120 = sbr.rel (%p10118) target = $region56
      $region55: #{linear_attention_forward.1} parent=51 // pred_region
        %p10121 = scmp.lt.s32.totalorder %s19, 1
        %s10122 = scalar_select %p10121, %s19, 1
        %s10123 = smul.addr %s10122, 8
        %s10124 = smul.addr %s10123, 8
        %s10125 = scalar_lea.vmem %s5, %s10124
      $region56: #{linear_attention_forward.1} parent=51 // pred_fallthru
        _
      // Predicated region
      $region57: #{linear_attention_forward.1} parent=51 // pred_check
        %p10126 = pneg %p178
      $region58: #{linear_attention_forward.1} parent=51 // pred_check_branch
        %10128 = sbr.rel (%p10126) target = $region60
      $region59: #{linear_attention_forward.1} parent=51 // pred_region
        %p10129 = scmp.lt.s32.totalorder %s19, 1
        %s10130 = scalar_select %p10129, %s19, 1
        %s10131 = smul.addr %s10130, 8
        %s10132 = smul.addr %s10131, 8
        %s10133 = scalar_lea.vmem %s6, %s10132
      $region60: #{linear_attention_forward.1} parent=51 // pred_fallthru
        _
    $region52: #{linear_attention_forward.1} parent=5 // pred_fallthru
      _
  $region6: #{linear_attention_forward.1} parent=0 // loop_footer
    %s17 = sadd.s32 1, %s13
  $region7: #{linear_attention_forward.1} parent=0 // loop_footer_branch
    %12 = sbr.rel target = $region3
  $region8: #{linear_attention_forward.1} parent=0 // loop_exit
    _

</llo_original>
